<compile_context>
chip_gen: v6e
topology: v6e:2x2x1
jax: 0.10.0
libtpu: 0.0.40
codegen_flags: <defaults>
</compile_context>

<pallas_src>
import functools
import math

import jax
import jax.numpy as jnp
from jax.experimental import pallas as pl
from jax.experimental.pallas import tpu as pltpu

# ----- small, DistilBERT-shaped config (scaled down; module implies 768/12/3072/64) -----
HIDDEN = 64          # stands in for 768
N_HEADS = 4          # stands in for 12
HEAD_DIM = HIDDEN // N_HEADS
FFN_DIM = 128        # stands in for 3072
ADAPTER = 16         # stands in for adapter_size=64
N_LAYERS = 6
NUM_LABELS = 3
CLS_PAD = 128        # lane-dense padded classifier width (real logits = first NUM_LABELS cols)
VOCAB = 128          # lane-aligned toy vocab (one-hot matmul K dim)
MAX_POS = 32
LN_EPS_BERT = 1e-12  # DistilBERT LayerNorm eps
LN_EPS_ADPT = 1e-5   # nn.LayerNorm default eps (Adapter)

STACKED_ORDER = (
    "qkv_w", "qkv_b", "o_w", "o_b", "sa_ln_w", "sa_ln_b",
    "ffn1_w", "ffn1_b", "ffn2_w", "ffn2_b", "out_ln_w", "out_ln_b",
    "ad_ln_w", "ad_ln_b", "ad_down_w", "ad_down_b", "ad_up_w", "ad_up_b",
)


# ------------------------------ in-kernel math helpers ------------------------------
def _layer_norm(x, w, b, eps):
    # PyTorch LayerNorm: biased variance, eps inside sqrt.  Kept in f32 (v5e-friendly).
    mu = jnp.mean(x, axis=-1, keepdims=True)
    var = jnp.mean((x - mu) ** 2, axis=-1, keepdims=True)
    return (x - mu) * jax.lax.rsqrt(var + eps) * w + b


def _gelu(x):
    # exact GELU (nn.GELU default): 0.5*x*(1+erf(x/sqrt(2)))
    return 0.5 * x * (1.0 + jax.lax.erf(x * (1.0 / math.sqrt(2.0))))


def _linear(x_f32, w_bf16, b_f32):
    # bf16 MXU operands, f32 accumulate, f32 bias.
    y = jnp.dot(x_f32.astype(jnp.bfloat16), w_bf16,
                preferred_element_type=jnp.float32)
    return y + b_f32


# --------------------------------- fused Pallas kernel -----------------------------------
def _fused_forward_kernel(seq_len,
                          ids_ref,            # (1, S, 1) int32 (VMEM)
                          mask_ref,           # (1, 1, S) f32, 1 = attend, 0 = masked
                          we_ref, pe_ref, elnw_ref, elnb_ref,
                          qkvw, qkvb, ow, ob, saw, sab,
                          f1w, f1b, f2w, f2b, olw, olb,
                          adlw, adlb, adw, adb, auw, aub,
                          clsw_ref, clsb_ref,
                          logits_ref):
    H, DH = HIDDEN, HEAD_DIM
    neg = jnp.finfo(jnp.float32).min

    # ---- embeddings: one-hot MXU gather (no per-token dynamic loads / concat) + pos + LN ----
    ids = ids_ref[0]                                                     # (S, 1) int32
    iota = jax.lax.broadcasted_iota(jnp.int32, (seq_len, VOCAB), 1)      # (S, V)
    onehot = jnp.where(ids == iota, 1.0, 0.0).astype(jnp.bfloat16)       # (S, V) bf16
    emb = jnp.dot(onehot, we_ref[...],
                  preferred_element_type=jnp.float32) + pe_ref[...]      # (S, H) f32
    # embedding dropout: eval mode -> identity
    h = _layer_norm(emb, elnw_ref[...], elnb_ref[...], LN_EPS_BERT)

    # ---- hoisted attention-mask predicate (compare once, reuse 6x) ----
    kill = mask_ref[0] == 0.0                                            # (1, S) bool

    # ---- 6 transformer blocks + adapters; weights resident in VMEM, statically unrolled ----
    for l in range(N_LAYERS):
        x16 = h.astype(jnp.bfloat16)

        # Fused Q/K/V projection: single lane-dense (S,H)@(H,3H) MXU push.
        # 1/sqrt(head_dim) is already folded into the Q columns at pack time.
        qkv = jnp.dot(x16, qkvw[l], preferred_element_type=jnp.float32) + qkvb[l]  # (S, 3H)

        ctx_parts = []
        for n in range(N_HEADS):
            qn = qkv[:, n * DH:(n + 1) * DH].astype(jnp.bfloat16)          # (S, dh)
            kn = qkv[:, H + n * DH: H + (n + 1) * DH].astype(jnp.bfloat16)
            vn = qkv[:, 2 * H + n * DH: 2 * H + (n + 1) * DH].astype(jnp.bfloat16)

            s = jax.lax.dot_general(qn, kn, (((1,), (1,)), ((), ())),
                                    preferred_element_type=jnp.float32)    # (S, S)
            # masked_fill with finfo.min; NOTE: fully-masked rows give a uniform softmax over
            # masked positions (matches HF DistilBERT behavior) — keep, do not "fix".
            s = jnp.where(kill, neg, s)
            s = s - jnp.max(s, axis=-1, keepdims=True)
            p = jnp.exp(s)
            p = p * pl.reciprocal(jnp.sum(p, axis=-1, keepdims=True), approx=True)
            # attention dropout: eval mode -> identity
            ctx_parts.append(jnp.dot(p.astype(jnp.bfloat16), vn,
                                     preferred_element_type=jnp.float32))  # (S, dh)

        # Single K=H output projection on the lane-concatenated heads.
        ctx = jnp.concatenate(ctx_parts, axis=1)                           # (S, H) f32
        attn = _linear(ctx, ow[l], ob[l])                                  # (S, H)
        sa = _layer_norm(attn + h, saw[l], sab[l], LN_EPS_BERT)

        h1 = _gelu(_linear(sa, f1w[l], f1b[l]))                            # (S, FFN)
        ffn = _linear(h1, f2w[l], f2b[l])                                  # (S, H)
        # FFN dropout: eval mode -> identity
        out = _layer_norm(ffn + sa, olw[l], olb[l], LN_EPS_BERT)

        # Adapter: LayerNorm -> down_proj -> GELU -> up_proj -> + residual
        a = _layer_norm(out, adlw[l], adlb[l], LN_EPS_ADPT)
        a = _gelu(_linear(a, adw[l], adb[l]))                              # (S, ADAPTER)
        a = _linear(a, auw[l], aub[l])                                     # (S, H)
        h = a + out

    # ---- CLS pooling + dropout(identity) + classifier (lane-dense 128-wide output) ----
    pooled = h[0:1, :]                                                     # (1, H)
    logits_ref[0] = _linear(pooled, clsw_ref[...], clsb_ref[...])          # (1, CLS_PAD)


# --------------------------------- model forward ------------------------------------
def distilbert_with_adapter_forward(params, input_ids, attention_mask):
    B, S = input_ids.shape
    ids3 = input_ids.astype(jnp.int32).reshape(B, S, 1)
    mask3 = attention_mask.astype(jnp.float32).reshape(B, 1, S)
    pe = params["pos_emb"][:S]                                 # static slice (glue)

    stacked = [params["stacked"][name] for name in STACKED_ORDER]

    def full_spec(arr):
        nd = arr.ndim
        return pl.BlockSpec(arr.shape, lambda b, _nd=nd: (0,) * _nd)

    in_specs = [
        pl.BlockSpec((1, S, 1), lambda b: (b, 0, 0)),          # input ids (VMEM, per batch)
        pl.BlockSpec((1, 1, S), lambda b: (b, 0, 0)),          # attention mask
        full_spec(params["word_emb"]),
        full_spec(pe),
        full_spec(params["emb_ln_w"]),
        full_spec(params["emb_ln_b"]),
    ]
    in_specs += [full_spec(w) for w in stacked]
    in_specs += [full_spec(params["cls_w"]), full_spec(params["cls_b"])]

    logits_padded = pl.pallas_call(
        functools.partial(_fused_forward_kernel, S),
        grid_spec=pltpu.PrefetchScalarGridSpec(
            num_scalar_prefetch=0,
            grid=(B,),
            in_specs=in_specs,
            out_specs=pl.BlockSpec((1, 1, CLS_PAD), lambda b: (b, 0, 0)),
        ),
        out_shape=jax.ShapeDtypeStruct((B, 1, CLS_PAD), jnp.float32),
        compiler_params=pltpu.CompilerParams(
            dimension_semantics=("parallel",),                 # batch may shard across v7x TCs
            vmem_limit_bytes=32 * 1024 * 1024,
        ),
    )(ids3, mask3, params["word_emb"], pe,
      params["emb_ln_w"], params["emb_ln_b"], *stacked,
      params["cls_w"], params["cls_b"])

    logits = logits_padded[:, 0, :NUM_LABELS]
    # TODO(synk): CrossEntropyLoss branch not implemented (labels=None path only).
    return {"loss": None, "logits": logits}


# ---------------------------- deterministic parameter init ---------------------------
def init_params(key):
    """PyTorch-equivalent parameters in standard [in, out] layout, f32."""
    def normal(k, shape, std=0.02):
        return (std * jax.random.normal(k, shape)).astype(jnp.float32)

    kit = iter(jax.random.split(key, 256))
    params = {
        "word_emb": normal(next(kit), (VOCAB, HIDDEN)),
        "pos_emb": normal(next(kit), (MAX_POS, HIDDEN)),
        "emb_ln_w": jnp.ones((1, HIDDEN), jnp.float32),
        "emb_ln_b": jnp.zeros((1, HIDDEN), jnp.float32),
        "cls_w": normal(next(kit), (HIDDEN, NUM_LABELS)),
        "cls_b": jnp.zeros((1, NUM_LABELS), jnp.float32),
        "layers": [],
    }
    for _ in range(N_LAYERS):
        lp = {
            "q_w": normal(next(kit), (HIDDEN, HIDDEN)), "q_b": normal(next(kit), (1, HIDDEN)),
            "k_w": normal(next(kit), (HIDDEN, HIDDEN)), "k_b": normal(next(kit), (1, HIDDEN)),
            "v_w": normal(next(kit), (HIDDEN, HIDDEN)), "v_b": normal(next(kit), (1, HIDDEN)),
            "o_w": normal(next(kit), (HIDDEN, HIDDEN)), "o_b": normal(next(kit), (1, HIDDEN)),
            "sa_ln_w": jnp.ones((1, HIDDEN), jnp.float32),
            "sa_ln_b": jnp.zeros((1, HIDDEN), jnp.float32),
            "ffn1_w": normal(next(kit), (HIDDEN, FFN_DIM)), "ffn1_b": normal(next(kit), (1, FFN_DIM)),
            "ffn2_w": normal(next(kit), (FFN_DIM, HIDDEN)), "ffn2_b": normal(next(kit), (1, HIDDEN)),
            "out_ln_w": jnp.ones((1, HIDDEN), jnp.float32),
            "out_ln_b": jnp.zeros((1, HIDDEN), jnp.float32),
            # Adapter init exactly as in Adapter.__init__: N(0, 0.02) weights, zero biases,
            # default LayerNorm init (ones / zeros).
            "ad_ln_w": jnp.ones((1, HIDDEN), jnp.float32),
            "ad_ln_b": jnp.zeros((1, HIDDEN), jnp.float32),
            "ad_down_w": normal(next(kit), (HIDDEN, ADAPTER)),
            "ad_down_b": jnp.zeros((1, ADAPTER), jnp.float32),
            "ad_up_w": normal(next(kit), (ADAPTER, HIDDEN)),
            "ad_up_b": jnp.zeros((1, HIDDEN), jnp.float32),
        }
        params["layers"].append(lp)
    return params


def pack_params(raw):
    """Kernel-layout params: layer-stacked, QKV fused into one (H,3H) weight with the
    1/sqrt(head_dim) scale folded into the Q columns, bf16 matmul weights (f32 biases / LN
    params), bf16 embedding table, classifier padded to 128 lanes."""
    BF = jnp.bfloat16
    scale = 1.0 / math.sqrt(HEAD_DIM)
    layers = raw["layers"]

    def stack(fn, dtype=None):
        arr = jnp.stack([fn(lp) for lp in layers], axis=0)
        return arr.astype(dtype) if dtype is not None else arr

    stacked = {
        # Fused QKV: columns ordered [Q | K | V]; Q part pre-scaled by 1/sqrt(dh).
        "qkv_w": stack(lambda lp: jnp.concatenate(
            [lp["q_w"] * scale, lp["k_w"], lp["v_w"]], axis=1), BF),       # (L, H, 3H)
        "qkv_b": stack(lambda lp: jnp.concatenate(
            [lp["q_b"] * scale, lp["k_b"], lp["v_b"]], axis=1)),           # (L, 1, 3H)
        "o_w": stack(lambda lp: lp["o_w"], BF), "o_b": stack(lambda lp: lp["o_b"]),
        "sa_ln_w": stack(lambda lp: lp["sa_ln_w"]), "sa_ln_b": stack(lambda lp: lp["sa_ln_b"]),
        "ffn1_w": stack(lambda lp: lp["ffn1_w"], BF), "ffn1_b": stack(lambda lp: lp["ffn1_b"]),
        "ffn2_w": stack(lambda lp: lp["ffn2_w"], BF), "ffn2_b": stack(lambda lp: lp["ffn2_b"]),
        "out_ln_w": stack(lambda lp: lp["out_ln_w"]), "out_ln_b": stack(lambda lp: lp["out_ln_b"]),
        "ad_ln_w": stack(lambda lp: lp["ad_ln_w"]), "ad_ln_b": stack(lambda lp: lp["ad_ln_b"]),
        "ad_down_w": stack(lambda lp: lp["ad_down_w"], BF),
        "ad_down_b": stack(lambda lp: lp["ad_down_b"]),
        "ad_up_w": stack(lambda lp: lp["ad_up_w"], BF),
        "ad_up_b": stack(lambda lp: lp["ad_up_b"]),
    }

    cls_w = jnp.zeros((HIDDEN, CLS_PAD), jnp.float32).at[:, :NUM_LABELS].set(raw["cls_w"]).astype(BF)
    cls_b = jnp.zeros((1, CLS_PAD), jnp.float32).at[:, :NUM_LABELS].set(raw["cls_b"])

    return {
        "word_emb": raw["word_emb"].astype(BF),     # bf16: one-hot matmul operand
        "pos_emb": raw["pos_emb"],                  # f32 (added post-accumulation)
        "emb_ln_w": raw["emb_ln_w"], "emb_ln_b": raw["emb_ln_b"],
        "cls_w": cls_w, "cls_b": cls_b,
        "stacked": stacked,
    }


if __name__ == "__main__":
    key = jax.random.PRNGKey(0)
    pkey, ikey = jax.random.split(key)
    params = pack_params(init_params(pkey))

    B, S = 2, 8
    input_ids = jax.random.randint(ikey, (B, S), 0, VOCAB, dtype=jnp.int32)
    attention_mask = jnp.array(
        [[1] * S, [1] * (S - 2) + [0, 0]], dtype=jnp.int32)   # second row has padding

    out = distilbert_with_adapter_forward(params, input_ids, attention_mask)
    logits = jax.block_until_ready(out["logits"])

    assert logits.shape == (B, NUM_LABELS)
    assert bool(jnp.all(jnp.isfinite(logits)))
    print("KERNEL_OK")
</pallas_src>

<mosaic_0001>
module attributes {stable_mosaic.version = 11 : i64} {
  func.func @_fused_forward_kernel(%arg0: i32, %arg1: memref<1x8x1xi32, #tpu.memory_space<vmem>>, %arg2: memref<1x1x8xf32, #tpu.memory_space<vmem>>, %arg3: memref<128x64xbf16, #tpu.memory_space<vmem>>, %arg4: memref<8x64xf32, #tpu.memory_space<vmem>>, %arg5: memref<1x64xf32, #tpu.memory_space<vmem>>, %arg6: memref<1x64xf32, #tpu.memory_space<vmem>>, %arg7: memref<6x64x192xbf16, #tpu.memory_space<vmem>>, %arg8: memref<6x1x192xf32, #tpu.memory_space<vmem>>, %arg9: memref<6x64x64xbf16, #tpu.memory_space<vmem>>, %arg10: memref<6x1x64xf32, #tpu.memory_space<vmem>>, %arg11: memref<6x1x64xf32, #tpu.memory_space<vmem>>, %arg12: memref<6x1x64xf32, #tpu.memory_space<vmem>>, %arg13: memref<6x64x128xbf16, #tpu.memory_space<vmem>>, %arg14: memref<6x1x128xf32, #tpu.memory_space<vmem>>, %arg15: memref<6x128x64xbf16, #tpu.memory_space<vmem>>, %arg16: memref<6x1x64xf32, #tpu.memory_space<vmem>>, %arg17: memref<6x1x64xf32, #tpu.memory_space<vmem>>, %arg18: memref<6x1x64xf32, #tpu.memory_space<vmem>>, %arg19: memref<6x1x64xf32, #tpu.memory_space<vmem>>, %arg20: memref<6x1x64xf32, #tpu.memory_space<vmem>>, %arg21: memref<6x64x16xbf16, #tpu.memory_space<vmem>>, %arg22: memref<6x1x16xf32, #tpu.memory_space<vmem>>, %arg23: memref<6x16x64xbf16, #tpu.memory_space<vmem>>, %arg24: memref<6x1x64xf32, #tpu.memory_space<vmem>>, %arg25: memref<64x128xbf16, #tpu.memory_space<vmem>>, %arg26: memref<1x128xf32, #tpu.memory_space<vmem>>, %arg27: memref<1x1x128xf32, #tpu.memory_space<vmem>>) attributes {dimension_semantics = [#tpu.dimension_semantics<parallel>], iteration_bounds = array<i64: 2>, scalar_prefetch = 0 : i64, scratch_operands = 0 : i64, tpu.core_type = #tpu.core_type<tc>, window_params = [{transform_indices = @transform_0, window_bounds = array<i64: 1, 8, 1>}, {transform_indices = @transform_1, window_bounds = array<i64: 1, 1, 8>}, {pipeline_mode = #tpu.pipeline_mode<synchronous>, transform_indices = @transform_2, window_bounds = array<i64: 128, 64>}, {pipeline_mode = #tpu.pipeline_mode<synchronous>, transform_indices = @transform_3, window_bounds = array<i64: 8, 64>}, {pipeline_mode = #tpu.pipeline_mode<synchronous>, transform_indices = @transform_4, window_bounds = array<i64: 1, 64>}, {pipeline_mode = #tpu.pipeline_mode<synchronous>, transform_indices = @transform_5, window_bounds = array<i64: 1, 64>}, {pipeline_mode = #tpu.pipeline_mode<synchronous>, transform_indices = @transform_6, window_bounds = array<i64: 6, 64, 192>}, {pipeline_mode = #tpu.pipeline_mode<synchronous>, transform_indices = @transform_7, window_bounds = array<i64: 6, 1, 192>}, {pipeline_mode = #tpu.pipeline_mode<synchronous>, transform_indices = @transform_8, window_bounds = array<i64: 6, 64, 64>}, {pipeline_mode = #tpu.pipeline_mode<synchronous>, transform_indices = @transform_9, window_bounds = array<i64: 6, 1, 64>}, {pipeline_mode = #tpu.pipeline_mode<synchronous>, transform_indices = @transform_10, window_bounds = array<i64: 6, 1, 64>}, {pipeline_mode = #tpu.pipeline_mode<synchronous>, transform_indices = @transform_11, window_bounds = array<i64: 6, 1, 64>}, {pipeline_mode = #tpu.pipeline_mode<synchronous>, transform_indices = @transform_12, window_bounds = array<i64: 6, 64, 128>}, {pipeline_mode = #tpu.pipeline_mode<synchronous>, transform_indices = @transform_13, window_bounds = array<i64: 6, 1, 128>}, {pipeline_mode = #tpu.pipeline_mode<synchronous>, transform_indices = @transform_14, window_bounds = array<i64: 6, 128, 64>}, {pipeline_mode = #tpu.pipeline_mode<synchronous>, transform_indices = @transform_15, window_bounds = array<i64: 6, 1, 64>}, {pipeline_mode = #tpu.pipeline_mode<synchronous>, transform_indices = @transform_16, window_bounds = array<i64: 6, 1, 64>}, {pipeline_mode = #tpu.pipeline_mode<synchronous>, transform_indices = @transform_17, window_bounds = array<i64: 6, 1, 64>}, {pipeline_mode = #tpu.pipeline_mode<synchronous>, transform_indices = @transform_18, window_bounds = array<i64: 6, 1, 64>}, {pipeline_mode = #tpu.pipeline_mode<synchronous>, transform_indices = @transform_19, window_bounds = array<i64: 6, 1, 64>}, {pipeline_mode = #tpu.pipeline_mode<synchronous>, transform_indices = @transform_20, window_bounds = array<i64: 6, 64, 16>}, {pipeline_mode = #tpu.pipeline_mode<synchronous>, transform_indices = @transform_21, window_bounds = array<i64: 6, 1, 16>}, {pipeline_mode = #tpu.pipeline_mode<synchronous>, transform_indices = @transform_22, window_bounds = array<i64: 6, 16, 64>}, {pipeline_mode = #tpu.pipeline_mode<synchronous>, transform_indices = @transform_23, window_bounds = array<i64: 6, 1, 64>}, {pipeline_mode = #tpu.pipeline_mode<synchronous>, transform_indices = @transform_24, window_bounds = array<i64: 64, 128>}, {pipeline_mode = #tpu.pipeline_mode<synchronous>, transform_indices = @transform_25, window_bounds = array<i64: 1, 128>}, {transform_indices = @transform_26, window_bounds = array<i64: 1, 1, 128>}]} {
    %c0 = arith.constant 0 : index
    %c0_0 = arith.constant 0 : index
    %c0_1 = arith.constant 0 : index
    %0 = vector.load %arg1[%c0, %c0_0, %c0_1] : memref<1x8x1xi32, #tpu.memory_space<vmem>>, vector<1x8x1xi32>
    %1 = vector.shape_cast %0 : vector<1x8x1xi32> to vector<8x1xi32>
    %2 = tpu.iota {dimensions = array<i32: 1>} : vector<8x128xi32>
    %3 = vector.broadcast %1 : vector<8x1xi32> to vector<8x128xi32>
    %4 = arith.cmpi eq, %3, %2 : vector<8x128xi32>
    %cst = arith.constant 1.000000e+00 : f32
    %cst_2 = arith.constant 0.000000e+00 : f32
    %5 = vector.broadcast %cst : f32 to vector<8x128xf32>
    %6 = vector.broadcast %cst_2 : f32 to vector<8x128xf32>
    %7 = arith.select %4, %5, %6 : vector<8x128xi1>, vector<8x128xf32>
    %8 = arith.truncf %7 : vector<8x128xf32> to vector<8x128xbf16>
    %c0_3 = arith.constant 0 : index
    %c0_4 = arith.constant 0 : index
    %9 = vector.load %arg3[%c0_3, %c0_4] : memref<128x64xbf16, #tpu.memory_space<vmem>>, vector<128x64xbf16>
    %cst_5 = arith.constant dense<0.000000e+00> : vector<8x64xf32>
    %10 = tpu.matmul %8, %9, %cst_5 {dimension_numbers = #tpu.dot_dimension_numbers<[1], [0], [0], [1], [0, 0, 1, 1], [], []>} : vector<8x128xbf16>, vector<128x64xbf16>, vector<8x64xf32> -> vector<8x64xf32>
    %c0_6 = arith.constant 0 : index
    %c0_7 = arith.constant 0 : index
    %11 = vector.load %arg4[%c0_6, %c0_7] : memref<8x64xf32, #tpu.memory_space<vmem>>, vector<8x64xf32>
    %12 = arith.addf %10, %11 : vector<8x64xf32>
    %c0_8 = arith.constant 0 : index
    %c0_9 = arith.constant 0 : index
    %13 = vector.load %arg5[%c0_8, %c0_9] : memref<1x64xf32, #tpu.memory_space<vmem>>, vector<1x64xf32>
    %c0_10 = arith.constant 0 : index
    %c0_11 = arith.constant 0 : index
    %14 = vector.load %arg6[%c0_10, %c0_11] : memref<1x64xf32, #tpu.memory_space<vmem>>, vector<1x64xf32>
    %cst_12 = arith.constant dense<0.000000e+00> : vector<8xf32>
    %15 = vector.multi_reduction <add>, %12, %cst_12 [1] : vector<8x64xf32> to vector<8xf32>
    %16 = vector.shape_cast %15 : vector<8xf32> to vector<8x1xf32>
    %cst_13 = arith.constant 6.400000e+01 : f32
    %17 = vector.broadcast %cst_13 : f32 to vector<8x1xf32>
    %18 = arith.divf %16, %17 : vector<8x1xf32>
    %19 = vector.broadcast %18 : vector<8x1xf32> to vector<8x64xf32>
    %20 = arith.subf %12, %19 : vector<8x64xf32>
    %21 = arith.mulf %20, %20 : vector<8x64xf32>
    %cst_14 = arith.constant dense<0.000000e+00> : vector<8xf32>
    %22 = vector.multi_reduction <add>, %21, %cst_14 [1] : vector<8x64xf32> to vector<8xf32>
    %23 = vector.shape_cast %22 : vector<8xf32> to vector<8x1xf32>
    %cst_15 = arith.constant 6.400000e+01 : f32
    %24 = vector.broadcast %cst_15 : f32 to vector<8x1xf32>
    %25 = arith.divf %23, %24 : vector<8x1xf32>
    %26 = vector.broadcast %18 : vector<8x1xf32> to vector<8x64xf32>
    %27 = arith.subf %12, %26 : vector<8x64xf32>
    %cst_16 = arith.constant 9.99999996E-13 : f32
    %28 = vector.broadcast %cst_16 : f32 to vector<8x1xf32>
    %29 = arith.addf %25, %28 : vector<8x1xf32>
    %30 = math.rsqrt %29 : vector<8x1xf32>
    %31 = vector.broadcast %30 : vector<8x1xf32> to vector<8x64xf32>
    %32 = arith.mulf %27, %31 : vector<8x64xf32>
    %33 = vector.broadcast %13 : vector<1x64xf32> to vector<8x64xf32>
    %34 = arith.mulf %32, %33 : vector<8x64xf32>
    %35 = vector.broadcast %14 : vector<1x64xf32> to vector<8x64xf32>
    %36 = arith.addf %34, %35 : vector<8x64xf32>
    %c0_17 = arith.constant 0 : index
    %c0_18 = arith.constant 0 : index
    %c0_19 = arith.constant 0 : index
    %37 = vector.load %arg2[%c0_17, %c0_18, %c0_19] : memref<1x1x8xf32, #tpu.memory_space<vmem>>, vector<1x1x8xf32>
    %38 = vector.shape_cast %37 : vector<1x1x8xf32> to vector<1x8xf32>
    %cst_20 = arith.constant 0.000000e+00 : f32
    %39 = vector.broadcast %cst_20 : f32 to vector<1x8xf32>
    %40 = arith.cmpf oeq, %38, %39 : vector<1x8xf32>
    %41 = arith.truncf %36 : vector<8x64xf32> to vector<8x64xbf16>
    %c0_21 = arith.constant 0 : index
    %c0_22 = arith.constant 0 : index
    %c0_23 = arith.constant 0 : index
    %42 = vector.load %arg7[%c0_21, %c0_22, %c0_23] : memref<6x64x192xbf16, #tpu.memory_space<vmem>>, vector<1x64x192xbf16>
    %43 = vector.shape_cast %42 : vector<1x64x192xbf16> to vector<64x192xbf16>
    %cst_24 = arith.constant dense<0.000000e+00> : vector<8x192xf32>
    %44 = tpu.matmul %41, %43, %cst_24 {dimension_numbers = #tpu.dot_dimension_numbers<[1], [0], [0], [1], [0, 0, 1, 1], [], []>} : vector<8x64xbf16>, vector<64x192xbf16>, vector<8x192xf32> -> vector<8x192xf32>
    %c0_25 = arith.constant 0 : index
    %c0_26 = arith.constant 0 : index
    %c0_27 = arith.constant 0 : index
    %45 = vector.load %arg8[%c0_25, %c0_26, %c0_27] : memref<6x1x192xf32, #tpu.memory_space<vmem>>, vector<1x1x192xf32>
    %46 = vector.shape_cast %45 : vector<1x1x192xf32> to vector<1x192xf32>
    %47 = vector.broadcast %46 : vector<1x192xf32> to vector<8x192xf32>
    %48 = arith.addf %44, %47 : vector<8x192xf32>
    %49 = vector.extract_strided_slice %48 {offsets = [0, 0], sizes = [8, 16], strides = [1, 1]} : vector<8x192xf32> to vector<8x16xf32>
    %50 = arith.truncf %49 : vector<8x16xf32> to vector<8x16xbf16>
    %51 = vector.extract_strided_slice %48 {offsets = [0, 64], sizes = [8, 16], strides = [1, 1]} : vector<8x192xf32> to vector<8x16xf32>
    %52 = arith.truncf %51 : vector<8x16xf32> to vector<8x16xbf16>
    %53 = vector.extract_strided_slice %48 {offsets = [0, 128], sizes = [8, 16], strides = [1, 1]} : vector<8x192xf32> to vector<8x16xf32>
    %54 = arith.truncf %53 : vector<8x16xf32> to vector<8x16xbf16>
    %cst_28 = arith.constant dense<0.000000e+00> : vector<8x8xf32>
    %55 = tpu.matmul %50, %52, %cst_28 {dimension_numbers = #tpu.dot_dimension_numbers<[1], [1], [0], [0], [0, 0, 1, 0], [], []>} : vector<8x16xbf16>, vector<8x16xbf16>, vector<8x8xf32> -> vector<8x8xf32>
    %cst_29 = arith.constant -3.40282347E+38 : f32
    %56 = vector.shape_cast %40 : vector<1x8xi1> to vector<1x8xi1>
    %57 = vector.broadcast %56 : vector<1x8xi1> to vector<8x8xi1>
    %58 = vector.broadcast %cst_29 : f32 to vector<8x8xf32>
    %59 = arith.select %57, %58, %55 : vector<8x8xi1>, vector<8x8xf32>
    %cst_30 = arith.constant dense<0xFF800000> : vector<8xf32>
    %60 = vector.multi_reduction <maximumf>, %59, %cst_30 [1] : vector<8x8xf32> to vector<8xf32>
    %61 = vector.shape_cast %60 : vector<8xf32> to vector<8x1xf32>
    %62 = vector.broadcast %61 : vector<8x1xf32> to vector<8x8xf32>
    %63 = arith.subf %59, %62 : vector<8x8xf32>
    %64 = math.exp %63 : vector<8x8xf32>
    %cst_31 = arith.constant dense<0.000000e+00> : vector<8xf32>
    %65 = vector.multi_reduction <add>, %64, %cst_31 [1] : vector<8x8xf32> to vector<8xf32>
    %66 = vector.shape_cast %65 : vector<8xf32> to vector<8x1xf32>
    %67 = tpu.reciprocal %66 {approx = true} : vector<8x1xf32> -> vector<8x1xf32>
    %68 = vector.broadcast %67 : vector<8x1xf32> to vector<8x8xf32>
    %69 = arith.mulf %64, %68 : vector<8x8xf32>
    %70 = arith.truncf %69 : vector<8x8xf32> to vector<8x8xbf16>
    %cst_32 = arith.constant dense<0.000000e+00> : vector<8x16xf32>
    %71 = tpu.matmul %70, %54, %cst_32 {dimension_numbers = #tpu.dot_dimension_numbers<[1], [0], [0], [1], [0, 0, 1, 1], [], []>} : vector<8x8xbf16>, vector<8x16xbf16>, vector<8x16xf32> -> vector<8x16xf32>
    %72 = vector.extract_strided_slice %48 {offsets = [0, 16], sizes = [8, 16], strides = [1, 1]} : vector<8x192xf32> to vector<8x16xf32>
    %73 = arith.truncf %72 : vector<8x16xf32> to vector<8x16xbf16>
    %74 = vector.extract_strided_slice %48 {offsets = [0, 80], sizes = [8, 16], strides = [1, 1]} : vector<8x192xf32> to vector<8x16xf32>
    %75 = arith.truncf %74 : vector<8x16xf32> to vector<8x16xbf16>
    %76 = vector.extract_strided_slice %48 {offsets = [0, 144], sizes = [8, 16], strides = [1, 1]} : vector<8x192xf32> to vector<8x16xf32>
    %77 = arith.truncf %76 : vector<8x16xf32> to vector<8x16xbf16>
    %cst_33 = arith.constant dense<0.000000e+00> : vector<8x8xf32>
    %78 = tpu.matmul %73, %75, %cst_33 {dimension_numbers = #tpu.dot_dimension_numbers<[1], [1], [0], [0], [0, 0, 1, 0], [], []>} : vector<8x16xbf16>, vector<8x16xbf16>, vector<8x8xf32> -> vector<8x8xf32>
    %cst_34 = arith.constant -3.40282347E+38 : f32
    %79 = vector.shape_cast %40 : vector<1x8xi1> to vector<1x8xi1>
    %80 = vector.broadcast %79 : vector<1x8xi1> to vector<8x8xi1>
    %81 = vector.broadcast %cst_34 : f32 to vector<8x8xf32>
    %82 = arith.select %80, %81, %78 : vector<8x8xi1>, vector<8x8xf32>
    %cst_35 = arith.constant dense<0xFF800000> : vector<8xf32>
    %83 = vector.multi_reduction <maximumf>, %82, %cst_35 [1] : vector<8x8xf32> to vector<8xf32>
    %84 = vector.shape_cast %83 : vector<8xf32> to vector<8x1xf32>
    %85 = vector.broadcast %84 : vector<8x1xf32> to vector<8x8xf32>
    %86 = arith.subf %82, %85 : vector<8x8xf32>
    %87 = math.exp %86 : vector<8x8xf32>
    %cst_36 = arith.constant dense<0.000000e+00> : vector<8xf32>
    %88 = vector.multi_reduction <add>, %87, %cst_36 [1] : vector<8x8xf32> to vector<8xf32>
    %89 = vector.shape_cast %88 : vector<8xf32> to vector<8x1xf32>
    %90 = tpu.reciprocal %89 {approx = true} : vector<8x1xf32> -> vector<8x1xf32>
    %91 = vector.broadcast %90 : vector<8x1xf32> to vector<8x8xf32>
    %92 = arith.mulf %87, %91 : vector<8x8xf32>
    %93 = arith.truncf %92 : vector<8x8xf32> to vector<8x8xbf16>
    %cst_37 = arith.constant dense<0.000000e+00> : vector<8x16xf32>
    %94 = tpu.matmul %93, %77, %cst_37 {dimension_numbers = #tpu.dot_dimension_numbers<[1], [0], [0], [1], [0, 0, 1, 1], [], []>} : vector<8x8xbf16>, vector<8x16xbf16>, vector<8x16xf32> -> vector<8x16xf32>
    %95 = vector.extract_strided_slice %48 {offsets = [0, 32], sizes = [8, 16], strides = [1, 1]} : vector<8x192xf32> to vector<8x16xf32>
    %96 = arith.truncf %95 : vector<8x16xf32> to vector<8x16xbf16>
    %97 = vector.extract_strided_slice %48 {offsets = [0, 96], sizes = [8, 16], strides = [1, 1]} : vector<8x192xf32> to vector<8x16xf32>
    %98 = arith.truncf %97 : vector<8x16xf32> to vector<8x16xbf16>
    %99 = vector.extract_strided_slice %48 {offsets = [0, 160], sizes = [8, 16], strides = [1, 1]} : vector<8x192xf32> to vector<8x16xf32>
    %100 = arith.truncf %99 : vector<8x16xf32> to vector<8x16xbf16>
    %cst_38 = arith.constant dense<0.000000e+00> : vector<8x8xf32>
    %101 = tpu.matmul %96, %98, %cst_38 {dimension_numbers = #tpu.dot_dimension_numbers<[1], [1], [0], [0], [0, 0, 1, 0], [], []>} : vector<8x16xbf16>, vector<8x16xbf16>, vector<8x8xf32> -> vector<8x8xf32>
    %cst_39 = arith.constant -3.40282347E+38 : f32
    %102 = vector.shape_cast %40 : vector<1x8xi1> to vector<1x8xi1>
    %103 = vector.broadcast %102 : vector<1x8xi1> to vector<8x8xi1>
    %104 = vector.broadcast %cst_39 : f32 to vector<8x8xf32>
    %105 = arith.select %103, %104, %101 : vector<8x8xi1>, vector<8x8xf32>
    %cst_40 = arith.constant dense<0xFF800000> : vector<8xf32>
    %106 = vector.multi_reduction <maximumf>, %105, %cst_40 [1] : vector<8x8xf32> to vector<8xf32>
    %107 = vector.shape_cast %106 : vector<8xf32> to vector<8x1xf32>
    %108 = vector.broadcast %107 : vector<8x1xf32> to vector<8x8xf32>
    %109 = arith.subf %105, %108 : vector<8x8xf32>
    %110 = math.exp %109 : vector<8x8xf32>
    %cst_41 = arith.constant dense<0.000000e+00> : vector<8xf32>
    %111 = vector.multi_reduction <add>, %110, %cst_41 [1] : vector<8x8xf32> to vector<8xf32>
    %112 = vector.shape_cast %111 : vector<8xf32> to vector<8x1xf32>
    %113 = tpu.reciprocal %112 {approx = true} : vector<8x1xf32> -> vector<8x1xf32>
    %114 = vector.broadcast %113 : vector<8x1xf32> to vector<8x8xf32>
    %115 = arith.mulf %110, %114 : vector<8x8xf32>
    %116 = arith.truncf %115 : vector<8x8xf32> to vector<8x8xbf16>
    %cst_42 = arith.constant dense<0.000000e+00> : vector<8x16xf32>
    %117 = tpu.matmul %116, %100, %cst_42 {dimension_numbers = #tpu.dot_dimension_numbers<[1], [0], [0], [1], [0, 0, 1, 1], [], []>} : vector<8x8xbf16>, vector<8x16xbf16>, vector<8x16xf32> -> vector<8x16xf32>
    %118 = vector.extract_strided_slice %48 {offsets = [0, 48], sizes = [8, 16], strides = [1, 1]} : vector<8x192xf32> to vector<8x16xf32>
    %119 = arith.truncf %118 : vector<8x16xf32> to vector<8x16xbf16>
    %120 = vector.extract_strided_slice %48 {offsets = [0, 112], sizes = [8, 16], strides = [1, 1]} : vector<8x192xf32> to vector<8x16xf32>
    %121 = arith.truncf %120 : vector<8x16xf32> to vector<8x16xbf16>
    %122 = vector.extract_strided_slice %48 {offsets = [0, 176], sizes = [8, 16], strides = [1, 1]} : vector<8x192xf32> to vector<8x16xf32>
    %123 = arith.truncf %122 : vector<8x16xf32> to vector<8x16xbf16>
    %cst_43 = arith.constant dense<0.000000e+00> : vector<8x8xf32>
    %124 = tpu.matmul %119, %121, %cst_43 {dimension_numbers = #tpu.dot_dimension_numbers<[1], [1], [0], [0], [0, 0, 1, 0], [], []>} : vector<8x16xbf16>, vector<8x16xbf16>, vector<8x8xf32> -> vector<8x8xf32>
    %cst_44 = arith.constant -3.40282347E+38 : f32
    %125 = vector.shape_cast %40 : vector<1x8xi1> to vector<1x8xi1>
    %126 = vector.broadcast %125 : vector<1x8xi1> to vector<8x8xi1>
    %127 = vector.broadcast %cst_44 : f32 to vector<8x8xf32>
    %128 = arith.select %126, %127, %124 : vector<8x8xi1>, vector<8x8xf32>
    %cst_45 = arith.constant dense<0xFF800000> : vector<8xf32>
    %129 = vector.multi_reduction <maximumf>, %128, %cst_45 [1] : vector<8x8xf32> to vector<8xf32>
    %130 = vector.shape_cast %129 : vector<8xf32> to vector<8x1xf32>
    %131 = vector.broadcast %130 : vector<8x1xf32> to vector<8x8xf32>
    %132 = arith.subf %128, %131 : vector<8x8xf32>
    %133 = math.exp %132 : vector<8x8xf32>
    %cst_46 = arith.constant dense<0.000000e+00> : vector<8xf32>
    %134 = vector.multi_reduction <add>, %133, %cst_46 [1] : vector<8x8xf32> to vector<8xf32>
    %135 = vector.shape_cast %134 : vector<8xf32> to vector<8x1xf32>
    %136 = tpu.reciprocal %135 {approx = true} : vector<8x1xf32> -> vector<8x1xf32>
    %137 = vector.broadcast %136 : vector<8x1xf32> to vector<8x8xf32>
    %138 = arith.mulf %133, %137 : vector<8x8xf32>
    %139 = arith.truncf %138 : vector<8x8xf32> to vector<8x8xbf16>
    %cst_47 = arith.constant dense<0.000000e+00> : vector<8x16xf32>
    %140 = tpu.matmul %139, %123, %cst_47 {dimension_numbers = #tpu.dot_dimension_numbers<[1], [0], [0], [1], [0, 0, 1, 1], [], []>} : vector<8x8xbf16>, vector<8x16xbf16>, vector<8x16xf32> -> vector<8x16xf32>
    %141 = tpu.concatenate %71, %94, %117, %140 in 1 : vector<8x16xf32>, vector<8x16xf32>, vector<8x16xf32>, vector<8x16xf32> -> vector<8x64xf32>
    %c0_48 = arith.constant 0 : index
    %c0_49 = arith.constant 0 : index
    %c0_50 = arith.constant 0 : index
    %142 = vector.load %arg9[%c0_48, %c0_49, %c0_50] : memref<6x64x64xbf16, #tpu.memory_space<vmem>>, vector<1x64x64xbf16>
    %143 = vector.shape_cast %142 : vector<1x64x64xbf16> to vector<64x64xbf16>
    %c0_51 = arith.constant 0 : index
    %c0_52 = arith.constant 0 : index
    %c0_53 = arith.constant 0 : index
    %144 = vector.load %arg10[%c0_51, %c0_52, %c0_53] : memref<6x1x64xf32, #tpu.memory_space<vmem>>, vector<1x1x64xf32>
    %145 = vector.shape_cast %144 : vector<1x1x64xf32> to vector<1x64xf32>
    %146 = arith.truncf %141 : vector<8x64xf32> to vector<8x64xbf16>
    %cst_54 = arith.constant dense<0.000000e+00> : vector<8x64xf32>
    %147 = tpu.matmul %146, %143, %cst_54 {dimension_numbers = #tpu.dot_dimension_numbers<[1], [0], [0], [1], [0, 0, 1, 1], [], []>} : vector<8x64xbf16>, vector<64x64xbf16>, vector<8x64xf32> -> vector<8x64xf32>
    %148 = vector.broadcast %145 : vector<1x64xf32> to vector<8x64xf32>
    %149 = arith.addf %147, %148 : vector<8x64xf32>
    %150 = arith.addf %149, %36 : vector<8x64xf32>
    %c0_55 = arith.constant 0 : index
    %c0_56 = arith.constant 0 : index
    %c0_57 = arith.constant 0 : index
    %151 = vector.load %arg11[%c0_55, %c0_56, %c0_57] : memref<6x1x64xf32, #tpu.memory_space<vmem>>, vector<1x1x64xf32>
    %152 = vector.shape_cast %151 : vector<1x1x64xf32> to vector<1x64xf32>
    %c0_58 = arith.constant 0 : index
    %c0_59 = arith.constant 0 : index
    %c0_60 = arith.constant 0 : index
    %153 = vector.load %arg12[%c0_58, %c0_59, %c0_60] : memref<6x1x64xf32, #tpu.memory_space<vmem>>, vector<1x1x64xf32>
    %154 = vector.shape_cast %153 : vector<1x1x64xf32> to vector<1x64xf32>
    %cst_61 = arith.constant dense<0.000000e+00> : vector<8xf32>
    %155 = vector.multi_reduction <add>, %150, %cst_61 [1] : vector<8x64xf32> to vector<8xf32>
    %156 = vector.shape_cast %155 : vector<8xf32> to vector<8x1xf32>
    %cst_62 = arith.constant 6.400000e+01 : f32
    %157 = vector.broadcast %cst_62 : f32 to vector<8x1xf32>
    %158 = arith.divf %156, %157 : vector<8x1xf32>
    %159 = vector.broadcast %158 : vector<8x1xf32> to vector<8x64xf32>
    %160 = arith.subf %150, %159 : vector<8x64xf32>
    %161 = arith.mulf %160, %160 : vector<8x64xf32>
    %cst_63 = arith.constant dense<0.000000e+00> : vector<8xf32>
    %162 = vector.multi_reduction <add>, %161, %cst_63 [1] : vector<8x64xf32> to vector<8xf32>
    %163 = vector.shape_cast %162 : vector<8xf32> to vector<8x1xf32>
    %cst_64 = arith.constant 6.400000e+01 : f32
    %164 = vector.broadcast %cst_64 : f32 to vector<8x1xf32>
    %165 = arith.divf %163, %164 : vector<8x1xf32>
    %166 = vector.broadcast %158 : vector<8x1xf32> to vector<8x64xf32>
    %167 = arith.subf %150, %166 : vector<8x64xf32>
    %cst_65 = arith.constant 9.99999996E-13 : f32
    %168 = vector.broadcast %cst_65 : f32 to vector<8x1xf32>
    %169 = arith.addf %165, %168 : vector<8x1xf32>
    %170 = math.rsqrt %169 : vector<8x1xf32>
    %171 = vector.broadcast %170 : vector<8x1xf32> to vector<8x64xf32>
    %172 = arith.mulf %167, %171 : vector<8x64xf32>
    %173 = vector.broadcast %152 : vector<1x64xf32> to vector<8x64xf32>
    %174 = arith.mulf %172, %173 : vector<8x64xf32>
    %175 = vector.broadcast %154 : vector<1x64xf32> to vector<8x64xf32>
    %176 = arith.addf %174, %175 : vector<8x64xf32>
    %c0_66 = arith.constant 0 : index
    %c0_67 = arith.constant 0 : index
    %c0_68 = arith.constant 0 : index
    %177 = vector.load %arg13[%c0_66, %c0_67, %c0_68] : memref<6x64x128xbf16, #tpu.memory_space<vmem>>, vector<1x64x128xbf16>
    %178 = vector.shape_cast %177 : vector<1x64x128xbf16> to vector<64x128xbf16>
    %c0_69 = arith.constant 0 : index
    %c0_70 = arith.constant 0 : index
    %c0_71 = arith.constant 0 : index
    %179 = vector.load %arg14[%c0_69, %c0_70, %c0_71] : memref<6x1x128xf32, #tpu.memory_space<vmem>>, vector<1x1x128xf32>
    %180 = vector.shape_cast %179 : vector<1x1x128xf32> to vector<1x128xf32>
    %181 = arith.truncf %176 : vector<8x64xf32> to vector<8x64xbf16>
    %cst_72 = arith.constant dense<0.000000e+00> : vector<8x128xf32>
    %182 = tpu.matmul %181, %178, %cst_72 {dimension_numbers = #tpu.dot_dimension_numbers<[1], [0], [0], [1], [0, 0, 1, 1], [], []>} : vector<8x64xbf16>, vector<64x128xbf16>, vector<8x128xf32> -> vector<8x128xf32>
    %183 = vector.broadcast %180 : vector<1x128xf32> to vector<8x128xf32>
    %184 = arith.addf %182, %183 : vector<8x128xf32>
    %cst_73 = arith.constant 5.000000e-01 : f32
    %185 = vector.broadcast %cst_73 : f32 to vector<8x128xf32>
    %186 = arith.mulf %185, %184 : vector<8x128xf32>
    %cst_74 = arith.constant 0.707106769 : f32
    %187 = vector.broadcast %cst_74 : f32 to vector<8x128xf32>
    %188 = arith.mulf %184, %187 : vector<8x128xf32>
    %189 = math.erf %188 : vector<8x128xf32>
    %cst_75 = arith.constant 1.000000e+00 : f32
    %190 = vector.broadcast %cst_75 : f32 to vector<8x128xf32>
    %191 = arith.addf %190, %189 : vector<8x128xf32>
    %192 = arith.mulf %186, %191 : vector<8x128xf32>
    %c0_76 = arith.constant 0 : index
    %c0_77 = arith.constant 0 : index
    %c0_78 = arith.constant 0 : index
    %193 = vector.load %arg15[%c0_76, %c0_77, %c0_78] : memref<6x128x64xbf16, #tpu.memory_space<vmem>>, vector<1x128x64xbf16>
    %194 = vector.shape_cast %193 : vector<1x128x64xbf16> to vector<128x64xbf16>
    %c0_79 = arith.constant 0 : index
    %c0_80 = arith.constant 0 : index
    %c0_81 = arith.constant 0 : index
    %195 = vector.load %arg16[%c0_79, %c0_80, %c0_81] : memref<6x1x64xf32, #tpu.memory_space<vmem>>, vector<1x1x64xf32>
    %196 = vector.shape_cast %195 : vector<1x1x64xf32> to vector<1x64xf32>
    %197 = arith.truncf %192 : vector<8x128xf32> to vector<8x128xbf16>
    %cst_82 = arith.constant dense<0.000000e+00> : vector<8x64xf32>
    %198 = tpu.matmul %197, %194, %cst_82 {dimension_numbers = #tpu.dot_dimension_numbers<[1], [0], [0], [1], [0, 0, 1, 1], [], []>} : vector<8x128xbf16>, vector<128x64xbf16>, vector<8x64xf32> -> vector<8x64xf32>
    %199 = vector.broadcast %196 : vector<1x64xf32> to vector<8x64xf32>
    %200 = arith.addf %198, %199 : vector<8x64xf32>
    %201 = arith.addf %200, %176 : vector<8x64xf32>
    %c0_83 = arith.constant 0 : index
    %c0_84 = arith.constant 0 : index
    %c0_85 = arith.constant 0 : index
    %202 = vector.load %arg17[%c0_83, %c0_84, %c0_85] : memref<6x1x64xf32, #tpu.memory_space<vmem>>, vector<1x1x64xf32>
    %203 = vector.shape_cast %202 : vector<1x1x64xf32> to vector<1x64xf32>
    %c0_86 = arith.constant 0 : index
    %c0_87 = arith.constant 0 : index
    %c0_88 = arith.constant 0 : index
    %204 = vector.load %arg18[%c0_86, %c0_87, %c0_88] : memref<6x1x64xf32, #tpu.memory_space<vmem>>, vector<1x1x64xf32>
    %205 = vector.shape_cast %204 : vector<1x1x64xf32> to vector<1x64xf32>
    %cst_89 = arith.constant dense<0.000000e+00> : vector<8xf32>
    %206 = vector.multi_reduction <add>, %201, %cst_89 [1] : vector<8x64xf32> to vector<8xf32>
    %207 = vector.shape_cast %206 : vector<8xf32> to vector<8x1xf32>
    %cst_90 = arith.constant 6.400000e+01 : f32
    %208 = vector.broadcast %cst_90 : f32 to vector<8x1xf32>
    %209 = arith.divf %207, %208 : vector<8x1xf32>
    %210 = vector.broadcast %209 : vector<8x1xf32> to vector<8x64xf32>
    %211 = arith.subf %201, %210 : vector<8x64xf32>
    %212 = arith.mulf %211, %211 : vector<8x64xf32>
    %cst_91 = arith.constant dense<0.000000e+00> : vector<8xf32>
    %213 = vector.multi_reduction <add>, %212, %cst_91 [1] : vector<8x64xf32> to vector<8xf32>
    %214 = vector.shape_cast %213 : vector<8xf32> to vector<8x1xf32>
    %cst_92 = arith.constant 6.400000e+01 : f32
    %215 = vector.broadcast %cst_92 : f32 to vector<8x1xf32>
    %216 = arith.divf %214, %215 : vector<8x1xf32>
    %217 = vector.broadcast %209 : vector<8x1xf32> to vector<8x64xf32>
    %218 = arith.subf %201, %217 : vector<8x64xf32>
    %cst_93 = arith.constant 9.99999996E-13 : f32
    %219 = vector.broadcast %cst_93 : f32 to vector<8x1xf32>
    %220 = arith.addf %216, %219 : vector<8x1xf32>
    %221 = math.rsqrt %220 : vector<8x1xf32>
    %222 = vector.broadcast %221 : vector<8x1xf32> to vector<8x64xf32>
    %223 = arith.mulf %218, %222 : vector<8x64xf32>
    %224 = vector.broadcast %203 : vector<1x64xf32> to vector<8x64xf32>
    %225 = arith.mulf %223, %224 : vector<8x64xf32>
    %226 = vector.broadcast %205 : vector<1x64xf32> to vector<8x64xf32>
    %227 = arith.addf %225, %226 : vector<8x64xf32>
    %c0_94 = arith.constant 0 : index
    %c0_95 = arith.constant 0 : index
    %c0_96 = arith.constant 0 : index
    %228 = vector.load %arg19[%c0_94, %c0_95, %c0_96] : memref<6x1x64xf32, #tpu.memory_space<vmem>>, vector<1x1x64xf32>
    %229 = vector.shape_cast %228 : vector<1x1x64xf32> to vector<1x64xf32>
    %c0_97 = arith.constant 0 : index
    %c0_98 = arith.constant 0 : index
    %c0_99 = arith.constant 0 : index
    %230 = vector.load %arg20[%c0_97, %c0_98, %c0_99] : memref<6x1x64xf32, #tpu.memory_space<vmem>>, vector<1x1x64xf32>
    %231 = vector.shape_cast %230 : vector<1x1x64xf32> to vector<1x64xf32>
    %cst_100 = arith.constant dense<0.000000e+00> : vector<8xf32>
    %232 = vector.multi_reduction <add>, %227, %cst_100 [1] : vector<8x64xf32> to vector<8xf32>
    %233 = vector.shape_cast %232 : vector<8xf32> to vector<8x1xf32>
    %cst_101 = arith.constant 6.400000e+01 : f32
    %234 = vector.broadcast %cst_101 : f32 to vector<8x1xf32>
    %235 = arith.divf %233, %234 : vector<8x1xf32>
    %236 = vector.broadcast %235 : vector<8x1xf32> to vector<8x64xf32>
    %237 = arith.subf %227, %236 : vector<8x64xf32>
    %238 = arith.mulf %237, %237 : vector<8x64xf32>
    %cst_102 = arith.constant dense<0.000000e+00> : vector<8xf32>
    %239 = vector.multi_reduction <add>, %238, %cst_102 [1] : vector<8x64xf32> to vector<8xf32>
    %240 = vector.shape_cast %239 : vector<8xf32> to vector<8x1xf32>
    %cst_103 = arith.constant 6.400000e+01 : f32
    %241 = vector.broadcast %cst_103 : f32 to vector<8x1xf32>
    %242 = arith.divf %240, %241 : vector<8x1xf32>
    %243 = vector.broadcast %235 : vector<8x1xf32> to vector<8x64xf32>
    %244 = arith.subf %227, %243 : vector<8x64xf32>
    %cst_104 = arith.constant 9.99999974E-6 : f32
    %245 = vector.broadcast %cst_104 : f32 to vector<8x1xf32>
    %246 = arith.addf %242, %245 : vector<8x1xf32>
    %247 = math.rsqrt %246 : vector<8x1xf32>
    %248 = vector.broadcast %247 : vector<8x1xf32> to vector<8x64xf32>
    %249 = arith.mulf %244, %248 : vector<8x64xf32>
    %250 = vector.broadcast %229 : vector<1x64xf32> to vector<8x64xf32>
    %251 = arith.mulf %249, %250 : vector<8x64xf32>
    %252 = vector.broadcast %231 : vector<1x64xf32> to vector<8x64xf32>
    %253 = arith.addf %251, %252 : vector<8x64xf32>
    %c0_105 = arith.constant 0 : index
    %c0_106 = arith.constant 0 : index
    %c0_107 = arith.constant 0 : index
    %254 = vector.load %arg21[%c0_105, %c0_106, %c0_107] : memref<6x64x16xbf16, #tpu.memory_space<vmem>>, vector<1x64x16xbf16>
    %255 = vector.shape_cast %254 : vector<1x64x16xbf16> to vector<64x16xbf16>
    %c0_108 = arith.constant 0 : index
    %c0_109 = arith.constant 0 : index
    %c0_110 = arith.constant 0 : index
    %256 = vector.load %arg22[%c0_108, %c0_109, %c0_110] : memref<6x1x16xf32, #tpu.memory_space<vmem>>, vector<1x1x16xf32>
    %257 = vector.shape_cast %256 : vector<1x1x16xf32> to vector<1x16xf32>
    %258 = arith.truncf %253 : vector<8x64xf32> to vector<8x64xbf16>
    %cst_111 = arith.constant dense<0.000000e+00> : vector<8x16xf32>
    %259 = tpu.matmul %258, %255, %cst_111 {dimension_numbers = #tpu.dot_dimension_numbers<[1], [0], [0], [1], [0, 0, 1, 1], [], []>} : vector<8x64xbf16>, vector<64x16xbf16>, vector<8x16xf32> -> vector<8x16xf32>
    %260 = vector.broadcast %257 : vector<1x16xf32> to vector<8x16xf32>
    %261 = arith.addf %259, %260 : vector<8x16xf32>
    %cst_112 = arith.constant 5.000000e-01 : f32
    %262 = vector.broadcast %cst_112 : f32 to vector<8x16xf32>
    %263 = arith.mulf %262, %261 : vector<8x16xf32>
    %cst_113 = arith.constant 0.707106769 : f32
    %264 = vector.broadcast %cst_113 : f32 to vector<8x16xf32>
    %265 = arith.mulf %261, %264 : vector<8x16xf32>
    %266 = math.erf %265 : vector<8x16xf32>
    %cst_114 = arith.constant 1.000000e+00 : f32
    %267 = vector.broadcast %cst_114 : f32 to vector<8x16xf32>
    %268 = arith.addf %267, %266 : vector<8x16xf32>
    %269 = arith.mulf %263, %268 : vector<8x16xf32>
    %c0_115 = arith.constant 0 : index
    %c0_116 = arith.constant 0 : index
    %c0_117 = arith.constant 0 : index
    %270 = vector.load %arg23[%c0_115, %c0_116, %c0_117] : memref<6x16x64xbf16, #tpu.memory_space<vmem>>, vector<1x16x64xbf16>
    %271 = vector.shape_cast %270 : vector<1x16x64xbf16> to vector<16x64xbf16>
    %c0_118 = arith.constant 0 : index
    %c0_119 = arith.constant 0 : index
    %c0_120 = arith.constant 0 : index
    %272 = vector.load %arg24[%c0_118, %c0_119, %c0_120] : memref<6x1x64xf32, #tpu.memory_space<vmem>>, vector<1x1x64xf32>
    %273 = vector.shape_cast %272 : vector<1x1x64xf32> to vector<1x64xf32>
    %274 = arith.truncf %269 : vector<8x16xf32> to vector<8x16xbf16>
    %cst_121 = arith.constant dense<0.000000e+00> : vector<8x64xf32>
    %275 = tpu.matmul %274, %271, %cst_121 {dimension_numbers = #tpu.dot_dimension_numbers<[1], [0], [0], [1], [0, 0, 1, 1], [], []>} : vector<8x16xbf16>, vector<16x64xbf16>, vector<8x64xf32> -> vector<8x64xf32>
    %276 = vector.broadcast %273 : vector<1x64xf32> to vector<8x64xf32>
    %277 = arith.addf %275, %276 : vector<8x64xf32>
    %278 = arith.addf %277, %227 : vector<8x64xf32>
    %279 = arith.truncf %278 : vector<8x64xf32> to vector<8x64xbf16>
    %c1 = arith.constant 1 : index
    %c0_122 = arith.constant 0 : index
    %c0_123 = arith.constant 0 : index
    %280 = vector.load %arg7[%c1, %c0_122, %c0_123] : memref<6x64x192xbf16, #tpu.memory_space<vmem>>, vector<1x64x192xbf16>
    %281 = vector.shape_cast %280 : vector<1x64x192xbf16> to vector<64x192xbf16>
    %cst_124 = arith.constant dense<0.000000e+00> : vector<8x192xf32>
    %282 = tpu.matmul %279, %281, %cst_124 {dimension_numbers = #tpu.dot_dimension_numbers<[1], [0], [0], [1], [0, 0, 1, 1], [], []>} : vector<8x64xbf16>, vector<64x192xbf16>, vector<8x192xf32> -> vector<8x192xf32>
    %c1_125 = arith.constant 1 : index
    %c0_126 = arith.constant 0 : index
    %c0_127 = arith.constant 0 : index
    %283 = vector.load %arg8[%c1_125, %c0_126, %c0_127] : memref<6x1x192xf32, #tpu.memory_space<vmem>>, vector<1x1x192xf32>
    %284 = vector.shape_cast %283 : vector<1x1x192xf32> to vector<1x192xf32>
    %285 = vector.broadcast %284 : vector<1x192xf32> to vector<8x192xf32>
    %286 = arith.addf %282, %285 : vector<8x192xf32>
    %287 = vector.extract_strided_slice %286 {offsets = [0, 0], sizes = [8, 16], strides = [1, 1]} : vector<8x192xf32> to vector<8x16xf32>
    %288 = arith.truncf %287 : vector<8x16xf32> to vector<8x16xbf16>
    %289 = vector.extract_strided_slice %286 {offsets = [0, 64], sizes = [8, 16], strides = [1, 1]} : vector<8x192xf32> to vector<8x16xf32>
    %290 = arith.truncf %289 : vector<8x16xf32> to vector<8x16xbf16>
    %291 = vector.extract_strided_slice %286 {offsets = [0, 128], sizes = [8, 16], strides = [1, 1]} : vector<8x192xf32> to vector<8x16xf32>
    %292 = arith.truncf %291 : vector<8x16xf32> to vector<8x16xbf16>
    %cst_128 = arith.constant dense<0.000000e+00> : vector<8x8xf32>
    %293 = tpu.matmul %288, %290, %cst_128 {dimension_numbers = #tpu.dot_dimension_numbers<[1], [1], [0], [0], [0, 0, 1, 0], [], []>} : vector<8x16xbf16>, vector<8x16xbf16>, vector<8x8xf32> -> vector<8x8xf32>
    %cst_129 = arith.constant -3.40282347E+38 : f32
    %294 = vector.shape_cast %40 : vector<1x8xi1> to vector<1x8xi1>
    %295 = vector.broadcast %294 : vector<1x8xi1> to vector<8x8xi1>
    %296 = vector.broadcast %cst_129 : f32 to vector<8x8xf32>
    %297 = arith.select %295, %296, %293 : vector<8x8xi1>, vector<8x8xf32>
    %cst_130 = arith.constant dense<0xFF800000> : vector<8xf32>
    %298 = vector.multi_reduction <maximumf>, %297, %cst_130 [1] : vector<8x8xf32> to vector<8xf32>
    %299 = vector.shape_cast %298 : vector<8xf32> to vector<8x1xf32>
    %300 = vector.broadcast %299 : vector<8x1xf32> to vector<8x8xf32>
    %301 = arith.subf %297, %300 : vector<8x8xf32>
    %302 = math.exp %301 : vector<8x8xf32>
    %cst_131 = arith.constant dense<0.000000e+00> : vector<8xf32>
    %303 = vector.multi_reduction <add>, %302, %cst_131 [1] : vector<8x8xf32> to vector<8xf32>
    %304 = vector.shape_cast %303 : vector<8xf32> to vector<8x1xf32>
    %305 = tpu.reciprocal %304 {approx = true} : vector<8x1xf32> -> vector<8x1xf32>
    %306 = vector.broadcast %305 : vector<8x1xf32> to vector<8x8xf32>
    %307 = arith.mulf %302, %306 : vector<8x8xf32>
    %308 = arith.truncf %307 : vector<8x8xf32> to vector<8x8xbf16>
    %cst_132 = arith.constant dense<0.000000e+00> : vector<8x16xf32>
    %309 = tpu.matmul %308, %292, %cst_132 {dimension_numbers = #tpu.dot_dimension_numbers<[1], [0], [0], [1], [0, 0, 1, 1], [], []>} : vector<8x8xbf16>, vector<8x16xbf16>, vector<8x16xf32> -> vector<8x16xf32>
    %310 = vector.extract_strided_slice %286 {offsets = [0, 16], sizes = [8, 16], strides = [1, 1]} : vector<8x192xf32> to vector<8x16xf32>
    %311 = arith.truncf %310 : vector<8x16xf32> to vector<8x16xbf16>
    %312 = vector.extract_strided_slice %286 {offsets = [0, 80], sizes = [8, 16], strides = [1, 1]} : vector<8x192xf32> to vector<8x16xf32>
    %313 = arith.truncf %312 : vector<8x16xf32> to vector<8x16xbf16>
    %314 = vector.extract_strided_slice %286 {offsets = [0, 144], sizes = [8, 16], strides = [1, 1]} : vector<8x192xf32> to vector<8x16xf32>
    %315 = arith.truncf %314 : vector<8x16xf32> to vector<8x16xbf16>
    %cst_133 = arith.constant dense<0.000000e+00> : vector<8x8xf32>
    %316 = tpu.matmul %311, %313, %cst_133 {dimension_numbers = #tpu.dot_dimension_numbers<[1], [1], [0], [0], [0, 0, 1, 0], [], []>} : vector<8x16xbf16>, vector<8x16xbf16>, vector<8x8xf32> -> vector<8x8xf32>
    %cst_134 = arith.constant -3.40282347E+38 : f32
    %317 = vector.shape_cast %40 : vector<1x8xi1> to vector<1x8xi1>
    %318 = vector.broadcast %317 : vector<1x8xi1> to vector<8x8xi1>
    %319 = vector.broadcast %cst_134 : f32 to vector<8x8xf32>
    %320 = arith.select %318, %319, %316 : vector<8x8xi1>, vector<8x8xf32>
    %cst_135 = arith.constant dense<0xFF800000> : vector<8xf32>
    %321 = vector.multi_reduction <maximumf>, %320, %cst_135 [1] : vector<8x8xf32> to vector<8xf32>
    %322 = vector.shape_cast %321 : vector<8xf32> to vector<8x1xf32>
    %323 = vector.broadcast %322 : vector<8x1xf32> to vector<8x8xf32>
    %324 = arith.subf %320, %323 : vector<8x8xf32>
    %325 = math.exp %324 : vector<8x8xf32>
    %cst_136 = arith.constant dense<0.000000e+00> : vector<8xf32>
    %326 = vector.multi_reduction <add>, %325, %cst_136 [1] : vector<8x8xf32> to vector<8xf32>
    %327 = vector.shape_cast %326 : vector<8xf32> to vector<8x1xf32>
    %328 = tpu.reciprocal %327 {approx = true} : vector<8x1xf32> -> vector<8x1xf32>
    %329 = vector.broadcast %328 : vector<8x1xf32> to vector<8x8xf32>
    %330 = arith.mulf %325, %329 : vector<8x8xf32>
    %331 = arith.truncf %330 : vector<8x8xf32> to vector<8x8xbf16>
    %cst_137 = arith.constant dense<0.000000e+00> : vector<8x16xf32>
    %332 = tpu.matmul %331, %315, %cst_137 {dimension_numbers = #tpu.dot_dimension_numbers<[1], [0], [0], [1], [0, 0, 1, 1], [], []>} : vector<8x8xbf16>, vector<8x16xbf16>, vector<8x16xf32> -> vector<8x16xf32>
    %333 = vector.extract_strided_slice %286 {offsets = [0, 32], sizes = [8, 16], strides = [1, 1]} : vector<8x192xf32> to vector<8x16xf32>
    %334 = arith.truncf %333 : vector<8x16xf32> to vector<8x16xbf16>
    %335 = vector.extract_strided_slice %286 {offsets = [0, 96], sizes = [8, 16], strides = [1, 1]} : vector<8x192xf32> to vector<8x16xf32>
    %336 = arith.truncf %335 : vector<8x16xf32> to vector<8x16xbf16>
    %337 = vector.extract_strided_slice %286 {offsets = [0, 160], sizes = [8, 16], strides = [1, 1]} : vector<8x192xf32> to vector<8x16xf32>
    %338 = arith.truncf %337 : vector<8x16xf32> to vector<8x16xbf16>
    %cst_138 = arith.constant dense<0.000000e+00> : vector<8x8xf32>
    %339 = tpu.matmul %334, %336, %cst_138 {dimension_numbers = #tpu.dot_dimension_numbers<[1], [1], [0], [0], [0, 0, 1, 0], [], []>} : vector<8x16xbf16>, vector<8x16xbf16>, vector<8x8xf32> -> vector<8x8xf32>
    %cst_139 = arith.constant -3.40282347E+38 : f32
    %340 = vector.shape_cast %40 : vector<1x8xi1> to vector<1x8xi1>
    %341 = vector.broadcast %340 : vector<1x8xi1> to vector<8x8xi1>
    %342 = vector.broadcast %cst_139 : f32 to vector<8x8xf32>
    %343 = arith.select %341, %342, %339 : vector<8x8xi1>, vector<8x8xf32>
    %cst_140 = arith.constant dense<0xFF800000> : vector<8xf32>
    %344 = vector.multi_reduction <maximumf>, %343, %cst_140 [1] : vector<8x8xf32> to vector<8xf32>
    %345 = vector.shape_cast %344 : vector<8xf32> to vector<8x1xf32>
    %346 = vector.broadcast %345 : vector<8x1xf32> to vector<8x8xf32>
    %347 = arith.subf %343, %346 : vector<8x8xf32>
    %348 = math.exp %347 : vector<8x8xf32>
    %cst_141 = arith.constant dense<0.000000e+00> : vector<8xf32>
    %349 = vector.multi_reduction <add>, %348, %cst_141 [1] : vector<8x8xf32> to vector<8xf32>
    %350 = vector.shape_cast %349 : vector<8xf32> to vector<8x1xf32>
    %351 = tpu.reciprocal %350 {approx = true} : vector<8x1xf32> -> vector<8x1xf32>
    %352 = vector.broadcast %351 : vector<8x1xf32> to vector<8x8xf32>
    %353 = arith.mulf %348, %352 : vector<8x8xf32>
    %354 = arith.truncf %353 : vector<8x8xf32> to vector<8x8xbf16>
    %cst_142 = arith.constant dense<0.000000e+00> : vector<8x16xf32>
    %355 = tpu.matmul %354, %338, %cst_142 {dimension_numbers = #tpu.dot_dimension_numbers<[1], [0], [0], [1], [0, 0, 1, 1], [], []>} : vector<8x8xbf16>, vector<8x16xbf16>, vector<8x16xf32> -> vector<8x16xf32>
    %356 = vector.extract_strided_slice %286 {offsets = [0, 48], sizes = [8, 16], strides = [1, 1]} : vector<8x192xf32> to vector<8x16xf32>
    %357 = arith.truncf %356 : vector<8x16xf32> to vector<8x16xbf16>
    %358 = vector.extract_strided_slice %286 {offsets = [0, 112], sizes = [8, 16], strides = [1, 1]} : vector<8x192xf32> to vector<8x16xf32>
    %359 = arith.truncf %358 : vector<8x16xf32> to vector<8x16xbf16>
    %360 = vector.extract_strided_slice %286 {offsets = [0, 176], sizes = [8, 16], strides = [1, 1]} : vector<8x192xf32> to vector<8x16xf32>
    %361 = arith.truncf %360 : vector<8x16xf32> to vector<8x16xbf16>
    %cst_143 = arith.constant dense<0.000000e+00> : vector<8x8xf32>
    %362 = tpu.matmul %357, %359, %cst_143 {dimension_numbers = #tpu.dot_dimension_numbers<[1], [1], [0], [0], [0, 0, 1, 0], [], []>} : vector<8x16xbf16>, vector<8x16xbf16>, vector<8x8xf32> -> vector<8x8xf32>
    %cst_144 = arith.constant -3.40282347E+38 : f32
    %363 = vector.shape_cast %40 : vector<1x8xi1> to vector<1x8xi1>
    %364 = vector.broadcast %363 : vector<1x8xi1> to vector<8x8xi1>
    %365 = vector.broadcast %cst_144 : f32 to vector<8x8xf32>
    %366 = arith.select %364, %365, %362 : vector<8x8xi1>, vector<8x8xf32>
    %cst_145 = arith.constant dense<0xFF800000> : vector<8xf32>
    %367 = vector.multi_reduction <maximumf>, %366, %cst_145 [1] : vector<8x8xf32> to vector<8xf32>
    %368 = vector.shape_cast %367 : vector<8xf32> to vector<8x1xf32>
    %369 = vector.broadcast %368 : vector<8x1xf32> to vector<8x8xf32>
    %370 = arith.subf %366, %369 : vector<8x8xf32>
    %371 = math.exp %370 : vector<8x8xf32>
    %cst_146 = arith.constant dense<0.000000e+00> : vector<8xf32>
    %372 = vector.multi_reduction <add>, %371, %cst_146 [1] : vector<8x8xf32> to vector<8xf32>
    %373 = vector.shape_cast %372 : vector<8xf32> to vector<8x1xf32>
    %374 = tpu.reciprocal %373 {approx = true} : vector<8x1xf32> -> vector<8x1xf32>
    %375 = vector.broadcast %374 : vector<8x1xf32> to vector<8x8xf32>
    %376 = arith.mulf %371, %375 : vector<8x8xf32>
    %377 = arith.truncf %376 : vector<8x8xf32> to vector<8x8xbf16>
    %cst_147 = arith.constant dense<0.000000e+00> : vector<8x16xf32>
    %378 = tpu.matmul %377, %361, %cst_147 {dimension_numbers = #tpu.dot_dimension_numbers<[1], [0], [0], [1], [0, 0, 1, 1], [], []>} : vector<8x8xbf16>, vector<8x16xbf16>, vector<8x16xf32> -> vector<8x16xf32>
    %379 = tpu.concatenate %309, %332, %355, %378 in 1 : vector<8x16xf32>, vector<8x16xf32>, vector<8x16xf32>, vector<8x16xf32> -> vector<8x64xf32>
    %c1_148 = arith.constant 1 : index
    %c0_149 = arith.constant 0 : index
    %c0_150 = arith.constant 0 : index
    %380 = vector.load %arg9[%c1_148, %c0_149, %c0_150] : memref<6x64x64xbf16, #tpu.memory_space<vmem>>, vector<1x64x64xbf16>
    %381 = vector.shape_cast %380 : vector<1x64x64xbf16> to vector<64x64xbf16>
    %c1_151 = arith.constant 1 : index
    %c0_152 = arith.constant 0 : index
    %c0_153 = arith.constant 0 : index
    %382 = vector.load %arg10[%c1_151, %c0_152, %c0_153] : memref<6x1x64xf32, #tpu.memory_space<vmem>>, vector<1x1x64xf32>
    %383 = vector.shape_cast %382 : vector<1x1x64xf32> to vector<1x64xf32>
    %384 = arith.truncf %379 : vector<8x64xf32> to vector<8x64xbf16>
    %cst_154 = arith.constant dense<0.000000e+00> : vector<8x64xf32>
    %385 = tpu.matmul %384, %381, %cst_154 {dimension_numbers = #tpu.dot_dimension_numbers<[1], [0], [0], [1], [0, 0, 1, 1], [], []>} : vector<8x64xbf16>, vector<64x64xbf16>, vector<8x64xf32> -> vector<8x64xf32>
    %386 = vector.broadcast %383 : vector<1x64xf32> to vector<8x64xf32>
    %387 = arith.addf %385, %386 : vector<8x64xf32>
    %388 = arith.addf %387, %278 : vector<8x64xf32>
    %c1_155 = arith.constant 1 : index
    %c0_156 = arith.constant 0 : index
    %c0_157 = arith.constant 0 : index
    %389 = vector.load %arg11[%c1_155, %c0_156, %c0_157] : memref<6x1x64xf32, #tpu.memory_space<vmem>>, vector<1x1x64xf32>
    %390 = vector.shape_cast %389 : vector<1x1x64xf32> to vector<1x64xf32>
    %c1_158 = arith.constant 1 : index
    %c0_159 = arith.constant 0 : index
    %c0_160 = arith.constant 0 : index
    %391 = vector.load %arg12[%c1_158, %c0_159, %c0_160] : memref<6x1x64xf32, #tpu.memory_space<vmem>>, vector<1x1x64xf32>
    %392 = vector.shape_cast %391 : vector<1x1x64xf32> to vector<1x64xf32>
    %cst_161 = arith.constant dense<0.000000e+00> : vector<8xf32>
    %393 = vector.multi_reduction <add>, %388, %cst_161 [1] : vector<8x64xf32> to vector<8xf32>
    %394 = vector.shape_cast %393 : vector<8xf32> to vector<8x1xf32>
    %cst_162 = arith.constant 6.400000e+01 : f32
    %395 = vector.broadcast %cst_162 : f32 to vector<8x1xf32>
    %396 = arith.divf %394, %395 : vector<8x1xf32>
    %397 = vector.broadcast %396 : vector<8x1xf32> to vector<8x64xf32>
    %398 = arith.subf %388, %397 : vector<8x64xf32>
    %399 = arith.mulf %398, %398 : vector<8x64xf32>
    %cst_163 = arith.constant dense<0.000000e+00> : vector<8xf32>
    %400 = vector.multi_reduction <add>, %399, %cst_163 [1] : vector<8x64xf32> to vector<8xf32>
    %401 = vector.shape_cast %400 : vector<8xf32> to vector<8x1xf32>
    %cst_164 = arith.constant 6.400000e+01 : f32
    %402 = vector.broadcast %cst_164 : f32 to vector<8x1xf32>
    %403 = arith.divf %401, %402 : vector<8x1xf32>
    %404 = vector.broadcast %396 : vector<8x1xf32> to vector<8x64xf32>
    %405 = arith.subf %388, %404 : vector<8x64xf32>
    %cst_165 = arith.constant 9.99999996E-13 : f32
    %406 = vector.broadcast %cst_165 : f32 to vector<8x1xf32>
    %407 = arith.addf %403, %406 : vector<8x1xf32>
    %408 = math.rsqrt %407 : vector<8x1xf32>
    %409 = vector.broadcast %408 : vector<8x1xf32> to vector<8x64xf32>
    %410 = arith.mulf %405, %409 : vector<8x64xf32>
    %411 = vector.broadcast %390 : vector<1x64xf32> to vector<8x64xf32>
    %412 = arith.mulf %410, %411 : vector<8x64xf32>
    %413 = vector.broadcast %392 : vector<1x64xf32> to vector<8x64xf32>
    %414 = arith.addf %412, %413 : vector<8x64xf32>
    %c1_166 = arith.constant 1 : index
    %c0_167 = arith.constant 0 : index
    %c0_168 = arith.constant 0 : index
    %415 = vector.load %arg13[%c1_166, %c0_167, %c0_168] : memref<6x64x128xbf16, #tpu.memory_space<vmem>>, vector<1x64x128xbf16>
    %416 = vector.shape_cast %415 : vector<1x64x128xbf16> to vector<64x128xbf16>
    %c1_169 = arith.constant 1 : index
    %c0_170 = arith.constant 0 : index
    %c0_171 = arith.constant 0 : index
    %417 = vector.load %arg14[%c1_169, %c0_170, %c0_171] : memref<6x1x128xf32, #tpu.memory_space<vmem>>, vector<1x1x128xf32>
    %418 = vector.shape_cast %417 : vector<1x1x128xf32> to vector<1x128xf32>
    %419 = arith.truncf %414 : vector<8x64xf32> to vector<8x64xbf16>
    %cst_172 = arith.constant dense<0.000000e+00> : vector<8x128xf32>
    %420 = tpu.matmul %419, %416, %cst_172 {dimension_numbers = #tpu.dot_dimension_numbers<[1], [0], [0], [1], [0, 0, 1, 1], [], []>} : vector<8x64xbf16>, vector<64x128xbf16>, vector<8x128xf32> -> vector<8x128xf32>
    %421 = vector.broadcast %418 : vector<1x128xf32> to vector<8x128xf32>
    %422 = arith.addf %420, %421 : vector<8x128xf32>
    %cst_173 = arith.constant 5.000000e-01 : f32
    %423 = vector.broadcast %cst_173 : f32 to vector<8x128xf32>
    %424 = arith.mulf %423, %422 : vector<8x128xf32>
    %cst_174 = arith.constant 0.707106769 : f32
    %425 = vector.broadcast %cst_174 : f32 to vector<8x128xf32>
    %426 = arith.mulf %422, %425 : vector<8x128xf32>
    %427 = math.erf %426 : vector<8x128xf32>
    %cst_175 = arith.constant 1.000000e+00 : f32
    %428 = vector.broadcast %cst_175 : f32 to vector<8x128xf32>
    %429 = arith.addf %428, %427 : vector<8x128xf32>
    %430 = arith.mulf %424, %429 : vector<8x128xf32>
    %c1_176 = arith.constant 1 : index
    %c0_177 = arith.constant 0 : index
    %c0_178 = arith.constant 0 : index
    %431 = vector.load %arg15[%c1_176, %c0_177, %c0_178] : memref<6x128x64xbf16, #tpu.memory_space<vmem>>, vector<1x128x64xbf16>
    %432 = vector.shape_cast %431 : vector<1x128x64xbf16> to vector<128x64xbf16>
    %c1_179 = arith.constant 1 : index
    %c0_180 = arith.constant 0 : index
    %c0_181 = arith.constant 0 : index
    %433 = vector.load %arg16[%c1_179, %c0_180, %c0_181] : memref<6x1x64xf32, #tpu.memory_space<vmem>>, vector<1x1x64xf32>
    %434 = vector.shape_cast %433 : vector<1x1x64xf32> to vector<1x64xf32>
    %435 = arith.truncf %430 : vector<8x128xf32> to vector<8x128xbf16>
    %cst_182 = arith.constant dense<0.000000e+00> : vector<8x64xf32>
    %436 = tpu.matmul %435, %432, %cst_182 {dimension_numbers = #tpu.dot_dimension_numbers<[1], [0], [0], [1], [0, 0, 1, 1], [], []>} : vector<8x128xbf16>, vector<128x64xbf16>, vector<8x64xf32> -> vector<8x64xf32>
    %437 = vector.broadcast %434 : vector<1x64xf32> to vector<8x64xf32>
    %438 = arith.addf %436, %437 : vector<8x64xf32>
    %439 = arith.addf %438, %414 : vector<8x64xf32>
    %c1_183 = arith.constant 1 : index
    %c0_184 = arith.constant 0 : index
    %c0_185 = arith.constant 0 : index
    %440 = vector.load %arg17[%c1_183, %c0_184, %c0_185] : memref<6x1x64xf32, #tpu.memory_space<vmem>>, vector<1x1x64xf32>
    %441 = vector.shape_cast %440 : vector<1x1x64xf32> to vector<1x64xf32>
    %c1_186 = arith.constant 1 : index
    %c0_187 = arith.constant 0 : index
    %c0_188 = arith.constant 0 : index
    %442 = vector.load %arg18[%c1_186, %c0_187, %c0_188] : memref<6x1x64xf32, #tpu.memory_space<vmem>>, vector<1x1x64xf32>
    %443 = vector.shape_cast %442 : vector<1x1x64xf32> to vector<1x64xf32>
    %cst_189 = arith.constant dense<0.000000e+00> : vector<8xf32>
    %444 = vector.multi_reduction <add>, %439, %cst_189 [1] : vector<8x64xf32> to vector<8xf32>
    %445 = vector.shape_cast %444 : vector<8xf32> to vector<8x1xf32>
    %cst_190 = arith.constant 6.400000e+01 : f32
    %446 = vector.broadcast %cst_190 : f32 to vector<8x1xf32>
    %447 = arith.divf %445, %446 : vector<8x1xf32>
    %448 = vector.broadcast %447 : vector<8x1xf32> to vector<8x64xf32>
    %449 = arith.subf %439, %448 : vector<8x64xf32>
    %450 = arith.mulf %449, %449 : vector<8x64xf32>
    %cst_191 = arith.constant dense<0.000000e+00> : vector<8xf32>
    %451 = vector.multi_reduction <add>, %450, %cst_191 [1] : vector<8x64xf32> to vector<8xf32>
    %452 = vector.shape_cast %451 : vector<8xf32> to vector<8x1xf32>
    %cst_192 = arith.constant 6.400000e+01 : f32
    %453 = vector.broadcast %cst_192 : f32 to vector<8x1xf32>
    %454 = arith.divf %452, %453 : vector<8x1xf32>
    %455 = vector.broadcast %447 : vector<8x1xf32> to vector<8x64xf32>
    %456 = arith.subf %439, %455 : vector<8x64xf32>
    %cst_193 = arith.constant 9.99999996E-13 : f32
    %457 = vector.broadcast %cst_193 : f32 to vector<8x1xf32>
    %458 = arith.addf %454, %457 : vector<8x1xf32>
    %459 = math.rsqrt %458 : vector<8x1xf32>
    %460 = vector.broadcast %459 : vector<8x1xf32> to vector<8x64xf32>
    %461 = arith.mulf %456, %460 : vector<8x64xf32>
    %462 = vector.broadcast %441 : vector<1x64xf32> to vector<8x64xf32>
    %463 = arith.mulf %461, %462 : vector<8x64xf32>
    %464 = vector.broadcast %443 : vector<1x64xf32> to vector<8x64xf32>
    %465 = arith.addf %463, %464 : vector<8x64xf32>
    %c1_194 = arith.constant 1 : index
    %c0_195 = arith.constant 0 : index
    %c0_196 = arith.constant 0 : index
    %466 = vector.load %arg19[%c1_194, %c0_195, %c0_196] : memref<6x1x64xf32, #tpu.memory_space<vmem>>, vector<1x1x64xf32>
    %467 = vector.shape_cast %466 : vector<1x1x64xf32> to vector<1x64xf32>
    %c1_197 = arith.constant 1 : index
    %c0_198 = arith.constant 0 : index
    %c0_199 = arith.constant 0 : index
    %468 = vector.load %arg20[%c1_197, %c0_198, %c0_199] : memref<6x1x64xf32, #tpu.memory_space<vmem>>, vector<1x1x64xf32>
    %469 = vector.shape_cast %468 : vector<1x1x64xf32> to vector<1x64xf32>
    %cst_200 = arith.constant dense<0.000000e+00> : vector<8xf32>
    %470 = vector.multi_reduction <add>, %465, %cst_200 [1] : vector<8x64xf32> to vector<8xf32>
    %471 = vector.shape_cast %470 : vector<8xf32> to vector<8x1xf32>
    %cst_201 = arith.constant 6.400000e+01 : f32
    %472 = vector.broadcast %cst_201 : f32 to vector<8x1xf32>
    %473 = arith.divf %471, %472 : vector<8x1xf32>
    %474 = vector.broadcast %473 : vector<8x1xf32> to vector<8x64xf32>
    %475 = arith.subf %465, %474 : vector<8x64xf32>
    %476 = arith.mulf %475, %475 : vector<8x64xf32>
    %cst_202 = arith.constant dense<0.000000e+00> : vector<8xf32>
    %477 = vector.multi_reduction <add>, %476, %cst_202 [1] : vector<8x64xf32> to vector<8xf32>
    %478 = vector.shape_cast %477 : vector<8xf32> to vector<8x1xf32>
    %cst_203 = arith.constant 6.400000e+01 : f32
    %479 = vector.broadcast %cst_203 : f32 to vector<8x1xf32>
    %480 = arith.divf %478, %479 : vector<8x1xf32>
    %481 = vector.broadcast %473 : vector<8x1xf32> to vector<8x64xf32>
    %482 = arith.subf %465, %481 : vector<8x64xf32>
    %cst_204 = arith.constant 9.99999974E-6 : f32
    %483 = vector.broadcast %cst_204 : f32 to vector<8x1xf32>
    %484 = arith.addf %480, %483 : vector<8x1xf32>
    %485 = math.rsqrt %484 : vector<8x1xf32>
    %486 = vector.broadcast %485 : vector<8x1xf32> to vector<8x64xf32>
    %487 = arith.mulf %482, %486 : vector<8x64xf32>
    %488 = vector.broadcast %467 : vector<1x64xf32> to vector<8x64xf32>
    %489 = arith.mulf %487, %488 : vector<8x64xf32>
    %490 = vector.broadcast %469 : vector<1x64xf32> to vector<8x64xf32>
    %491 = arith.addf %489, %490 : vector<8x64xf32>
    %c1_205 = arith.constant 1 : index
    %c0_206 = arith.constant 0 : index
    %c0_207 = arith.constant 0 : index
    %492 = vector.load %arg21[%c1_205, %c0_206, %c0_207] : memref<6x64x16xbf16, #tpu.memory_space<vmem>>, vector<1x64x16xbf16>
    %493 = vector.shape_cast %492 : vector<1x64x16xbf16> to vector<64x16xbf16>
    %c1_208 = arith.constant 1 : index
    %c0_209 = arith.constant 0 : index
    %c0_210 = arith.constant 0 : index
    %494 = vector.load %arg22[%c1_208, %c0_209, %c0_210] : memref<6x1x16xf32, #tpu.memory_space<vmem>>, vector<1x1x16xf32>
    %495 = vector.shape_cast %494 : vector<1x1x16xf32> to vector<1x16xf32>
    %496 = arith.truncf %491 : vector<8x64xf32> to vector<8x64xbf16>
    %cst_211 = arith.constant dense<0.000000e+00> : vector<8x16xf32>
    %497 = tpu.matmul %496, %493, %cst_211 {dimension_numbers = #tpu.dot_dimension_numbers<[1], [0], [0], [1], [0, 0, 1, 1], [], []>} : vector<8x64xbf16>, vector<64x16xbf16>, vector<8x16xf32> -> vector<8x16xf32>
    %498 = vector.broadcast %495 : vector<1x16xf32> to vector<8x16xf32>
    %499 = arith.addf %497, %498 : vector<8x16xf32>
    %cst_212 = arith.constant 5.000000e-01 : f32
    %500 = vector.broadcast %cst_212 : f32 to vector<8x16xf32>
    %501 = arith.mulf %500, %499 : vector<8x16xf32>
    %cst_213 = arith.constant 0.707106769 : f32
    %502 = vector.broadcast %cst_213 : f32 to vector<8x16xf32>
    %503 = arith.mulf %499, %502 : vector<8x16xf32>
    %504 = math.erf %503 : vector<8x16xf32>
    %cst_214 = arith.constant 1.000000e+00 : f32
    %505 = vector.broadcast %cst_214 : f32 to vector<8x16xf32>
    %506 = arith.addf %505, %504 : vector<8x16xf32>
    %507 = arith.mulf %501, %506 : vector<8x16xf32>
    %c1_215 = arith.constant 1 : index
    %c0_216 = arith.constant 0 : index
    %c0_217 = arith.constant 0 : index
    %508 = vector.load %arg23[%c1_215, %c0_216, %c0_217] : memref<6x16x64xbf16, #tpu.memory_space<vmem>>, vector<1x16x64xbf16>
    %509 = vector.shape_cast %508 : vector<1x16x64xbf16> to vector<16x64xbf16>
    %c1_218 = arith.constant 1 : index
    %c0_219 = arith.constant 0 : index
    %c0_220 = arith.constant 0 : index
    %510 = vector.load %arg24[%c1_218, %c0_219, %c0_220] : memref<6x1x64xf32, #tpu.memory_space<vmem>>, vector<1x1x64xf32>
    %511 = vector.shape_cast %510 : vector<1x1x64xf32> to vector<1x64xf32>
    %512 = arith.truncf %507 : vector<8x16xf32> to vector<8x16xbf16>
    %cst_221 = arith.constant dense<0.000000e+00> : vector<8x64xf32>
    %513 = tpu.matmul %512, %509, %cst_221 {dimension_numbers = #tpu.dot_dimension_numbers<[1], [0], [0], [1], [0, 0, 1, 1], [], []>} : vector<8x16xbf16>, vector<16x64xbf16>, vector<8x64xf32> -> vector<8x64xf32>
    %514 = vector.broadcast %511 : vector<1x64xf32> to vector<8x64xf32>
    %515 = arith.addf %513, %514 : vector<8x64xf32>
    %516 = arith.addf %515, %465 : vector<8x64xf32>
    %517 = arith.truncf %516 : vector<8x64xf32> to vector<8x64xbf16>
    %c2 = arith.constant 2 : index
    %c0_222 = arith.constant 0 : index
    %c0_223 = arith.constant 0 : index
    %518 = vector.load %arg7[%c2, %c0_222, %c0_223] : memref<6x64x192xbf16, #tpu.memory_space<vmem>>, vector<1x64x192xbf16>
    %519 = vector.shape_cast %518 : vector<1x64x192xbf16> to vector<64x192xbf16>
    %cst_224 = arith.constant dense<0.000000e+00> : vector<8x192xf32>
    %520 = tpu.matmul %517, %519, %cst_224 {dimension_numbers = #tpu.dot_dimension_numbers<[1], [0], [0], [1], [0, 0, 1, 1], [], []>} : vector<8x64xbf16>, vector<64x192xbf16>, vector<8x192xf32> -> vector<8x192xf32>
    %c2_225 = arith.constant 2 : index
    %c0_226 = arith.constant 0 : index
    %c0_227 = arith.constant 0 : index
    %521 = vector.load %arg8[%c2_225, %c0_226, %c0_227] : memref<6x1x192xf32, #tpu.memory_space<vmem>>, vector<1x1x192xf32>
    %522 = vector.shape_cast %521 : vector<1x1x192xf32> to vector<1x192xf32>
    %523 = vector.broadcast %522 : vector<1x192xf32> to vector<8x192xf32>
    %524 = arith.addf %520, %523 : vector<8x192xf32>
    %525 = vector.extract_strided_slice %524 {offsets = [0, 0], sizes = [8, 16], strides = [1, 1]} : vector<8x192xf32> to vector<8x16xf32>
    %526 = arith.truncf %525 : vector<8x16xf32> to vector<8x16xbf16>
    %527 = vector.extract_strided_slice %524 {offsets = [0, 64], sizes = [8, 16], strides = [1, 1]} : vector<8x192xf32> to vector<8x16xf32>
    %528 = arith.truncf %527 : vector<8x16xf32> to vector<8x16xbf16>
    %529 = vector.extract_strided_slice %524 {offsets = [0, 128], sizes = [8, 16], strides = [1, 1]} : vector<8x192xf32> to vector<8x16xf32>
    %530 = arith.truncf %529 : vector<8x16xf32> to vector<8x16xbf16>
    %cst_228 = arith.constant dense<0.000000e+00> : vector<8x8xf32>
    %531 = tpu.matmul %526, %528, %cst_228 {dimension_numbers = #tpu.dot_dimension_numbers<[1], [1], [0], [0], [0, 0, 1, 0], [], []>} : vector<8x16xbf16>, vector<8x16xbf16>, vector<8x8xf32> -> vector<8x8xf32>
    %cst_229 = arith.constant -3.40282347E+38 : f32
    %532 = vector.shape_cast %40 : vector<1x8xi1> to vector<1x8xi1>
    %533 = vector.broadcast %532 : vector<1x8xi1> to vector<8x8xi1>
    %534 = vector.broadcast %cst_229 : f32 to vector<8x8xf32>
    %535 = arith.select %533, %534, %531 : vector<8x8xi1>, vector<8x8xf32>
    %cst_230 = arith.constant dense<0xFF800000> : vector<8xf32>
    %536 = vector.multi_reduction <maximumf>, %535, %cst_230 [1] : vector<8x8xf32> to vector<8xf32>
    %537 = vector.shape_cast %536 : vector<8xf32> to vector<8x1xf32>
    %538 = vector.broadcast %537 : vector<8x1xf32> to vector<8x8xf32>
    %539 = arith.subf %535, %538 : vector<8x8xf32>
    %540 = math.exp %539 : vector<8x8xf32>
    %cst_231 = arith.constant dense<0.000000e+00> : vector<8xf32>
    %541 = vector.multi_reduction <add>, %540, %cst_231 [1] : vector<8x8xf32> to vector<8xf32>
    %542 = vector.shape_cast %541 : vector<8xf32> to vector<8x1xf32>
    %543 = tpu.reciprocal %542 {approx = true} : vector<8x1xf32> -> vector<8x1xf32>
    %544 = vector.broadcast %543 : vector<8x1xf32> to vector<8x8xf32>
    %545 = arith.mulf %540, %544 : vector<8x8xf32>
    %546 = arith.truncf %545 : vector<8x8xf32> to vector<8x8xbf16>
    %cst_232 = arith.constant dense<0.000000e+00> : vector<8x16xf32>
    %547 = tpu.matmul %546, %530, %cst_232 {dimension_numbers = #tpu.dot_dimension_numbers<[1], [0], [0], [1], [0, 0, 1, 1], [], []>} : vector<8x8xbf16>, vector<8x16xbf16>, vector<8x16xf32> -> vector<8x16xf32>
    %548 = vector.extract_strided_slice %524 {offsets = [0, 16], sizes = [8, 16], strides = [1, 1]} : vector<8x192xf32> to vector<8x16xf32>
    %549 = arith.truncf %548 : vector<8x16xf32> to vector<8x16xbf16>
    %550 = vector.extract_strided_slice %524 {offsets = [0, 80], sizes = [8, 16], strides = [1, 1]} : vector<8x192xf32> to vector<8x16xf32>
    %551 = arith.truncf %550 : vector<8x16xf32> to vector<8x16xbf16>
    %552 = vector.extract_strided_slice %524 {offsets = [0, 144], sizes = [8, 16], strides = [1, 1]} : vector<8x192xf32> to vector<8x16xf32>
    %553 = arith.truncf %552 : vector<8x16xf32> to vector<8x16xbf16>
    %cst_233 = arith.constant dense<0.000000e+00> : vector<8x8xf32>
    %554 = tpu.matmul %549, %551, %cst_233 {dimension_numbers = #tpu.dot_dimension_numbers<[1], [1], [0], [0], [0, 0, 1, 0], [], []>} : vector<8x16xbf16>, vector<8x16xbf16>, vector<8x8xf32> -> vector<8x8xf32>
    %cst_234 = arith.constant -3.40282347E+38 : f32
    %555 = vector.shape_cast %40 : vector<1x8xi1> to vector<1x8xi1>
    %556 = vector.broadcast %555 : vector<1x8xi1> to vector<8x8xi1>
    %557 = vector.broadcast %cst_234 : f32 to vector<8x8xf32>
    %558 = arith.select %556, %557, %554 : vector<8x8xi1>, vector<8x8xf32>
    %cst_235 = arith.constant dense<0xFF800000> : vector<8xf32>
    %559 = vector.multi_reduction <maximumf>, %558, %cst_235 [1] : vector<8x8xf32> to vector<8xf32>
    %560 = vector.shape_cast %559 : vector<8xf32> to vector<8x1xf32>
    %561 = vector.broadcast %560 : vector<8x1xf32> to vector<8x8xf32>
    %562 = arith.subf %558, %561 : vector<8x8xf32>
    %563 = math.exp %562 : vector<8x8xf32>
    %cst_236 = arith.constant dense<0.000000e+00> : vector<8xf32>
    %564 = vector.multi_reduction <add>, %563, %cst_236 [1] : vector<8x8xf32> to vector<8xf32>
    %565 = vector.shape_cast %564 : vector<8xf32> to vector<8x1xf32>
    %566 = tpu.reciprocal %565 {approx = true} : vector<8x1xf32> -> vector<8x1xf32>
    %567 = vector.broadcast %566 : vector<8x1xf32> to vector<8x8xf32>
    %568 = arith.mulf %563, %567 : vector<8x8xf32>
    %569 = arith.truncf %568 : vector<8x8xf32> to vector<8x8xbf16>
    %cst_237 = arith.constant dense<0.000000e+00> : vector<8x16xf32>
    %570 = tpu.matmul %569, %553, %cst_237 {dimension_numbers = #tpu.dot_dimension_numbers<[1], [0], [0], [1], [0, 0, 1, 1], [], []>} : vector<8x8xbf16>, vector<8x16xbf16>, vector<8x16xf32> -> vector<8x16xf32>
    %571 = vector.extract_strided_slice %524 {offsets = [0, 32], sizes = [8, 16], strides = [1, 1]} : vector<8x192xf32> to vector<8x16xf32>
    %572 = arith.truncf %571 : vector<8x16xf32> to vector<8x16xbf16>
    %573 = vector.extract_strided_slice %524 {offsets = [0, 96], sizes = [8, 16], strides = [1, 1]} : vector<8x192xf32> to vector<8x16xf32>
    %574 = arith.truncf %573 : vector<8x16xf32> to vector<8x16xbf16>
    %575 = vector.extract_strided_slice %524 {offsets = [0, 160], sizes = [8, 16], strides = [1, 1]} : vector<8x192xf32> to vector<8x16xf32>
    %576 = arith.truncf %575 : vector<8x16xf32> to vector<8x16xbf16>
    %cst_238 = arith.constant dense<0.000000e+00> : vector<8x8xf32>
    %577 = tpu.matmul %572, %574, %cst_238 {dimension_numbers = #tpu.dot_dimension_numbers<[1], [1], [0], [0], [0, 0, 1, 0], [], []>} : vector<8x16xbf16>, vector<8x16xbf16>, vector<8x8xf32> -> vector<8x8xf32>
    %cst_239 = arith.constant -3.40282347E+38 : f32
    %578 = vector.shape_cast %40 : vector<1x8xi1> to vector<1x8xi1>
    %579 = vector.broadcast %578 : vector<1x8xi1> to vector<8x8xi1>
    %580 = vector.broadcast %cst_239 : f32 to vector<8x8xf32>
    %581 = arith.select %579, %580, %577 : vector<8x8xi1>, vector<8x8xf32>
    %cst_240 = arith.constant dense<0xFF800000> : vector<8xf32>
    %582 = vector.multi_reduction <maximumf>, %581, %cst_240 [1] : vector<8x8xf32> to vector<8xf32>
    %583 = vector.shape_cast %582 : vector<8xf32> to vector<8x1xf32>
    %584 = vector.broadcast %583 : vector<8x1xf32> to vector<8x8xf32>
    %585 = arith.subf %581, %584 : vector<8x8xf32>
    %586 = math.exp %585 : vector<8x8xf32>
    %cst_241 = arith.constant dense<0.000000e+00> : vector<8xf32>
    %587 = vector.multi_reduction <add>, %586, %cst_241 [1] : vector<8x8xf32> to vector<8xf32>
    %588 = vector.shape_cast %587 : vector<8xf32> to vector<8x1xf32>
    %589 = tpu.reciprocal %588 {approx = true} : vector<8x1xf32> -> vector<8x1xf32>
    %590 = vector.broadcast %589 : vector<8x1xf32> to vector<8x8xf32>
    %591 = arith.mulf %586, %590 : vector<8x8xf32>
    %592 = arith.truncf %591 : vector<8x8xf32> to vector<8x8xbf16>
    %cst_242 = arith.constant dense<0.000000e+00> : vector<8x16xf32>
    %593 = tpu.matmul %592, %576, %cst_242 {dimension_numbers = #tpu.dot_dimension_numbers<[1], [0], [0], [1], [0, 0, 1, 1], [], []>} : vector<8x8xbf16>, vector<8x16xbf16>, vector<8x16xf32> -> vector<8x16xf32>
    %594 = vector.extract_strided_slice %524 {offsets = [0, 48], sizes = [8, 16], strides = [1, 1]} : vector<8x192xf32> to vector<8x16xf32>
    %595 = arith.truncf %594 : vector<8x16xf32> to vector<8x16xbf16>
    %596 = vector.extract_strided_slice %524 {offsets = [0, 112], sizes = [8, 16], strides = [1, 1]} : vector<8x192xf32> to vector<8x16xf32>
    %597 = arith.truncf %596 : vector<8x16xf32> to vector<8x16xbf16>
    %598 = vector.extract_strided_slice %524 {offsets = [0, 176], sizes = [8, 16], strides = [1, 1]} : vector<8x192xf32> to vector<8x16xf32>
    %599 = arith.truncf %598 : vector<8x16xf32> to vector<8x16xbf16>
    %cst_243 = arith.constant dense<0.000000e+00> : vector<8x8xf32>
    %600 = tpu.matmul %595, %597, %cst_243 {dimension_numbers = #tpu.dot_dimension_numbers<[1], [1], [0], [0], [0, 0, 1, 0], [], []>} : vector<8x16xbf16>, vector<8x16xbf16>, vector<8x8xf32> -> vector<8x8xf32>
    %cst_244 = arith.constant -3.40282347E+38 : f32
    %601 = vector.shape_cast %40 : vector<1x8xi1> to vector<1x8xi1>
    %602 = vector.broadcast %601 : vector<1x8xi1> to vector<8x8xi1>
    %603 = vector.broadcast %cst_244 : f32 to vector<8x8xf32>
    %604 = arith.select %602, %603, %600 : vector<8x8xi1>, vector<8x8xf32>
    %cst_245 = arith.constant dense<0xFF800000> : vector<8xf32>
    %605 = vector.multi_reduction <maximumf>, %604, %cst_245 [1] : vector<8x8xf32> to vector<8xf32>
    %606 = vector.shape_cast %605 : vector<8xf32> to vector<8x1xf32>
    %607 = vector.broadcast %606 : vector<8x1xf32> to vector<8x8xf32>
    %608 = arith.subf %604, %607 : vector<8x8xf32>
    %609 = math.exp %608 : vector<8x8xf32>
    %cst_246 = arith.constant dense<0.000000e+00> : vector<8xf32>
    %610 = vector.multi_reduction <add>, %609, %cst_246 [1] : vector<8x8xf32> to vector<8xf32>
    %611 = vector.shape_cast %610 : vector<8xf32> to vector<8x1xf32>
    %612 = tpu.reciprocal %611 {approx = true} : vector<8x1xf32> -> vector<8x1xf32>
    %613 = vector.broadcast %612 : vector<8x1xf32> to vector<8x8xf32>
    %614 = arith.mulf %609, %613 : vector<8x8xf32>
    %615 = arith.truncf %614 : vector<8x8xf32> to vector<8x8xbf16>
    %cst_247 = arith.constant dense<0.000000e+00> : vector<8x16xf32>
    %616 = tpu.matmul %615, %599, %cst_247 {dimension_numbers = #tpu.dot_dimension_numbers<[1], [0], [0], [1], [0, 0, 1, 1], [], []>} : vector<8x8xbf16>, vector<8x16xbf16>, vector<8x16xf32> -> vector<8x16xf32>
    %617 = tpu.concatenate %547, %570, %593, %616 in 1 : vector<8x16xf32>, vector<8x16xf32>, vector<8x16xf32>, vector<8x16xf32> -> vector<8x64xf32>
    %c2_248 = arith.constant 2 : index
    %c0_249 = arith.constant 0 : index
    %c0_250 = arith.constant 0 : index
    %618 = vector.load %arg9[%c2_248, %c0_249, %c0_250] : memref<6x64x64xbf16, #tpu.memory_space<vmem>>, vector<1x64x64xbf16>
    %619 = vector.shape_cast %618 : vector<1x64x64xbf16> to vector<64x64xbf16>
    %c2_251 = arith.constant 2 : index
    %c0_252 = arith.constant 0 : index
    %c0_253 = arith.constant 0 : index
    %620 = vector.load %arg10[%c2_251, %c0_252, %c0_253] : memref<6x1x64xf32, #tpu.memory_space<vmem>>, vector<1x1x64xf32>
    %621 = vector.shape_cast %620 : vector<1x1x64xf32> to vector<1x64xf32>
    %622 = arith.truncf %617 : vector<8x64xf32> to vector<8x64xbf16>
    %cst_254 = arith.constant dense<0.000000e+00> : vector<8x64xf32>
    %623 = tpu.matmul %622, %619, %cst_254 {dimension_numbers = #tpu.dot_dimension_numbers<[1], [0], [0], [1], [0, 0, 1, 1], [], []>} : vector<8x64xbf16>, vector<64x64xbf16>, vector<8x64xf32> -> vector<8x64xf32>
    %624 = vector.broadcast %621 : vector<1x64xf32> to vector<8x64xf32>
    %625 = arith.addf %623, %624 : vector<8x64xf32>
    %626 = arith.addf %625, %516 : vector<8x64xf32>
    %c2_255 = arith.constant 2 : index
    %c0_256 = arith.constant 0 : index
    %c0_257 = arith.constant 0 : index
    %627 = vector.load %arg11[%c2_255, %c0_256, %c0_257] : memref<6x1x64xf32, #tpu.memory_space<vmem>>, vector<1x1x64xf32>
    %628 = vector.shape_cast %627 : vector<1x1x64xf32> to vector<1x64xf32>
    %c2_258 = arith.constant 2 : index
    %c0_259 = arith.constant 0 : index
    %c0_260 = arith.constant 0 : index
    %629 = vector.load %arg12[%c2_258, %c0_259, %c0_260] : memref<6x1x64xf32, #tpu.memory_space<vmem>>, vector<1x1x64xf32>
    %630 = vector.shape_cast %629 : vector<1x1x64xf32> to vector<1x64xf32>
    %cst_261 = arith.constant dense<0.000000e+00> : vector<8xf32>
    %631 = vector.multi_reduction <add>, %626, %cst_261 [1] : vector<8x64xf32> to vector<8xf32>
    %632 = vector.shape_cast %631 : vector<8xf32> to vector<8x1xf32>
    %cst_262 = arith.constant 6.400000e+01 : f32
    %633 = vector.broadcast %cst_262 : f32 to vector<8x1xf32>
    %634 = arith.divf %632, %633 : vector<8x1xf32>
    %635 = vector.broadcast %634 : vector<8x1xf32> to vector<8x64xf32>
    %636 = arith.subf %626, %635 : vector<8x64xf32>
    %637 = arith.mulf %636, %636 : vector<8x64xf32>
    %cst_263 = arith.constant dense<0.000000e+00> : vector<8xf32>
    %638 = vector.multi_reduction <add>, %637, %cst_263 [1] : vector<8x64xf32> to vector<8xf32>
    %639 = vector.shape_cast %638 : vector<8xf32> to vector<8x1xf32>
    %cst_264 = arith.constant 6.400000e+01 : f32
    %640 = vector.broadcast %cst_264 : f32 to vector<8x1xf32>
    %641 = arith.divf %639, %640 : vector<8x1xf32>
    %642 = vector.broadcast %634 : vector<8x1xf32> to vector<8x64xf32>
    %643 = arith.subf %626, %642 : vector<8x64xf32>
    %cst_265 = arith.constant 9.99999996E-13 : f32
    %644 = vector.broadcast %cst_265 : f32 to vector<8x1xf32>
    %645 = arith.addf %641, %644 : vector<8x1xf32>
    %646 = math.rsqrt %645 : vector<8x1xf32>
    %647 = vector.broadcast %646 : vector<8x1xf32> to vector<8x64xf32>
    %648 = arith.mulf %643, %647 : vector<8x64xf32>
    %649 = vector.broadcast %628 : vector<1x64xf32> to vector<8x64xf32>
    %650 = arith.mulf %648, %649 : vector<8x64xf32>
    %651 = vector.broadcast %630 : vector<1x64xf32> to vector<8x64xf32>
    %652 = arith.addf %650, %651 : vector<8x64xf32>
    %c2_266 = arith.constant 2 : index
    %c0_267 = arith.constant 0 : index
    %c0_268 = arith.constant 0 : index
    %653 = vector.load %arg13[%c2_266, %c0_267, %c0_268] : memref<6x64x128xbf16, #tpu.memory_space<vmem>>, vector<1x64x128xbf16>
    %654 = vector.shape_cast %653 : vector<1x64x128xbf16> to vector<64x128xbf16>
    %c2_269 = arith.constant 2 : index
    %c0_270 = arith.constant 0 : index
    %c0_271 = arith.constant 0 : index
    %655 = vector.load %arg14[%c2_269, %c0_270, %c0_271] : memref<6x1x128xf32, #tpu.memory_space<vmem>>, vector<1x1x128xf32>
    %656 = vector.shape_cast %655 : vector<1x1x128xf32> to vector<1x128xf32>
    %657 = arith.truncf %652 : vector<8x64xf32> to vector<8x64xbf16>
    %cst_272 = arith.constant dense<0.000000e+00> : vector<8x128xf32>
    %658 = tpu.matmul %657, %654, %cst_272 {dimension_numbers = #tpu.dot_dimension_numbers<[1], [0], [0], [1], [0, 0, 1, 1], [], []>} : vector<8x64xbf16>, vector<64x128xbf16>, vector<8x128xf32> -> vector<8x128xf32>
    %659 = vector.broadcast %656 : vector<1x128xf32> to vector<8x128xf32>
    %660 = arith.addf %658, %659 : vector<8x128xf32>
    %cst_273 = arith.constant 5.000000e-01 : f32
    %661 = vector.broadcast %cst_273 : f32 to vector<8x128xf32>
    %662 = arith.mulf %661, %660 : vector<8x128xf32>
    %cst_274 = arith.constant 0.707106769 : f32
    %663 = vector.broadcast %cst_274 : f32 to vector<8x128xf32>
    %664 = arith.mulf %660, %663 : vector<8x128xf32>
    %665 = math.erf %664 : vector<8x128xf32>
    %cst_275 = arith.constant 1.000000e+00 : f32
    %666 = vector.broadcast %cst_275 : f32 to vector<8x128xf32>
    %667 = arith.addf %666, %665 : vector<8x128xf32>
    %668 = arith.mulf %662, %667 : vector<8x128xf32>
    %c2_276 = arith.constant 2 : index
    %c0_277 = arith.constant 0 : index
    %c0_278 = arith.constant 0 : index
    %669 = vector.load %arg15[%c2_276, %c0_277, %c0_278] : memref<6x128x64xbf16, #tpu.memory_space<vmem>>, vector<1x128x64xbf16>
    %670 = vector.shape_cast %669 : vector<1x128x64xbf16> to vector<128x64xbf16>
    %c2_279 = arith.constant 2 : index
    %c0_280 = arith.constant 0 : index
    %c0_281 = arith.constant 0 : index
    %671 = vector.load %arg16[%c2_279, %c0_280, %c0_281] : memref<6x1x64xf32, #tpu.memory_space<vmem>>, vector<1x1x64xf32>
    %672 = vector.shape_cast %671 : vector<1x1x64xf32> to vector<1x64xf32>
    %673 = arith.truncf %668 : vector<8x128xf32> to vector<8x128xbf16>
    %cst_282 = arith.constant dense<0.000000e+00> : vector<8x64xf32>
    %674 = tpu.matmul %673, %670, %cst_282 {dimension_numbers = #tpu.dot_dimension_numbers<[1], [0], [0], [1], [0, 0, 1, 1], [], []>} : vector<8x128xbf16>, vector<128x64xbf16>, vector<8x64xf32> -> vector<8x64xf32>
    %675 = vector.broadcast %672 : vector<1x64xf32> to vector<8x64xf32>
    %676 = arith.addf %674, %675 : vector<8x64xf32>
    %677 = arith.addf %676, %652 : vector<8x64xf32>
    %c2_283 = arith.constant 2 : index
    %c0_284 = arith.constant 0 : index
    %c0_285 = arith.constant 0 : index
    %678 = vector.load %arg17[%c2_283, %c0_284, %c0_285] : memref<6x1x64xf32, #tpu.memory_space<vmem>>, vector<1x1x64xf32>
    %679 = vector.shape_cast %678 : vector<1x1x64xf32> to vector<1x64xf32>
    %c2_286 = arith.constant 2 : index
    %c0_287 = arith.constant 0 : index
    %c0_288 = arith.constant 0 : index
    %680 = vector.load %arg18[%c2_286, %c0_287, %c0_288] : memref<6x1x64xf32, #tpu.memory_space<vmem>>, vector<1x1x64xf32>
    %681 = vector.shape_cast %680 : vector<1x1x64xf32> to vector<1x64xf32>
    %cst_289 = arith.constant dense<0.000000e+00> : vector<8xf32>
    %682 = vector.multi_reduction <add>, %677, %cst_289 [1] : vector<8x64xf32> to vector<8xf32>
    %683 = vector.shape_cast %682 : vector<8xf32> to vector<8x1xf32>
    %cst_290 = arith.constant 6.400000e+01 : f32
    %684 = vector.broadcast %cst_290 : f32 to vector<8x1xf32>
    %685 = arith.divf %683, %684 : vector<8x1xf32>
    %686 = vector.broadcast %685 : vector<8x1xf32> to vector<8x64xf32>
    %687 = arith.subf %677, %686 : vector<8x64xf32>
    %688 = arith.mulf %687, %687 : vector<8x64xf32>
    %cst_291 = arith.constant dense<0.000000e+00> : vector<8xf32>
    %689 = vector.multi_reduction <add>, %688, %cst_291 [1] : vector<8x64xf32> to vector<8xf32>
    %690 = vector.shape_cast %689 : vector<8xf32> to vector<8x1xf32>
    %cst_292 = arith.constant 6.400000e+01 : f32
    %691 = vector.broadcast %cst_292 : f32 to vector<8x1xf32>
    %692 = arith.divf %690, %691 : vector<8x1xf32>
    %693 = vector.broadcast %685 : vector<8x1xf32> to vector<8x64xf32>
    %694 = arith.subf %677, %693 : vector<8x64xf32>
    %cst_293 = arith.constant 9.99999996E-13 : f32
    %695 = vector.broadcast %cst_293 : f32 to vector<8x1xf32>
    %696 = arith.addf %692, %695 : vector<8x1xf32>
    %697 = math.rsqrt %696 : vector<8x1xf32>
    %698 = vector.broadcast %697 : vector<8x1xf32> to vector<8x64xf32>
    %699 = arith.mulf %694, %698 : vector<8x64xf32>
    %700 = vector.broadcast %679 : vector<1x64xf32> to vector<8x64xf32>
    %701 = arith.mulf %699, %700 : vector<8x64xf32>
    %702 = vector.broadcast %681 : vector<1x64xf32> to vector<8x64xf32>
    %703 = arith.addf %701, %702 : vector<8x64xf32>
    %c2_294 = arith.constant 2 : index
    %c0_295 = arith.constant 0 : index
    %c0_296 = arith.constant 0 : index
    %704 = vector.load %arg19[%c2_294, %c0_295, %c0_296] : memref<6x1x64xf32, #tpu.memory_space<vmem>>, vector<1x1x64xf32>
    %705 = vector.shape_cast %704 : vector<1x1x64xf32> to vector<1x64xf32>
    %c2_297 = arith.constant 2 : index
    %c0_298 = arith.constant 0 : index
    %c0_299 = arith.constant 0 : index
    %706 = vector.load %arg20[%c2_297, %c0_298, %c0_299] : memref<6x1x64xf32, #tpu.memory_space<vmem>>, vector<1x1x64xf32>
    %707 = vector.shape_cast %706 : vector<1x1x64xf32> to vector<1x64xf32>
    %cst_300 = arith.constant dense<0.000000e+00> : vector<8xf32>
    %708 = vector.multi_reduction <add>, %703, %cst_300 [1] : vector<8x64xf32> to vector<8xf32>
    %709 = vector.shape_cast %708 : vector<8xf32> to vector<8x1xf32>
    %cst_301 = arith.constant 6.400000e+01 : f32
    %710 = vector.broadcast %cst_301 : f32 to vector<8x1xf32>
    %711 = arith.divf %709, %710 : vector<8x1xf32>
    %712 = vector.broadcast %711 : vector<8x1xf32> to vector<8x64xf32>
    %713 = arith.subf %703, %712 : vector<8x64xf32>
    %714 = arith.mulf %713, %713 : vector<8x64xf32>
    %cst_302 = arith.constant dense<0.000000e+00> : vector<8xf32>
    %715 = vector.multi_reduction <add>, %714, %cst_302 [1] : vector<8x64xf32> to vector<8xf32>
    %716 = vector.shape_cast %715 : vector<8xf32> to vector<8x1xf32>
    %cst_303 = arith.constant 6.400000e+01 : f32
    %717 = vector.broadcast %cst_303 : f32 to vector<8x1xf32>
    %718 = arith.divf %716, %717 : vector<8x1xf32>
    %719 = vector.broadcast %711 : vector<8x1xf32> to vector<8x64xf32>
    %720 = arith.subf %703, %719 : vector<8x64xf32>
    %cst_304 = arith.constant 9.99999974E-6 : f32
    %721 = vector.broadcast %cst_304 : f32 to vector<8x1xf32>
    %722 = arith.addf %718, %721 : vector<8x1xf32>
    %723 = math.rsqrt %722 : vector<8x1xf32>
    %724 = vector.broadcast %723 : vector<8x1xf32> to vector<8x64xf32>
    %725 = arith.mulf %720, %724 : vector<8x64xf32>
    %726 = vector.broadcast %705 : vector<1x64xf32> to vector<8x64xf32>
    %727 = arith.mulf %725, %726 : vector<8x64xf32>
    %728 = vector.broadcast %707 : vector<1x64xf32> to vector<8x64xf32>
    %729 = arith.addf %727, %728 : vector<8x64xf32>
    %c2_305 = arith.constant 2 : index
    %c0_306 = arith.constant 0 : index
    %c0_307 = arith.constant 0 : index
    %730 = vector.load %arg21[%c2_305, %c0_306, %c0_307] : memref<6x64x16xbf16, #tpu.memory_space<vmem>>, vector<1x64x16xbf16>
    %731 = vector.shape_cast %730 : vector<1x64x16xbf16> to vector<64x16xbf16>
    %c2_308 = arith.constant 2 : index
    %c0_309 = arith.constant 0 : index
    %c0_310 = arith.constant 0 : index
    %732 = vector.load %arg22[%c2_308, %c0_309, %c0_310] : memref<6x1x16xf32, #tpu.memory_space<vmem>>, vector<1x1x16xf32>
    %733 = vector.shape_cast %732 : vector<1x1x16xf32> to vector<1x16xf32>
    %734 = arith.truncf %729 : vector<8x64xf32> to vector<8x64xbf16>
    %cst_311 = arith.constant dense<0.000000e+00> : vector<8x16xf32>
    %735 = tpu.matmul %734, %731, %cst_311 {dimension_numbers = #tpu.dot_dimension_numbers<[1], [0], [0], [1], [0, 0, 1, 1], [], []>} : vector<8x64xbf16>, vector<64x16xbf16>, vector<8x16xf32> -> vector<8x16xf32>
    %736 = vector.broadcast %733 : vector<1x16xf32> to vector<8x16xf32>
    %737 = arith.addf %735, %736 : vector<8x16xf32>
    %cst_312 = arith.constant 5.000000e-01 : f32
    %738 = vector.broadcast %cst_312 : f32 to vector<8x16xf32>
    %739 = arith.mulf %738, %737 : vector<8x16xf32>
    %cst_313 = arith.constant 0.707106769 : f32
    %740 = vector.broadcast %cst_313 : f32 to vector<8x16xf32>
    %741 = arith.mulf %737, %740 : vector<8x16xf32>
    %742 = math.erf %741 : vector<8x16xf32>
    %cst_314 = arith.constant 1.000000e+00 : f32
    %743 = vector.broadcast %cst_314 : f32 to vector<8x16xf32>
    %744 = arith.addf %743, %742 : vector<8x16xf32>
    %745 = arith.mulf %739, %744 : vector<8x16xf32>
    %c2_315 = arith.constant 2 : index
    %c0_316 = arith.constant 0 : index
    %c0_317 = arith.constant 0 : index
    %746 = vector.load %arg23[%c2_315, %c0_316, %c0_317] : memref<6x16x64xbf16, #tpu.memory_space<vmem>>, vector<1x16x64xbf16>
    %747 = vector.shape_cast %746 : vector<1x16x64xbf16> to vector<16x64xbf16>
    %c2_318 = arith.constant 2 : index
    %c0_319 = arith.constant 0 : index
    %c0_320 = arith.constant 0 : index
    %748 = vector.load %arg24[%c2_318, %c0_319, %c0_320] : memref<6x1x64xf32, #tpu.memory_space<vmem>>, vector<1x1x64xf32>
    %749 = vector.shape_cast %748 : vector<1x1x64xf32> to vector<1x64xf32>
    %750 = arith.truncf %745 : vector<8x16xf32> to vector<8x16xbf16>
    %cst_321 = arith.constant dense<0.000000e+00> : vector<8x64xf32>
    %751 = tpu.matmul %750, %747, %cst_321 {dimension_numbers = #tpu.dot_dimension_numbers<[1], [0], [0], [1], [0, 0, 1, 1], [], []>} : vector<8x16xbf16>, vector<16x64xbf16>, vector<8x64xf32> -> vector<8x64xf32>
    %752 = vector.broadcast %749 : vector<1x64xf32> to vector<8x64xf32>
    %753 = arith.addf %751, %752 : vector<8x64xf32>
    %754 = arith.addf %753, %703 : vector<8x64xf32>
    %755 = arith.truncf %754 : vector<8x64xf32> to vector<8x64xbf16>
    %c3 = arith.constant 3 : index
    %c0_322 = arith.constant 0 : index
    %c0_323 = arith.constant 0 : index
    %756 = vector.load %arg7[%c3, %c0_322, %c0_323] : memref<6x64x192xbf16, #tpu.memory_space<vmem>>, vector<1x64x192xbf16>
    %757 = vector.shape_cast %756 : vector<1x64x192xbf16> to vector<64x192xbf16>
    %cst_324 = arith.constant dense<0.000000e+00> : vector<8x192xf32>
    %758 = tpu.matmul %755, %757, %cst_324 {dimension_numbers = #tpu.dot_dimension_numbers<[1], [0], [0], [1], [0, 0, 1, 1], [], []>} : vector<8x64xbf16>, vector<64x192xbf16>, vector<8x192xf32> -> vector<8x192xf32>
    %c3_325 = arith.constant 3 : index
    %c0_326 = arith.constant 0 : index
    %c0_327 = arith.constant 0 : index
    %759 = vector.load %arg8[%c3_325, %c0_326, %c0_327] : memref<6x1x192xf32, #tpu.memory_space<vmem>>, vector<1x1x192xf32>
    %760 = vector.shape_cast %759 : vector<1x1x192xf32> to vector<1x192xf32>
    %761 = vector.broadcast %760 : vector<1x192xf32> to vector<8x192xf32>
    %762 = arith.addf %758, %761 : vector<8x192xf32>
    %763 = vector.extract_strided_slice %762 {offsets = [0, 0], sizes = [8, 16], strides = [1, 1]} : vector<8x192xf32> to vector<8x16xf32>
    %764 = arith.truncf %763 : vector<8x16xf32> to vector<8x16xbf16>
    %765 = vector.extract_strided_slice %762 {offsets = [0, 64], sizes = [8, 16], strides = [1, 1]} : vector<8x192xf32> to vector<8x16xf32>
    %766 = arith.truncf %765 : vector<8x16xf32> to vector<8x16xbf16>
    %767 = vector.extract_strided_slice %762 {offsets = [0, 128], sizes = [8, 16], strides = [1, 1]} : vector<8x192xf32> to vector<8x16xf32>
    %768 = arith.truncf %767 : vector<8x16xf32> to vector<8x16xbf16>
    %cst_328 = arith.constant dense<0.000000e+00> : vector<8x8xf32>
    %769 = tpu.matmul %764, %766, %cst_328 {dimension_numbers = #tpu.dot_dimension_numbers<[1], [1], [0], [0], [0, 0, 1, 0], [], []>} : vector<8x16xbf16>, vector<8x16xbf16>, vector<8x8xf32> -> vector<8x8xf32>
    %cst_329 = arith.constant -3.40282347E+38 : f32
    %770 = vector.shape_cast %40 : vector<1x8xi1> to vector<1x8xi1>
    %771 = vector.broadcast %770 : vector<1x8xi1> to vector<8x8xi1>
    %772 = vector.broadcast %cst_329 : f32 to vector<8x8xf32>
    %773 = arith.select %771, %772, %769 : vector<8x8xi1>, vector<8x8xf32>
    %cst_330 = arith.constant dense<0xFF800000> : vector<8xf32>
    %774 = vector.multi_reduction <maximumf>, %773, %cst_330 [1] : vector<8x8xf32> to vector<8xf32>
    %775 = vector.shape_cast %774 : vector<8xf32> to vector<8x1xf32>
    %776 = vector.broadcast %775 : vector<8x1xf32> to vector<8x8xf32>
    %777 = arith.subf %773, %776 : vector<8x8xf32>
    %778 = math.exp %777 : vector<8x8xf32>
    %cst_331 = arith.constant dense<0.000000e+00> : vector<8xf32>
    %779 = vector.multi_reduction <add>, %778, %cst_331 [1] : vector<8x8xf32> to vector<8xf32>
    %780 = vector.shape_cast %779 : vector<8xf32> to vector<8x1xf32>
    %781 = tpu.reciprocal %780 {approx = true} : vector<8x1xf32> -> vector<8x1xf32>
    %782 = vector.broadcast %781 : vector<8x1xf32> to vector<8x8xf32>
    %783 = arith.mulf %778, %782 : vector<8x8xf32>
    %784 = arith.truncf %783 : vector<8x8xf32> to vector<8x8xbf16>
    %cst_332 = arith.constant dense<0.000000e+00> : vector<8x16xf32>
    %785 = tpu.matmul %784, %768, %cst_332 {dimension_numbers = #tpu.dot_dimension_numbers<[1], [0], [0], [1], [0, 0, 1, 1], [], []>} : vector<8x8xbf16>, vector<8x16xbf16>, vector<8x16xf32> -> vector<8x16xf32>
    %786 = vector.extract_strided_slice %762 {offsets = [0, 16], sizes = [8, 16], strides = [1, 1]} : vector<8x192xf32> to vector<8x16xf32>
    %787 = arith.truncf %786 : vector<8x16xf32> to vector<8x16xbf16>
    %788 = vector.extract_strided_slice %762 {offsets = [0, 80], sizes = [8, 16], strides = [1, 1]} : vector<8x192xf32> to vector<8x16xf32>
    %789 = arith.truncf %788 : vector<8x16xf32> to vector<8x16xbf16>
    %790 = vector.extract_strided_slice %762 {offsets = [0, 144], sizes = [8, 16], strides = [1, 1]} : vector<8x192xf32> to vector<8x16xf32>
    %791 = arith.truncf %790 : vector<8x16xf32> to vector<8x16xbf16>
    %cst_333 = arith.constant dense<0.000000e+00> : vector<8x8xf32>
    %792 = tpu.matmul %787, %789, %cst_333 {dimension_numbers = #tpu.dot_dimension_numbers<[1], [1], [0], [0], [0, 0, 1, 0], [], []>} : vector<8x16xbf16>, vector<8x16xbf16>, vector<8x8xf32> -> vector<8x8xf32>
    %cst_334 = arith.constant -3.40282347E+38 : f32
    %793 = vector.shape_cast %40 : vector<1x8xi1> to vector<1x8xi1>
    %794 = vector.broadcast %793 : vector<1x8xi1> to vector<8x8xi1>
    %795 = vector.broadcast %cst_334 : f32 to vector<8x8xf32>
    %796 = arith.select %794, %795, %792 : vector<8x8xi1>, vector<8x8xf32>
    %cst_335 = arith.constant dense<0xFF800000> : vector<8xf32>
    %797 = vector.multi_reduction <maximumf>, %796, %cst_335 [1] : vector<8x8xf32> to vector<8xf32>
    %798 = vector.shape_cast %797 : vector<8xf32> to vector<8x1xf32>
    %799 = vector.broadcast %798 : vector<8x1xf32> to vector<8x8xf32>
    %800 = arith.subf %796, %799 : vector<8x8xf32>
    %801 = math.exp %800 : vector<8x8xf32>
    %cst_336 = arith.constant dense<0.000000e+00> : vector<8xf32>
    %802 = vector.multi_reduction <add>, %801, %cst_336 [1] : vector<8x8xf32> to vector<8xf32>
    %803 = vector.shape_cast %802 : vector<8xf32> to vector<8x1xf32>
    %804 = tpu.reciprocal %803 {approx = true} : vector<8x1xf32> -> vector<8x1xf32>
    %805 = vector.broadcast %804 : vector<8x1xf32> to vector<8x8xf32>
    %806 = arith.mulf %801, %805 : vector<8x8xf32>
    %807 = arith.truncf %806 : vector<8x8xf32> to vector<8x8xbf16>
    %cst_337 = arith.constant dense<0.000000e+00> : vector<8x16xf32>
    %808 = tpu.matmul %807, %791, %cst_337 {dimension_numbers = #tpu.dot_dimension_numbers<[1], [0], [0], [1], [0, 0, 1, 1], [], []>} : vector<8x8xbf16>, vector<8x16xbf16>, vector<8x16xf32> -> vector<8x16xf32>
    %809 = vector.extract_strided_slice %762 {offsets = [0, 32], sizes = [8, 16], strides = [1, 1]} : vector<8x192xf32> to vector<8x16xf32>
    %810 = arith.truncf %809 : vector<8x16xf32> to vector<8x16xbf16>
    %811 = vector.extract_strided_slice %762 {offsets = [0, 96], sizes = [8, 16], strides = [1, 1]} : vector<8x192xf32> to vector<8x16xf32>
    %812 = arith.truncf %811 : vector<8x16xf32> to vector<8x16xbf16>
    %813 = vector.extract_strided_slice %762 {offsets = [0, 160], sizes = [8, 16], strides = [1, 1]} : vector<8x192xf32> to vector<8x16xf32>
    %814 = arith.truncf %813 : vector<8x16xf32> to vector<8x16xbf16>
    %cst_338 = arith.constant dense<0.000000e+00> : vector<8x8xf32>
    %815 = tpu.matmul %810, %812, %cst_338 {dimension_numbers = #tpu.dot_dimension_numbers<[1], [1], [0], [0], [0, 0, 1, 0], [], []>} : vector<8x16xbf16>, vector<8x16xbf16>, vector<8x8xf32> -> vector<8x8xf32>
    %cst_339 = arith.constant -3.40282347E+38 : f32
    %816 = vector.shape_cast %40 : vector<1x8xi1> to vector<1x8xi1>
    %817 = vector.broadcast %816 : vector<1x8xi1> to vector<8x8xi1>
    %818 = vector.broadcast %cst_339 : f32 to vector<8x8xf32>
    %819 = arith.select %817, %818, %815 : vector<8x8xi1>, vector<8x8xf32>
    %cst_340 = arith.constant dense<0xFF800000> : vector<8xf32>
    %820 = vector.multi_reduction <maximumf>, %819, %cst_340 [1] : vector<8x8xf32> to vector<8xf32>
    %821 = vector.shape_cast %820 : vector<8xf32> to vector<8x1xf32>
    %822 = vector.broadcast %821 : vector<8x1xf32> to vector<8x8xf32>
    %823 = arith.subf %819, %822 : vector<8x8xf32>
    %824 = math.exp %823 : vector<8x8xf32>
    %cst_341 = arith.constant dense<0.000000e+00> : vector<8xf32>
    %825 = vector.multi_reduction <add>, %824, %cst_341 [1] : vector<8x8xf32> to vector<8xf32>
    %826 = vector.shape_cast %825 : vector<8xf32> to vector<8x1xf32>
    %827 = tpu.reciprocal %826 {approx = true} : vector<8x1xf32> -> vector<8x1xf32>
    %828 = vector.broadcast %827 : vector<8x1xf32> to vector<8x8xf32>
    %829 = arith.mulf %824, %828 : vector<8x8xf32>
    %830 = arith.truncf %829 : vector<8x8xf32> to vector<8x8xbf16>
    %cst_342 = arith.constant dense<0.000000e+00> : vector<8x16xf32>
    %831 = tpu.matmul %830, %814, %cst_342 {dimension_numbers = #tpu.dot_dimension_numbers<[1], [0], [0], [1], [0, 0, 1, 1], [], []>} : vector<8x8xbf16>, vector<8x16xbf16>, vector<8x16xf32> -> vector<8x16xf32>
    %832 = vector.extract_strided_slice %762 {offsets = [0, 48], sizes = [8, 16], strides = [1, 1]} : vector<8x192xf32> to vector<8x16xf32>
    %833 = arith.truncf %832 : vector<8x16xf32> to vector<8x16xbf16>
    %834 = vector.extract_strided_slice %762 {offsets = [0, 112], sizes = [8, 16], strides = [1, 1]} : vector<8x192xf32> to vector<8x16xf32>
    %835 = arith.truncf %834 : vector<8x16xf32> to vector<8x16xbf16>
    %836 = vector.extract_strided_slice %762 {offsets = [0, 176], sizes = [8, 16], strides = [1, 1]} : vector<8x192xf32> to vector<8x16xf32>
    %837 = arith.truncf %836 : vector<8x16xf32> to vector<8x16xbf16>
    %cst_343 = arith.constant dense<0.000000e+00> : vector<8x8xf32>
    %838 = tpu.matmul %833, %835, %cst_343 {dimension_numbers = #tpu.dot_dimension_numbers<[1], [1], [0], [0], [0, 0, 1, 0], [], []>} : vector<8x16xbf16>, vector<8x16xbf16>, vector<8x8xf32> -> vector<8x8xf32>
    %cst_344 = arith.constant -3.40282347E+38 : f32
    %839 = vector.shape_cast %40 : vector<1x8xi1> to vector<1x8xi1>
    %840 = vector.broadcast %839 : vector<1x8xi1> to vector<8x8xi1>
    %841 = vector.broadcast %cst_344 : f32 to vector<8x8xf32>
    %842 = arith.select %840, %841, %838 : vector<8x8xi1>, vector<8x8xf32>
    %cst_345 = arith.constant dense<0xFF800000> : vector<8xf32>
    %843 = vector.multi_reduction <maximumf>, %842, %cst_345 [1] : vector<8x8xf32> to vector<8xf32>
    %844 = vector.shape_cast %843 : vector<8xf32> to vector<8x1xf32>
    %845 = vector.broadcast %844 : vector<8x1xf32> to vector<8x8xf32>
    %846 = arith.subf %842, %845 : vector<8x8xf32>
    %847 = math.exp %846 : vector<8x8xf32>
    %cst_346 = arith.constant dense<0.000000e+00> : vector<8xf32>
    %848 = vector.multi_reduction <add>, %847, %cst_346 [1] : vector<8x8xf32> to vector<8xf32>
    %849 = vector.shape_cast %848 : vector<8xf32> to vector<8x1xf32>
    %850 = tpu.reciprocal %849 {approx = true} : vector<8x1xf32> -> vector<8x1xf32>
    %851 = vector.broadcast %850 : vector<8x1xf32> to vector<8x8xf32>
    %852 = arith.mulf %847, %851 : vector<8x8xf32>
    %853 = arith.truncf %852 : vector<8x8xf32> to vector<8x8xbf16>
    %cst_347 = arith.constant dense<0.000000e+00> : vector<8x16xf32>
    %854 = tpu.matmul %853, %837, %cst_347 {dimension_numbers = #tpu.dot_dimension_numbers<[1], [0], [0], [1], [0, 0, 1, 1], [], []>} : vector<8x8xbf16>, vector<8x16xbf16>, vector<8x16xf32> -> vector<8x16xf32>
    %855 = tpu.concatenate %785, %808, %831, %854 in 1 : vector<8x16xf32>, vector<8x16xf32>, vector<8x16xf32>, vector<8x16xf32> -> vector<8x64xf32>
    %c3_348 = arith.constant 3 : index
    %c0_349 = arith.constant 0 : index
    %c0_350 = arith.constant 0 : index
    %856 = vector.load %arg9[%c3_348, %c0_349, %c0_350] : memref<6x64x64xbf16, #tpu.memory_space<vmem>>, vector<1x64x64xbf16>
    %857 = vector.shape_cast %856 : vector<1x64x64xbf16> to vector<64x64xbf16>
    %c3_351 = arith.constant 3 : index
    %c0_352 = arith.constant 0 : index
    %c0_353 = arith.constant 0 : index
    %858 = vector.load %arg10[%c3_351, %c0_352, %c0_353] : memref<6x1x64xf32, #tpu.memory_space<vmem>>, vector<1x1x64xf32>
    %859 = vector.shape_cast %858 : vector<1x1x64xf32> to vector<1x64xf32>
    %860 = arith.truncf %855 : vector<8x64xf32> to vector<8x64xbf16>
    %cst_354 = arith.constant dense<0.000000e+00> : vector<8x64xf32>
    %861 = tpu.matmul %860, %857, %cst_354 {dimension_numbers = #tpu.dot_dimension_numbers<[1], [0], [0], [1], [0, 0, 1, 1], [], []>} : vector<8x64xbf16>, vector<64x64xbf16>, vector<8x64xf32> -> vector<8x64xf32>
    %862 = vector.broadcast %859 : vector<1x64xf32> to vector<8x64xf32>
    %863 = arith.addf %861, %862 : vector<8x64xf32>
    %864 = arith.addf %863, %754 : vector<8x64xf32>
    %c3_355 = arith.constant 3 : index
    %c0_356 = arith.constant 0 : index
    %c0_357 = arith.constant 0 : index
    %865 = vector.load %arg11[%c3_355, %c0_356, %c0_357] : memref<6x1x64xf32, #tpu.memory_space<vmem>>, vector<1x1x64xf32>
    %866 = vector.shape_cast %865 : vector<1x1x64xf32> to vector<1x64xf32>
    %c3_358 = arith.constant 3 : index
    %c0_359 = arith.constant 0 : index
    %c0_360 = arith.constant 0 : index
    %867 = vector.load %arg12[%c3_358, %c0_359, %c0_360] : memref<6x1x64xf32, #tpu.memory_space<vmem>>, vector<1x1x64xf32>
    %868 = vector.shape_cast %867 : vector<1x1x64xf32> to vector<1x64xf32>
    %cst_361 = arith.constant dense<0.000000e+00> : vector<8xf32>
    %869 = vector.multi_reduction <add>, %864, %cst_361 [1] : vector<8x64xf32> to vector<8xf32>
    %870 = vector.shape_cast %869 : vector<8xf32> to vector<8x1xf32>
    %cst_362 = arith.constant 6.400000e+01 : f32
    %871 = vector.broadcast %cst_362 : f32 to vector<8x1xf32>
    %872 = arith.divf %870, %871 : vector<8x1xf32>
    %873 = vector.broadcast %872 : vector<8x1xf32> to vector<8x64xf32>
    %874 = arith.subf %864, %873 : vector<8x64xf32>
    %875 = arith.mulf %874, %874 : vector<8x64xf32>
    %cst_363 = arith.constant dense<0.000000e+00> : vector<8xf32>
    %876 = vector.multi_reduction <add>, %875, %cst_363 [1] : vector<8x64xf32> to vector<8xf32>
    %877 = vector.shape_cast %876 : vector<8xf32> to vector<8x1xf32>
    %cst_364 = arith.constant 6.400000e+01 : f32
    %878 = vector.broadcast %cst_364 : f32 to vector<8x1xf32>
    %879 = arith.divf %877, %878 : vector<8x1xf32>
    %880 = vector.broadcast %872 : vector<8x1xf32> to vector<8x64xf32>
    %881 = arith.subf %864, %880 : vector<8x64xf32>
    %cst_365 = arith.constant 9.99999996E-13 : f32
    %882 = vector.broadcast %cst_365 : f32 to vector<8x1xf32>
    %883 = arith.addf %879, %882 : vector<8x1xf32>
    %884 = math.rsqrt %883 : vector<8x1xf32>
    %885 = vector.broadcast %884 : vector<8x1xf32> to vector<8x64xf32>
    %886 = arith.mulf %881, %885 : vector<8x64xf32>
    %887 = vector.broadcast %866 : vector<1x64xf32> to vector<8x64xf32>
    %888 = arith.mulf %886, %887 : vector<8x64xf32>
    %889 = vector.broadcast %868 : vector<1x64xf32> to vector<8x64xf32>
    %890 = arith.addf %888, %889 : vector<8x64xf32>
    %c3_366 = arith.constant 3 : index
    %c0_367 = arith.constant 0 : index
    %c0_368 = arith.constant 0 : index
    %891 = vector.load %arg13[%c3_366, %c0_367, %c0_368] : memref<6x64x128xbf16, #tpu.memory_space<vmem>>, vector<1x64x128xbf16>
    %892 = vector.shape_cast %891 : vector<1x64x128xbf16> to vector<64x128xbf16>
    %c3_369 = arith.constant 3 : index
    %c0_370 = arith.constant 0 : index
    %c0_371 = arith.constant 0 : index
    %893 = vector.load %arg14[%c3_369, %c0_370, %c0_371] : memref<6x1x128xf32, #tpu.memory_space<vmem>>, vector<1x1x128xf32>
    %894 = vector.shape_cast %893 : vector<1x1x128xf32> to vector<1x128xf32>
    %895 = arith.truncf %890 : vector<8x64xf32> to vector<8x64xbf16>
    %cst_372 = arith.constant dense<0.000000e+00> : vector<8x128xf32>
    %896 = tpu.matmul %895, %892, %cst_372 {dimension_numbers = #tpu.dot_dimension_numbers<[1], [0], [0], [1], [0, 0, 1, 1], [], []>} : vector<8x64xbf16>, vector<64x128xbf16>, vector<8x128xf32> -> vector<8x128xf32>
    %897 = vector.broadcast %894 : vector<1x128xf32> to vector<8x128xf32>
    %898 = arith.addf %896, %897 : vector<8x128xf32>
    %cst_373 = arith.constant 5.000000e-01 : f32
    %899 = vector.broadcast %cst_373 : f32 to vector<8x128xf32>
    %900 = arith.mulf %899, %898 : vector<8x128xf32>
    %cst_374 = arith.constant 0.707106769 : f32
    %901 = vector.broadcast %cst_374 : f32 to vector<8x128xf32>
    %902 = arith.mulf %898, %901 : vector<8x128xf32>
    %903 = math.erf %902 : vector<8x128xf32>
    %cst_375 = arith.constant 1.000000e+00 : f32
    %904 = vector.broadcast %cst_375 : f32 to vector<8x128xf32>
    %905 = arith.addf %904, %903 : vector<8x128xf32>
    %906 = arith.mulf %900, %905 : vector<8x128xf32>
    %c3_376 = arith.constant 3 : index
    %c0_377 = arith.constant 0 : index
    %c0_378 = arith.constant 0 : index
    %907 = vector.load %arg15[%c3_376, %c0_377, %c0_378] : memref<6x128x64xbf16, #tpu.memory_space<vmem>>, vector<1x128x64xbf16>
    %908 = vector.shape_cast %907 : vector<1x128x64xbf16> to vector<128x64xbf16>
    %c3_379 = arith.constant 3 : index
    %c0_380 = arith.constant 0 : index
    %c0_381 = arith.constant 0 : index
    %909 = vector.load %arg16[%c3_379, %c0_380, %c0_381] : memref<6x1x64xf32, #tpu.memory_space<vmem>>, vector<1x1x64xf32>
    %910 = vector.shape_cast %909 : vector<1x1x64xf32> to vector<1x64xf32>
    %911 = arith.truncf %906 : vector<8x128xf32> to vector<8x128xbf16>
    %cst_382 = arith.constant dense<0.000000e+00> : vector<8x64xf32>
    %912 = tpu.matmul %911, %908, %cst_382 {dimension_numbers = #tpu.dot_dimension_numbers<[1], [0], [0], [1], [0, 0, 1, 1], [], []>} : vector<8x128xbf16>, vector<128x64xbf16>, vector<8x64xf32> -> vector<8x64xf32>
    %913 = vector.broadcast %910 : vector<1x64xf32> to vector<8x64xf32>
    %914 = arith.addf %912, %913 : vector<8x64xf32>
    %915 = arith.addf %914, %890 : vector<8x64xf32>
    %c3_383 = arith.constant 3 : index
    %c0_384 = arith.constant 0 : index
    %c0_385 = arith.constant 0 : index
    %916 = vector.load %arg17[%c3_383, %c0_384, %c0_385] : memref<6x1x64xf32, #tpu.memory_space<vmem>>, vector<1x1x64xf32>
    %917 = vector.shape_cast %916 : vector<1x1x64xf32> to vector<1x64xf32>
    %c3_386 = arith.constant 3 : index
    %c0_387 = arith.constant 0 : index
    %c0_388 = arith.constant 0 : index
    %918 = vector.load %arg18[%c3_386, %c0_387, %c0_388] : memref<6x1x64xf32, #tpu.memory_space<vmem>>, vector<1x1x64xf32>
    %919 = vector.shape_cast %918 : vector<1x1x64xf32> to vector<1x64xf32>
    %cst_389 = arith.constant dense<0.000000e+00> : vector<8xf32>
    %920 = vector.multi_reduction <add>, %915, %cst_389 [1] : vector<8x64xf32> to vector<8xf32>
    %921 = vector.shape_cast %920 : vector<8xf32> to vector<8x1xf32>
    %cst_390 = arith.constant 6.400000e+01 : f32
    %922 = vector.broadcast %cst_390 : f32 to vector<8x1xf32>
    %923 = arith.divf %921, %922 : vector<8x1xf32>
    %924 = vector.broadcast %923 : vector<8x1xf32> to vector<8x64xf32>
    %925 = arith.subf %915, %924 : vector<8x64xf32>
    %926 = arith.mulf %925, %925 : vector<8x64xf32>
    %cst_391 = arith.constant dense<0.000000e+00> : vector<8xf32>
    %927 = vector.multi_reduction <add>, %926, %cst_391 [1] : vector<8x64xf32> to vector<8xf32>
    %928 = vector.shape_cast %927 : vector<8xf32> to vector<8x1xf32>
    %cst_392 = arith.constant 6.400000e+01 : f32
    %929 = vector.broadcast %cst_392 : f32 to vector<8x1xf32>
    %930 = arith.divf %928, %929 : vector<8x1xf32>
    %931 = vector.broadcast %923 : vector<8x1xf32> to vector<8x64xf32>
    %932 = arith.subf %915, %931 : vector<8x64xf32>
    %cst_393 = arith.constant 9.99999996E-13 : f32
    %933 = vector.broadcast %cst_393 : f32 to vector<8x1xf32>
    %934 = arith.addf %930, %933 : vector<8x1xf32>
    %935 = math.rsqrt %934 : vector<8x1xf32>
    %936 = vector.broadcast %935 : vector<8x1xf32> to vector<8x64xf32>
    %937 = arith.mulf %932, %936 : vector<8x64xf32>
    %938 = vector.broadcast %917 : vector<1x64xf32> to vector<8x64xf32>
    %939 = arith.mulf %937, %938 : vector<8x64xf32>
    %940 = vector.broadcast %919 : vector<1x64xf32> to vector<8x64xf32>
    %941 = arith.addf %939, %940 : vector<8x64xf32>
    %c3_394 = arith.constant 3 : index
    %c0_395 = arith.constant 0 : index
    %c0_396 = arith.constant 0 : index
    %942 = vector.load %arg19[%c3_394, %c0_395, %c0_396] : memref<6x1x64xf32, #tpu.memory_space<vmem>>, vector<1x1x64xf32>
    %943 = vector.shape_cast %942 : vector<1x1x64xf32> to vector<1x64xf32>
    %c3_397 = arith.constant 3 : index
    %c0_398 = arith.constant 0 : index
    %c0_399 = arith.constant 0 : index
    %944 = vector.load %arg20[%c3_397, %c0_398, %c0_399] : memref<6x1x64xf32, #tpu.memory_space<vmem>>, vector<1x1x64xf32>
    %945 = vector.shape_cast %944 : vector<1x1x64xf32> to vector<1x64xf32>
    %cst_400 = arith.constant dense<0.000000e+00> : vector<8xf32>
    %946 = vector.multi_reduction <add>, %941, %cst_400 [1] : vector<8x64xf32> to vector<8xf32>
    %947 = vector.shape_cast %946 : vector<8xf32> to vector<8x1xf32>
    %cst_401 = arith.constant 6.400000e+01 : f32
    %948 = vector.broadcast %cst_401 : f32 to vector<8x1xf32>
    %949 = arith.divf %947, %948 : vector<8x1xf32>
    %950 = vector.broadcast %949 : vector<8x1xf32> to vector<8x64xf32>
    %951 = arith.subf %941, %950 : vector<8x64xf32>
    %952 = arith.mulf %951, %951 : vector<8x64xf32>
    %cst_402 = arith.constant dense<0.000000e+00> : vector<8xf32>
    %953 = vector.multi_reduction <add>, %952, %cst_402 [1] : vector<8x64xf32> to vector<8xf32>
    %954 = vector.shape_cast %953 : vector<8xf32> to vector<8x1xf32>
    %cst_403 = arith.constant 6.400000e+01 : f32
    %955 = vector.broadcast %cst_403 : f32 to vector<8x1xf32>
    %956 = arith.divf %954, %955 : vector<8x1xf32>
    %957 = vector.broadcast %949 : vector<8x1xf32> to vector<8x64xf32>
    %958 = arith.subf %941, %957 : vector<8x64xf32>
    %cst_404 = arith.constant 9.99999974E-6 : f32
    %959 = vector.broadcast %cst_404 : f32 to vector<8x1xf32>
    %960 = arith.addf %956, %959 : vector<8x1xf32>
    %961 = math.rsqrt %960 : vector<8x1xf32>
    %962 = vector.broadcast %961 : vector<8x1xf32> to vector<8x64xf32>
    %963 = arith.mulf %958, %962 : vector<8x64xf32>
    %964 = vector.broadcast %943 : vector<1x64xf32> to vector<8x64xf32>
    %965 = arith.mulf %963, %964 : vector<8x64xf32>
    %966 = vector.broadcast %945 : vector<1x64xf32> to vector<8x64xf32>
    %967 = arith.addf %965, %966 : vector<8x64xf32>
    %c3_405 = arith.constant 3 : index
    %c0_406 = arith.constant 0 : index
    %c0_407 = arith.constant 0 : index
    %968 = vector.load %arg21[%c3_405, %c0_406, %c0_407] : memref<6x64x16xbf16, #tpu.memory_space<vmem>>, vector<1x64x16xbf16>
    %969 = vector.shape_cast %968 : vector<1x64x16xbf16> to vector<64x16xbf16>
    %c3_408 = arith.constant 3 : index
    %c0_409 = arith.constant 0 : index
    %c0_410 = arith.constant 0 : index
    %970 = vector.load %arg22[%c3_408, %c0_409, %c0_410] : memref<6x1x16xf32, #tpu.memory_space<vmem>>, vector<1x1x16xf32>
    %971 = vector.shape_cast %970 : vector<1x1x16xf32> to vector<1x16xf32>
    %972 = arith.truncf %967 : vector<8x64xf32> to vector<8x64xbf16>
    %cst_411 = arith.constant dense<0.000000e+00> : vector<8x16xf32>
    %973 = tpu.matmul %972, %969, %cst_411 {dimension_numbers = #tpu.dot_dimension_numbers<[1], [0], [0], [1], [0, 0, 1, 1], [], []>} : vector<8x64xbf16>, vector<64x16xbf16>, vector<8x16xf32> -> vector<8x16xf32>
    %974 = vector.broadcast %971 : vector<1x16xf32> to vector<8x16xf32>
    %975 = arith.addf %973, %974 : vector<8x16xf32>
    %cst_412 = arith.constant 5.000000e-01 : f32
    %976 = vector.broadcast %cst_412 : f32 to vector<8x16xf32>
    %977 = arith.mulf %976, %975 : vector<8x16xf32>
    %cst_413 = arith.constant 0.707106769 : f32
    %978 = vector.broadcast %cst_413 : f32 to vector<8x16xf32>
    %979 = arith.mulf %975, %978 : vector<8x16xf32>
    %980 = math.erf %979 : vector<8x16xf32>
    %cst_414 = arith.constant 1.000000e+00 : f32
    %981 = vector.broadcast %cst_414 : f32 to vector<8x16xf32>
    %982 = arith.addf %981, %980 : vector<8x16xf32>
    %983 = arith.mulf %977, %982 : vector<8x16xf32>
    %c3_415 = arith.constant 3 : index
    %c0_416 = arith.constant 0 : index
    %c0_417 = arith.constant 0 : index
    %984 = vector.load %arg23[%c3_415, %c0_416, %c0_417] : memref<6x16x64xbf16, #tpu.memory_space<vmem>>, vector<1x16x64xbf16>
    %985 = vector.shape_cast %984 : vector<1x16x64xbf16> to vector<16x64xbf16>
    %c3_418 = arith.constant 3 : index
    %c0_419 = arith.constant 0 : index
    %c0_420 = arith.constant 0 : index
    %986 = vector.load %arg24[%c3_418, %c0_419, %c0_420] : memref<6x1x64xf32, #tpu.memory_space<vmem>>, vector<1x1x64xf32>
    %987 = vector.shape_cast %986 : vector<1x1x64xf32> to vector<1x64xf32>
    %988 = arith.truncf %983 : vector<8x16xf32> to vector<8x16xbf16>
    %cst_421 = arith.constant dense<0.000000e+00> : vector<8x64xf32>
    %989 = tpu.matmul %988, %985, %cst_421 {dimension_numbers = #tpu.dot_dimension_numbers<[1], [0], [0], [1], [0, 0, 1, 1], [], []>} : vector<8x16xbf16>, vector<16x64xbf16>, vector<8x64xf32> -> vector<8x64xf32>
    %990 = vector.broadcast %987 : vector<1x64xf32> to vector<8x64xf32>
    %991 = arith.addf %989, %990 : vector<8x64xf32>
    %992 = arith.addf %991, %941 : vector<8x64xf32>
    %993 = arith.truncf %992 : vector<8x64xf32> to vector<8x64xbf16>
    %c4 = arith.constant 4 : index
    %c0_422 = arith.constant 0 : index
    %c0_423 = arith.constant 0 : index
    %994 = vector.load %arg7[%c4, %c0_422, %c0_423] : memref<6x64x192xbf16, #tpu.memory_space<vmem>>, vector<1x64x192xbf16>
    %995 = vector.shape_cast %994 : vector<1x64x192xbf16> to vector<64x192xbf16>
    %cst_424 = arith.constant dense<0.000000e+00> : vector<8x192xf32>
    %996 = tpu.matmul %993, %995, %cst_424 {dimension_numbers = #tpu.dot_dimension_numbers<[1], [0], [0], [1], [0, 0, 1, 1], [], []>} : vector<8x64xbf16>, vector<64x192xbf16>, vector<8x192xf32> -> vector<8x192xf32>
    %c4_425 = arith.constant 4 : index
    %c0_426 = arith.constant 0 : index
    %c0_427 = arith.constant 0 : index
    %997 = vector.load %arg8[%c4_425, %c0_426, %c0_427] : memref<6x1x192xf32, #tpu.memory_space<vmem>>, vector<1x1x192xf32>
    %998 = vector.shape_cast %997 : vector<1x1x192xf32> to vector<1x192xf32>
    %999 = vector.broadcast %998 : vector<1x192xf32> to vector<8x192xf32>
    %1000 = arith.addf %996, %999 : vector<8x192xf32>
    %1001 = vector.extract_strided_slice %1000 {offsets = [0, 0], sizes = [8, 16], strides = [1, 1]} : vector<8x192xf32> to vector<8x16xf32>
    %1002 = arith.truncf %1001 : vector<8x16xf32> to vector<8x16xbf16>
    %1003 = vector.extract_strided_slice %1000 {offsets = [0, 64], sizes = [8, 16], strides = [1, 1]} : vector<8x192xf32> to vector<8x16xf32>
    %1004 = arith.truncf %1003 : vector<8x16xf32> to vector<8x16xbf16>
    %1005 = vector.extract_strided_slice %1000 {offsets = [0, 128], sizes = [8, 16], strides = [1, 1]} : vector<8x192xf32> to vector<8x16xf32>
    %1006 = arith.truncf %1005 : vector<8x16xf32> to vector<8x16xbf16>
    %cst_428 = arith.constant dense<0.000000e+00> : vector<8x8xf32>
    %1007 = tpu.matmul %1002, %1004, %cst_428 {dimension_numbers = #tpu.dot_dimension_numbers<[1], [1], [0], [0], [0, 0, 1, 0], [], []>} : vector<8x16xbf16>, vector<8x16xbf16>, vector<8x8xf32> -> vector<8x8xf32>
    %cst_429 = arith.constant -3.40282347E+38 : f32
    %1008 = vector.shape_cast %40 : vector<1x8xi1> to vector<1x8xi1>
    %1009 = vector.broadcast %1008 : vector<1x8xi1> to vector<8x8xi1>
    %1010 = vector.broadcast %cst_429 : f32 to vector<8x8xf32>
    %1011 = arith.select %1009, %1010, %1007 : vector<8x8xi1>, vector<8x8xf32>
    %cst_430 = arith.constant dense<0xFF800000> : vector<8xf32>
    %1012 = vector.multi_reduction <maximumf>, %1011, %cst_430 [1] : vector<8x8xf32> to vector<8xf32>
    %1013 = vector.shape_cast %1012 : vector<8xf32> to vector<8x1xf32>
    %1014 = vector.broadcast %1013 : vector<8x1xf32> to vector<8x8xf32>
    %1015 = arith.subf %1011, %1014 : vector<8x8xf32>
    %1016 = math.exp %1015 : vector<8x8xf32>
    %cst_431 = arith.constant dense<0.000000e+00> : vector<8xf32>
    %1017 = vector.multi_reduction <add>, %1016, %cst_431 [1] : vector<8x8xf32> to vector<8xf32>
    %1018 = vector.shape_cast %1017 : vector<8xf32> to vector<8x1xf32>
    %1019 = tpu.reciprocal %1018 {approx = true} : vector<8x1xf32> -> vector<8x1xf32>
    %1020 = vector.broadcast %1019 : vector<8x1xf32> to vector<8x8xf32>
    %1021 = arith.mulf %1016, %1020 : vector<8x8xf32>
    %1022 = arith.truncf %1021 : vector<8x8xf32> to vector<8x8xbf16>
    %cst_432 = arith.constant dense<0.000000e+00> : vector<8x16xf32>
    %1023 = tpu.matmul %1022, %1006, %cst_432 {dimension_numbers = #tpu.dot_dimension_numbers<[1], [0], [0], [1], [0, 0, 1, 1], [], []>} : vector<8x8xbf16>, vector<8x16xbf16>, vector<8x16xf32> -> vector<8x16xf32>
    %1024 = vector.extract_strided_slice %1000 {offsets = [0, 16], sizes = [8, 16], strides = [1, 1]} : vector<8x192xf32> to vector<8x16xf32>
    %1025 = arith.truncf %1024 : vector<8x16xf32> to vector<8x16xbf16>
    %1026 = vector.extract_strided_slice %1000 {offsets = [0, 80], sizes = [8, 16], strides = [1, 1]} : vector<8x192xf32> to vector<8x16xf32>
    %1027 = arith.truncf %1026 : vector<8x16xf32> to vector<8x16xbf16>
    %1028 = vector.extract_strided_slice %1000 {offsets = [0, 144], sizes = [8, 16], strides = [1, 1]} : vector<8x192xf32> to vector<8x16xf32>
    %1029 = arith.truncf %1028 : vector<8x16xf32> to vector<8x16xbf16>
    %cst_433 = arith.constant dense<0.000000e+00> : vector<8x8xf32>
    %1030 = tpu.matmul %1025, %1027, %cst_433 {dimension_numbers = #tpu.dot_dimension_numbers<[1], [1], [0], [0], [0, 0, 1, 0], [], []>} : vector<8x16xbf16>, vector<8x16xbf16>, vector<8x8xf32> -> vector<8x8xf32>
    %cst_434 = arith.constant -3.40282347E+38 : f32
    %1031 = vector.shape_cast %40 : vector<1x8xi1> to vector<1x8xi1>
    %1032 = vector.broadcast %1031 : vector<1x8xi1> to vector<8x8xi1>
    %1033 = vector.broadcast %cst_434 : f32 to vector<8x8xf32>
    %1034 = arith.select %1032, %1033, %1030 : vector<8x8xi1>, vector<8x8xf32>
    %cst_435 = arith.constant dense<0xFF800000> : vector<8xf32>
    %1035 = vector.multi_reduction <maximumf>, %1034, %cst_435 [1] : vector<8x8xf32> to vector<8xf32>
    %1036 = vector.shape_cast %1035 : vector<8xf32> to vector<8x1xf32>
    %1037 = vector.broadcast %1036 : vector<8x1xf32> to vector<8x8xf32>
    %1038 = arith.subf %1034, %1037 : vector<8x8xf32>
    %1039 = math.exp %1038 : vector<8x8xf32>
    %cst_436 = arith.constant dense<0.000000e+00> : vector<8xf32>
    %1040 = vector.multi_reduction <add>, %1039, %cst_436 [1] : vector<8x8xf32> to vector<8xf32>
    %1041 = vector.shape_cast %1040 : vector<8xf32> to vector<8x1xf32>
    %1042 = tpu.reciprocal %1041 {approx = true} : vector<8x1xf32> -> vector<8x1xf32>
    %1043 = vector.broadcast %1042 : vector<8x1xf32> to vector<8x8xf32>
    %1044 = arith.mulf %1039, %1043 : vector<8x8xf32>
    %1045 = arith.truncf %1044 : vector<8x8xf32> to vector<8x8xbf16>
    %cst_437 = arith.constant dense<0.000000e+00> : vector<8x16xf32>
    %1046 = tpu.matmul %1045, %1029, %cst_437 {dimension_numbers = #tpu.dot_dimension_numbers<[1], [0], [0], [1], [0, 0, 1, 1], [], []>} : vector<8x8xbf16>, vector<8x16xbf16>, vector<8x16xf32> -> vector<8x16xf32>
    %1047 = vector.extract_strided_slice %1000 {offsets = [0, 32], sizes = [8, 16], strides = [1, 1]} : vector<8x192xf32> to vector<8x16xf32>
    %1048 = arith.truncf %1047 : vector<8x16xf32> to vector<8x16xbf16>
    %1049 = vector.extract_strided_slice %1000 {offsets = [0, 96], sizes = [8, 16], strides = [1, 1]} : vector<8x192xf32> to vector<8x16xf32>
    %1050 = arith.truncf %1049 : vector<8x16xf32> to vector<8x16xbf16>
    %1051 = vector.extract_strided_slice %1000 {offsets = [0, 160], sizes = [8, 16], strides = [1, 1]} : vector<8x192xf32> to vector<8x16xf32>
    %1052 = arith.truncf %1051 : vector<8x16xf32> to vector<8x16xbf16>
    %cst_438 = arith.constant dense<0.000000e+00> : vector<8x8xf32>
    %1053 = tpu.matmul %1048, %1050, %cst_438 {dimension_numbers = #tpu.dot_dimension_numbers<[1], [1], [0], [0], [0, 0, 1, 0], [], []>} : vector<8x16xbf16>, vector<8x16xbf16>, vector<8x8xf32> -> vector<8x8xf32>
    %cst_439 = arith.constant -3.40282347E+38 : f32
    %1054 = vector.shape_cast %40 : vector<1x8xi1> to vector<1x8xi1>
    %1055 = vector.broadcast %1054 : vector<1x8xi1> to vector<8x8xi1>
    %1056 = vector.broadcast %cst_439 : f32 to vector<8x8xf32>
    %1057 = arith.select %1055, %1056, %1053 : vector<8x8xi1>, vector<8x8xf32>
    %cst_440 = arith.constant dense<0xFF800000> : vector<8xf32>
    %1058 = vector.multi_reduction <maximumf>, %1057, %cst_440 [1] : vector<8x8xf32> to vector<8xf32>
    %1059 = vector.shape_cast %1058 : vector<8xf32> to vector<8x1xf32>
    %1060 = vector.broadcast %1059 : vector<8x1xf32> to vector<8x8xf32>
    %1061 = arith.subf %1057, %1060 : vector<8x8xf32>
    %1062 = math.exp %1061 : vector<8x8xf32>
    %cst_441 = arith.constant dense<0.000000e+00> : vector<8xf32>
    %1063 = vector.multi_reduction <add>, %1062, %cst_441 [1] : vector<8x8xf32> to vector<8xf32>
    %1064 = vector.shape_cast %1063 : vector<8xf32> to vector<8x1xf32>
    %1065 = tpu.reciprocal %1064 {approx = true} : vector<8x1xf32> -> vector<8x1xf32>
    %1066 = vector.broadcast %1065 : vector<8x1xf32> to vector<8x8xf32>
    %1067 = arith.mulf %1062, %1066 : vector<8x8xf32>
    %1068 = arith.truncf %1067 : vector<8x8xf32> to vector<8x8xbf16>
    %cst_442 = arith.constant dense<0.000000e+00> : vector<8x16xf32>
    %1069 = tpu.matmul %1068, %1052, %cst_442 {dimension_numbers = #tpu.dot_dimension_numbers<[1], [0], [0], [1], [0, 0, 1, 1], [], []>} : vector<8x8xbf16>, vector<8x16xbf16>, vector<8x16xf32> -> vector<8x16xf32>
    %1070 = vector.extract_strided_slice %1000 {offsets = [0, 48], sizes = [8, 16], strides = [1, 1]} : vector<8x192xf32> to vector<8x16xf32>
    %1071 = arith.truncf %1070 : vector<8x16xf32> to vector<8x16xbf16>
    %1072 = vector.extract_strided_slice %1000 {offsets = [0, 112], sizes = [8, 16], strides = [1, 1]} : vector<8x192xf32> to vector<8x16xf32>
    %1073 = arith.truncf %1072 : vector<8x16xf32> to vector<8x16xbf16>
    %1074 = vector.extract_strided_slice %1000 {offsets = [0, 176], sizes = [8, 16], strides = [1, 1]} : vector<8x192xf32> to vector<8x16xf32>
    %1075 = arith.truncf %1074 : vector<8x16xf32> to vector<8x16xbf16>
    %cst_443 = arith.constant dense<0.000000e+00> : vector<8x8xf32>
    %1076 = tpu.matmul %1071, %1073, %cst_443 {dimension_numbers = #tpu.dot_dimension_numbers<[1], [1], [0], [0], [0, 0, 1, 0], [], []>} : vector<8x16xbf16>, vector<8x16xbf16>, vector<8x8xf32> -> vector<8x8xf32>
    %cst_444 = arith.constant -3.40282347E+38 : f32
    %1077 = vector.shape_cast %40 : vector<1x8xi1> to vector<1x8xi1>
    %1078 = vector.broadcast %1077 : vector<1x8xi1> to vector<8x8xi1>
    %1079 = vector.broadcast %cst_444 : f32 to vector<8x8xf32>
    %1080 = arith.select %1078, %1079, %1076 : vector<8x8xi1>, vector<8x8xf32>
    %cst_445 = arith.constant dense<0xFF800000> : vector<8xf32>
    %1081 = vector.multi_reduction <maximumf>, %1080, %cst_445 [1] : vector<8x8xf32> to vector<8xf32>
    %1082 = vector.shape_cast %1081 : vector<8xf32> to vector<8x1xf32>
    %1083 = vector.broadcast %1082 : vector<8x1xf32> to vector<8x8xf32>
    %1084 = arith.subf %1080, %1083 : vector<8x8xf32>
    %1085 = math.exp %1084 : vector<8x8xf32>
    %cst_446 = arith.constant dense<0.000000e+00> : vector<8xf32>
    %1086 = vector.multi_reduction <add>, %1085, %cst_446 [1] : vector<8x8xf32> to vector<8xf32>
    %1087 = vector.shape_cast %1086 : vector<8xf32> to vector<8x1xf32>
    %1088 = tpu.reciprocal %1087 {approx = true} : vector<8x1xf32> -> vector<8x1xf32>
    %1089 = vector.broadcast %1088 : vector<8x1xf32> to vector<8x8xf32>
    %1090 = arith.mulf %1085, %1089 : vector<8x8xf32>
    %1091 = arith.truncf %1090 : vector<8x8xf32> to vector<8x8xbf16>
    %cst_447 = arith.constant dense<0.000000e+00> : vector<8x16xf32>
    %1092 = tpu.matmul %1091, %1075, %cst_447 {dimension_numbers = #tpu.dot_dimension_numbers<[1], [0], [0], [1], [0, 0, 1, 1], [], []>} : vector<8x8xbf16>, vector<8x16xbf16>, vector<8x16xf32> -> vector<8x16xf32>
    %1093 = tpu.concatenate %1023, %1046, %1069, %1092 in 1 : vector<8x16xf32>, vector<8x16xf32>, vector<8x16xf32>, vector<8x16xf32> -> vector<8x64xf32>
    %c4_448 = arith.constant 4 : index
    %c0_449 = arith.constant 0 : index
    %c0_450 = arith.constant 0 : index
    %1094 = vector.load %arg9[%c4_448, %c0_449, %c0_450] : memref<6x64x64xbf16, #tpu.memory_space<vmem>>, vector<1x64x64xbf16>
    %1095 = vector.shape_cast %1094 : vector<1x64x64xbf16> to vector<64x64xbf16>
    %c4_451 = arith.constant 4 : index
    %c0_452 = arith.constant 0 : index
    %c0_453 = arith.constant 0 : index
    %1096 = vector.load %arg10[%c4_451, %c0_452, %c0_453] : memref<6x1x64xf32, #tpu.memory_space<vmem>>, vector<1x1x64xf32>
    %1097 = vector.shape_cast %1096 : vector<1x1x64xf32> to vector<1x64xf32>
    %1098 = arith.truncf %1093 : vector<8x64xf32> to vector<8x64xbf16>
    %cst_454 = arith.constant dense<0.000000e+00> : vector<8x64xf32>
    %1099 = tpu.matmul %1098, %1095, %cst_454 {dimension_numbers = #tpu.dot_dimension_numbers<[1], [0], [0], [1], [0, 0, 1, 1], [], []>} : vector<8x64xbf16>, vector<64x64xbf16>, vector<8x64xf32> -> vector<8x64xf32>
    %1100 = vector.broadcast %1097 : vector<1x64xf32> to vector<8x64xf32>
    %1101 = arith.addf %1099, %1100 : vector<8x64xf32>
    %1102 = arith.addf %1101, %992 : vector<8x64xf32>
    %c4_455 = arith.constant 4 : index
    %c0_456 = arith.constant 0 : index
    %c0_457 = arith.constant 0 : index
    %1103 = vector.load %arg11[%c4_455, %c0_456, %c0_457] : memref<6x1x64xf32, #tpu.memory_space<vmem>>, vector<1x1x64xf32>
    %1104 = vector.shape_cast %1103 : vector<1x1x64xf32> to vector<1x64xf32>
    %c4_458 = arith.constant 4 : index
    %c0_459 = arith.constant 0 : index
    %c0_460 = arith.constant 0 : index
    %1105 = vector.load %arg12[%c4_458, %c0_459, %c0_460] : memref<6x1x64xf32, #tpu.memory_space<vmem>>, vector<1x1x64xf32>
    %1106 = vector.shape_cast %1105 : vector<1x1x64xf32> to vector<1x64xf32>
    %cst_461 = arith.constant dense<0.000000e+00> : vector<8xf32>
    %1107 = vector.multi_reduction <add>, %1102, %cst_461 [1] : vector<8x64xf32> to vector<8xf32>
    %1108 = vector.shape_cast %1107 : vector<8xf32> to vector<8x1xf32>
    %cst_462 = arith.constant 6.400000e+01 : f32
    %1109 = vector.broadcast %cst_462 : f32 to vector<8x1xf32>
    %1110 = arith.divf %1108, %1109 : vector<8x1xf32>
    %1111 = vector.broadcast %1110 : vector<8x1xf32> to vector<8x64xf32>
    %1112 = arith.subf %1102, %1111 : vector<8x64xf32>
    %1113 = arith.mulf %1112, %1112 : vector<8x64xf32>
    %cst_463 = arith.constant dense<0.000000e+00> : vector<8xf32>
    %1114 = vector.multi_reduction <add>, %1113, %cst_463 [1] : vector<8x64xf32> to vector<8xf32>
    %1115 = vector.shape_cast %1114 : vector<8xf32> to vector<8x1xf32>
    %cst_464 = arith.constant 6.400000e+01 : f32
    %1116 = vector.broadcast %cst_464 : f32 to vector<8x1xf32>
    %1117 = arith.divf %1115, %1116 : vector<8x1xf32>
    %1118 = vector.broadcast %1110 : vector<8x1xf32> to vector<8x64xf32>
    %1119 = arith.subf %1102, %1118 : vector<8x64xf32>
    %cst_465 = arith.constant 9.99999996E-13 : f32
    %1120 = vector.broadcast %cst_465 : f32 to vector<8x1xf32>
    %1121 = arith.addf %1117, %1120 : vector<8x1xf32>
    %1122 = math.rsqrt %1121 : vector<8x1xf32>
    %1123 = vector.broadcast %1122 : vector<8x1xf32> to vector<8x64xf32>
    %1124 = arith.mulf %1119, %1123 : vector<8x64xf32>
    %1125 = vector.broadcast %1104 : vector<1x64xf32> to vector<8x64xf32>
    %1126 = arith.mulf %1124, %1125 : vector<8x64xf32>
    %1127 = vector.broadcast %1106 : vector<1x64xf32> to vector<8x64xf32>
    %1128 = arith.addf %1126, %1127 : vector<8x64xf32>
    %c4_466 = arith.constant 4 : index
    %c0_467 = arith.constant 0 : index
    %c0_468 = arith.constant 0 : index
    %1129 = vector.load %arg13[%c4_466, %c0_467, %c0_468] : memref<6x64x128xbf16, #tpu.memory_space<vmem>>, vector<1x64x128xbf16>
    %1130 = vector.shape_cast %1129 : vector<1x64x128xbf16> to vector<64x128xbf16>
    %c4_469 = arith.constant 4 : index
    %c0_470 = arith.constant 0 : index
    %c0_471 = arith.constant 0 : index
    %1131 = vector.load %arg14[%c4_469, %c0_470, %c0_471] : memref<6x1x128xf32, #tpu.memory_space<vmem>>, vector<1x1x128xf32>
    %1132 = vector.shape_cast %1131 : vector<1x1x128xf32> to vector<1x128xf32>
    %1133 = arith.truncf %1128 : vector<8x64xf32> to vector<8x64xbf16>
    %cst_472 = arith.constant dense<0.000000e+00> : vector<8x128xf32>
    %1134 = tpu.matmul %1133, %1130, %cst_472 {dimension_numbers = #tpu.dot_dimension_numbers<[1], [0], [0], [1], [0, 0, 1, 1], [], []>} : vector<8x64xbf16>, vector<64x128xbf16>, vector<8x128xf32> -> vector<8x128xf32>
    %1135 = vector.broadcast %1132 : vector<1x128xf32> to vector<8x128xf32>
    %1136 = arith.addf %1134, %1135 : vector<8x128xf32>
    %cst_473 = arith.constant 5.000000e-01 : f32
    %1137 = vector.broadcast %cst_473 : f32 to vector<8x128xf32>
    %1138 = arith.mulf %1137, %1136 : vector<8x128xf32>
    %cst_474 = arith.constant 0.707106769 : f32
    %1139 = vector.broadcast %cst_474 : f32 to vector<8x128xf32>
    %1140 = arith.mulf %1136, %1139 : vector<8x128xf32>
    %1141 = math.erf %1140 : vector<8x128xf32>
    %cst_475 = arith.constant 1.000000e+00 : f32
    %1142 = vector.broadcast %cst_475 : f32 to vector<8x128xf32>
    %1143 = arith.addf %1142, %1141 : vector<8x128xf32>
    %1144 = arith.mulf %1138, %1143 : vector<8x128xf32>
    %c4_476 = arith.constant 4 : index
    %c0_477 = arith.constant 0 : index
    %c0_478 = arith.constant 0 : index
    %1145 = vector.load %arg15[%c4_476, %c0_477, %c0_478] : memref<6x128x64xbf16, #tpu.memory_space<vmem>>, vector<1x128x64xbf16>
    %1146 = vector.shape_cast %1145 : vector<1x128x64xbf16> to vector<128x64xbf16>
    %c4_479 = arith.constant 4 : index
    %c0_480 = arith.constant 0 : index
    %c0_481 = arith.constant 0 : index
    %1147 = vector.load %arg16[%c4_479, %c0_480, %c0_481] : memref<6x1x64xf32, #tpu.memory_space<vmem>>, vector<1x1x64xf32>
    %1148 = vector.shape_cast %1147 : vector<1x1x64xf32> to vector<1x64xf32>
    %1149 = arith.truncf %1144 : vector<8x128xf32> to vector<8x128xbf16>
    %cst_482 = arith.constant dense<0.000000e+00> : vector<8x64xf32>
    %1150 = tpu.matmul %1149, %1146, %cst_482 {dimension_numbers = #tpu.dot_dimension_numbers<[1], [0], [0], [1], [0, 0, 1, 1], [], []>} : vector<8x128xbf16>, vector<128x64xbf16>, vector<8x64xf32> -> vector<8x64xf32>
    %1151 = vector.broadcast %1148 : vector<1x64xf32> to vector<8x64xf32>
    %1152 = arith.addf %1150, %1151 : vector<8x64xf32>
    %1153 = arith.addf %1152, %1128 : vector<8x64xf32>
    %c4_483 = arith.constant 4 : index
    %c0_484 = arith.constant 0 : index
    %c0_485 = arith.constant 0 : index
    %1154 = vector.load %arg17[%c4_483, %c0_484, %c0_485] : memref<6x1x64xf32, #tpu.memory_space<vmem>>, vector<1x1x64xf32>
    %1155 = vector.shape_cast %1154 : vector<1x1x64xf32> to vector<1x64xf32>
    %c4_486 = arith.constant 4 : index
    %c0_487 = arith.constant 0 : index
    %c0_488 = arith.constant 0 : index
    %1156 = vector.load %arg18[%c4_486, %c0_487, %c0_488] : memref<6x1x64xf32, #tpu.memory_space<vmem>>, vector<1x1x64xf32>
    %1157 = vector.shape_cast %1156 : vector<1x1x64xf32> to vector<1x64xf32>
    %cst_489 = arith.constant dense<0.000000e+00> : vector<8xf32>
    %1158 = vector.multi_reduction <add>, %1153, %cst_489 [1] : vector<8x64xf32> to vector<8xf32>
    %1159 = vector.shape_cast %1158 : vector<8xf32> to vector<8x1xf32>
    %cst_490 = arith.constant 6.400000e+01 : f32
    %1160 = vector.broadcast %cst_490 : f32 to vector<8x1xf32>
    %1161 = arith.divf %1159, %1160 : vector<8x1xf32>
    %1162 = vector.broadcast %1161 : vector<8x1xf32> to vector<8x64xf32>
    %1163 = arith.subf %1153, %1162 : vector<8x64xf32>
    %1164 = arith.mulf %1163, %1163 : vector<8x64xf32>
    %cst_491 = arith.constant dense<0.000000e+00> : vector<8xf32>
    %1165 = vector.multi_reduction <add>, %1164, %cst_491 [1] : vector<8x64xf32> to vector<8xf32>
    %1166 = vector.shape_cast %1165 : vector<8xf32> to vector<8x1xf32>
    %cst_492 = arith.constant 6.400000e+01 : f32
    %1167 = vector.broadcast %cst_492 : f32 to vector<8x1xf32>
    %1168 = arith.divf %1166, %1167 : vector<8x1xf32>
    %1169 = vector.broadcast %1161 : vector<8x1xf32> to vector<8x64xf32>
    %1170 = arith.subf %1153, %1169 : vector<8x64xf32>
    %cst_493 = arith.constant 9.99999996E-13 : f32
    %1171 = vector.broadcast %cst_493 : f32 to vector<8x1xf32>
    %1172 = arith.addf %1168, %1171 : vector<8x1xf32>
    %1173 = math.rsqrt %1172 : vector<8x1xf32>
    %1174 = vector.broadcast %1173 : vector<8x1xf32> to vector<8x64xf32>
    %1175 = arith.mulf %1170, %1174 : vector<8x64xf32>
    %1176 = vector.broadcast %1155 : vector<1x64xf32> to vector<8x64xf32>
    %1177 = arith.mulf %1175, %1176 : vector<8x64xf32>
    %1178 = vector.broadcast %1157 : vector<1x64xf32> to vector<8x64xf32>
    %1179 = arith.addf %1177, %1178 : vector<8x64xf32>
    %c4_494 = arith.constant 4 : index
    %c0_495 = arith.constant 0 : index
    %c0_496 = arith.constant 0 : index
    %1180 = vector.load %arg19[%c4_494, %c0_495, %c0_496] : memref<6x1x64xf32, #tpu.memory_space<vmem>>, vector<1x1x64xf32>
    %1181 = vector.shape_cast %1180 : vector<1x1x64xf32> to vector<1x64xf32>
    %c4_497 = arith.constant 4 : index
    %c0_498 = arith.constant 0 : index
    %c0_499 = arith.constant 0 : index
    %1182 = vector.load %arg20[%c4_497, %c0_498, %c0_499] : memref<6x1x64xf32, #tpu.memory_space<vmem>>, vector<1x1x64xf32>
    %1183 = vector.shape_cast %1182 : vector<1x1x64xf32> to vector<1x64xf32>
    %cst_500 = arith.constant dense<0.000000e+00> : vector<8xf32>
    %1184 = vector.multi_reduction <add>, %1179, %cst_500 [1] : vector<8x64xf32> to vector<8xf32>
    %1185 = vector.shape_cast %1184 : vector<8xf32> to vector<8x1xf32>
    %cst_501 = arith.constant 6.400000e+01 : f32
    %1186 = vector.broadcast %cst_501 : f32 to vector<8x1xf32>
    %1187 = arith.divf %1185, %1186 : vector<8x1xf32>
    %1188 = vector.broadcast %1187 : vector<8x1xf32> to vector<8x64xf32>
    %1189 = arith.subf %1179, %1188 : vector<8x64xf32>
    %1190 = arith.mulf %1189, %1189 : vector<8x64xf32>
    %cst_502 = arith.constant dense<0.000000e+00> : vector<8xf32>
    %1191 = vector.multi_reduction <add>, %1190, %cst_502 [1] : vector<8x64xf32> to vector<8xf32>
    %1192 = vector.shape_cast %1191 : vector<8xf32> to vector<8x1xf32>
    %cst_503 = arith.constant 6.400000e+01 : f32
    %1193 = vector.broadcast %cst_503 : f32 to vector<8x1xf32>
    %1194 = arith.divf %1192, %1193 : vector<8x1xf32>
    %1195 = vector.broadcast %1187 : vector<8x1xf32> to vector<8x64xf32>
    %1196 = arith.subf %1179, %1195 : vector<8x64xf32>
    %cst_504 = arith.constant 9.99999974E-6 : f32
    %1197 = vector.broadcast %cst_504 : f32 to vector<8x1xf32>
    %1198 = arith.addf %1194, %1197 : vector<8x1xf32>
    %1199 = math.rsqrt %1198 : vector<8x1xf32>
    %1200 = vector.broadcast %1199 : vector<8x1xf32> to vector<8x64xf32>
    %1201 = arith.mulf %1196, %1200 : vector<8x64xf32>
    %1202 = vector.broadcast %1181 : vector<1x64xf32> to vector<8x64xf32>
    %1203 = arith.mulf %1201, %1202 : vector<8x64xf32>
    %1204 = vector.broadcast %1183 : vector<1x64xf32> to vector<8x64xf32>
    %1205 = arith.addf %1203, %1204 : vector<8x64xf32>
    %c4_505 = arith.constant 4 : index
    %c0_506 = arith.constant 0 : index
    %c0_507 = arith.constant 0 : index
    %1206 = vector.load %arg21[%c4_505, %c0_506, %c0_507] : memref<6x64x16xbf16, #tpu.memory_space<vmem>>, vector<1x64x16xbf16>
    %1207 = vector.shape_cast %1206 : vector<1x64x16xbf16> to vector<64x16xbf16>
    %c4_508 = arith.constant 4 : index
    %c0_509 = arith.constant 0 : index
    %c0_510 = arith.constant 0 : index
    %1208 = vector.load %arg22[%c4_508, %c0_509, %c0_510] : memref<6x1x16xf32, #tpu.memory_space<vmem>>, vector<1x1x16xf32>
    %1209 = vector.shape_cast %1208 : vector<1x1x16xf32> to vector<1x16xf32>
    %1210 = arith.truncf %1205 : vector<8x64xf32> to vector<8x64xbf16>
    %cst_511 = arith.constant dense<0.000000e+00> : vector<8x16xf32>
    %1211 = tpu.matmul %1210, %1207, %cst_511 {dimension_numbers = #tpu.dot_dimension_numbers<[1], [0], [0], [1], [0, 0, 1, 1], [], []>} : vector<8x64xbf16>, vector<64x16xbf16>, vector<8x16xf32> -> vector<8x16xf32>
    %1212 = vector.broadcast %1209 : vector<1x16xf32> to vector<8x16xf32>
    %1213 = arith.addf %1211, %1212 : vector<8x16xf32>
    %cst_512 = arith.constant 5.000000e-01 : f32
    %1214 = vector.broadcast %cst_512 : f32 to vector<8x16xf32>
    %1215 = arith.mulf %1214, %1213 : vector<8x16xf32>
    %cst_513 = arith.constant 0.707106769 : f32
    %1216 = vector.broadcast %cst_513 : f32 to vector<8x16xf32>
    %1217 = arith.mulf %1213, %1216 : vector<8x16xf32>
    %1218 = math.erf %1217 : vector<8x16xf32>
    %cst_514 = arith.constant 1.000000e+00 : f32
    %1219 = vector.broadcast %cst_514 : f32 to vector<8x16xf32>
    %1220 = arith.addf %1219, %1218 : vector<8x16xf32>
    %1221 = arith.mulf %1215, %1220 : vector<8x16xf32>
    %c4_515 = arith.constant 4 : index
    %c0_516 = arith.constant 0 : index
    %c0_517 = arith.constant 0 : index
    %1222 = vector.load %arg23[%c4_515, %c0_516, %c0_517] : memref<6x16x64xbf16, #tpu.memory_space<vmem>>, vector<1x16x64xbf16>
    %1223 = vector.shape_cast %1222 : vector<1x16x64xbf16> to vector<16x64xbf16>
    %c4_518 = arith.constant 4 : index
    %c0_519 = arith.constant 0 : index
    %c0_520 = arith.constant 0 : index
    %1224 = vector.load %arg24[%c4_518, %c0_519, %c0_520] : memref<6x1x64xf32, #tpu.memory_space<vmem>>, vector<1x1x64xf32>
    %1225 = vector.shape_cast %1224 : vector<1x1x64xf32> to vector<1x64xf32>
    %1226 = arith.truncf %1221 : vector<8x16xf32> to vector<8x16xbf16>
    %cst_521 = arith.constant dense<0.000000e+00> : vector<8x64xf32>
    %1227 = tpu.matmul %1226, %1223, %cst_521 {dimension_numbers = #tpu.dot_dimension_numbers<[1], [0], [0], [1], [0, 0, 1, 1], [], []>} : vector<8x16xbf16>, vector<16x64xbf16>, vector<8x64xf32> -> vector<8x64xf32>
    %1228 = vector.broadcast %1225 : vector<1x64xf32> to vector<8x64xf32>
    %1229 = arith.addf %1227, %1228 : vector<8x64xf32>
    %1230 = arith.addf %1229, %1179 : vector<8x64xf32>
    %1231 = arith.truncf %1230 : vector<8x64xf32> to vector<8x64xbf16>
    %c5 = arith.constant 5 : index
    %c0_522 = arith.constant 0 : index
    %c0_523 = arith.constant 0 : index
    %1232 = vector.load %arg7[%c5, %c0_522, %c0_523] : memref<6x64x192xbf16, #tpu.memory_space<vmem>>, vector<1x64x192xbf16>
    %1233 = vector.shape_cast %1232 : vector<1x64x192xbf16> to vector<64x192xbf16>
    %cst_524 = arith.constant dense<0.000000e+00> : vector<8x192xf32>
    %1234 = tpu.matmul %1231, %1233, %cst_524 {dimension_numbers = #tpu.dot_dimension_numbers<[1], [0], [0], [1], [0, 0, 1, 1], [], []>} : vector<8x64xbf16>, vector<64x192xbf16>, vector<8x192xf32> -> vector<8x192xf32>
    %c5_525 = arith.constant 5 : index
    %c0_526 = arith.constant 0 : index
    %c0_527 = arith.constant 0 : index
    %1235 = vector.load %arg8[%c5_525, %c0_526, %c0_527] : memref<6x1x192xf32, #tpu.memory_space<vmem>>, vector<1x1x192xf32>
    %1236 = vector.shape_cast %1235 : vector<1x1x192xf32> to vector<1x192xf32>
    %1237 = vector.broadcast %1236 : vector<1x192xf32> to vector<8x192xf32>
    %1238 = arith.addf %1234, %1237 : vector<8x192xf32>
    %1239 = vector.extract_strided_slice %1238 {offsets = [0, 0], sizes = [8, 16], strides = [1, 1]} : vector<8x192xf32> to vector<8x16xf32>
    %1240 = arith.truncf %1239 : vector<8x16xf32> to vector<8x16xbf16>
    %1241 = vector.extract_strided_slice %1238 {offsets = [0, 64], sizes = [8, 16], strides = [1, 1]} : vector<8x192xf32> to vector<8x16xf32>
    %1242 = arith.truncf %1241 : vector<8x16xf32> to vector<8x16xbf16>
    %1243 = vector.extract_strided_slice %1238 {offsets = [0, 128], sizes = [8, 16], strides = [1, 1]} : vector<8x192xf32> to vector<8x16xf32>
    %1244 = arith.truncf %1243 : vector<8x16xf32> to vector<8x16xbf16>
    %cst_528 = arith.constant dense<0.000000e+00> : vector<8x8xf32>
    %1245 = tpu.matmul %1240, %1242, %cst_528 {dimension_numbers = #tpu.dot_dimension_numbers<[1], [1], [0], [0], [0, 0, 1, 0], [], []>} : vector<8x16xbf16>, vector<8x16xbf16>, vector<8x8xf32> -> vector<8x8xf32>
    %cst_529 = arith.constant -3.40282347E+38 : f32
    %1246 = vector.shape_cast %40 : vector<1x8xi1> to vector<1x8xi1>
    %1247 = vector.broadcast %1246 : vector<1x8xi1> to vector<8x8xi1>
    %1248 = vector.broadcast %cst_529 : f32 to vector<8x8xf32>
    %1249 = arith.select %1247, %1248, %1245 : vector<8x8xi1>, vector<8x8xf32>
    %cst_530 = arith.constant dense<0xFF800000> : vector<8xf32>
    %1250 = vector.multi_reduction <maximumf>, %1249, %cst_530 [1] : vector<8x8xf32> to vector<8xf32>
    %1251 = vector.shape_cast %1250 : vector<8xf32> to vector<8x1xf32>
    %1252 = vector.broadcast %1251 : vector<8x1xf32> to vector<8x8xf32>
    %1253 = arith.subf %1249, %1252 : vector<8x8xf32>
    %1254 = math.exp %1253 : vector<8x8xf32>
    %cst_531 = arith.constant dense<0.000000e+00> : vector<8xf32>
    %1255 = vector.multi_reduction <add>, %1254, %cst_531 [1] : vector<8x8xf32> to vector<8xf32>
    %1256 = vector.shape_cast %1255 : vector<8xf32> to vector<8x1xf32>
    %1257 = tpu.reciprocal %1256 {approx = true} : vector<8x1xf32> -> vector<8x1xf32>
    %1258 = vector.broadcast %1257 : vector<8x1xf32> to vector<8x8xf32>
    %1259 = arith.mulf %1254, %1258 : vector<8x8xf32>
    %1260 = arith.truncf %1259 : vector<8x8xf32> to vector<8x8xbf16>
    %cst_532 = arith.constant dense<0.000000e+00> : vector<8x16xf32>
    %1261 = tpu.matmul %1260, %1244, %cst_532 {dimension_numbers = #tpu.dot_dimension_numbers<[1], [0], [0], [1], [0, 0, 1, 1], [], []>} : vector<8x8xbf16>, vector<8x16xbf16>, vector<8x16xf32> -> vector<8x16xf32>
    %1262 = vector.extract_strided_slice %1238 {offsets = [0, 16], sizes = [8, 16], strides = [1, 1]} : vector<8x192xf32> to vector<8x16xf32>
    %1263 = arith.truncf %1262 : vector<8x16xf32> to vector<8x16xbf16>
    %1264 = vector.extract_strided_slice %1238 {offsets = [0, 80], sizes = [8, 16], strides = [1, 1]} : vector<8x192xf32> to vector<8x16xf32>
    %1265 = arith.truncf %1264 : vector<8x16xf32> to vector<8x16xbf16>
    %1266 = vector.extract_strided_slice %1238 {offsets = [0, 144], sizes = [8, 16], strides = [1, 1]} : vector<8x192xf32> to vector<8x16xf32>
    %1267 = arith.truncf %1266 : vector<8x16xf32> to vector<8x16xbf16>
    %cst_533 = arith.constant dense<0.000000e+00> : vector<8x8xf32>
    %1268 = tpu.matmul %1263, %1265, %cst_533 {dimension_numbers = #tpu.dot_dimension_numbers<[1], [1], [0], [0], [0, 0, 1, 0], [], []>} : vector<8x16xbf16>, vector<8x16xbf16>, vector<8x8xf32> -> vector<8x8xf32>
    %cst_534 = arith.constant -3.40282347E+38 : f32
    %1269 = vector.shape_cast %40 : vector<1x8xi1> to vector<1x8xi1>
    %1270 = vector.broadcast %1269 : vector<1x8xi1> to vector<8x8xi1>
    %1271 = vector.broadcast %cst_534 : f32 to vector<8x8xf32>
    %1272 = arith.select %1270, %1271, %1268 : vector<8x8xi1>, vector<8x8xf32>
    %cst_535 = arith.constant dense<0xFF800000> : vector<8xf32>
    %1273 = vector.multi_reduction <maximumf>, %1272, %cst_535 [1] : vector<8x8xf32> to vector<8xf32>
    %1274 = vector.shape_cast %1273 : vector<8xf32> to vector<8x1xf32>
    %1275 = vector.broadcast %1274 : vector<8x1xf32> to vector<8x8xf32>
    %1276 = arith.subf %1272, %1275 : vector<8x8xf32>
    %1277 = math.exp %1276 : vector<8x8xf32>
    %cst_536 = arith.constant dense<0.000000e+00> : vector<8xf32>
    %1278 = vector.multi_reduction <add>, %1277, %cst_536 [1] : vector<8x8xf32> to vector<8xf32>
    %1279 = vector.shape_cast %1278 : vector<8xf32> to vector<8x1xf32>
    %1280 = tpu.reciprocal %1279 {approx = true} : vector<8x1xf32> -> vector<8x1xf32>
    %1281 = vector.broadcast %1280 : vector<8x1xf32> to vector<8x8xf32>
    %1282 = arith.mulf %1277, %1281 : vector<8x8xf32>
    %1283 = arith.truncf %1282 : vector<8x8xf32> to vector<8x8xbf16>
    %cst_537 = arith.constant dense<0.000000e+00> : vector<8x16xf32>
    %1284 = tpu.matmul %1283, %1267, %cst_537 {dimension_numbers = #tpu.dot_dimension_numbers<[1], [0], [0], [1], [0, 0, 1, 1], [], []>} : vector<8x8xbf16>, vector<8x16xbf16>, vector<8x16xf32> -> vector<8x16xf32>
    %1285 = vector.extract_strided_slice %1238 {offsets = [0, 32], sizes = [8, 16], strides = [1, 1]} : vector<8x192xf32> to vector<8x16xf32>
    %1286 = arith.truncf %1285 : vector<8x16xf32> to vector<8x16xbf16>
    %1287 = vector.extract_strided_slice %1238 {offsets = [0, 96], sizes = [8, 16], strides = [1, 1]} : vector<8x192xf32> to vector<8x16xf32>
    %1288 = arith.truncf %1287 : vector<8x16xf32> to vector<8x16xbf16>
    %1289 = vector.extract_strided_slice %1238 {offsets = [0, 160], sizes = [8, 16], strides = [1, 1]} : vector<8x192xf32> to vector<8x16xf32>
    %1290 = arith.truncf %1289 : vector<8x16xf32> to vector<8x16xbf16>
    %cst_538 = arith.constant dense<0.000000e+00> : vector<8x8xf32>
    %1291 = tpu.matmul %1286, %1288, %cst_538 {dimension_numbers = #tpu.dot_dimension_numbers<[1], [1], [0], [0], [0, 0, 1, 0], [], []>} : vector<8x16xbf16>, vector<8x16xbf16>, vector<8x8xf32> -> vector<8x8xf32>
    %cst_539 = arith.constant -3.40282347E+38 : f32
    %1292 = vector.shape_cast %40 : vector<1x8xi1> to vector<1x8xi1>
    %1293 = vector.broadcast %1292 : vector<1x8xi1> to vector<8x8xi1>
    %1294 = vector.broadcast %cst_539 : f32 to vector<8x8xf32>
    %1295 = arith.select %1293, %1294, %1291 : vector<8x8xi1>, vector<8x8xf32>
    %cst_540 = arith.constant dense<0xFF800000> : vector<8xf32>
    %1296 = vector.multi_reduction <maximumf>, %1295, %cst_540 [1] : vector<8x8xf32> to vector<8xf32>
    %1297 = vector.shape_cast %1296 : vector<8xf32> to vector<8x1xf32>
    %1298 = vector.broadcast %1297 : vector<8x1xf32> to vector<8x8xf32>
    %1299 = arith.subf %1295, %1298 : vector<8x8xf32>
    %1300 = math.exp %1299 : vector<8x8xf32>
    %cst_541 = arith.constant dense<0.000000e+00> : vector<8xf32>
    %1301 = vector.multi_reduction <add>, %1300, %cst_541 [1] : vector<8x8xf32> to vector<8xf32>
    %1302 = vector.shape_cast %1301 : vector<8xf32> to vector<8x1xf32>
    %1303 = tpu.reciprocal %1302 {approx = true} : vector<8x1xf32> -> vector<8x1xf32>
    %1304 = vector.broadcast %1303 : vector<8x1xf32> to vector<8x8xf32>
    %1305 = arith.mulf %1300, %1304 : vector<8x8xf32>
    %1306 = arith.truncf %1305 : vector<8x8xf32> to vector<8x8xbf16>
    %cst_542 = arith.constant dense<0.000000e+00> : vector<8x16xf32>
    %1307 = tpu.matmul %1306, %1290, %cst_542 {dimension_numbers = #tpu.dot_dimension_numbers<[1], [0], [0], [1], [0, 0, 1, 1], [], []>} : vector<8x8xbf16>, vector<8x16xbf16>, vector<8x16xf32> -> vector<8x16xf32>
    %1308 = vector.extract_strided_slice %1238 {offsets = [0, 48], sizes = [8, 16], strides = [1, 1]} : vector<8x192xf32> to vector<8x16xf32>
    %1309 = arith.truncf %1308 : vector<8x16xf32> to vector<8x16xbf16>
    %1310 = vector.extract_strided_slice %1238 {offsets = [0, 112], sizes = [8, 16], strides = [1, 1]} : vector<8x192xf32> to vector<8x16xf32>
    %1311 = arith.truncf %1310 : vector<8x16xf32> to vector<8x16xbf16>
    %1312 = vector.extract_strided_slice %1238 {offsets = [0, 176], sizes = [8, 16], strides = [1, 1]} : vector<8x192xf32> to vector<8x16xf32>
    %1313 = arith.truncf %1312 : vector<8x16xf32> to vector<8x16xbf16>
    %cst_543 = arith.constant dense<0.000000e+00> : vector<8x8xf32>
    %1314 = tpu.matmul %1309, %1311, %cst_543 {dimension_numbers = #tpu.dot_dimension_numbers<[1], [1], [0], [0], [0, 0, 1, 0], [], []>} : vector<8x16xbf16>, vector<8x16xbf16>, vector<8x8xf32> -> vector<8x8xf32>
    %cst_544 = arith.constant -3.40282347E+38 : f32
    %1315 = vector.shape_cast %40 : vector<1x8xi1> to vector<1x8xi1>
    %1316 = vector.broadcast %1315 : vector<1x8xi1> to vector<8x8xi1>
    %1317 = vector.broadcast %cst_544 : f32 to vector<8x8xf32>
    %1318 = arith.select %1316, %1317, %1314 : vector<8x8xi1>, vector<8x8xf32>
    %cst_545 = arith.constant dense<0xFF800000> : vector<8xf32>
    %1319 = vector.multi_reduction <maximumf>, %1318, %cst_545 [1] : vector<8x8xf32> to vector<8xf32>
    %1320 = vector.shape_cast %1319 : vector<8xf32> to vector<8x1xf32>
    %1321 = vector.broadcast %1320 : vector<8x1xf32> to vector<8x8xf32>
    %1322 = arith.subf %1318, %1321 : vector<8x8xf32>
    %1323 = math.exp %1322 : vector<8x8xf32>
    %cst_546 = arith.constant dense<0.000000e+00> : vector<8xf32>
    %1324 = vector.multi_reduction <add>, %1323, %cst_546 [1] : vector<8x8xf32> to vector<8xf32>
    %1325 = vector.shape_cast %1324 : vector<8xf32> to vector<8x1xf32>
    %1326 = tpu.reciprocal %1325 {approx = true} : vector<8x1xf32> -> vector<8x1xf32>
    %1327 = vector.broadcast %1326 : vector<8x1xf32> to vector<8x8xf32>
    %1328 = arith.mulf %1323, %1327 : vector<8x8xf32>
    %1329 = arith.truncf %1328 : vector<8x8xf32> to vector<8x8xbf16>
    %cst_547 = arith.constant dense<0.000000e+00> : vector<8x16xf32>
    %1330 = tpu.matmul %1329, %1313, %cst_547 {dimension_numbers = #tpu.dot_dimension_numbers<[1], [0], [0], [1], [0, 0, 1, 1], [], []>} : vector<8x8xbf16>, vector<8x16xbf16>, vector<8x16xf32> -> vector<8x16xf32>
    %1331 = tpu.concatenate %1261, %1284, %1307, %1330 in 1 : vector<8x16xf32>, vector<8x16xf32>, vector<8x16xf32>, vector<8x16xf32> -> vector<8x64xf32>
    %c5_548 = arith.constant 5 : index
    %c0_549 = arith.constant 0 : index
    %c0_550 = arith.constant 0 : index
    %1332 = vector.load %arg9[%c5_548, %c0_549, %c0_550] : memref<6x64x64xbf16, #tpu.memory_space<vmem>>, vector<1x64x64xbf16>
    %1333 = vector.shape_cast %1332 : vector<1x64x64xbf16> to vector<64x64xbf16>
    %c5_551 = arith.constant 5 : index
    %c0_552 = arith.constant 0 : index
    %c0_553 = arith.constant 0 : index
    %1334 = vector.load %arg10[%c5_551, %c0_552, %c0_553] : memref<6x1x64xf32, #tpu.memory_space<vmem>>, vector<1x1x64xf32>
    %1335 = vector.shape_cast %1334 : vector<1x1x64xf32> to vector<1x64xf32>
    %1336 = arith.truncf %1331 : vector<8x64xf32> to vector<8x64xbf16>
    %cst_554 = arith.constant dense<0.000000e+00> : vector<8x64xf32>
    %1337 = tpu.matmul %1336, %1333, %cst_554 {dimension_numbers = #tpu.dot_dimension_numbers<[1], [0], [0], [1], [0, 0, 1, 1], [], []>} : vector<8x64xbf16>, vector<64x64xbf16>, vector<8x64xf32> -> vector<8x64xf32>
    %1338 = vector.broadcast %1335 : vector<1x64xf32> to vector<8x64xf32>
    %1339 = arith.addf %1337, %1338 : vector<8x64xf32>
    %1340 = arith.addf %1339, %1230 : vector<8x64xf32>
    %c5_555 = arith.constant 5 : index
    %c0_556 = arith.constant 0 : index
    %c0_557 = arith.constant 0 : index
    %1341 = vector.load %arg11[%c5_555, %c0_556, %c0_557] : memref<6x1x64xf32, #tpu.memory_space<vmem>>, vector<1x1x64xf32>
    %1342 = vector.shape_cast %1341 : vector<1x1x64xf32> to vector<1x64xf32>
    %c5_558 = arith.constant 5 : index
    %c0_559 = arith.constant 0 : index
    %c0_560 = arith.constant 0 : index
    %1343 = vector.load %arg12[%c5_558, %c0_559, %c0_560] : memref<6x1x64xf32, #tpu.memory_space<vmem>>, vector<1x1x64xf32>
    %1344 = vector.shape_cast %1343 : vector<1x1x64xf32> to vector<1x64xf32>
    %cst_561 = arith.constant dense<0.000000e+00> : vector<8xf32>
    %1345 = vector.multi_reduction <add>, %1340, %cst_561 [1] : vector<8x64xf32> to vector<8xf32>
    %1346 = vector.shape_cast %1345 : vector<8xf32> to vector<8x1xf32>
    %cst_562 = arith.constant 6.400000e+01 : f32
    %1347 = vector.broadcast %cst_562 : f32 to vector<8x1xf32>
    %1348 = arith.divf %1346, %1347 : vector<8x1xf32>
    %1349 = vector.broadcast %1348 : vector<8x1xf32> to vector<8x64xf32>
    %1350 = arith.subf %1340, %1349 : vector<8x64xf32>
    %1351 = arith.mulf %1350, %1350 : vector<8x64xf32>
    %cst_563 = arith.constant dense<0.000000e+00> : vector<8xf32>
    %1352 = vector.multi_reduction <add>, %1351, %cst_563 [1] : vector<8x64xf32> to vector<8xf32>
    %1353 = vector.shape_cast %1352 : vector<8xf32> to vector<8x1xf32>
    %cst_564 = arith.constant 6.400000e+01 : f32
    %1354 = vector.broadcast %cst_564 : f32 to vector<8x1xf32>
    %1355 = arith.divf %1353, %1354 : vector<8x1xf32>
    %1356 = vector.broadcast %1348 : vector<8x1xf32> to vector<8x64xf32>
    %1357 = arith.subf %1340, %1356 : vector<8x64xf32>
    %cst_565 = arith.constant 9.99999996E-13 : f32
    %1358 = vector.broadcast %cst_565 : f32 to vector<8x1xf32>
    %1359 = arith.addf %1355, %1358 : vector<8x1xf32>
    %1360 = math.rsqrt %1359 : vector<8x1xf32>
    %1361 = vector.broadcast %1360 : vector<8x1xf32> to vector<8x64xf32>
    %1362 = arith.mulf %1357, %1361 : vector<8x64xf32>
    %1363 = vector.broadcast %1342 : vector<1x64xf32> to vector<8x64xf32>
    %1364 = arith.mulf %1362, %1363 : vector<8x64xf32>
    %1365 = vector.broadcast %1344 : vector<1x64xf32> to vector<8x64xf32>
    %1366 = arith.addf %1364, %1365 : vector<8x64xf32>
    %c5_566 = arith.constant 5 : index
    %c0_567 = arith.constant 0 : index
    %c0_568 = arith.constant 0 : index
    %1367 = vector.load %arg13[%c5_566, %c0_567, %c0_568] : memref<6x64x128xbf16, #tpu.memory_space<vmem>>, vector<1x64x128xbf16>
    %1368 = vector.shape_cast %1367 : vector<1x64x128xbf16> to vector<64x128xbf16>
    %c5_569 = arith.constant 5 : index
    %c0_570 = arith.constant 0 : index
    %c0_571 = arith.constant 0 : index
    %1369 = vector.load %arg14[%c5_569, %c0_570, %c0_571] : memref<6x1x128xf32, #tpu.memory_space<vmem>>, vector<1x1x128xf32>
    %1370 = vector.shape_cast %1369 : vector<1x1x128xf32> to vector<1x128xf32>
    %1371 = arith.truncf %1366 : vector<8x64xf32> to vector<8x64xbf16>
    %cst_572 = arith.constant dense<0.000000e+00> : vector<8x128xf32>
    %1372 = tpu.matmul %1371, %1368, %cst_572 {dimension_numbers = #tpu.dot_dimension_numbers<[1], [0], [0], [1], [0, 0, 1, 1], [], []>} : vector<8x64xbf16>, vector<64x128xbf16>, vector<8x128xf32> -> vector<8x128xf32>
    %1373 = vector.broadcast %1370 : vector<1x128xf32> to vector<8x128xf32>
    %1374 = arith.addf %1372, %1373 : vector<8x128xf32>
    %cst_573 = arith.constant 5.000000e-01 : f32
    %1375 = vector.broadcast %cst_573 : f32 to vector<8x128xf32>
    %1376 = arith.mulf %1375, %1374 : vector<8x128xf32>
    %cst_574 = arith.constant 0.707106769 : f32
    %1377 = vector.broadcast %cst_574 : f32 to vector<8x128xf32>
    %1378 = arith.mulf %1374, %1377 : vector<8x128xf32>
    %1379 = math.erf %1378 : vector<8x128xf32>
    %cst_575 = arith.constant 1.000000e+00 : f32
    %1380 = vector.broadcast %cst_575 : f32 to vector<8x128xf32>
    %1381 = arith.addf %1380, %1379 : vector<8x128xf32>
    %1382 = arith.mulf %1376, %1381 : vector<8x128xf32>
    %c5_576 = arith.constant 5 : index
    %c0_577 = arith.constant 0 : index
    %c0_578 = arith.constant 0 : index
    %1383 = vector.load %arg15[%c5_576, %c0_577, %c0_578] : memref<6x128x64xbf16, #tpu.memory_space<vmem>>, vector<1x128x64xbf16>
    %1384 = vector.shape_cast %1383 : vector<1x128x64xbf16> to vector<128x64xbf16>
    %c5_579 = arith.constant 5 : index
    %c0_580 = arith.constant 0 : index
    %c0_581 = arith.constant 0 : index
    %1385 = vector.load %arg16[%c5_579, %c0_580, %c0_581] : memref<6x1x64xf32, #tpu.memory_space<vmem>>, vector<1x1x64xf32>
    %1386 = vector.shape_cast %1385 : vector<1x1x64xf32> to vector<1x64xf32>
    %1387 = arith.truncf %1382 : vector<8x128xf32> to vector<8x128xbf16>
    %cst_582 = arith.constant dense<0.000000e+00> : vector<8x64xf32>
    %1388 = tpu.matmul %1387, %1384, %cst_582 {dimension_numbers = #tpu.dot_dimension_numbers<[1], [0], [0], [1], [0, 0, 1, 1], [], []>} : vector<8x128xbf16>, vector<128x64xbf16>, vector<8x64xf32> -> vector<8x64xf32>
    %1389 = vector.broadcast %1386 : vector<1x64xf32> to vector<8x64xf32>
    %1390 = arith.addf %1388, %1389 : vector<8x64xf32>
    %1391 = arith.addf %1390, %1366 : vector<8x64xf32>
    %c5_583 = arith.constant 5 : index
    %c0_584 = arith.constant 0 : index
    %c0_585 = arith.constant 0 : index
    %1392 = vector.load %arg17[%c5_583, %c0_584, %c0_585] : memref<6x1x64xf32, #tpu.memory_space<vmem>>, vector<1x1x64xf32>
    %1393 = vector.shape_cast %1392 : vector<1x1x64xf32> to vector<1x64xf32>
    %c5_586 = arith.constant 5 : index
    %c0_587 = arith.constant 0 : index
    %c0_588 = arith.constant 0 : index
    %1394 = vector.load %arg18[%c5_586, %c0_587, %c0_588] : memref<6x1x64xf32, #tpu.memory_space<vmem>>, vector<1x1x64xf32>
    %1395 = vector.shape_cast %1394 : vector<1x1x64xf32> to vector<1x64xf32>
    %cst_589 = arith.constant dense<0.000000e+00> : vector<8xf32>
    %1396 = vector.multi_reduction <add>, %1391, %cst_589 [1] : vector<8x64xf32> to vector<8xf32>
    %1397 = vector.shape_cast %1396 : vector<8xf32> to vector<8x1xf32>
    %cst_590 = arith.constant 6.400000e+01 : f32
    %1398 = vector.broadcast %cst_590 : f32 to vector<8x1xf32>
    %1399 = arith.divf %1397, %1398 : vector<8x1xf32>
    %1400 = vector.broadcast %1399 : vector<8x1xf32> to vector<8x64xf32>
    %1401 = arith.subf %1391, %1400 : vector<8x64xf32>
    %1402 = arith.mulf %1401, %1401 : vector<8x64xf32>
    %cst_591 = arith.constant dense<0.000000e+00> : vector<8xf32>
    %1403 = vector.multi_reduction <add>, %1402, %cst_591 [1] : vector<8x64xf32> to vector<8xf32>
    %1404 = vector.shape_cast %1403 : vector<8xf32> to vector<8x1xf32>
    %cst_592 = arith.constant 6.400000e+01 : f32
    %1405 = vector.broadcast %cst_592 : f32 to vector<8x1xf32>
    %1406 = arith.divf %1404, %1405 : vector<8x1xf32>
    %1407 = vector.broadcast %1399 : vector<8x1xf32> to vector<8x64xf32>
    %1408 = arith.subf %1391, %1407 : vector<8x64xf32>
    %cst_593 = arith.constant 9.99999996E-13 : f32
    %1409 = vector.broadcast %cst_593 : f32 to vector<8x1xf32>
    %1410 = arith.addf %1406, %1409 : vector<8x1xf32>
    %1411 = math.rsqrt %1410 : vector<8x1xf32>
    %1412 = vector.broadcast %1411 : vector<8x1xf32> to vector<8x64xf32>
    %1413 = arith.mulf %1408, %1412 : vector<8x64xf32>
    %1414 = vector.broadcast %1393 : vector<1x64xf32> to vector<8x64xf32>
    %1415 = arith.mulf %1413, %1414 : vector<8x64xf32>
    %1416 = vector.broadcast %1395 : vector<1x64xf32> to vector<8x64xf32>
    %1417 = arith.addf %1415, %1416 : vector<8x64xf32>
    %c5_594 = arith.constant 5 : index
    %c0_595 = arith.constant 0 : index
    %c0_596 = arith.constant 0 : index
    %1418 = vector.load %arg19[%c5_594, %c0_595, %c0_596] : memref<6x1x64xf32, #tpu.memory_space<vmem>>, vector<1x1x64xf32>
    %1419 = vector.shape_cast %1418 : vector<1x1x64xf32> to vector<1x64xf32>
    %c5_597 = arith.constant 5 : index
    %c0_598 = arith.constant 0 : index
    %c0_599 = arith.constant 0 : index
    %1420 = vector.load %arg20[%c5_597, %c0_598, %c0_599] : memref<6x1x64xf32, #tpu.memory_space<vmem>>, vector<1x1x64xf32>
    %1421 = vector.shape_cast %1420 : vector<1x1x64xf32> to vector<1x64xf32>
    %cst_600 = arith.constant dense<0.000000e+00> : vector<8xf32>
    %1422 = vector.multi_reduction <add>, %1417, %cst_600 [1] : vector<8x64xf32> to vector<8xf32>
    %1423 = vector.shape_cast %1422 : vector<8xf32> to vector<8x1xf32>
    %cst_601 = arith.constant 6.400000e+01 : f32
    %1424 = vector.broadcast %cst_601 : f32 to vector<8x1xf32>
    %1425 = arith.divf %1423, %1424 : vector<8x1xf32>
    %1426 = vector.broadcast %1425 : vector<8x1xf32> to vector<8x64xf32>
    %1427 = arith.subf %1417, %1426 : vector<8x64xf32>
    %1428 = arith.mulf %1427, %1427 : vector<8x64xf32>
    %cst_602 = arith.constant dense<0.000000e+00> : vector<8xf32>
    %1429 = vector.multi_reduction <add>, %1428, %cst_602 [1] : vector<8x64xf32> to vector<8xf32>
    %1430 = vector.shape_cast %1429 : vector<8xf32> to vector<8x1xf32>
    %cst_603 = arith.constant 6.400000e+01 : f32
    %1431 = vector.broadcast %cst_603 : f32 to vector<8x1xf32>
    %1432 = arith.divf %1430, %1431 : vector<8x1xf32>
    %1433 = vector.broadcast %1425 : vector<8x1xf32> to vector<8x64xf32>
    %1434 = arith.subf %1417, %1433 : vector<8x64xf32>
    %cst_604 = arith.constant 9.99999974E-6 : f32
    %1435 = vector.broadcast %cst_604 : f32 to vector<8x1xf32>
    %1436 = arith.addf %1432, %1435 : vector<8x1xf32>
    %1437 = math.rsqrt %1436 : vector<8x1xf32>
    %1438 = vector.broadcast %1437 : vector<8x1xf32> to vector<8x64xf32>
    %1439 = arith.mulf %1434, %1438 : vector<8x64xf32>
    %1440 = vector.broadcast %1419 : vector<1x64xf32> to vector<8x64xf32>
    %1441 = arith.mulf %1439, %1440 : vector<8x64xf32>
    %1442 = vector.broadcast %1421 : vector<1x64xf32> to vector<8x64xf32>
    %1443 = arith.addf %1441, %1442 : vector<8x64xf32>
    %c5_605 = arith.constant 5 : index
    %c0_606 = arith.constant 0 : index
    %c0_607 = arith.constant 0 : index
    %1444 = vector.load %arg21[%c5_605, %c0_606, %c0_607] : memref<6x64x16xbf16, #tpu.memory_space<vmem>>, vector<1x64x16xbf16>
    %1445 = vector.shape_cast %1444 : vector<1x64x16xbf16> to vector<64x16xbf16>
    %c5_608 = arith.constant 5 : index
    %c0_609 = arith.constant 0 : index
    %c0_610 = arith.constant 0 : index
    %1446 = vector.load %arg22[%c5_608, %c0_609, %c0_610] : memref<6x1x16xf32, #tpu.memory_space<vmem>>, vector<1x1x16xf32>
    %1447 = vector.shape_cast %1446 : vector<1x1x16xf32> to vector<1x16xf32>
    %1448 = arith.truncf %1443 : vector<8x64xf32> to vector<8x64xbf16>
    %cst_611 = arith.constant dense<0.000000e+00> : vector<8x16xf32>
    %1449 = tpu.matmul %1448, %1445, %cst_611 {dimension_numbers = #tpu.dot_dimension_numbers<[1], [0], [0], [1], [0, 0, 1, 1], [], []>} : vector<8x64xbf16>, vector<64x16xbf16>, vector<8x16xf32> -> vector<8x16xf32>
    %1450 = vector.broadcast %1447 : vector<1x16xf32> to vector<8x16xf32>
    %1451 = arith.addf %1449, %1450 : vector<8x16xf32>
    %cst_612 = arith.constant 5.000000e-01 : f32
    %1452 = vector.broadcast %cst_612 : f32 to vector<8x16xf32>
    %1453 = arith.mulf %1452, %1451 : vector<8x16xf32>
    %cst_613 = arith.constant 0.707106769 : f32
    %1454 = vector.broadcast %cst_613 : f32 to vector<8x16xf32>
    %1455 = arith.mulf %1451, %1454 : vector<8x16xf32>
    %1456 = math.erf %1455 : vector<8x16xf32>
    %cst_614 = arith.constant 1.000000e+00 : f32
    %1457 = vector.broadcast %cst_614 : f32 to vector<8x16xf32>
    %1458 = arith.addf %1457, %1456 : vector<8x16xf32>
    %1459 = arith.mulf %1453, %1458 : vector<8x16xf32>
    %c5_615 = arith.constant 5 : index
    %c0_616 = arith.constant 0 : index
    %c0_617 = arith.constant 0 : index
    %1460 = vector.load %arg23[%c5_615, %c0_616, %c0_617] : memref<6x16x64xbf16, #tpu.memory_space<vmem>>, vector<1x16x64xbf16>
    %1461 = vector.shape_cast %1460 : vector<1x16x64xbf16> to vector<16x64xbf16>
    %c5_618 = arith.constant 5 : index
    %c0_619 = arith.constant 0 : index
    %c0_620 = arith.constant 0 : index
    %1462 = vector.load %arg24[%c5_618, %c0_619, %c0_620] : memref<6x1x64xf32, #tpu.memory_space<vmem>>, vector<1x1x64xf32>
    %1463 = vector.shape_cast %1462 : vector<1x1x64xf32> to vector<1x64xf32>
    %1464 = arith.truncf %1459 : vector<8x16xf32> to vector<8x16xbf16>
    %cst_621 = arith.constant dense<0.000000e+00> : vector<8x64xf32>
    %1465 = tpu.matmul %1464, %1461, %cst_621 {dimension_numbers = #tpu.dot_dimension_numbers<[1], [0], [0], [1], [0, 0, 1, 1], [], []>} : vector<8x16xbf16>, vector<16x64xbf16>, vector<8x64xf32> -> vector<8x64xf32>
    %1466 = vector.broadcast %1463 : vector<1x64xf32> to vector<8x64xf32>
    %1467 = arith.addf %1465, %1466 : vector<8x64xf32>
    %1468 = arith.addf %1467, %1417 : vector<8x64xf32>
    %1469 = vector.extract_strided_slice %1468 {offsets = [0, 0], sizes = [1, 64], strides = [1, 1]} : vector<8x64xf32> to vector<1x64xf32>
    %c0_622 = arith.constant 0 : index
    %c0_623 = arith.constant 0 : index
    %1470 = vector.load %arg25[%c0_622, %c0_623] : memref<64x128xbf16, #tpu.memory_space<vmem>>, vector<64x128xbf16>
    %c0_624 = arith.constant 0 : index
    %c0_625 = arith.constant 0 : index
    %1471 = vector.load %arg26[%c0_624, %c0_625] : memref<1x128xf32, #tpu.memory_space<vmem>>, vector<1x128xf32>
    %1472 = arith.truncf %1469 : vector<1x64xf32> to vector<1x64xbf16>
    %cst_626 = arith.constant dense<0.000000e+00> : vector<1x128xf32>
    %1473 = tpu.matmul %1472, %1470, %cst_626 {dimension_numbers = #tpu.dot_dimension_numbers<[1], [0], [0], [1], [0, 0, 1, 1], [], []>} : vector<1x64xbf16>, vector<64x128xbf16>, vector<1x128xf32> -> vector<1x128xf32>
    %1474 = arith.addf %1473, %1471 : vector<1x128xf32>
    %c0_627 = arith.constant 0 : index
    %c0_628 = arith.constant 0 : index
    %c0_629 = arith.constant 0 : index
    %1475 = vector.load %arg27[%c0_627, %c0_628, %c0_629] : memref<1x1x128xf32, #tpu.memory_space<vmem>>, vector<1x1x128xf32>
    %1476 = vector.shape_cast %1475 : vector<1x1x128xf32> to vector<1x128xf32>
    %1477 = vector.shape_cast %1474 : vector<1x128xf32> to vector<1x1x128xf32>
    tpu.vector_store %arg27[%c0_627, %c0_628, %c0_629], %1477 {strides = array<i32>} : memref<1x1x128xf32, #tpu.memory_space<vmem>>, vector<1x1x128xf32>,
    return
  }
  func.func @transform_0(%arg0: i32) -> (i32, i32, i32) {
    %c0_i32 = arith.constant 0 : i32
    %c0_i32_0 = arith.constant 0 : i32
    %c0_i32_1 = arith.constant 0 : i32
    return %arg0, %c0_i32, %c0_i32_0 : i32, i32, i32
  }
  func.func @transform_1(%arg0: i32) -> (i32, i32, i32) {
    %c0_i32 = arith.constant 0 : i32
    %c0_i32_0 = arith.constant 0 : i32
    %c0_i32_1 = arith.constant 0 : i32
    return %arg0, %c0_i32, %c0_i32_0 : i32, i32, i32
  }
  func.func @transform_2(%arg0: i32) -> (i32, i32) {
    %c0_i32 = arith.constant 0 : i32
    %c0_i32_0 = arith.constant 0 : i32
    %c0_i32_1 = arith.constant 0 : i32
    return %c0_i32, %c0_i32_0 : i32, i32
  }
  func.func @transform_3(%arg0: i32) -> (i32, i32) {
    %c0_i32 = arith.constant 0 : i32
    %c0_i32_0 = arith.constant 0 : i32
    %c0_i32_1 = arith.constant 0 : i32
    return %c0_i32, %c0_i32_0 : i32, i32
  }
  func.func @transform_4(%arg0: i32) -> (i32, i32) {
    %c0_i32 = arith.constant 0 : i32
    %c0_i32_0 = arith.constant 0 : i32
    %c0_i32_1 = arith.constant 0 : i32
    return %c0_i32, %c0_i32_0 : i32, i32
  }
  func.func @transform_5(%arg0: i32) -> (i32, i32) {
    %c0_i32 = arith.constant 0 : i32
    %c0_i32_0 = arith.constant 0 : i32
    %c0_i32_1 = arith.constant 0 : i32
    return %c0_i32, %c0_i32_0 : i32, i32
  }
  func.func @transform_6(%arg0: i32) -> (i32, i32, i32) {
    %c0_i32 = arith.constant 0 : i32
    %c0_i32_0 = arith.constant 0 : i32
    %c0_i32_1 = arith.constant 0 : i32
    %c0_i32_2 = arith.constant 0 : i32
    return %c0_i32, %c0_i32_0, %c0_i32_1 : i32, i32, i32
  }
  func.func @transform_7(%arg0: i32) -> (i32, i32, i32) {
    %c0_i32 = arith.constant 0 : i32
    %c0_i32_0 = arith.constant 0 : i32
    %c0_i32_1 = arith.constant 0 : i32
    %c0_i32_2 = arith.constant 0 : i32
    return %c0_i32, %c0_i32_0, %c0_i32_1 : i32, i32, i32
  }
  func.func @transform_8(%arg0: i32) -> (i32, i32, i32) {
    %c0_i32 = arith.constant 0 : i32
    %c0_i32_0 = arith.constant 0 : i32
    %c0_i32_1 = arith.constant 0 : i32
    %c0_i32_2 = arith.constant 0 : i32
    return %c0_i32, %c0_i32_0, %c0_i32_1 : i32, i32, i32
  }
  func.func @transform_9(%arg0: i32) -> (i32, i32, i32) {
    %c0_i32 = arith.constant 0 : i32
    %c0_i32_0 = arith.constant 0 : i32
    %c0_i32_1 = arith.constant 0 : i32
    %c0_i32_2 = arith.constant 0 : i32
    return %c0_i32, %c0_i32_0, %c0_i32_1 : i32, i32, i32
  }
  func.func @transform_10(%arg0: i32) -> (i32, i32, i32) {
    %c0_i32 = arith.constant 0 : i32
    %c0_i32_0 = arith.constant 0 : i32
    %c0_i32_1 = arith.constant 0 : i32
    %c0_i32_2 = arith.constant 0 : i32
    return %c0_i32, %c0_i32_0, %c0_i32_1 : i32, i32, i32
  }
  func.func @transform_11(%arg0: i32) -> (i32, i32, i32) {
    %c0_i32 = arith.constant 0 : i32
    %c0_i32_0 = arith.constant 0 : i32
    %c0_i32_1 = arith.constant 0 : i32
    %c0_i32_2 = arith.constant 0 : i32
    return %c0_i32, %c0_i32_0, %c0_i32_1 : i32, i32, i32
  }
  func.func @transform_12(%arg0: i32) -> (i32, i32, i32) {
    %c0_i32 = arith.constant 0 : i32
    %c0_i32_0 = arith.constant 0 : i32
    %c0_i32_1 = arith.constant 0 : i32
    %c0_i32_2 = arith.constant 0 : i32
    return %c0_i32, %c0_i32_0, %c0_i32_1 : i32, i32, i32
  }
  func.func @transform_13(%arg0: i32) -> (i32, i32, i32) {
    %c0_i32 = arith.constant 0 : i32
    %c0_i32_0 = arith.constant 0 : i32
    %c0_i32_1 = arith.constant 0 : i32
    %c0_i32_2 = arith.constant 0 : i32
    return %c0_i32, %c0_i32_0, %c0_i32_1 : i32, i32, i32
  }
  func.func @transform_14(%arg0: i32) -> (i32, i32, i32) {
    %c0_i32 = arith.constant 0 : i32
    %c0_i32_0 = arith.constant 0 : i32
    %c0_i32_1 = arith.constant 0 : i32
    %c0_i32_2 = arith.constant 0 : i32
    return %c0_i32, %c0_i32_0, %c0_i32_1 : i32, i32, i32
  }
  func.func @transform_15(%arg0: i32) -> (i32, i32, i32) {
    %c0_i32 = arith.constant 0 : i32
    %c0_i32_0 = arith.constant 0 : i32
    %c0_i32_1 = arith.constant 0 : i32
    %c0_i32_2 = arith.constant 0 : i32
    return %c0_i32, %c0_i32_0, %c0_i32_1 : i32, i32, i32
  }
  func.func @transform_16(%arg0: i32) -> (i32, i32, i32) {
    %c0_i32 = arith.constant 0 : i32
    %c0_i32_0 = arith.constant 0 : i32
    %c0_i32_1 = arith.constant 0 : i32
    %c0_i32_2 = arith.constant 0 : i32
    return %c0_i32, %c0_i32_0, %c0_i32_1 : i32, i32, i32
  }
  func.func @transform_17(%arg0: i32) -> (i32, i32, i32) {
    %c0_i32 = arith.constant 0 : i32
    %c0_i32_0 = arith.constant 0 : i32
    %c0_i32_1 = arith.constant 0 : i32
    %c0_i32_2 = arith.constant 0 : i32
    return %c0_i32, %c0_i32_0, %c0_i32_1 : i32, i32, i32
  }
  func.func @transform_18(%arg0: i32) -> (i32, i32, i32) {
    %c0_i32 = arith.constant 0 : i32
    %c0_i32_0 = arith.constant 0 : i32
    %c0_i32_1 = arith.constant 0 : i32
    %c0_i32_2 = arith.constant 0 : i32
    return %c0_i32, %c0_i32_0, %c0_i32_1 : i32, i32, i32
  }
  func.func @transform_19(%arg0: i32) -> (i32, i32, i32) {
    %c0_i32 = arith.constant 0 : i32
    %c0_i32_0 = arith.constant 0 : i32
    %c0_i32_1 = arith.constant 0 : i32
    %c0_i32_2 = arith.constant 0 : i32
    return %c0_i32, %c0_i32_0, %c0_i32_1 : i32, i32, i32
  }
  func.func @transform_20(%arg0: i32) -> (i32, i32, i32) {
    %c0_i32 = arith.constant 0 : i32
    %c0_i32_0 = arith.constant 0 : i32
    %c0_i32_1 = arith.constant 0 : i32
    %c0_i32_2 = arith.constant 0 : i32
    return %c0_i32, %c0_i32_0, %c0_i32_1 : i32, i32, i32
  }
  func.func @transform_21(%arg0: i32) -> (i32, i32, i32) {
    %c0_i32 = arith.constant 0 : i32
    %c0_i32_0 = arith.constant 0 : i32
    %c0_i32_1 = arith.constant 0 : i32
    %c0_i32_2 = arith.constant 0 : i32
    return %c0_i32, %c0_i32_0, %c0_i32_1 : i32, i32, i32
  }
  func.func @transform_22(%arg0: i32) -> (i32, i32, i32) {
    %c0_i32 = arith.constant 0 : i32
    %c0_i32_0 = arith.constant 0 : i32
    %c0_i32_1 = arith.constant 0 : i32
    %c0_i32_2 = arith.constant 0 : i32
    return %c0_i32, %c0_i32_0, %c0_i32_1 : i32, i32, i32
  }
  func.func @transform_23(%arg0: i32) -> (i32, i32, i32) {
    %c0_i32 = arith.constant 0 : i32
    %c0_i32_0 = arith.constant 0 : i32
    %c0_i32_1 = arith.constant 0 : i32
    %c0_i32_2 = arith.constant 0 : i32
    return %c0_i32, %c0_i32_0, %c0_i32_1 : i32, i32, i32
  }
  func.func @transform_24(%arg0: i32) -> (i32, i32) {
    %c0_i32 = arith.constant 0 : i32
    %c0_i32_0 = arith.constant 0 : i32
    %c0_i32_1 = arith.constant 0 : i32
    return %c0_i32, %c0_i32_0 : i32, i32
  }
  func.func @transform_25(%arg0: i32) -> (i32, i32) {
    %c0_i32 = arith.constant 0 : i32
    %c0_i32_0 = arith.constant 0 : i32
    %c0_i32_1 = arith.constant 0 : i32
    return %c0_i32, %c0_i32_0 : i32, i32
  }
  func.func @transform_26(%arg0: i32) -> (i32, i32, i32) {
    %c0_i32 = arith.constant 0 : i32
    %c0_i32_0 = arith.constant 0 : i32
    %c0_i32_1 = arith.constant 0 : i32
    return %arg0, %c0_i32, %c0_i32_0 : i32, i32, i32
  }
}

</mosaic_0001>

<llo_original>
// kernel: tpu_custom_call.1
$region0: #{tpu_custom_call.1}
  #allocation0 [shape = 'u32[]', space=smem, size = 0x4, offset = 0x4, fixed_abs, tag = 'smem constant byte address 0x4 - core index']
  #allocation1 [shape = 'u32[144,128]{1,0:T(1,128)}', space=vmem, size = 0x12000, scoped, tag = 'internal scratch']
  %s0 = inlined_call_operand.vmem [shape: s32[2,8,1], index: 0, kind: input, shape index: {}]
  %s1 = inlined_call_operand.vmem [shape: f32[2,1,8], index: 1, kind: input, shape index: {}]
  %s2 = inlined_call_operand.vmem [shape: bf16[128,64], index: 2, kind: input, shape index: {}]
  %s3 = inlined_call_operand.vmem [shape: f32[8,64], index: 3, kind: input, shape index: {}]
  %s4 = inlined_call_operand.vmem [shape: f32[1,64], index: 4, kind: input, shape index: {}]
  %s5 = inlined_call_operand.vmem [shape: f32[1,64], index: 5, kind: input, shape index: {}]
  %s6 = inlined_call_operand.vmem [shape: bf16[6,64,192], index: 6, kind: input, shape index: {}]
  %s7 = inlined_call_operand.vmem [shape: f32[6,1,192], index: 7, kind: input, shape index: {}]
  %s8 = inlined_call_operand.vmem [shape: bf16[6,64,64], index: 8, kind: input, shape index: {}]
  %s9 = inlined_call_operand.vmem [shape: f32[6,1,64], index: 9, kind: input, shape index: {}]
  %s10 = inlined_call_operand.vmem [shape: f32[6,1,64], index: 10, kind: input, shape index: {}]
  %s11 = inlined_call_operand.vmem [shape: f32[6,1,64], index: 11, kind: input, shape index: {}]
  %s12 = inlined_call_operand.hbm [shape: bf16[6,64,128], index: 12, kind: input, shape index: {}]
  %s13 = inlined_call_operand.vmem [shape: f32[6,1,128], index: 13, kind: input, shape index: {}]
  %s14 = inlined_call_operand.vmem [shape: bf16[6,128,64], index: 14, kind: input, shape index: {}]
  %s15 = inlined_call_operand.vmem [shape: f32[6,1,64], index: 15, kind: input, shape index: {}]
  %s16 = inlined_call_operand.vmem [shape: f32[6,1,64], index: 16, kind: input, shape index: {}]
  %s17 = inlined_call_operand.hbm [shape: f32[6,1,64], index: 17, kind: input, shape index: {}]
  %s18 = inlined_call_operand.vmem [shape: f32[6,1,64], index: 18, kind: input, shape index: {}]
  %s19 = inlined_call_operand.hbm [shape: f32[6,1,64], index: 19, kind: input, shape index: {}]
  %s20 = inlined_call_operand.vmem [shape: bf16[6,64,16], index: 20, kind: input, shape index: {}]
  %s21 = inlined_call_operand.hbm [shape: f32[6,1,16], index: 21, kind: input, shape index: {}]
  %s22 = inlined_call_operand.vmem [shape: bf16[6,16,64], index: 22, kind: input, shape index: {}]
  %s23 = inlined_call_operand.hbm [shape: f32[6,1,64], index: 23, kind: input, shape index: {}]
  %s24 = inlined_call_operand.vmem [shape: bf16[64,128], index: 24, kind: input, shape index: {}]
  %s25 = inlined_call_operand.vmem [shape: f32[1,128], index: 25, kind: input, shape index: {}]
  %s26 = inlined_call_operand.hbm [shape: f32[2,1,128], index: 26, kind: output, shape index: {}]
  %s27 = sld [smem:[#allocation0]]
  $region157: #{tpu_custom_call.1} parent=0
    _
  %s29 = ssub.s32 1, %s27
  %s30 = scalar_select 0, %s29, %s27
  $region1: #{tpu_custom_call.1} parent=0
    #allocation2 [shape = 'u8[98304]{0}', space=vmem, size = 0x18000, scoped, tag = 'input window, operand 12, single buffered']
    #allocation3 [shape = 's32[2]{0}', space=sflag, size = 0x8, scoped, tag = 'scoped memory for tpu_custom_call.1']
    #allocation4 [shape = 's32[2]{0}', space=sflag, size = 0x8, scoped, tag = 'scoped memory for tpu_custom_call.1']
    #allocation5 [shape = 'u8[3072]{0}', space=vmem, size = 0xc00, scoped, tag = 'input window, operand 17, single buffered']
    #allocation6 [shape = 's32[1]{0}', space=sflag, size = 0x4, scoped, tag = 'scoped memory for tpu_custom_call.1']
    #allocation7 [shape = 'u8[3072]{0}', space=vmem, size = 0xc00, scoped, tag = 'input window, operand 19, single buffered']
    #allocation8 [shape = 'u8[3072]{0}', space=vmem, size = 0xc00, scoped, tag = 'input window, operand 21, single buffered']
    #allocation9 [shape = 's32[1]{0}', space=sflag, size = 0x4, scoped, tag = 'scoped memory for tpu_custom_call.1']
    #allocation10 [shape = 'u8[3072]{0}', space=vmem, size = 0xc00, scoped, tag = 'input window, operand 23, single buffered']
    #allocation11 [shape = 'u8[1024]{0}', space=vmem, size = 0x400, scoped, tag = 'output window, operand 0']
    %31 = vsyncpa [#allocation3], 0
    %32 = vsyncpa [#allocation6], 0
    %33 = vsyncpa [#allocation9], 0
    %34 = vsyncpa [#allocation4], 0
    %s35 = scalar_lea.sflag [#allocation4], 1
    %36 = vsyncpa %s35, 0
    loop: start=0, step=1, limit=4
    $region2: #{tpu_custom_call.1} parent=1 // loop_pre_header
      _
    $region3: #{tpu_custom_call.1} parent=1 // loop_header
      %s38 = sphi 0, %s42
      %p39 = scmp.ge.s32.totalorder %s38, 4
      %s48 = sphi 0, %s50
      %s51 = sphi 0, %s48
      %s52 = sphi 0, %s51
      %s68 = sphi 0, %s52
      %s74 = sphi 0, %s76
      %s77 = sphi 0, %s74
      %s78 = sphi 0, %s77
      %s94 = sphi 0, %s78
      %s98 = sphi 0, %s98
      %s100 = sphi 0, %s98
      %s101 = sphi 0, %s100
      %s115 = sphi 0, %s101
      %s119 = sphi 0, %s119
      %s121 = sphi 0, %s119
      %s122 = sphi 0, %s121
      %s136 = sphi 0, %s122
      %s140 = sphi 0, %s140
      %s142 = sphi 0, %s140
      %s143 = sphi 0, %s142
      %s157 = sphi 0, %s143
      %s161 = sphi 0, %s161
      %s163 = sphi 0, %s161
      %s164 = sphi 0, %s163
      %s178 = sphi 0, %s164
      %s182 = sphi 0, %s182
      %s184 = sphi 0, %s182
      %s185 = sphi 0, %s184
      %s199 = sphi 0, %s185
      %s203 = sphi 0, %s203
      %s205 = sphi 0, %s203
      %s206 = sphi 0, %s205
      %s220 = sphi 0, %s206
      %s224 = sphi 0, %s224
      %s226 = sphi 0, %s224
      %s227 = sphi 0, %s226
      %s241 = sphi 0, %s227
      %s245 = sphi 0, %s245
      %s247 = sphi 0, %s245
      %s248 = sphi 0, %s247
      %s262 = sphi 0, %s248
      %s266 = sphi 0, %s266
      %s268 = sphi 0, %s266
      %s269 = sphi 0, %s268
      %s283 = sphi 0, %s269
      %s287 = sphi 0, %s287
      %s289 = sphi 0, %s287
      %s290 = sphi 0, %s289
      %s304 = sphi 0, %s290
      %s308 = sphi 0, %s308
      %s310 = sphi 0, %s308
      %s311 = sphi 0, %s310
      %s325 = sphi 0, %s311
      %s329 = sphi 0, %s329
      %s331 = sphi 0, %s329
      %s332 = sphi 0, %s331
      %s346 = sphi 0, %s332
      %s350 = sphi 0, %s350
      %s352 = sphi 0, %s350
      %s353 = sphi 0, %s352
      %s367 = sphi 0, %s353
      %s371 = sphi 0, %s371
      %s373 = sphi 0, %s371
      %s374 = sphi 0, %s373
      %s388 = sphi 0, %s374
      %s392 = sphi 0, %s392
      %s394 = sphi 0, %s392
      %s395 = sphi 0, %s394
      %s409 = sphi 0, %s395
      %s413 = sphi 0, %s413
      %s415 = sphi 0, %s413
      %s416 = sphi 0, %s415
      %s430 = sphi 0, %s416
      %s434 = sphi 0, %s434
      %s436 = sphi 0, %s434
      %s437 = sphi 0, %s436
      %s451 = sphi 0, %s437
      %s455 = sphi 0, %s455
      %s457 = sphi 0, %s455
      %s458 = sphi 0, %s457
      %s472 = sphi 0, %s458
      %s476 = sphi 0, %s476
      %s478 = sphi 0, %s476
      %s479 = sphi 0, %s478
      %s493 = sphi 0, %s479
      %s497 = sphi 0, %s497
      %s499 = sphi 0, %s497
      %s500 = sphi 0, %s499
      %s514 = sphi 0, %s500
      %s518 = sphi 0, %s518
      %s520 = sphi 0, %s518
      %s521 = sphi 0, %s520
      %s535 = sphi 0, %s521
      %s539 = sphi 0, %s539
      %s541 = sphi 0, %s539
      %s542 = sphi 0, %s541
      %s556 = sphi 0, %s542
      %s560 = sphi 0, %s560
      %s562 = sphi 0, %s560
      %s563 = sphi 0, %s562
      %s577 = sphi 0, %s563
      %s581 = sphi 0, %s581
      %s583 = sphi 0, %s581
      %s584 = sphi 0, %s583
      %s598 = sphi 0, %s584
      %s604 = sphi 0, %s606
      %s607 = sphi 0, %s604
      %s608 = sphi 0, %s607
      %s624 = sphi 0, %s608
    $region4: #{tpu_custom_call.1} parent=1 // loop_header_branch
      %41 = sbr.rel (%p39) target = $region8
    $region5: #{tpu_custom_call.1} parent=1 // loop_body
      %s43 = ssub.s32 %s38, 1
      %s44 = ssub.s32 %s38, 2
      %s45 = sadd.s32 %s38, 1
      %s46 = ssub.s32 %s38, %s45
      %p47 = scmp.eq.s32.totalorder %s46, 0
      %s49 = sadd.s32 %s48, 1
      %s50 = scalar_select %p47, %s48, %s49
      %p53 = pneg %p47
      %p54 = scmp.eq.s32.totalorder %s38, 1
      %p55 = por %p53, %p54
      %p56 = scmp.ne.s32.totalorder %s48, %s51
      %p57 = scmp.eq.s32.totalorder %s38, 0
      %p58 = por %p56, %p57
      %p59 = scmp.ne.s32.totalorder %s48, %s51
      %p60 = scmp.eq.s32.totalorder %s43, 1
      %p61 = por %p59, %p60
      %p62 = scmp.ne.s32.totalorder %s51, %s52
      %p63 = scmp.eq.s32.totalorder %s43, 0
      %p64 = por %p62, %p63
      %p65 = scmp.ne.s32.totalorder %s51, %s52
      %p66 = scmp.eq.s32.totalorder %s44, 1
      %p67 = por %p65, %p66
      %p69 = scmp.ne.s32.totalorder %s52, %s68
      %p70 = scmp.eq.s32.totalorder %s44, 0
      %p71 = por %p69, %p70
      %s72 = ssub.s32 %s38, %s45
      %p73 = scmp.eq.s32.totalorder %s72, 0
      %s75 = sadd.s32 %s74, 1
      %s76 = scalar_select %p73, %s74, %s75
      %p79 = pneg %p73
      %p80 = scmp.eq.s32.totalorder %s38, 1
      %p81 = por %p79, %p80
      %p82 = scmp.ne.s32.totalorder %s74, %s77
      %p83 = scmp.eq.s32.totalorder %s38, 0
      %p84 = por %p82, %p83
      %p85 = scmp.ne.s32.totalorder %s74, %s77
      %p86 = scmp.eq.s32.totalorder %s43, 1
      %p87 = por %p85, %p86
      %p88 = scmp.ne.s32.totalorder %s77, %s78
      %p89 = scmp.eq.s32.totalorder %s43, 0
      %p90 = por %p88, %p89
      %p91 = scmp.ne.s32.totalorder %s77, %s78
      %p92 = scmp.eq.s32.totalorder %s44, 1
      %p93 = por %p91, %p92
      %p95 = scmp.ne.s32.totalorder %s78, %s94
      %p96 = scmp.eq.s32.totalorder %s44, 0
      %p97 = por %p95, %p96
      %s99 = sadd.s32 %s98, 1
      %p102 = scmp.eq.s32.totalorder %s38, 1
      %p103 = scmp.ne.s32.totalorder %s98, %s100
      %p104 = scmp.eq.s32.totalorder %s38, 0
      %p105 = por %p103, %p104
      %p106 = scmp.ne.s32.totalorder %s98, %s100
      %p107 = scmp.eq.s32.totalorder %s43, 1
      %p108 = por %p106, %p107
      %p109 = scmp.ne.s32.totalorder %s100, %s101
      %p110 = scmp.eq.s32.totalorder %s43, 0
      %p111 = por %p109, %p110
      %p112 = scmp.ne.s32.totalorder %s100, %s101
      %p113 = scmp.eq.s32.totalorder %s44, 1
      %p114 = por %p112, %p113
      %p116 = scmp.ne.s32.totalorder %s101, %s115
      %p117 = scmp.eq.s32.totalorder %s44, 0
      %p118 = por %p116, %p117
      %s120 = sadd.s32 %s119, 1
      %p123 = scmp.eq.s32.totalorder %s38, 1
      %p124 = scmp.ne.s32.totalorder %s119, %s121
      %p125 = scmp.eq.s32.totalorder %s38, 0
      %p126 = por %p124, %p125
      %p127 = scmp.ne.s32.totalorder %s119, %s121
      %p128 = scmp.eq.s32.totalorder %s43, 1
      %p129 = por %p127, %p128
      %p130 = scmp.ne.s32.totalorder %s121, %s122
      %p131 = scmp.eq.s32.totalorder %s43, 0
      %p132 = por %p130, %p131
      %p133 = scmp.ne.s32.totalorder %s121, %s122
      %p134 = scmp.eq.s32.totalorder %s44, 1
      %p135 = por %p133, %p134
      %p137 = scmp.ne.s32.totalorder %s122, %s136
      %p138 = scmp.eq.s32.totalorder %s44, 0
      %p139 = por %p137, %p138
      %s141 = sadd.s32 %s140, 1
      %p144 = scmp.eq.s32.totalorder %s38, 1
      %p145 = scmp.ne.s32.totalorder %s140, %s142
      %p146 = scmp.eq.s32.totalorder %s38, 0
      %p147 = por %p145, %p146
      %p148 = scmp.ne.s32.totalorder %s140, %s142
      %p149 = scmp.eq.s32.totalorder %s43, 1
      %p150 = por %p148, %p149
      %p151 = scmp.ne.s32.totalorder %s142, %s143
      %p152 = scmp.eq.s32.totalorder %s43, 0
      %p153 = por %p151, %p152
      %p154 = scmp.ne.s32.totalorder %s142, %s143
      %p155 = scmp.eq.s32.totalorder %s44, 1
      %p156 = por %p154, %p155
      %p158 = scmp.ne.s32.totalorder %s143, %s157
      %p159 = scmp.eq.s32.totalorder %s44, 0
      %p160 = por %p158, %p159
      %s162 = sadd.s32 %s161, 1
      %p165 = scmp.eq.s32.totalorder %s38, 1
      %p166 = scmp.ne.s32.totalorder %s161, %s163
      %p167 = scmp.eq.s32.totalorder %s38, 0
      %p168 = por %p166, %p167
      %p169 = scmp.ne.s32.totalorder %s161, %s163
      %p170 = scmp.eq.s32.totalorder %s43, 1
      %p171 = por %p169, %p170
      %p172 = scmp.ne.s32.totalorder %s163, %s164
      %p173 = scmp.eq.s32.totalorder %s43, 0
      %p174 = por %p172, %p173
      %p175 = scmp.ne.s32.totalorder %s163, %s164
      %p176 = scmp.eq.s32.totalorder %s44, 1
      %p177 = por %p175, %p176
      %p179 = scmp.ne.s32.totalorder %s164, %s178
      %p180 = scmp.eq.s32.totalorder %s44, 0
      %p181 = por %p179, %p180
      %s183 = sadd.s32 %s182, 1
      %p186 = scmp.eq.s32.totalorder %s38, 1
      %p187 = scmp.ne.s32.totalorder %s182, %s184
      %p188 = scmp.eq.s32.totalorder %s38, 0
      %p189 = por %p187, %p188
      %p190 = scmp.ne.s32.totalorder %s182, %s184
      %p191 = scmp.eq.s32.totalorder %s43, 1
      %p192 = por %p190, %p191
      %p193 = scmp.ne.s32.totalorder %s184, %s185
      %p194 = scmp.eq.s32.totalorder %s43, 0
      %p195 = por %p193, %p194
      %p196 = scmp.ne.s32.totalorder %s184, %s185
      %p197 = scmp.eq.s32.totalorder %s44, 1
      %p198 = por %p196, %p197
      %p200 = scmp.ne.s32.totalorder %s185, %s199
      %p201 = scmp.eq.s32.totalorder %s44, 0
      %p202 = por %p200, %p201
      %s204 = sadd.s32 %s203, 1
      %p207 = scmp.eq.s32.totalorder %s38, 1
      %p208 = scmp.ne.s32.totalorder %s203, %s205
      %p209 = scmp.eq.s32.totalorder %s38, 0
      %p210 = por %p208, %p209
      %p211 = scmp.ne.s32.totalorder %s203, %s205
      %p212 = scmp.eq.s32.totalorder %s43, 1
      %p213 = por %p211, %p212
      %p214 = scmp.ne.s32.totalorder %s205, %s206
      %p215 = scmp.eq.s32.totalorder %s43, 0
      %p216 = por %p214, %p215
      %p217 = scmp.ne.s32.totalorder %s205, %s206
      %p218 = scmp.eq.s32.totalorder %s44, 1
      %p219 = por %p217, %p218
      %p221 = scmp.ne.s32.totalorder %s206, %s220
      %p222 = scmp.eq.s32.totalorder %s44, 0
      %p223 = por %p221, %p222
      %s225 = sadd.s32 %s224, 1
      %p228 = scmp.eq.s32.totalorder %s38, 1
      %p229 = scmp.ne.s32.totalorder %s224, %s226
      %p230 = scmp.eq.s32.totalorder %s38, 0
      %p231 = por %p229, %p230
      %p232 = scmp.ne.s32.totalorder %s224, %s226
      %p233 = scmp.eq.s32.totalorder %s43, 1
      %p234 = por %p232, %p233
      %p235 = scmp.ne.s32.totalorder %s226, %s227
      %p236 = scmp.eq.s32.totalorder %s43, 0
      %p237 = por %p235, %p236
      %p238 = scmp.ne.s32.totalorder %s226, %s227
      %p239 = scmp.eq.s32.totalorder %s44, 1
      %p240 = por %p238, %p239
      %p242 = scmp.ne.s32.totalorder %s227, %s241
      %p243 = scmp.eq.s32.totalorder %s44, 0
      %p244 = por %p242, %p243
      %s246 = sadd.s32 %s245, 1
      %p249 = scmp.eq.s32.totalorder %s38, 1
      %p250 = scmp.ne.s32.totalorder %s245, %s247
      %p251 = scmp.eq.s32.totalorder %s38, 0
      %p252 = por %p250, %p251
      %p253 = scmp.ne.s32.totalorder %s245, %s247
      %p254 = scmp.eq.s32.totalorder %s43, 1
      %p255 = por %p253, %p254
      %p256 = scmp.ne.s32.totalorder %s247, %s248
      %p257 = scmp.eq.s32.totalorder %s43, 0
      %p258 = por %p256, %p257
      %p259 = scmp.ne.s32.totalorder %s247, %s248
      %p260 = scmp.eq.s32.totalorder %s44, 1
      %p261 = por %p259, %p260
      %p263 = scmp.ne.s32.totalorder %s248, %s262
      %p264 = scmp.eq.s32.totalorder %s44, 0
      %p265 = por %p263, %p264
      %s267 = sadd.s32 %s266, 1
      %p270 = scmp.eq.s32.totalorder %s38, 1
      %p271 = scmp.ne.s32.totalorder %s266, %s268
      %p272 = scmp.eq.s32.totalorder %s38, 0
      %p273 = por %p271, %p272
      %p274 = scmp.ne.s32.totalorder %s266, %s268
      %p275 = scmp.eq.s32.totalorder %s43, 1
      %p276 = por %p274, %p275
      %p277 = scmp.ne.s32.totalorder %s268, %s269
      %p278 = scmp.eq.s32.totalorder %s43, 0
      %p279 = por %p277, %p278
      %p280 = scmp.ne.s32.totalorder %s268, %s269
      %p281 = scmp.eq.s32.totalorder %s44, 1
      %p282 = por %p280, %p281
      %p284 = scmp.ne.s32.totalorder %s269, %s283
      %p285 = scmp.eq.s32.totalorder %s44, 0
      %p286 = por %p284, %p285
      %s288 = sadd.s32 %s287, 1
      %p291 = scmp.eq.s32.totalorder %s38, 1
      %p292 = scmp.ne.s32.totalorder %s287, %s289
      %p293 = scmp.eq.s32.totalorder %s38, 0
      %p294 = por %p292, %p293
      %p295 = scmp.ne.s32.totalorder %s287, %s289
      %p296 = scmp.eq.s32.totalorder %s43, 1
      %p297 = por %p295, %p296
      %p298 = scmp.ne.s32.totalorder %s289, %s290
      %p299 = scmp.eq.s32.totalorder %s43, 0
      %p300 = por %p298, %p299
      %p301 = scmp.ne.s32.totalorder %s289, %s290
      %p302 = scmp.eq.s32.totalorder %s44, 1
      %p303 = por %p301, %p302
      %p305 = scmp.ne.s32.totalorder %s290, %s304
      %p306 = scmp.eq.s32.totalorder %s44, 0
      %p307 = por %p305, %p306
      %s309 = sadd.s32 %s308, 1
      %p312 = scmp.eq.s32.totalorder %s38, 1
      %p313 = scmp.ne.s32.totalorder %s308, %s310
      %p314 = scmp.eq.s32.totalorder %s38, 0
      %p315 = por %p313, %p314
      %p316 = scmp.ne.s32.totalorder %s308, %s310
      %p317 = scmp.eq.s32.totalorder %s43, 1
      %p318 = por %p316, %p317
      %p319 = scmp.ne.s32.totalorder %s310, %s311
      %p320 = scmp.eq.s32.totalorder %s43, 0
      %p321 = por %p319, %p320
      %p322 = scmp.ne.s32.totalorder %s310, %s311
      %p323 = scmp.eq.s32.totalorder %s44, 1
      %p324 = por %p322, %p323
      %p326 = scmp.ne.s32.totalorder %s311, %s325
      %p327 = scmp.eq.s32.totalorder %s44, 0
      %p328 = por %p326, %p327
      %s330 = sadd.s32 %s329, 1
      %p333 = scmp.eq.s32.totalorder %s38, 1
      %p334 = scmp.ne.s32.totalorder %s329, %s331
      %p335 = scmp.eq.s32.totalorder %s38, 0
      %p336 = por %p334, %p335
      %p337 = scmp.ne.s32.totalorder %s329, %s331
      %p338 = scmp.eq.s32.totalorder %s43, 1
      %p339 = por %p337, %p338
      %p340 = scmp.ne.s32.totalorder %s331, %s332
      %p341 = scmp.eq.s32.totalorder %s43, 0
      %p342 = por %p340, %p341
      %p343 = scmp.ne.s32.totalorder %s331, %s332
      %p344 = scmp.eq.s32.totalorder %s44, 1
      %p345 = por %p343, %p344
      %p347 = scmp.ne.s32.totalorder %s332, %s346
      %p348 = scmp.eq.s32.totalorder %s44, 0
      %p349 = por %p347, %p348
      %s351 = sadd.s32 %s350, 1
      %p354 = scmp.eq.s32.totalorder %s38, 1
      %p355 = scmp.ne.s32.totalorder %s350, %s352
      %p356 = scmp.eq.s32.totalorder %s38, 0
      %p357 = por %p355, %p356
      %p358 = scmp.ne.s32.totalorder %s350, %s352
      %p359 = scmp.eq.s32.totalorder %s43, 1
      %p360 = por %p358, %p359
      %p361 = scmp.ne.s32.totalorder %s352, %s353
      %p362 = scmp.eq.s32.totalorder %s43, 0
      %p363 = por %p361, %p362
      %p364 = scmp.ne.s32.totalorder %s352, %s353
      %p365 = scmp.eq.s32.totalorder %s44, 1
      %p366 = por %p364, %p365
      %p368 = scmp.ne.s32.totalorder %s353, %s367
      %p369 = scmp.eq.s32.totalorder %s44, 0
      %p370 = por %p368, %p369
      %s372 = sadd.s32 %s371, 1
      %p375 = scmp.eq.s32.totalorder %s38, 1
      %p376 = scmp.ne.s32.totalorder %s371, %s373
      %p377 = scmp.eq.s32.totalorder %s38, 0
      %p378 = por %p376, %p377
      %p379 = scmp.ne.s32.totalorder %s371, %s373
      %p380 = scmp.eq.s32.totalorder %s43, 1
      %p381 = por %p379, %p380
      %p382 = scmp.ne.s32.totalorder %s373, %s374
      %p383 = scmp.eq.s32.totalorder %s43, 0
      %p384 = por %p382, %p383
      %p385 = scmp.ne.s32.totalorder %s373, %s374
      %p386 = scmp.eq.s32.totalorder %s44, 1
      %p387 = por %p385, %p386
      %p389 = scmp.ne.s32.totalorder %s374, %s388
      %p390 = scmp.eq.s32.totalorder %s44, 0
      %p391 = por %p389, %p390
      %s393 = sadd.s32 %s392, 1
      %p396 = scmp.eq.s32.totalorder %s38, 1
      %p397 = scmp.ne.s32.totalorder %s392, %s394
      %p398 = scmp.eq.s32.totalorder %s38, 0
      %p399 = por %p397, %p398
      %p400 = scmp.ne.s32.totalorder %s392, %s394
      %p401 = scmp.eq.s32.totalorder %s43, 1
      %p402 = por %p400, %p401
      %p403 = scmp.ne.s32.totalorder %s394, %s395
      %p404 = scmp.eq.s32.totalorder %s43, 0
      %p405 = por %p403, %p404
      %p406 = scmp.ne.s32.totalorder %s394, %s395
      %p407 = scmp.eq.s32.totalorder %s44, 1
      %p408 = por %p406, %p407
      %p410 = scmp.ne.s32.totalorder %s395, %s409
      %p411 = scmp.eq.s32.totalorder %s44, 0
      %p412 = por %p410, %p411
      %s414 = sadd.s32 %s413, 1
      %p417 = scmp.eq.s32.totalorder %s38, 1
      %p418 = scmp.ne.s32.totalorder %s413, %s415
      %p419 = scmp.eq.s32.totalorder %s38, 0
      %p420 = por %p418, %p419
      %p421 = scmp.ne.s32.totalorder %s413, %s415
      %p422 = scmp.eq.s32.totalorder %s43, 1
      %p423 = por %p421, %p422
      %p424 = scmp.ne.s32.totalorder %s415, %s416
      %p425 = scmp.eq.s32.totalorder %s43, 0
      %p426 = por %p424, %p425
      %p427 = scmp.ne.s32.totalorder %s415, %s416
      %p428 = scmp.eq.s32.totalorder %s44, 1
      %p429 = por %p427, %p428
      %p431 = scmp.ne.s32.totalorder %s416, %s430
      %p432 = scmp.eq.s32.totalorder %s44, 0
      %p433 = por %p431, %p432
      %s435 = sadd.s32 %s434, 1
      %p438 = scmp.eq.s32.totalorder %s38, 1
      %p439 = scmp.ne.s32.totalorder %s434, %s436
      %p440 = scmp.eq.s32.totalorder %s38, 0
      %p441 = por %p439, %p440
      %p442 = scmp.ne.s32.totalorder %s434, %s436
      %p443 = scmp.eq.s32.totalorder %s43, 1
      %p444 = por %p442, %p443
      %p445 = scmp.ne.s32.totalorder %s436, %s437
      %p446 = scmp.eq.s32.totalorder %s43, 0
      %p447 = por %p445, %p446
      %p448 = scmp.ne.s32.totalorder %s436, %s437
      %p449 = scmp.eq.s32.totalorder %s44, 1
      %p450 = por %p448, %p449
      %p452 = scmp.ne.s32.totalorder %s437, %s451
      %p453 = scmp.eq.s32.totalorder %s44, 0
      %p454 = por %p452, %p453
      %s456 = sadd.s32 %s455, 1
      %p459 = scmp.eq.s32.totalorder %s38, 1
      %p460 = scmp.ne.s32.totalorder %s455, %s457
      %p461 = scmp.eq.s32.totalorder %s38, 0
      %p462 = por %p460, %p461
      %p463 = scmp.ne.s32.totalorder %s455, %s457
      %p464 = scmp.eq.s32.totalorder %s43, 1
      %p465 = por %p463, %p464
      %p466 = scmp.ne.s32.totalorder %s457, %s458
      %p467 = scmp.eq.s32.totalorder %s43, 0
      %p468 = por %p466, %p467
      %p469 = scmp.ne.s32.totalorder %s457, %s458
      %p470 = scmp.eq.s32.totalorder %s44, 1
      %p471 = por %p469, %p470
      %p473 = scmp.ne.s32.totalorder %s458, %s472
      %p474 = scmp.eq.s32.totalorder %s44, 0
      %p475 = por %p473, %p474
      %s477 = sadd.s32 %s476, 1
      %p480 = scmp.eq.s32.totalorder %s38, 1
      %p481 = scmp.ne.s32.totalorder %s476, %s478
      %p482 = scmp.eq.s32.totalorder %s38, 0
      %p483 = por %p481, %p482
      %p484 = scmp.ne.s32.totalorder %s476, %s478
      %p485 = scmp.eq.s32.totalorder %s43, 1
      %p486 = por %p484, %p485
      %p487 = scmp.ne.s32.totalorder %s478, %s479
      %p488 = scmp.eq.s32.totalorder %s43, 0
      %p489 = por %p487, %p488
      %p490 = scmp.ne.s32.totalorder %s478, %s479
      %p491 = scmp.eq.s32.totalorder %s44, 1
      %p492 = por %p490, %p491
      %p494 = scmp.ne.s32.totalorder %s479, %s493
      %p495 = scmp.eq.s32.totalorder %s44, 0
      %p496 = por %p494, %p495
      %s498 = sadd.s32 %s497, 1
      %p501 = scmp.eq.s32.totalorder %s38, 1
      %p502 = scmp.ne.s32.totalorder %s497, %s499
      %p503 = scmp.eq.s32.totalorder %s38, 0
      %p504 = por %p502, %p503
      %p505 = scmp.ne.s32.totalorder %s497, %s499
      %p506 = scmp.eq.s32.totalorder %s43, 1
      %p507 = por %p505, %p506
      %p508 = scmp.ne.s32.totalorder %s499, %s500
      %p509 = scmp.eq.s32.totalorder %s43, 0
      %p510 = por %p508, %p509
      %p511 = scmp.ne.s32.totalorder %s499, %s500
      %p512 = scmp.eq.s32.totalorder %s44, 1
      %p513 = por %p511, %p512
      %p515 = scmp.ne.s32.totalorder %s500, %s514
      %p516 = scmp.eq.s32.totalorder %s44, 0
      %p517 = por %p515, %p516
      %s519 = sadd.s32 %s518, 1
      %p522 = scmp.eq.s32.totalorder %s38, 1
      %p523 = scmp.ne.s32.totalorder %s518, %s520
      %p524 = scmp.eq.s32.totalorder %s38, 0
      %p525 = por %p523, %p524
      %p526 = scmp.ne.s32.totalorder %s518, %s520
      %p527 = scmp.eq.s32.totalorder %s43, 1
      %p528 = por %p526, %p527
      %p529 = scmp.ne.s32.totalorder %s520, %s521
      %p530 = scmp.eq.s32.totalorder %s43, 0
      %p531 = por %p529, %p530
      %p532 = scmp.ne.s32.totalorder %s520, %s521
      %p533 = scmp.eq.s32.totalorder %s44, 1
      %p534 = por %p532, %p533
      %p536 = scmp.ne.s32.totalorder %s521, %s535
      %p537 = scmp.eq.s32.totalorder %s44, 0
      %p538 = por %p536, %p537
      %s540 = sadd.s32 %s539, 1
      %p543 = scmp.eq.s32.totalorder %s38, 1
      %p544 = scmp.ne.s32.totalorder %s539, %s541
      %p545 = scmp.eq.s32.totalorder %s38, 0
      %p546 = por %p544, %p545
      %p547 = scmp.ne.s32.totalorder %s539, %s541
      %p548 = scmp.eq.s32.totalorder %s43, 1
      %p549 = por %p547, %p548
      %p550 = scmp.ne.s32.totalorder %s541, %s542
      %p551 = scmp.eq.s32.totalorder %s43, 0
      %p552 = por %p550, %p551
      %p553 = scmp.ne.s32.totalorder %s541, %s542
      %p554 = scmp.eq.s32.totalorder %s44, 1
      %p555 = por %p553, %p554
      %p557 = scmp.ne.s32.totalorder %s542, %s556
      %p558 = scmp.eq.s32.totalorder %s44, 0
      %p559 = por %p557, %p558
      %s561 = sadd.s32 %s560, 1
      %p564 = scmp.eq.s32.totalorder %s38, 1
      %p565 = scmp.ne.s32.totalorder %s560, %s562
      %p566 = scmp.eq.s32.totalorder %s38, 0
      %p567 = por %p565, %p566
      %p568 = scmp.ne.s32.totalorder %s560, %s562
      %p569 = scmp.eq.s32.totalorder %s43, 1
      %p570 = por %p568, %p569
      %p571 = scmp.ne.s32.totalorder %s562, %s563
      %p572 = scmp.eq.s32.totalorder %s43, 0
      %p573 = por %p571, %p572
      %p574 = scmp.ne.s32.totalorder %s562, %s563
      %p575 = scmp.eq.s32.totalorder %s44, 1
      %p576 = por %p574, %p575
      %p578 = scmp.ne.s32.totalorder %s563, %s577
      %p579 = scmp.eq.s32.totalorder %s44, 0
      %p580 = por %p578, %p579
      %s582 = sadd.s32 %s581, 1
      %p585 = scmp.eq.s32.totalorder %s38, 1
      %p586 = scmp.ne.s32.totalorder %s581, %s583
      %p587 = scmp.eq.s32.totalorder %s38, 0
      %p588 = por %p586, %p587
      %p589 = scmp.ne.s32.totalorder %s581, %s583
      %p590 = scmp.eq.s32.totalorder %s43, 1
      %p591 = por %p589, %p590
      %p592 = scmp.ne.s32.totalorder %s583, %s584
      %p593 = scmp.eq.s32.totalorder %s43, 0
      %p594 = por %p592, %p593
      %p595 = scmp.ne.s32.totalorder %s583, %s584
      %p596 = scmp.eq.s32.totalorder %s44, 1
      %p597 = por %p595, %p596
      %p599 = scmp.ne.s32.totalorder %s584, %s598
      %p600 = scmp.eq.s32.totalorder %s44, 0
      %p601 = por %p599, %p600
      %s602 = ssub.s32 %s38, %s45
      %p603 = scmp.eq.s32.totalorder %s602, 0
      %s605 = sadd.s32 %s604, 1
      %s606 = scalar_select %p603, %s604, %s605
      %p609 = pneg %p603
      %p610 = scmp.eq.s32.totalorder %s38, 1
      %p611 = por %p609, %p610
      %p612 = scmp.ne.s32.totalorder %s604, %s607
      %p613 = scmp.eq.s32.totalorder %s38, 0
      %p614 = por %p612, %p613
      %p615 = scmp.ne.s32.totalorder %s604, %s607
      %p616 = scmp.eq.s32.totalorder %s43, 1
      %p617 = por %p615, %p616
      %p618 = scmp.ne.s32.totalorder %s607, %s608
      %p619 = scmp.eq.s32.totalorder %s43, 0
      %p620 = por %p618, %p619
      %p621 = scmp.ne.s32.totalorder %s607, %s608
      %p622 = scmp.eq.s32.totalorder %s44, 1
      %p623 = por %p621, %p622
      %p625 = scmp.ne.s32.totalorder %s608, %s624
      %p626 = scmp.eq.s32.totalorder %s44, 0
      %p627 = por %p625, %p626
      %p628 = scmp.le.s32.totalorder 1, %s38
      %p629 = scmp.lt.s32.totalorder %s38, 3
      %p630 = pnand %p628, %p629
      %p631 = pneg %p630
      // Predicated region
      $region9: #{tpu_custom_call.1} parent=5 // pred_check
        _
      $region10: #{tpu_custom_call.1} parent=5 // pred_check_branch
        %633 = sbr.rel (%p630) target = $region12
      $region11: #{tpu_custom_call.1} parent=5 // pred_region
        %s634 = ssub.s32 %s38, 1
        // Predicated region
        $region13: #{tpu_custom_call.1} parent=11 // pred_check
          %p635 = pneg %p111
        $region14: #{tpu_custom_call.1} parent=11 // pred_check_branch
          %637 = sbr.rel (%p635) target = $region16
        $region15: #{tpu_custom_call.1} parent=11 // pred_region
          _
        $region16: #{tpu_custom_call.1} parent=11 // pred_fallthru
          _
        // Predicated region
        $region17: #{tpu_custom_call.1} parent=11 // pred_check
          %p638 = pneg %p132
        $region18: #{tpu_custom_call.1} parent=11 // pred_check_branch
          %640 = sbr.rel (%p638) target = $region20
        $region19: #{tpu_custom_call.1} parent=11 // pred_region
          _
        $region20: #{tpu_custom_call.1} parent=11 // pred_fallthru
          _
        // Predicated region
        $region21: #{tpu_custom_call.1} parent=11 // pred_check
          %p641 = pneg %p153
        $region22: #{tpu_custom_call.1} parent=11 // pred_check_branch
          %643 = sbr.rel (%p641) target = $region24
        $region23: #{tpu_custom_call.1} parent=11 // pred_region
          _
        $region24: #{tpu_custom_call.1} parent=11 // pred_fallthru
          _
        // Predicated region
        $region25: #{tpu_custom_call.1} parent=11 // pred_check
          %p644 = pneg %p174
        $region26: #{tpu_custom_call.1} parent=11 // pred_check_branch
          %646 = sbr.rel (%p644) target = $region28
        $region27: #{tpu_custom_call.1} parent=11 // pred_region
          _
        $region28: #{tpu_custom_call.1} parent=11 // pred_fallthru
          _
        // Predicated region
        $region29: #{tpu_custom_call.1} parent=11 // pred_check
          %p647 = pneg %p195
        $region30: #{tpu_custom_call.1} parent=11 // pred_check_branch
          %649 = sbr.rel (%p647) target = $region32
        $region31: #{tpu_custom_call.1} parent=11 // pred_region
          _
        $region32: #{tpu_custom_call.1} parent=11 // pred_fallthru
          _
        // Predicated region
        $region33: #{tpu_custom_call.1} parent=11 // pred_check
          %p650 = pneg %p216
        $region34: #{tpu_custom_call.1} parent=11 // pred_check_branch
          %652 = sbr.rel (%p650) target = $region36
        $region35: #{tpu_custom_call.1} parent=11 // pred_region
          _
        $region36: #{tpu_custom_call.1} parent=11 // pred_fallthru
          _
        // Predicated region
        $region37: #{tpu_custom_call.1} parent=11 // pred_check
          %p653 = pneg %p237
        $region38: #{tpu_custom_call.1} parent=11 // pred_check_branch
          %655 = sbr.rel (%p653) target = $region40
        $region39: #{tpu_custom_call.1} parent=11 // pred_region
          _
        $region40: #{tpu_custom_call.1} parent=11 // pred_fallthru
          _
        // Predicated region
        $region41: #{tpu_custom_call.1} parent=11 // pred_check
          %p656 = pneg %p258
        $region42: #{tpu_custom_call.1} parent=11 // pred_check_branch
          %658 = sbr.rel (%p656) target = $region44
        $region43: #{tpu_custom_call.1} parent=11 // pred_region
          _
        $region44: #{tpu_custom_call.1} parent=11 // pred_fallthru
          _
        // Predicated region
        $region45: #{tpu_custom_call.1} parent=11 // pred_check
          %p659 = pneg %p279
        $region46: #{tpu_custom_call.1} parent=11 // pred_check_branch
          %661 = sbr.rel (%p659) target = $region48
        $region47: #{tpu_custom_call.1} parent=11 // pred_region
          _
        $region48: #{tpu_custom_call.1} parent=11 // pred_fallthru
          _
        // Predicated region
        $region49: #{tpu_custom_call.1} parent=11 // pred_check
          %p662 = pneg %p300
        $region50: #{tpu_custom_call.1} parent=11 // pred_check_branch
          %664 = sbr.rel (%p662) target = $region52
        $region51: #{tpu_custom_call.1} parent=11 // pred_region
          _
        $region52: #{tpu_custom_call.1} parent=11 // pred_fallthru
          _
        // Predicated region
        $region53: #{tpu_custom_call.1} parent=11 // pred_check
          %p665 = pneg %p321
        $region54: #{tpu_custom_call.1} parent=11 // pred_check_branch
          %667 = sbr.rel (%p665) target = $region56
        $region55: #{tpu_custom_call.1} parent=11 // pred_region
          %s669 = ssub.s32 3072, 3072
          %670 = vsyncadd [#allocation3], %s669
          %s671 = sshll.u32 [#allocation2], 4
          %s672 = int_to_ptr.vmem [resolvable:$true] %s671
          %677 = dma.hbm_to_vmem [thread:$0]  %s12, 3072, %s672, [#allocation3], 64, 64, 4
        $region56: #{tpu_custom_call.1} parent=11 // pred_fallthru
          _
        // Predicated region
        $region57: #{tpu_custom_call.1} parent=11 // pred_check
          %p678 = pneg %p342
        $region58: #{tpu_custom_call.1} parent=11 // pred_check_branch
          %680 = sbr.rel (%p678) target = $region60
        $region59: #{tpu_custom_call.1} parent=11 // pred_region
          _
        $region60: #{tpu_custom_call.1} parent=11 // pred_fallthru
          _
        // Predicated region
        $region61: #{tpu_custom_call.1} parent=11 // pred_check
          %p681 = pneg %p363
        $region62: #{tpu_custom_call.1} parent=11 // pred_check_branch
          %683 = sbr.rel (%p681) target = $region64
        $region63: #{tpu_custom_call.1} parent=11 // pred_region
          _
        $region64: #{tpu_custom_call.1} parent=11 // pred_fallthru
          _
        // Predicated region
        $region65: #{tpu_custom_call.1} parent=11 // pred_check
          %p684 = pneg %p384
        $region66: #{tpu_custom_call.1} parent=11 // pred_check_branch
          %686 = sbr.rel (%p684) target = $region68
        $region67: #{tpu_custom_call.1} parent=11 // pred_region
          _
        $region68: #{tpu_custom_call.1} parent=11 // pred_fallthru
          _
        // Predicated region
        $region69: #{tpu_custom_call.1} parent=11 // pred_check
          %p687 = pneg %p405
        $region70: #{tpu_custom_call.1} parent=11 // pred_check_branch
          %689 = sbr.rel (%p687) target = $region72
        $region71: #{tpu_custom_call.1} parent=11 // pred_region
          _
        $region72: #{tpu_custom_call.1} parent=11 // pred_fallthru
          _
        // Predicated region
        $region73: #{tpu_custom_call.1} parent=11 // pred_check
          %p690 = pneg %p426
        $region74: #{tpu_custom_call.1} parent=11 // pred_check_branch
          %692 = sbr.rel (%p690) target = $region76
        $region75: #{tpu_custom_call.1} parent=11 // pred_region
          %s694 = ssub.s32 96, 96
          %695 = vsyncadd [#allocation6], %s694
          %s696 = sshll.u32 [#allocation5], 4
          %s697 = int_to_ptr.vmem [resolvable:$true] %s696
          %702 = dma.hbm_to_vmem [thread:$0]  %s17, 96, %s697, [#allocation6], 16, 16, 1
        $region76: #{tpu_custom_call.1} parent=11 // pred_fallthru
          _
        // Predicated region
        $region77: #{tpu_custom_call.1} parent=11 // pred_check
          %p703 = pneg %p447
        $region78: #{tpu_custom_call.1} parent=11 // pred_check_branch
          %705 = sbr.rel (%p703) target = $region80
        $region79: #{tpu_custom_call.1} parent=11 // pred_region
          _
        $region80: #{tpu_custom_call.1} parent=11 // pred_fallthru
          _
        // Predicated region
        $region81: #{tpu_custom_call.1} parent=11 // pred_check
          %p706 = pneg %p468
        $region82: #{tpu_custom_call.1} parent=11 // pred_check_branch
          %708 = sbr.rel (%p706) target = $region84
        $region83: #{tpu_custom_call.1} parent=11 // pred_region
          %s710 = ssub.s32 96, 96
          %711 = vsyncadd [#allocation6], %s710
          %s712 = sshll.u32 [#allocation7], 4
          %s713 = int_to_ptr.vmem [resolvable:$true] %s712
          %718 = dma.hbm_to_vmem [thread:$0]  %s19, 96, %s713, [#allocation6], 16, 16, 1
        $region84: #{tpu_custom_call.1} parent=11 // pred_fallthru
          _
        // Predicated region
        $region85: #{tpu_custom_call.1} parent=11 // pred_check
          %p719 = pneg %p489
        $region86: #{tpu_custom_call.1} parent=11 // pred_check_branch
          %721 = sbr.rel (%p719) target = $region88
        $region87: #{tpu_custom_call.1} parent=11 // pred_region
          _
        $region88: #{tpu_custom_call.1} parent=11 // pred_fallthru
          _
        // Predicated region
        $region89: #{tpu_custom_call.1} parent=11 // pred_check
          %p722 = pneg %p510
        $region90: #{tpu_custom_call.1} parent=11 // pred_check_branch
          %724 = sbr.rel (%p722) target = $region92
        $region91: #{tpu_custom_call.1} parent=11 // pred_region
          %s726 = ssub.s32 96, 96
          %727 = vsyncadd [#allocation9], %s726
          %s728 = sshll.u32 [#allocation8], 4
          %s729 = int_to_ptr.vmem [resolvable:$true] %s728
          %734 = dma.hbm_to_vmem [thread:$0]  %s21, 96, %s729, [#allocation9], 16, 16, 1
        $region92: #{tpu_custom_call.1} parent=11 // pred_fallthru
          _
        // Predicated region
        $region93: #{tpu_custom_call.1} parent=11 // pred_check
          %p735 = pneg %p531
        $region94: #{tpu_custom_call.1} parent=11 // pred_check_branch
          %737 = sbr.rel (%p735) target = $region96
        $region95: #{tpu_custom_call.1} parent=11 // pred_region
          _
        $region96: #{tpu_custom_call.1} parent=11 // pred_fallthru
          _
        // Predicated region
        $region97: #{tpu_custom_call.1} parent=11 // pred_check
          %p738 = pneg %p552
        $region98: #{tpu_custom_call.1} parent=11 // pred_check_branch
          %740 = sbr.rel (%p738) target = $region100
        $region99: #{tpu_custom_call.1} parent=11 // pred_region
          %s742 = ssub.s32 96, 96
          %743 = vsyncadd [#allocation9], %s742
          %s744 = sshll.u32 [#allocation10], 4
          %s745 = int_to_ptr.vmem [resolvable:$true] %s744
          %750 = dma.hbm_to_vmem [thread:$0]  %s23, 96, %s745, [#allocation9], 16, 16, 1
        $region100: #{tpu_custom_call.1} parent=11 // pred_fallthru
          _
        // Predicated region
        $region101: #{tpu_custom_call.1} parent=11 // pred_check
          %p751 = pneg %p573
        $region102: #{tpu_custom_call.1} parent=11 // pred_check_branch
          %753 = sbr.rel (%p751) target = $region104
        $region103: #{tpu_custom_call.1} parent=11 // pred_region
          _
        $region104: #{tpu_custom_call.1} parent=11 // pred_fallthru
          _
        // Predicated region
        $region105: #{tpu_custom_call.1} parent=11 // pred_check
          %p754 = pneg %p594
        $region106: #{tpu_custom_call.1} parent=11 // pred_check_branch
          %756 = sbr.rel (%p754) target = $region108
        $region107: #{tpu_custom_call.1} parent=11 // pred_region
          _
        $region108: #{tpu_custom_call.1} parent=11 // pred_fallthru
          _
      $region12: #{tpu_custom_call.1} parent=5 // pred_fallthru
        _
      %p757 = scmp.lt.s32.totalorder %s38, 2
      // Predicated region
      $region109: #{tpu_custom_call.1} parent=5 // pred_check
        %p758 = pneg %p757
      $region110: #{tpu_custom_call.1} parent=5 // pred_check_branch
        %760 = sbr.rel (%p758) target = $region112
      $region111: #{tpu_custom_call.1} parent=5 // pred_region
        // Predicated region
        $region113: #{tpu_custom_call.1} parent=111 // pred_check
          %p761 = pneg %p58
        $region114: #{tpu_custom_call.1} parent=111 // pred_check_branch
          %763 = sbr.rel (%p761) target = $region116
        $region115: #{tpu_custom_call.1} parent=111 // pred_region
          %p764 = scmp.lt.s32.totalorder %s38, 1
          %s765 = scalar_select %p764, %s38, 1
          %s766 = smul.addr %s765, 8
          %s767 = scalar_lea.vmem %s0, %s766
        $region116: #{tpu_custom_call.1} parent=111 // pred_fallthru
          _
        // Predicated region
        $region117: #{tpu_custom_call.1} parent=111 // pred_check
          %p768 = pneg %p84
        $region118: #{tpu_custom_call.1} parent=111 // pred_check_branch
          %770 = sbr.rel (%p768) target = $region120
        $region119: #{tpu_custom_call.1} parent=111 // pred_region
          %p771 = scmp.lt.s32.totalorder %s38, 1
          %s772 = scalar_select %p771, %s38, 1
          %s773 = scalar_lea.vmem %s1, %s772
        $region120: #{tpu_custom_call.1} parent=111 // pred_fallthru
          _
      $region112: #{tpu_custom_call.1} parent=5 // pred_fallthru
        _
      %p774 = scmp.le.s32.totalorder 1, %s38
      %p775 = scmp.lt.s32.totalorder %s38, 3
      %p776 = pnand %p774, %p775
      %p777 = pneg %p776
      // Predicated region
      $region121: #{tpu_custom_call.1} parent=5 // pred_check
        _
      $region122: #{tpu_custom_call.1} parent=5 // pred_check_branch
        %779 = sbr.rel (%p776) target = $region124
      $region123: #{tpu_custom_call.1} parent=5 // pred_region
        %s780 = ssub.s32 %s38, 1
        // Predicated region
        $region125: #{tpu_custom_call.1} parent=123 // pred_check
          %p781 = pneg %p321
        $region126: #{tpu_custom_call.1} parent=123 // pred_check_branch
          %783 = sbr.rel (%p781) target = $region128
        $region127: #{tpu_custom_call.1} parent=123 // pred_region
          %784 = dma.done [#allocation3], 3072
        $region128: #{tpu_custom_call.1} parent=123 // pred_fallthru
          _
        // Predicated region
        $region129: #{tpu_custom_call.1} parent=123 // pred_check
          %p785 = pneg %p426
        $region130: #{tpu_custom_call.1} parent=123 // pred_check_branch
          %787 = sbr.rel (%p785) target = $region132
        $region131: #{tpu_custom_call.1} parent=123 // pred_region
          %788 = dma.done [#allocation6], 96
        $region132: #{tpu_custom_call.1} parent=123 // pred_fallthru
          _
        // Predicated region
        $region133: #{tpu_custom_call.1} parent=123 // pred_check
          %p789 = pneg %p468
        $region134: #{tpu_custom_call.1} parent=123 // pred_check_branch
          %791 = sbr.rel (%p789) target = $region136
        $region135: #{tpu_custom_call.1} parent=123 // pred_region
          %792 = dma.done [#allocation6], 96
        $region136: #{tpu_custom_call.1} parent=123 // pred_fallthru
          _
        // Predicated region
        $region137: #{tpu_custom_call.1} parent=123 // pred_check
          %p793 = pneg %p510
        $region138: #{tpu_custom_call.1} parent=123 // pred_check_branch
          %795 = sbr.rel (%p793) target = $region140
        $region139: #{tpu_custom_call.1} parent=123 // pred_region
          %796 = dma.done [#allocation9], 96
        $region140: #{tpu_custom_call.1} parent=123 // pred_fallthru
          _
        // Predicated region
        $region141: #{tpu_custom_call.1} parent=123 // pred_check
          %p797 = pneg %p552
        $region142: #{tpu_custom_call.1} parent=123 // pred_check_branch
          %799 = sbr.rel (%p797) target = $region144
        $region143: #{tpu_custom_call.1} parent=123 // pred_region
          %800 = dma.done [#allocation9], 96
        $region144: #{tpu_custom_call.1} parent=123 // pred_fallthru
          _
        %p801 = scmp.lt.s32.totalorder %s43, 1
        %s802 = scalar_select %p801, %s43, 1
        %s803 = smul.addr %s802, 8
        %s804 = scalar_lea.vmem %s0, %s803
        %p805 = pneg %p64
        %p806 = pneg %p61
        %p807 = scmp.lt.s32.totalorder %s43, 1
        %s808 = scalar_select %p807, %s43, 1
        %s809 = scalar_lea.vmem %s1, %s808
        %p810 = pneg %p90
        %p811 = pneg %p87
        %p812 = pneg %p111
        %p813 = pneg %p108
        %p814 = pneg %p132
        %p815 = pneg %p129
        %p816 = pneg %p153
        %p817 = pneg %p150
        %p818 = pneg %p174
        %p819 = pneg %p171
        %p820 = pneg %p195
        %p821 = pneg %p192
        %p822 = pneg %p216
        %p823 = pneg %p213
        %p824 = pneg %p237
        %p825 = pneg %p234
        %p826 = pneg %p258
        %p827 = pneg %p255
        %p828 = pneg %p279
        %p829 = pneg %p276
        %p830 = pneg %p300
        %p831 = pneg %p297
        %p832 = pneg %p321
        %p833 = pneg %p318
        %p834 = pneg %p342
        %p835 = pneg %p339
        %p836 = pneg %p363
        %p837 = pneg %p360
        %p838 = pneg %p384
        %p839 = pneg %p381
        %p840 = pneg %p405
        %p841 = pneg %p402
        %p842 = pneg %p426
        %p843 = pneg %p423
        %p844 = pneg %p447
        %p845 = pneg %p444
        %p846 = pneg %p468
        %p847 = pneg %p465
        %p848 = pneg %p489
        %p849 = pneg %p486
        %p850 = pneg %p510
        %p851 = pneg %p507
        %p852 = pneg %p531
        %p853 = pneg %p528
        %p854 = pneg %p552
        %p855 = pneg %p549
        %p856 = pneg %p573
        %p857 = pneg %p570
        %p858 = pneg %p594
        %p859 = pneg %p591
        %p860 = pneg %p620
        %p861 = pneg %p617
        %s862 = sand.u32 %s607, 1
        %s863 = scalar_lea.sflag [#allocation4], %s862
        %s864 = sand.u32 %s607, 1
        %s865 = scalar_lea.vmem [#allocation11], %s864
        %p866 = scmp.lt.s32.totalorder %s43, 1
        %s867 = scalar_select %p866, %s43, 1
        %s868 = smul.addr %s867, 8
        %s869 = scalar_lea.vmem %s0, %s868
        %p870 = scmp.lt.s32.totalorder %s43, 1
        %s871 = scalar_select %p870, %s43, 1
        %s872 = scalar_lea.vmem %s1, %s871
        %v874 = vld [vmem:[%s869] sm:$0xff]
        %v875 = vlaneseq
        %v876 = vand.u32 %v875, 127
        %877 = vset.pattern.permute.xlu0 0
        %878 = vperm.xlu0 %877, %v874
        %v879 = vpop.permute.xlu0 %878
        %vm880 = vcmp.eq.s32.totalorder %v879, %v876
        %v881 = vsel %vm880, 1.0, 0.0
        %v882 = vpack.c.bf16 %v881, %v881
        %v883 = vld [vmem:[%s2] sm:$0xf]
        %v884 = vld [vmem:[%s2 + $0x4] sm:$0xf]
        %v885 = vld [vmem:[%s2 + $0x8] sm:$0xf]
        %v886 = vld [vmem:[%s2 + $0xc] sm:$0xf]
        %v887 = vld [vmem:[%s2 + $0x10] sm:$0xf]
        %v888 = vld [vmem:[%s2 + $0x14] sm:$0xf]
        %v889 = vld [vmem:[%s2 + $0x18] sm:$0xf]
        %v890 = vld [vmem:[%s2 + $0x1c] sm:$0xf]
        %v891 = vld [vmem:[%s2 + $0x20] sm:$0xf]
        %v892 = vld [vmem:[%s2 + $0x24] sm:$0xf]
        %v893 = vld [vmem:[%s2 + $0x28] sm:$0xf]
        %v894 = vld [vmem:[%s2 + $0x2c] sm:$0xf]
        %v895 = vld [vmem:[%s2 + $0x30] sm:$0xf]
        %v896 = vld [vmem:[%s2 + $0x34] sm:$0xf]
        %v897 = vld [vmem:[%s2 + $0x38] sm:$0xf]
        %v898 = vld [vmem:[%s2 + $0x3c] sm:$0xf]
        %v899 = vld [vmem:[%s3] sm:$0xff]
        %v916 = vunpack.c.l.b16 %v883
        %v917 = vunpack.c.l.b16 %v884
        %v918 = vunpack.c.l.b16 %v885
        %v919 = vunpack.c.l.b16 %v886
        %v920 = vunpack.c.l.b16 %v887
        %v921 = vunpack.c.l.b16 %v888
        %v922 = vunpack.c.l.b16 %v889
        %v923 = vunpack.c.l.b16 %v890
        %v924 = vunpack.c.l.b16 %v891
        %v925 = vunpack.c.l.b16 %v892
        %v926 = vunpack.c.l.b16 %v893
        %v927 = vunpack.c.l.b16 %v894
        %v928 = vunpack.c.l.b16 %v895
        %v929 = vunpack.c.l.b16 %v896
        %v930 = vunpack.c.l.b16 %v897
        %v931 = vunpack.c.l.b16 %v898
        %v932 = vpack.c.b16 %v917, %v916
        %v933 = vpack.c.b16 %v919, %v918
        %v934 = vpack.c.b16 %v921, %v920
        %v935 = vpack.c.b16 %v923, %v922
        %v936 = vpack.c.b16 %v925, %v924
        %v937 = vpack.c.b16 %v927, %v926
        %v938 = vpack.c.b16 %v929, %v928
        %v939 = vpack.c.b16 %v931, %v930
        %948 = vmatprep.subr.bf16.mxu0 0
        %949 = vmatpush1.bf16.msra.mxu0 %v939
        %950 = vmatprep.subr.bf16.mxu0 0
        %951 = vmatpush1.bf16.msra.mxu0 %v938
        %952 = vmatprep.subr.bf16.mxu0 0
        %953 = vmatpush1.bf16.msra.mxu0 %v937
        %954 = vmatprep.subr.bf16.mxu0 0
        %955 = vmatpush1.bf16.msra.mxu0 %v936
        %956 = vmatprep.subr.bf16.mxu0 0
        %957 = vmatpush1.bf16.msra.mxu0 %v935
        %958 = vmatprep.subr.bf16.mxu0 0
        %959 = vmatpush1.bf16.msra.mxu0 %v934
        %960 = vmatprep.subr.bf16.mxu0 0
        %961 = vmatpush1.bf16.msra.mxu0 %v933
        %962 = vmatprep.subr.bf16.mxu0 0
        %963 = vmatpush1.bf16.msra.mxu0 %v932
        %964 = vmatprep.subr.bf16.mxu0 0
        %965 = vmatpush2.bf16.msra.mxu0 0
        %966 = vmatprep.subr.bf16.mxu0 0
        %967 = vmatpush2.bf16.msra.mxu0 0
        %968 = vmatprep.subr.bf16.mxu0 0
        %969 = vmatpush2.bf16.msra.mxu0 0
        %970 = vmatprep.subr.bf16.mxu0 0
        %971 = vmatpush2.bf16.msra.mxu0 0
        %972 = vmatprep.subr.bf16.mxu0 0
        %973 = vmatpush2.bf16.msra.mxu0 0
        %974 = vmatprep.subr.bf16.mxu0 0
        %975 = vmatpush2.bf16.msra.mxu0 0
        %976 = vmatprep.subr.bf16.mxu0 0
        %977 = vmatpush2.bf16.msra.mxu0 0
        %978 = vmatprep.subr.bf16.mxu0 0
        %979 = vmatpush2.bf16.msra.mxu0 0
        %980 = vmatprep.mubr.bf16.mxu0 0
        %981 = vmatmul.mubr.bf16.gmra.mxu0 %v882
        %v982 = vpop.f32.mrf.mxu0
        %v983 = vadd.f32 %v899, %v982
        %v984 = vpop.f32.mrf.mxu0
        %v985 = vpop.f32.mrf.mxu0
        %v986 = vpop.f32.mrf.mxu0
        %987 = vdwg.mxu0
        %v988 = vld [vmem:[%s4] sm:$0x1]
        %v989 = vld [vmem:[%s5] sm:$0x1]
        %vm990 = vcmask 523264
        %v991 = vsel %vm990, %v983, 0.0
        %992 = vadd.xlane.f32.xlu0 %v991
        %v993 = vpop.xlane.xlu0 %992
        %v994 = vrcp.pop 64.0
        %v995 = vmul.f32 %v993, %v994
        %v996 = vsub.f32 %v983, %v995
        %v997 = vmul.f32 %v996, %v996
        %v998 = vsel %vm990, %v997, 0.0
        %999 = vadd.xlane.f32.xlu0 %v998
        %v1000 = vpop.xlane.xlu0 %999
        %v1001 = vmul.f32 %v1000, %v994
        %v1002 = vadd.f32 %v1001, 1e-12
        %v1003 = vrsqrt.pop %v1002
        %v1004 = vmul.f32 %v996, %v1003
        %v1006 = vlaneseq
        %v1007 = vshrl.u32 %v1006, 7
        %v1008 = vsub.s32 0, %v1007
        %v1009 = vrot.slane %v988, %v1008
        %v1011 = vmul.f32 %v1004, %v1009
        %v1013 = vlaneseq
        %v1014 = vshrl.u32 %v1013, 7
        %v1015 = vsub.s32 0, %v1014
        %v1016 = vrot.slane %v989, %v1015
        %v1018 = vadd.f32 %v1011, %v1016
        %v1019 = vld [vmem:[%s872] sm:$0x1]
        %vm1020 = vcmp.eq.f32.partialorder %v1019, 0.0
        %v1021 = vpack.c.bf16 %v1018, %v1018
        %v1022 = vld [vmem:[%s6] sm:$0xff]
        %v1023 = vld [vmem:[%s6 + $0x8] sm:$0xff]
        %v1024 = vld [vmem:[%s6 + $0x10] sm:$0xff]
        %v1025 = vld [vmem:[%s6 + $0x18] sm:$0xff]
        %v1026 = vld [vmem:[%s6 + $0x20] sm:$0xff]
        %v1027 = vld [vmem:[%s6 + $0x28] sm:$0xff]
        %v1028 = vld [vmem:[%s6 + $0x30] sm:$0xff]
        %v1029 = vld [vmem:[%s6 + $0x38] sm:$0xff]
        %v1030 = vld [vmem:[%s7] sm:$0x3]
        %v1032 = vlaneseq
        %v1033 = vshrl.u32 %v1032, 7
        %v1034 = vsub.s32 0, %v1033
        %v1035 = vrot.slane %v1030, %v1034
        %v1036 = vlaneseq
        %v1037 = vshrl.u32 %v1036, 7
        %v1038 = vsub.s32 1, %v1037
        %v1039 = vrot.slane %v1030, %v1038
        %v1050 = vunpack.c.l.b16 %v1022
        %v1051 = vunpack.c.h.b16 %v1022
        %v1052 = vunpack.c.l.b16 %v1023
        %v1053 = vunpack.c.h.b16 %v1023
        %v1054 = vunpack.c.l.b16 %v1024
        %v1055 = vunpack.c.h.b16 %v1024
        %v1056 = vunpack.c.l.b16 %v1025
        %v1057 = vunpack.c.h.b16 %v1025
        %v1058 = vunpack.c.l.b16 %v1026
        %v1059 = vunpack.c.h.b16 %v1026
        %v1060 = vunpack.c.l.b16 %v1027
        %v1061 = vunpack.c.h.b16 %v1027
        %v1062 = vunpack.c.l.b16 %v1028
        %v1063 = vunpack.c.h.b16 %v1028
        %v1064 = vunpack.c.l.b16 %v1029
        %v1065 = vunpack.c.h.b16 %v1029
        %v1066 = vpack.c.b16 %v1052, %v1050
        %v1067 = vpack.c.b16 %v1053, %v1051
        %v1068 = vpack.c.b16 %v1056, %v1054
        %v1069 = vpack.c.b16 %v1057, %v1055
        %v1070 = vpack.c.b16 %v1060, %v1058
        %v1071 = vpack.c.b16 %v1061, %v1059
        %v1072 = vpack.c.b16 %v1064, %v1062
        %v1073 = vpack.c.b16 %v1065, %v1063
        %v1083 = vsel %vm990, %v1021, 0
        %1085 = vmatprep.subr.bf16.mxu0 0
        %1086 = vmatpush1.bf16.msra.mxu0 0
        %1087 = vmatprep.subr.bf16.mxu0 0
        %1088 = vmatpush1.bf16.msra.mxu0 0
        %1089 = vmatprep.subr.bf16.mxu0 0
        %1090 = vmatpush1.bf16.msra.mxu0 0
        %1091 = vmatprep.subr.bf16.mxu0 0
        %1092 = vmatpush1.bf16.msra.mxu0 0
        %1093 = vmatprep.subr.bf16.mxu0 %v1073
        %1094 = vmatpush1.bf16.msra.mxu0 %v1072
        %1095 = vmatprep.subr.bf16.mxu0 %v1071
        %1096 = vmatpush1.bf16.msra.mxu0 %v1070
        %1097 = vmatprep.subr.bf16.mxu0 %v1069
        %1098 = vmatpush1.bf16.msra.mxu0 %v1068
        %1099 = vmatprep.subr.bf16.mxu0 %v1067
        %1100 = vmatpush1.bf16.msra.mxu0 %v1066
        %1101 = vmatprep.subr.bf16.mxu0 0
        %1102 = vmatpush2.bf16.msra.mxu0 0
        %1103 = vmatprep.subr.bf16.mxu0 0
        %1104 = vmatpush2.bf16.msra.mxu0 0
        %1105 = vmatprep.subr.bf16.mxu0 0
        %1106 = vmatpush2.bf16.msra.mxu0 0
        %1107 = vmatprep.subr.bf16.mxu0 0
        %1108 = vmatpush2.bf16.msra.mxu0 0
        %1109 = vmatprep.subr.bf16.mxu0 0
        %1110 = vmatpush2.bf16.msra.mxu0 0
        %1111 = vmatprep.subr.bf16.mxu0 0
        %1112 = vmatpush2.bf16.msra.mxu0 0
        %1113 = vmatprep.subr.bf16.mxu0 0
        %1114 = vmatpush2.bf16.msra.mxu0 0
        %1115 = vmatprep.subr.bf16.mxu0 0
        %1116 = vmatpush2.bf16.msra.mxu0 0
        %1117 = vmatprep.mubr.bf16.mxu0 0
        %1118 = vmatmul.mubr.bf16.gmra.mxu0 %v1083
        %v1119 = vpop.f32.mrf.mxu0
        %v1120 = vadd.f32 %v1035, %v1119
        %v1121 = vpop.f32.mrf.mxu0
        %v1122 = vadd.f32 %v1039, %v1121
        %v1123 = vpop.f32.mrf.mxu0
        %v1124 = vpop.f32.mrf.mxu0
        %1125 = vdwg.mxu0
        %v1126 = vpack.c.bf16 %v1120, %v1120
        %v1127 = vpack.c.bf16 %v1122, %v1122
        %1129 = vrot.lane.b32.xlu0 %v1126, 64
        %v1130 = vpop.permute.xlu0 %1129
        %vm1131 = vcmask 130048
        %v1133 = vsel %vm1131, %v1126, 0
        %v1136 = vsel %vm1131, %v1130, 0
        %1138 = vmatprep.subr.bf16.mxu0 0
        %1139 = vmatpush1.bf16.xpose.msra.mxu0 0
        %1140 = vmatprep.subr.bf16.mxu0 0
        %1141 = vmatpush1.bf16.xpose.msra.mxu0 0
        %1142 = vmatprep.subr.bf16.mxu0 0
        %1143 = vmatpush1.bf16.xpose.msra.mxu0 0
        %1144 = vmatprep.subr.bf16.mxu0 0
        %1145 = vmatpush1.bf16.xpose.msra.mxu0 0
        %1146 = vmatprep.subr.bf16.mxu0 0
        %1147 = vmatpush1.bf16.xpose.msra.mxu0 0
        %1148 = vmatprep.subr.bf16.mxu0 0
        %1149 = vmatpush1.bf16.xpose.msra.mxu0 0
        %1150 = vmatprep.subr.bf16.mxu0 0
        %1151 = vmatpush1.bf16.xpose.msra.mxu0 0
        %1152 = vmatprep.subr.bf16.mxu0 0
        %1153 = vmatpush1.bf16.xpose.msra.mxu0 %v1136
        %1154 = vmatprep.subr.bf16.mxu0 0
        %1155 = vmatpush2.bf16.xpose.msra.mxu0 0
        %1156 = vmatprep.subr.bf16.mxu0 0
        %1157 = vmatpush2.bf16.xpose.msra.mxu0 0
        %1158 = vmatprep.subr.bf16.mxu0 0
        %1159 = vmatpush2.bf16.xpose.msra.mxu0 0
        %1160 = vmatprep.subr.bf16.mxu0 0
        %1161 = vmatpush2.bf16.xpose.msra.mxu0 0
        %1162 = vmatprep.subr.bf16.mxu0 0
        %1163 = vmatpush2.bf16.xpose.msra.mxu0 0
        %1164 = vmatprep.subr.bf16.mxu0 0
        %1165 = vmatpush2.bf16.xpose.msra.mxu0 0
        %1166 = vmatprep.subr.bf16.mxu0 0
        %1167 = vmatpush2.bf16.xpose.msra.mxu0 0
        %1168 = vmatprep.subr.bf16.mxu0 0
        %1169 = vmatpush2.bf16.xpose.msra.mxu0 0
        %1170 = vmatprep.mubr.bf16.mxu0 0
        %1171 = vmatmul.mubr.bf16.gmra.mxu0 %v1133
        %v1172 = vpop.f32.mrf.mxu0
        %v1173 = vadd.f32 0.0, %v1172
        %v1174 = vpop.f32.mrf.mxu0
        %v1175 = vpop.f32.mrf.mxu0
        %v1176 = vpop.f32.mrf.mxu0
        %1177 = vdwg.mxu0
        %v1178 = vsel %vm1020, 1, 0
        %v1179 = vlaneseq
        %v1180 = vshrl.u32 %v1179, 7
        %v1181 = vsub.s32 0, %v1180
        %v1182 = vrot.slane %v1178, %v1181
        %vm1183 = vcmp.eq.s32.totalorder %v1182, 1
        %v1184 = vsel %vm1183, -3.4028235e+38, %v1173
        %vm1185 = vcmask 64512
        %v1186 = vsel %vm1185, %v1184, -inf
        %1187 = vmax.xlane.f32.xlu0 %v1186
        %v1188 = vpop.xlane.xlu0 %1187
        %v1189 = vsub.f32 %v1184, %v1188
        %v1190 = vmul.f32 %v1189, 1.442695
        %v1191 = vpow.pop %v1190
        %v1192 = vsel %vm1185, %v1191, 0.0
        %1193 = vadd.xlane.f32.xlu0 %v1192
        %v1194 = vpop.xlane.xlu0 %1193
        %v1195 = vrcp.pop %v1194
        %v1196 = vmul.f32 %v1191, %v1195
        %v1197 = vpack.c.bf16 %v1196, %v1196
        %v1199 = vsel %vm1185, %v1197, 0
        %vm1201 = vcmask 1043456
        %v1203 = vsel %vm1201, %v1127, 0
        %1205 = vmatprep.subr.bf16.mxu0 0
        %1206 = vmatpush1.bf16.msra.mxu0 0
        %1207 = vmatprep.subr.bf16.mxu0 0
        %1208 = vmatpush1.bf16.msra.mxu0 0
        %1209 = vmatprep.subr.bf16.mxu0 0
        %1210 = vmatpush1.bf16.msra.mxu0 0
        %1211 = vmatprep.subr.bf16.mxu0 0
        %1212 = vmatpush1.bf16.msra.mxu0 0
        %1213 = vmatprep.subr.bf16.mxu0 0
        %1214 = vmatpush1.bf16.msra.mxu0 0
        %1215 = vmatprep.subr.bf16.mxu0 0
        %1216 = vmatpush1.bf16.msra.mxu0 0
        %1217 = vmatprep.subr.bf16.mxu0 0
        %1218 = vmatpush1.bf16.msra.mxu0 0
        %1219 = vmatprep.subr.bf16.mxu0 0
        %1220 = vmatpush1.bf16.msra.mxu0 %v1203
        %1221 = vmatprep.subr.bf16.mxu0 0
        %1222 = vmatpush2.bf16.msra.mxu0 0
        %1223 = vmatprep.subr.bf16.mxu0 0
        %1224 = vmatpush2.bf16.msra.mxu0 0
        %1225 = vmatprep.subr.bf16.mxu0 0
        %1226 = vmatpush2.bf16.msra.mxu0 0
        %1227 = vmatprep.subr.bf16.mxu0 0
        %1228 = vmatpush2.bf16.msra.mxu0 0
        %1229 = vmatprep.subr.bf16.mxu0 0
        %1230 = vmatpush2.bf16.msra.mxu0 0
        %1231 = vmatprep.subr.bf16.mxu0 0
        %1232 = vmatpush2.bf16.msra.mxu0 0
        %1233 = vmatprep.subr.bf16.mxu0 0
        %1234 = vmatpush2.bf16.msra.mxu0 0
        %1235 = vmatprep.subr.bf16.mxu0 0
        %1236 = vmatpush2.bf16.msra.mxu0 0
        %1237 = vmatprep.mubr.bf16.mxu0 0
        %1238 = vmatmul.mubr.bf16.gmra.mxu0 %v1199
        %v1239 = vpop.f32.mrf.mxu0
        %v1240 = vadd.f32 0.0, %v1239
        %v1241 = vpop.f32.mrf.mxu0
        %v1242 = vpop.f32.mrf.mxu0
        %v1243 = vpop.f32.mrf.mxu0
        %1244 = vdwg.mxu0
        %1245 = vrot.lane.b32.xlu0 %v1126, 112
        %v1246 = vpop.permute.xlu0 %1245
        %1247 = vrot.lane.b32.xlu0 %v1126, 48
        %v1248 = vpop.permute.xlu0 %1247
        %v1250 = vsel %vm1131, %v1246, 0
        %v1253 = vsel %vm1131, %v1248, 0
        %1255 = vmatprep.subr.bf16.mxu0 0
        %1256 = vmatpush1.bf16.xpose.msra.mxu0 0
        %1257 = vmatprep.subr.bf16.mxu0 0
        %1258 = vmatpush1.bf16.xpose.msra.mxu0 0
        %1259 = vmatprep.subr.bf16.mxu0 0
        %1260 = vmatpush1.bf16.xpose.msra.mxu0 0
        %1261 = vmatprep.subr.bf16.mxu0 0
        %1262 = vmatpush1.bf16.xpose.msra.mxu0 0
        %1263 = vmatprep.subr.bf16.mxu0 0
        %1264 = vmatpush1.bf16.xpose.msra.mxu0 0
        %1265 = vmatprep.subr.bf16.mxu0 0
        %1266 = vmatpush1.bf16.xpose.msra.mxu0 0
        %1267 = vmatprep.subr.bf16.mxu0 0
        %1268 = vmatpush1.bf16.xpose.msra.mxu0 0
        %1269 = vmatprep.subr.bf16.mxu0 0
        %1270 = vmatpush1.bf16.xpose.msra.mxu0 %v1253
        %1271 = vmatprep.subr.bf16.mxu0 0
        %1272 = vmatpush2.bf16.xpose.msra.mxu0 0
        %1273 = vmatprep.subr.bf16.mxu0 0
        %1274 = vmatpush2.bf16.xpose.msra.mxu0 0
        %1275 = vmatprep.subr.bf16.mxu0 0
        %1276 = vmatpush2.bf16.xpose.msra.mxu0 0
        %1277 = vmatprep.subr.bf16.mxu0 0
        %1278 = vmatpush2.bf16.xpose.msra.mxu0 0
        %1279 = vmatprep.subr.bf16.mxu0 0
        %1280 = vmatpush2.bf16.xpose.msra.mxu0 0
        %1281 = vmatprep.subr.bf16.mxu0 0
        %1282 = vmatpush2.bf16.xpose.msra.mxu0 0
        %1283 = vmatprep.subr.bf16.mxu0 0
        %1284 = vmatpush2.bf16.xpose.msra.mxu0 0
        %1285 = vmatprep.subr.bf16.mxu0 0
        %1286 = vmatpush2.bf16.xpose.msra.mxu0 0
        %1287 = vmatprep.mubr.bf16.mxu0 0
        %1288 = vmatmul.mubr.bf16.gmra.mxu0 %v1250
        %v1289 = vpop.f32.mrf.mxu0
        %v1290 = vadd.f32 0.0, %v1289
        %v1291 = vpop.f32.mrf.mxu0
        %v1292 = vpop.f32.mrf.mxu0
        %v1293 = vpop.f32.mrf.mxu0
        %1294 = vdwg.mxu0
        %v1295 = vsel %vm1183, -3.4028235e+38, %v1290
        %v1296 = vsel %vm1185, %v1295, -inf
        %1297 = vmax.xlane.f32.xlu0 %v1296
        %v1298 = vpop.xlane.xlu0 %1297
        %v1299 = vsub.f32 %v1295, %v1298
        %v1300 = vmul.f32 %v1299, 1.442695
        %v1301 = vpow.pop %v1300
        %v1302 = vsel %vm1185, %v1301, 0.0
        %1303 = vadd.xlane.f32.xlu0 %v1302
        %v1304 = vpop.xlane.xlu0 %1303
        %v1305 = vrcp.pop %v1304
        %v1306 = vmul.f32 %v1301, %v1305
        %v1307 = vpack.c.bf16 %v1306, %v1306
        %1309 = vrot.lane.b32.xlu0 %v1127, 112
        %v1310 = vpop.permute.xlu0 %1309
        %v1312 = vsel %vm1185, %v1307, 0
        %v1315 = vsel %vm1201, %v1310, 0
        %1317 = vmatprep.subr.bf16.mxu0 0
        %1318 = vmatpush1.bf16.msra.mxu0 0
        %1319 = vmatprep.subr.bf16.mxu0 0
        %1320 = vmatpush1.bf16.msra.mxu0 0
        %1321 = vmatprep.subr.bf16.mxu0 0
        %1322 = vmatpush1.bf16.msra.mxu0 0
        %1323 = vmatprep.subr.bf16.mxu0 0
        %1324 = vmatpush1.bf16.msra.mxu0 0
        %1325 = vmatprep.subr.bf16.mxu0 0
        %1326 = vmatpush1.bf16.msra.mxu0 0
        %1327 = vmatprep.subr.bf16.mxu0 0
        %1328 = vmatpush1.bf16.msra.mxu0 0
        %1329 = vmatprep.subr.bf16.mxu0 0
        %1330 = vmatpush1.bf16.msra.mxu0 0
        %1331 = vmatprep.subr.bf16.mxu0 0
        %1332 = vmatpush1.bf16.msra.mxu0 %v1315
        %1333 = vmatprep.subr.bf16.mxu0 0
        %1334 = vmatpush2.bf16.msra.mxu0 0
        %1335 = vmatprep.subr.bf16.mxu0 0
        %1336 = vmatpush2.bf16.msra.mxu0 0
        %1337 = vmatprep.subr.bf16.mxu0 0
        %1338 = vmatpush2.bf16.msra.mxu0 0
        %1339 = vmatprep.subr.bf16.mxu0 0
        %1340 = vmatpush2.bf16.msra.mxu0 0
        %1341 = vmatprep.subr.bf16.mxu0 0
        %1342 = vmatpush2.bf16.msra.mxu0 0
        %1343 = vmatprep.subr.bf16.mxu0 0
        %1344 = vmatpush2.bf16.msra.mxu0 0
        %1345 = vmatprep.subr.bf16.mxu0 0
        %1346 = vmatpush2.bf16.msra.mxu0 0
        %1347 = vmatprep.subr.bf16.mxu0 0
        %1348 = vmatpush2.bf16.msra.mxu0 0
        %1349 = vmatprep.mubr.bf16.mxu0 0
        %1350 = vmatmul.mubr.bf16.gmra.mxu0 %v1312
        %v1351 = vpop.f32.mrf.mxu0
        %v1352 = vadd.f32 0.0, %v1351
        %v1353 = vpop.f32.mrf.mxu0
        %v1354 = vpop.f32.mrf.mxu0
        %v1355 = vpop.f32.mrf.mxu0
        %1356 = vdwg.mxu0
        %1357 = vrot.lane.b32.xlu0 %v1126, 96
        %v1358 = vpop.permute.xlu0 %1357
        %1359 = vrot.lane.b32.xlu0 %v1126, 32
        %v1360 = vpop.permute.xlu0 %1359
        %v1362 = vsel %vm1131, %v1358, 0
        %v1365 = vsel %vm1131, %v1360, 0
        %1367 = vmatprep.subr.bf16.mxu0 0
        %1368 = vmatpush1.bf16.xpose.msra.mxu0 0
        %1369 = vmatprep.subr.bf16.mxu0 0
        %1370 = vmatpush1.bf16.xpose.msra.mxu0 0
        %1371 = vmatprep.subr.bf16.mxu0 0
        %1372 = vmatpush1.bf16.xpose.msra.mxu0 0
        %1373 = vmatprep.subr.bf16.mxu0 0
        %1374 = vmatpush1.bf16.xpose.msra.mxu0 0
        %1375 = vmatprep.subr.bf16.mxu0 0
        %1376 = vmatpush1.bf16.xpose.msra.mxu0 0
        %1377 = vmatprep.subr.bf16.mxu0 0
        %1378 = vmatpush1.bf16.xpose.msra.mxu0 0
        %1379 = vmatprep.subr.bf16.mxu0 0
        %1380 = vmatpush1.bf16.xpose.msra.mxu0 0
        %1381 = vmatprep.subr.bf16.mxu0 0
        %1382 = vmatpush1.bf16.xpose.msra.mxu0 %v1365
        %1383 = vmatprep.subr.bf16.mxu0 0
        %1384 = vmatpush2.bf16.xpose.msra.mxu0 0
        %1385 = vmatprep.subr.bf16.mxu0 0
        %1386 = vmatpush2.bf16.xpose.msra.mxu0 0
        %1387 = vmatprep.subr.bf16.mxu0 0
        %1388 = vmatpush2.bf16.xpose.msra.mxu0 0
        %1389 = vmatprep.subr.bf16.mxu0 0
        %1390 = vmatpush2.bf16.xpose.msra.mxu0 0
        %1391 = vmatprep.subr.bf16.mxu0 0
        %1392 = vmatpush2.bf16.xpose.msra.mxu0 0
        %1393 = vmatprep.subr.bf16.mxu0 0
        %1394 = vmatpush2.bf16.xpose.msra.mxu0 0
        %1395 = vmatprep.subr.bf16.mxu0 0
        %1396 = vmatpush2.bf16.xpose.msra.mxu0 0
        %1397 = vmatprep.subr.bf16.mxu0 0
        %1398 = vmatpush2.bf16.xpose.msra.mxu0 0
        %1399 = vmatprep.mubr.bf16.mxu0 0
        %1400 = vmatmul.mubr.bf16.gmra.mxu0 %v1362
        %v1401 = vpop.f32.mrf.mxu0
        %v1402 = vadd.f32 0.0, %v1401
        %v1403 = vpop.f32.mrf.mxu0
        %v1404 = vpop.f32.mrf.mxu0
        %v1405 = vpop.f32.mrf.mxu0
        %1406 = vdwg.mxu0
        %v1407 = vsel %vm1183, -3.4028235e+38, %v1402
        %v1408 = vsel %vm1185, %v1407, -inf
        %1409 = vmax.xlane.f32.xlu0 %v1408
        %v1410 = vpop.xlane.xlu0 %1409
        %v1411 = vsub.f32 %v1407, %v1410
        %v1412 = vmul.f32 %v1411, 1.442695
        %v1413 = vpow.pop %v1412
        %v1414 = vsel %vm1185, %v1413, 0.0
        %1415 = vadd.xlane.f32.xlu0 %v1414
        %v1416 = vpop.xlane.xlu0 %1415
        %v1417 = vrcp.pop %v1416
        %v1418 = vmul.f32 %v1413, %v1417
        %v1419 = vpack.c.bf16 %v1418, %v1418
        %1420 = vrot.lane.b32.xlu0 %v1127, 96
        %v1421 = vpop.permute.xlu0 %1420
        %v1423 = vsel %vm1185, %v1419, 0
        %v1426 = vsel %vm1201, %v1421, 0
        %1428 = vmatprep.subr.bf16.mxu0 0
        %1429 = vmatpush1.bf16.msra.mxu0 0
        %1430 = vmatprep.subr.bf16.mxu0 0
        %1431 = vmatpush1.bf16.msra.mxu0 0
        %1432 = vmatprep.subr.bf16.mxu0 0
        %1433 = vmatpush1.bf16.msra.mxu0 0
        %1434 = vmatprep.subr.bf16.mxu0 0
        %1435 = vmatpush1.bf16.msra.mxu0 0
        %1436 = vmatprep.subr.bf16.mxu0 0
        %1437 = vmatpush1.bf16.msra.mxu0 0
        %1438 = vmatprep.subr.bf16.mxu0 0
        %1439 = vmatpush1.bf16.msra.mxu0 0
        %1440 = vmatprep.subr.bf16.mxu0 0
        %1441 = vmatpush1.bf16.msra.mxu0 0
        %1442 = vmatprep.subr.bf16.mxu0 0
        %1443 = vmatpush1.bf16.msra.mxu0 %v1426
        %1444 = vmatprep.subr.bf16.mxu0 0
        %1445 = vmatpush2.bf16.msra.mxu0 0
        %1446 = vmatprep.subr.bf16.mxu0 0
        %1447 = vmatpush2.bf16.msra.mxu0 0
        %1448 = vmatprep.subr.bf16.mxu0 0
        %1449 = vmatpush2.bf16.msra.mxu0 0
        %1450 = vmatprep.subr.bf16.mxu0 0
        %1451 = vmatpush2.bf16.msra.mxu0 0
        %1452 = vmatprep.subr.bf16.mxu0 0
        %1453 = vmatpush2.bf16.msra.mxu0 0
        %1454 = vmatprep.subr.bf16.mxu0 0
        %1455 = vmatpush2.bf16.msra.mxu0 0
        %1456 = vmatprep.subr.bf16.mxu0 0
        %1457 = vmatpush2.bf16.msra.mxu0 0
        %1458 = vmatprep.subr.bf16.mxu0 0
        %1459 = vmatpush2.bf16.msra.mxu0 0
        %1460 = vmatprep.mubr.bf16.mxu0 0
        %1461 = vmatmul.mubr.bf16.gmra.mxu0 %v1423
        %v1462 = vpop.f32.mrf.mxu0
        %v1463 = vadd.f32 0.0, %v1462
        %v1464 = vpop.f32.mrf.mxu0
        %v1465 = vpop.f32.mrf.mxu0
        %v1466 = vpop.f32.mrf.mxu0
        %1467 = vdwg.mxu0
        %1468 = vrot.lane.b32.xlu0 %v1126, 80
        %v1469 = vpop.permute.xlu0 %1468
        %1470 = vrot.lane.b32.xlu0 %v1126, 16
        %v1471 = vpop.permute.xlu0 %1470
        %v1473 = vsel %vm1131, %v1469, 0
        %v1476 = vsel %vm1131, %v1471, 0
        %1478 = vmatprep.subr.bf16.mxu0 0
        %1479 = vmatpush1.bf16.xpose.msra.mxu0 0
        %1480 = vmatprep.subr.bf16.mxu0 0
        %1481 = vmatpush1.bf16.xpose.msra.mxu0 0
        %1482 = vmatprep.subr.bf16.mxu0 0
        %1483 = vmatpush1.bf16.xpose.msra.mxu0 0
        %1484 = vmatprep.subr.bf16.mxu0 0
        %1485 = vmatpush1.bf16.xpose.msra.mxu0 0
        %1486 = vmatprep.subr.bf16.mxu0 0
        %1487 = vmatpush1.bf16.xpose.msra.mxu0 0
        %1488 = vmatprep.subr.bf16.mxu0 0
        %1489 = vmatpush1.bf16.xpose.msra.mxu0 0
        %1490 = vmatprep.subr.bf16.mxu0 0
        %1491 = vmatpush1.bf16.xpose.msra.mxu0 0
        %1492 = vmatprep.subr.bf16.mxu0 0
        %1493 = vmatpush1.bf16.xpose.msra.mxu0 %v1476
        %1494 = vmatprep.subr.bf16.mxu0 0
        %1495 = vmatpush2.bf16.xpose.msra.mxu0 0
        %1496 = vmatprep.subr.bf16.mxu0 0
        %1497 = vmatpush2.bf16.xpose.msra.mxu0 0
        %1498 = vmatprep.subr.bf16.mxu0 0
        %1499 = vmatpush2.bf16.xpose.msra.mxu0 0
        %1500 = vmatprep.subr.bf16.mxu0 0
        %1501 = vmatpush2.bf16.xpose.msra.mxu0 0
        %1502 = vmatprep.subr.bf16.mxu0 0
        %1503 = vmatpush2.bf16.xpose.msra.mxu0 0
        %1504 = vmatprep.subr.bf16.mxu0 0
        %1505 = vmatpush2.bf16.xpose.msra.mxu0 0
        %1506 = vmatprep.subr.bf16.mxu0 0
        %1507 = vmatpush2.bf16.xpose.msra.mxu0 0
        %1508 = vmatprep.subr.bf16.mxu0 0
        %1509 = vmatpush2.bf16.xpose.msra.mxu0 0
        %1510 = vmatprep.mubr.bf16.mxu0 0
        %1511 = vmatmul.mubr.bf16.gmra.mxu0 %v1473
        %v1512 = vpop.f32.mrf.mxu0
        %v1513 = vadd.f32 0.0, %v1512
        %v1514 = vpop.f32.mrf.mxu0
        %v1515 = vpop.f32.mrf.mxu0
        %v1516 = vpop.f32.mrf.mxu0
        %1517 = vdwg.mxu0
        %v1518 = vsel %vm1183, -3.4028235e+38, %v1513
        %v1519 = vsel %vm1185, %v1518, -inf
        %1520 = vmax.xlane.f32.xlu0 %v1519
        %v1521 = vpop.xlane.xlu0 %1520
        %v1522 = vsub.f32 %v1518, %v1521
        %v1523 = vmul.f32 %v1522, 1.442695
        %v1524 = vpow.pop %v1523
        %v1525 = vsel %vm1185, %v1524, 0.0
        %1526 = vadd.xlane.f32.xlu0 %v1525
        %v1527 = vpop.xlane.xlu0 %1526
        %v1528 = vrcp.pop %v1527
        %v1529 = vmul.f32 %v1524, %v1528
        %v1530 = vpack.c.bf16 %v1529, %v1529
        %1531 = vrot.lane.b32.xlu0 %v1127, 80
        %v1532 = vpop.permute.xlu0 %1531
        %v1534 = vsel %vm1185, %v1530, 0
        %v1537 = vsel %vm1201, %v1532, 0
        %1539 = vmatprep.subr.bf16.mxu0 0
        %1540 = vmatpush1.bf16.msra.mxu0 0
        %1541 = vmatprep.subr.bf16.mxu0 0
        %1542 = vmatpush1.bf16.msra.mxu0 0
        %1543 = vmatprep.subr.bf16.mxu0 0
        %1544 = vmatpush1.bf16.msra.mxu0 0
        %1545 = vmatprep.subr.bf16.mxu0 0
        %1546 = vmatpush1.bf16.msra.mxu0 0
        %1547 = vmatprep.subr.bf16.mxu0 0
        %1548 = vmatpush1.bf16.msra.mxu0 0
        %1549 = vmatprep.subr.bf16.mxu0 0
        %1550 = vmatpush1.bf16.msra.mxu0 0
        %1551 = vmatprep.subr.bf16.mxu0 0
        %1552 = vmatpush1.bf16.msra.mxu0 0
        %1553 = vmatprep.subr.bf16.mxu0 0
        %1554 = vmatpush1.bf16.msra.mxu0 %v1537
        %1555 = vmatprep.subr.bf16.mxu0 0
        %1556 = vmatpush2.bf16.msra.mxu0 0
        %1557 = vmatprep.subr.bf16.mxu0 0
        %1558 = vmatpush2.bf16.msra.mxu0 0
        %1559 = vmatprep.subr.bf16.mxu0 0
        %1560 = vmatpush2.bf16.msra.mxu0 0
        %1561 = vmatprep.subr.bf16.mxu0 0
        %1562 = vmatpush2.bf16.msra.mxu0 0
        %1563 = vmatprep.subr.bf16.mxu0 0
        %1564 = vmatpush2.bf16.msra.mxu0 0
        %1565 = vmatprep.subr.bf16.mxu0 0
        %1566 = vmatpush2.bf16.msra.mxu0 0
        %1567 = vmatprep.subr.bf16.mxu0 0
        %1568 = vmatpush2.bf16.msra.mxu0 0
        %1569 = vmatprep.subr.bf16.mxu0 0
        %1570 = vmatpush2.bf16.msra.mxu0 0
        %1571 = vmatprep.mubr.bf16.mxu0 0
        %1572 = vmatmul.mubr.bf16.gmra.mxu0 %v1534
        %v1573 = vpop.f32.mrf.mxu0
        %v1574 = vadd.f32 0.0, %v1573
        %v1575 = vpop.f32.mrf.mxu0
        %v1576 = vpop.f32.mrf.mxu0
        %v1577 = vpop.f32.mrf.mxu0
        %1578 = vdwg.mxu0
        %1580 = vrot.lane.b32.xlu0 %v1352, 16
        %v1581 = vpop.permute.xlu0 %1580
        %1584 = vrot.lane.b32.xlu0 %v1463, 32
        %v1585 = vpop.permute.xlu0 %1584
        %1588 = vrot.lane.b32.xlu0 %v1574, 48
        %v1589 = vpop.permute.xlu0 %1588
        %v1591 = vsel %vm1131, %v1240, %v1581
        %vm1592 = vcmask 261120
        %v1593 = vsel %vm1592, %v1591, %v1585
        %vm1594 = vcmask 392192
        %v1595 = vsel %vm1594, %v1593, %v1589
        %v1596 = vld [vmem:[%s8] sm:$0xf]
        %v1597 = vld [vmem:[%s8 + $0x4] sm:$0xf]
        %v1598 = vld [vmem:[%s8 + $0x8] sm:$0xf]
        %v1599 = vld [vmem:[%s8 + $0xc] sm:$0xf]
        %v1600 = vld [vmem:[%s8 + $0x10] sm:$0xf]
        %v1601 = vld [vmem:[%s8 + $0x14] sm:$0xf]
        %v1602 = vld [vmem:[%s8 + $0x18] sm:$0xf]
        %v1603 = vld [vmem:[%s8 + $0x1c] sm:$0xf]
        %v1604 = vld [vmem:[%s9] sm:$0x1]
        %v1605 = vpack.c.bf16 %v1595, %v1595
        %v1607 = vlaneseq
        %v1608 = vshrl.u32 %v1607, 7
        %v1609 = vsub.s32 0, %v1608
        %v1610 = vrot.slane %v1604, %v1609
        %v1620 = vunpack.c.l.b16 %v1596
        %v1621 = vunpack.c.l.b16 %v1597
        %v1622 = vunpack.c.l.b16 %v1598
        %v1623 = vunpack.c.l.b16 %v1599
        %v1624 = vunpack.c.l.b16 %v1600
        %v1625 = vunpack.c.l.b16 %v1601
        %v1626 = vunpack.c.l.b16 %v1602
        %v1627 = vunpack.c.l.b16 %v1603
        %v1628 = vpack.c.b16 %v1621, %v1620
        %v1629 = vpack.c.b16 %v1623, %v1622
        %v1630 = vpack.c.b16 %v1625, %v1624
        %v1631 = vpack.c.b16 %v1627, %v1626
        %v1637 = vsel %vm990, %v1605, 0
        %1639 = vmatprep.subr.bf16.mxu0 0
        %1640 = vmatpush1.bf16.msra.mxu0 0
        %1641 = vmatprep.subr.bf16.mxu0 0
        %1642 = vmatpush1.bf16.msra.mxu0 0
        %1643 = vmatprep.subr.bf16.mxu0 0
        %1644 = vmatpush1.bf16.msra.mxu0 0
        %1645 = vmatprep.subr.bf16.mxu0 0
        %1646 = vmatpush1.bf16.msra.mxu0 0
        %1647 = vmatprep.subr.bf16.mxu0 0
        %1648 = vmatpush1.bf16.msra.mxu0 %v1631
        %1649 = vmatprep.subr.bf16.mxu0 0
        %1650 = vmatpush1.bf16.msra.mxu0 %v1630
        %1651 = vmatprep.subr.bf16.mxu0 0
        %1652 = vmatpush1.bf16.msra.mxu0 %v1629
        %1653 = vmatprep.subr.bf16.mxu0 0
        %1654 = vmatpush1.bf16.msra.mxu0 %v1628
        %1655 = vmatprep.subr.bf16.mxu0 0
        %1656 = vmatpush2.bf16.msra.mxu0 0
        %1657 = vmatprep.subr.bf16.mxu0 0
        %1658 = vmatpush2.bf16.msra.mxu0 0
        %1659 = vmatprep.subr.bf16.mxu0 0
        %1660 = vmatpush2.bf16.msra.mxu0 0
        %1661 = vmatprep.subr.bf16.mxu0 0
        %1662 = vmatpush2.bf16.msra.mxu0 0
        %1663 = vmatprep.subr.bf16.mxu0 0
        %1664 = vmatpush2.bf16.msra.mxu0 0
        %1665 = vmatprep.subr.bf16.mxu0 0
        %1666 = vmatpush2.bf16.msra.mxu0 0
        %1667 = vmatprep.subr.bf16.mxu0 0
        %1668 = vmatpush2.bf16.msra.mxu0 0
        %1669 = vmatprep.subr.bf16.mxu0 0
        %1670 = vmatpush2.bf16.msra.mxu0 0
        %1671 = vmatprep.mubr.bf16.mxu0 0
        %1672 = vmatmul.mubr.bf16.gmra.mxu0 %v1637
        %v1673 = vpop.f32.mrf.mxu0
        %v1674 = vadd.f32 %v1610, %v1673
        %v1675 = vpop.f32.mrf.mxu0
        %v1676 = vpop.f32.mrf.mxu0
        %v1677 = vpop.f32.mrf.mxu0
        %1678 = vdwg.mxu0
        %v1679 = vadd.f32 %v1674, %v1018
        %v1680 = vld [vmem:[%s10] sm:$0x1]
        %v1681 = vld [vmem:[%s11] sm:$0x1]
        %v1682 = vsel %vm990, %v1679, 0.0
        %1683 = vadd.xlane.f32.xlu0 %v1682
        %v1684 = vpop.xlane.xlu0 %1683
        %v1685 = vmul.f32 %v1684, %v994
        %v1686 = vsub.f32 %v1679, %v1685
        %v1687 = vmul.f32 %v1686, %v1686
        %v1688 = vsel %vm990, %v1687, 0.0
        %1689 = vadd.xlane.f32.xlu0 %v1688
        %v1690 = vpop.xlane.xlu0 %1689
        %v1691 = vmul.f32 %v1690, %v994
        %v1692 = vadd.f32 %v1691, 1e-12
        %v1693 = vrsqrt.pop %v1692
        %v1694 = vmul.f32 %v1686, %v1693
        %v1696 = vlaneseq
        %v1697 = vshrl.u32 %v1696, 7
        %v1698 = vsub.s32 0, %v1697
        %v1699 = vrot.slane %v1680, %v1698
        %v1701 = vmul.f32 %v1694, %v1699
        %v1703 = vlaneseq
        %v1704 = vshrl.u32 %v1703, 7
        %v1705 = vsub.s32 0, %v1704
        %v1706 = vrot.slane %v1681, %v1705
        %v1708 = vadd.f32 %v1701, %v1706
        %v1709 = vld [vmem:[#allocation2] sm:$0xf]
        %v1710 = vld [vmem:[#allocation2 + $0x4] sm:$0xf]
        %v1711 = vld [vmem:[#allocation2 + $0x8] sm:$0xf]
        %v1712 = vld [vmem:[#allocation2 + $0xc] sm:$0xf]
        %v1713 = vld [vmem:[#allocation2 + $0x10] sm:$0xf]
        %v1714 = vld [vmem:[#allocation2 + $0x14] sm:$0xf]
        %v1715 = vld [vmem:[#allocation2 + $0x18] sm:$0xf]
        %v1716 = vld [vmem:[#allocation2 + $0x1c] sm:$0xf]
        %v1717 = vld [vmem:[%s13] sm:$0x1]
        %v1718 = vpack.c.bf16 %v1708, %v1708
        %v1720 = vlaneseq
        %v1721 = vshrl.u32 %v1720, 7
        %v1722 = vsub.s32 0, %v1721
        %v1723 = vrot.slane %v1717, %v1722
        %v1733 = vunpack.c.l.b16 %v1709
        %v1734 = vunpack.c.l.b16 %v1710
        %v1735 = vunpack.c.l.b16 %v1711
        %v1736 = vunpack.c.l.b16 %v1712
        %v1737 = vunpack.c.l.b16 %v1713
        %v1738 = vunpack.c.l.b16 %v1714
        %v1739 = vunpack.c.l.b16 %v1715
        %v1740 = vunpack.c.l.b16 %v1716
        %v1741 = vpack.c.b16 %v1734, %v1733
        %v1742 = vpack.c.b16 %v1736, %v1735
        %v1743 = vpack.c.b16 %v1738, %v1737
        %v1744 = vpack.c.b16 %v1740, %v1739
        %v1750 = vsel %vm990, %v1718, 0
        %1752 = vmatprep.subr.bf16.mxu0 0
        %1753 = vmatpush1.bf16.msra.mxu0 0
        %1754 = vmatprep.subr.bf16.mxu0 0
        %1755 = vmatpush1.bf16.msra.mxu0 0
        %1756 = vmatprep.subr.bf16.mxu0 0
        %1757 = vmatpush1.bf16.msra.mxu0 0
        %1758 = vmatprep.subr.bf16.mxu0 0
        %1759 = vmatpush1.bf16.msra.mxu0 0
        %1760 = vmatprep.subr.bf16.mxu0 0
        %1761 = vmatpush1.bf16.msra.mxu0 %v1744
        %1762 = vmatprep.subr.bf16.mxu0 0
        %1763 = vmatpush1.bf16.msra.mxu0 %v1743
        %1764 = vmatprep.subr.bf16.mxu0 0
        %1765 = vmatpush1.bf16.msra.mxu0 %v1742
        %1766 = vmatprep.subr.bf16.mxu0 0
        %1767 = vmatpush1.bf16.msra.mxu0 %v1741
        %1768 = vmatprep.subr.bf16.mxu0 0
        %1769 = vmatpush2.bf16.msra.mxu0 0
        %1770 = vmatprep.subr.bf16.mxu0 0
        %1771 = vmatpush2.bf16.msra.mxu0 0
        %1772 = vmatprep.subr.bf16.mxu0 0
        %1773 = vmatpush2.bf16.msra.mxu0 0
        %1774 = vmatprep.subr.bf16.mxu0 0
        %1775 = vmatpush2.bf16.msra.mxu0 0
        %1776 = vmatprep.subr.bf16.mxu0 0
        %1777 = vmatpush2.bf16.msra.mxu0 0
        %1778 = vmatprep.subr.bf16.mxu0 0
        %1779 = vmatpush2.bf16.msra.mxu0 0
        %1780 = vmatprep.subr.bf16.mxu0 0
        %1781 = vmatpush2.bf16.msra.mxu0 0
        %1782 = vmatprep.subr.bf16.mxu0 0
        %1783 = vmatpush2.bf16.msra.mxu0 0
        %1784 = vmatprep.mubr.bf16.mxu0 0
        %1785 = vmatmul.mubr.bf16.gmra.mxu0 %v1750
        %v1786 = vpop.f32.mrf.mxu0
        %v1787 = vadd.f32 %v1723, %v1786
        %v1788 = vpop.f32.mrf.mxu0
        %v1789 = vpop.f32.mrf.mxu0
        %v1790 = vpop.f32.mrf.mxu0
        %1791 = vdwg.mxu0
        %v1792 = vmul.f32 %v1787, 0.5
        %v1793 = vmul.f32 %v1787, 0.70710677
        %v1794 = verf.f32.pop %v1793
        %v1795 = vadd.f32 %v1794, 1.0
        %v1796 = vmul.f32 %v1792, %v1795
        %v1797 = vld [vmem:[%s14] sm:$0xf]
        %v1798 = vld [vmem:[%s14 + $0x4] sm:$0xf]
        %v1799 = vld [vmem:[%s14 + $0x8] sm:$0xf]
        %v1800 = vld [vmem:[%s14 + $0xc] sm:$0xf]
        %v1801 = vld [vmem:[%s14 + $0x10] sm:$0xf]
        %v1802 = vld [vmem:[%s14 + $0x14] sm:$0xf]
        %v1803 = vld [vmem:[%s14 + $0x18] sm:$0xf]
        %v1804 = vld [vmem:[%s14 + $0x1c] sm:$0xf]
        %v1805 = vld [vmem:[%s14 + $0x20] sm:$0xf]
        %v1806 = vld [vmem:[%s14 + $0x24] sm:$0xf]
        %v1807 = vld [vmem:[%s14 + $0x28] sm:$0xf]
        %v1808 = vld [vmem:[%s14 + $0x2c] sm:$0xf]
        %v1809 = vld [vmem:[%s14 + $0x30] sm:$0xf]
        %v1810 = vld [vmem:[%s14 + $0x34] sm:$0xf]
        %v1811 = vld [vmem:[%s14 + $0x38] sm:$0xf]
        %v1812 = vld [vmem:[%s14 + $0x3c] sm:$0xf]
        %v1813 = vld [vmem:[%s15] sm:$0x1]
        %v1814 = vpack.c.bf16 %v1796, %v1796
        %v1816 = vlaneseq
        %v1817 = vshrl.u32 %v1816, 7
        %v1818 = vsub.s32 0, %v1817
        %v1819 = vrot.slane %v1813, %v1818
        %v1837 = vunpack.c.l.b16 %v1797
        %v1838 = vunpack.c.l.b16 %v1798
        %v1839 = vunpack.c.l.b16 %v1799
        %v1840 = vunpack.c.l.b16 %v1800
        %v1841 = vunpack.c.l.b16 %v1801
        %v1842 = vunpack.c.l.b16 %v1802
        %v1843 = vunpack.c.l.b16 %v1803
        %v1844 = vunpack.c.l.b16 %v1804
        %v1845 = vunpack.c.l.b16 %v1805
        %v1846 = vunpack.c.l.b16 %v1806
        %v1847 = vunpack.c.l.b16 %v1807
        %v1848 = vunpack.c.l.b16 %v1808
        %v1849 = vunpack.c.l.b16 %v1809
        %v1850 = vunpack.c.l.b16 %v1810
        %v1851 = vunpack.c.l.b16 %v1811
        %v1852 = vunpack.c.l.b16 %v1812
        %v1853 = vpack.c.b16 %v1838, %v1837
        %v1854 = vpack.c.b16 %v1840, %v1839
        %v1855 = vpack.c.b16 %v1842, %v1841
        %v1856 = vpack.c.b16 %v1844, %v1843
        %v1857 = vpack.c.b16 %v1846, %v1845
        %v1858 = vpack.c.b16 %v1848, %v1847
        %v1859 = vpack.c.b16 %v1850, %v1849
        %v1860 = vpack.c.b16 %v1852, %v1851
        %1869 = vmatprep.subr.bf16.mxu0 0
        %1870 = vmatpush1.bf16.msra.mxu0 %v1860
        %1871 = vmatprep.subr.bf16.mxu0 0
        %1872 = vmatpush1.bf16.msra.mxu0 %v1859
        %1873 = vmatprep.subr.bf16.mxu0 0
        %1874 = vmatpush1.bf16.msra.mxu0 %v1858
        %1875 = vmatprep.subr.bf16.mxu0 0
        %1876 = vmatpush1.bf16.msra.mxu0 %v1857
        %1877 = vmatprep.subr.bf16.mxu0 0
        %1878 = vmatpush1.bf16.msra.mxu0 %v1856
        %1879 = vmatprep.subr.bf16.mxu0 0
        %1880 = vmatpush1.bf16.msra.mxu0 %v1855
        %1881 = vmatprep.subr.bf16.mxu0 0
        %1882 = vmatpush1.bf16.msra.mxu0 %v1854
        %1883 = vmatprep.subr.bf16.mxu0 0
        %1884 = vmatpush1.bf16.msra.mxu0 %v1853
        %1885 = vmatprep.subr.bf16.mxu0 0
        %1886 = vmatpush2.bf16.msra.mxu0 0
        %1887 = vmatprep.subr.bf16.mxu0 0
        %1888 = vmatpush2.bf16.msra.mxu0 0
        %1889 = vmatprep.subr.bf16.mxu0 0
        %1890 = vmatpush2.bf16.msra.mxu0 0
        %1891 = vmatprep.subr.bf16.mxu0 0
        %1892 = vmatpush2.bf16.msra.mxu0 0
        %1893 = vmatprep.subr.bf16.mxu0 0
        %1894 = vmatpush2.bf16.msra.mxu0 0
        %1895 = vmatprep.subr.bf16.mxu0 0
        %1896 = vmatpush2.bf16.msra.mxu0 0
        %1897 = vmatprep.subr.bf16.mxu0 0
        %1898 = vmatpush2.bf16.msra.mxu0 0
        %1899 = vmatprep.subr.bf16.mxu0 0
        %1900 = vmatpush2.bf16.msra.mxu0 0
        %1901 = vmatprep.mubr.bf16.mxu0 0
        %1902 = vmatmul.mubr.bf16.gmra.mxu0 %v1814
        %v1903 = vpop.f32.mrf.mxu0
        %v1904 = vadd.f32 %v1819, %v1903
        %v1905 = vpop.f32.mrf.mxu0
        %v1906 = vpop.f32.mrf.mxu0
        %v1907 = vpop.f32.mrf.mxu0
        %1908 = vdwg.mxu0
        %v1909 = vadd.f32 %v1904, %v1708
        %v1910 = vld [vmem:[%s16] sm:$0x1]
        %v1911 = vld [vmem:[#allocation5] sm:$0x1]
        %v1912 = vsel %vm990, %v1909, 0.0
        %1913 = vadd.xlane.f32.xlu0 %v1912
        %v1914 = vpop.xlane.xlu0 %1913
        %v1915 = vmul.f32 %v1914, %v994
        %v1916 = vsub.f32 %v1909, %v1915
        %v1917 = vmul.f32 %v1916, %v1916
        %v1918 = vsel %vm990, %v1917, 0.0
        %1919 = vadd.xlane.f32.xlu0 %v1918
        %v1920 = vpop.xlane.xlu0 %1919
        %v1921 = vmul.f32 %v1920, %v994
        %v1922 = vadd.f32 %v1921, 1e-12
        %v1923 = vrsqrt.pop %v1922
        %v1924 = vmul.f32 %v1916, %v1923
        %v1926 = vlaneseq
        %v1927 = vshrl.u32 %v1926, 7
        %v1928 = vsub.s32 0, %v1927
        %v1929 = vrot.slane %v1910, %v1928
        %v1931 = vmul.f32 %v1924, %v1929
        %v1933 = vlaneseq
        %v1934 = vshrl.u32 %v1933, 7
        %v1935 = vsub.s32 0, %v1934
        %v1936 = vrot.slane %v1911, %v1935
        %v1938 = vadd.f32 %v1931, %v1936
        %v1939 = vld [vmem:[%s18] sm:$0x1]
        %v1940 = vld [vmem:[#allocation7] sm:$0x1]
        %v1941 = vsel %vm990, %v1938, 0.0
        %1942 = vadd.xlane.f32.xlu0 %v1941
        %v1943 = vpop.xlane.xlu0 %1942
        %v1944 = vmul.f32 %v1943, %v994
        %v1945 = vsub.f32 %v1938, %v1944
        %v1946 = vmul.f32 %v1945, %v1945
        %v1947 = vsel %vm990, %v1946, 0.0
        %1948 = vadd.xlane.f32.xlu0 %v1947
        %v1949 = vpop.xlane.xlu0 %1948
        %v1950 = vmul.f32 %v1949, %v994
        %v1951 = vadd.f32 %v1950, 1e-05
        %v1952 = vrsqrt.pop %v1951
        %v1953 = vmul.f32 %v1945, %v1952
        %v1955 = vlaneseq
        %v1956 = vshrl.u32 %v1955, 7
        %v1957 = vsub.s32 0, %v1956
        %v1958 = vrot.slane %v1939, %v1957
        %v1960 = vmul.f32 %v1953, %v1958
        %v1962 = vlaneseq
        %v1963 = vshrl.u32 %v1962, 7
        %v1964 = vsub.s32 0, %v1963
        %v1965 = vrot.slane %v1940, %v1964
        %v1967 = vadd.f32 %v1960, %v1965
        %v1968 = vld [vmem:[%s20] sm:$0xf]
        %v1969 = vld [vmem:[%s20 + $0x4] sm:$0xf]
        %v1970 = vld [vmem:[%s20 + $0x8] sm:$0xf]
        %v1971 = vld [vmem:[%s20 + $0xc] sm:$0xf]
        %v1972 = vld [vmem:[%s20 + $0x10] sm:$0xf]
        %v1973 = vld [vmem:[%s20 + $0x14] sm:$0xf]
        %v1974 = vld [vmem:[%s20 + $0x18] sm:$0xf]
        %v1975 = vld [vmem:[%s20 + $0x1c] sm:$0xf]
        %v1976 = vld [vmem:[#allocation8] sm:$0x1]
        %v1977 = vpack.c.bf16 %v1967, %v1967
        %v1979 = vlaneseq
        %v1980 = vshrl.u32 %v1979, 7
        %v1981 = vsub.s32 0, %v1980
        %v1982 = vrot.slane %v1976, %v1981
        %v1992 = vunpack.c.l.b16 %v1968
        %v1993 = vunpack.c.l.b16 %v1969
        %v1994 = vunpack.c.l.b16 %v1970
        %v1995 = vunpack.c.l.b16 %v1971
        %v1996 = vunpack.c.l.b16 %v1972
        %v1997 = vunpack.c.l.b16 %v1973
        %v1998 = vunpack.c.l.b16 %v1974
        %v1999 = vunpack.c.l.b16 %v1975
        %v2000 = vpack.c.b16 %v1993, %v1992
        %v2001 = vpack.c.b16 %v1995, %v1994
        %v2002 = vpack.c.b16 %v1997, %v1996
        %v2003 = vpack.c.b16 %v1999, %v1998
        %v2009 = vsel %vm990, %v1977, 0
        %2011 = vmatprep.subr.bf16.mxu0 0
        %2012 = vmatpush1.bf16.msra.mxu0 0
        %2013 = vmatprep.subr.bf16.mxu0 0
        %2014 = vmatpush1.bf16.msra.mxu0 0
        %2015 = vmatprep.subr.bf16.mxu0 0
        %2016 = vmatpush1.bf16.msra.mxu0 0
        %2017 = vmatprep.subr.bf16.mxu0 0
        %2018 = vmatpush1.bf16.msra.mxu0 0
        %2019 = vmatprep.subr.bf16.mxu0 0
        %2020 = vmatpush1.bf16.msra.mxu0 %v2003
        %2021 = vmatprep.subr.bf16.mxu0 0
        %2022 = vmatpush1.bf16.msra.mxu0 %v2002
        %2023 = vmatprep.subr.bf16.mxu0 0
        %2024 = vmatpush1.bf16.msra.mxu0 %v2001
        %2025 = vmatprep.subr.bf16.mxu0 0
        %2026 = vmatpush1.bf16.msra.mxu0 %v2000
        %2027 = vmatprep.subr.bf16.mxu0 0
        %2028 = vmatpush2.bf16.msra.mxu0 0
        %2029 = vmatprep.subr.bf16.mxu0 0
        %2030 = vmatpush2.bf16.msra.mxu0 0
        %2031 = vmatprep.subr.bf16.mxu0 0
        %2032 = vmatpush2.bf16.msra.mxu0 0
        %2033 = vmatprep.subr.bf16.mxu0 0
        %2034 = vmatpush2.bf16.msra.mxu0 0
        %2035 = vmatprep.subr.bf16.mxu0 0
        %2036 = vmatpush2.bf16.msra.mxu0 0
        %2037 = vmatprep.subr.bf16.mxu0 0
        %2038 = vmatpush2.bf16.msra.mxu0 0
        %2039 = vmatprep.subr.bf16.mxu0 0
        %2040 = vmatpush2.bf16.msra.mxu0 0
        %2041 = vmatprep.subr.bf16.mxu0 0
        %2042 = vmatpush2.bf16.msra.mxu0 0
        %2043 = vmatprep.mubr.bf16.mxu0 0
        %2044 = vmatmul.mubr.bf16.gmra.mxu0 %v2009
        %v2045 = vpop.f32.mrf.mxu0
        %v2046 = vadd.f32 %v1982, %v2045
        %v2047 = vpop.f32.mrf.mxu0
        %v2048 = vpop.f32.mrf.mxu0
        %v2049 = vpop.f32.mrf.mxu0
        %2050 = vdwg.mxu0
        %v2051 = vmul.f32 %v2046, 0.5
        %v2052 = vmul.f32 %v2046, 0.70710677
        %v2053 = verf.f32.pop %v2052
        %v2054 = vadd.f32 %v2053, 1.0
        %v2055 = vmul.f32 %v2051, %v2054
        %v2056 = vld [vmem:[%s22] sm:$0xf]
        %v2057 = vld [vmem:[%s22 + $0x4] sm:$0xf]
        %v2058 = vld [vmem:[#allocation10] sm:$0x1]
        %v2059 = vpack.c.bf16 %v2055, %v2055
        %v2061 = vlaneseq
        %v2062 = vshrl.u32 %v2061, 7
        %v2063 = vsub.s32 0, %v2062
        %v2064 = vrot.slane %v2058, %v2063
        %v2068 = vunpack.c.l.b16 %v2056
        %v2069 = vunpack.c.l.b16 %v2057
        %v2070 = vpack.c.b16 %v2069, %v2068
        %v2073 = vsel %vm1131, %v2059, 0
        %2075 = vmatprep.subr.bf16.mxu0 0
        %2076 = vmatpush1.bf16.msra.mxu0 0
        %2077 = vmatprep.subr.bf16.mxu0 0
        %2078 = vmatpush1.bf16.msra.mxu0 0
        %2079 = vmatprep.subr.bf16.mxu0 0
        %2080 = vmatpush1.bf16.msra.mxu0 0
        %2081 = vmatprep.subr.bf16.mxu0 0
        %2082 = vmatpush1.bf16.msra.mxu0 0
        %2083 = vmatprep.subr.bf16.mxu0 0
        %2084 = vmatpush1.bf16.msra.mxu0 0
        %2085 = vmatprep.subr.bf16.mxu0 0
        %2086 = vmatpush1.bf16.msra.mxu0 0
        %2087 = vmatprep.subr.bf16.mxu0 0
        %2088 = vmatpush1.bf16.msra.mxu0 0
        %2089 = vmatprep.subr.bf16.mxu0 0
        %2090 = vmatpush1.bf16.msra.mxu0 %v2070
        %2091 = vmatprep.subr.bf16.mxu0 0
        %2092 = vmatpush2.bf16.msra.mxu0 0
        %2093 = vmatprep.subr.bf16.mxu0 0
        %2094 = vmatpush2.bf16.msra.mxu0 0
        %2095 = vmatprep.subr.bf16.mxu0 0
        %2096 = vmatpush2.bf16.msra.mxu0 0
        %2097 = vmatprep.subr.bf16.mxu0 0
        %2098 = vmatpush2.bf16.msra.mxu0 0
        %2099 = vmatprep.subr.bf16.mxu0 0
        %2100 = vmatpush2.bf16.msra.mxu0 0
        %2101 = vmatprep.subr.bf16.mxu0 0
        %2102 = vmatpush2.bf16.msra.mxu0 0
        %2103 = vmatprep.subr.bf16.mxu0 0
        %2104 = vmatpush2.bf16.msra.mxu0 0
        %2105 = vmatprep.subr.bf16.mxu0 0
        %2106 = vmatpush2.bf16.msra.mxu0 0
        %2107 = vmatprep.mubr.bf16.mxu0 0
        %2108 = vmatmul.mubr.bf16.gmra.mxu0 %v2073
        %v2109 = vpop.f32.mrf.mxu0
        %v2110 = vadd.f32 %v2064, %v2109
        %v2111 = vpop.f32.mrf.mxu0
        %v2112 = vpop.f32.mrf.mxu0
        %v2113 = vpop.f32.mrf.mxu0
        %2114 = vdwg.mxu0
        %v2115 = vadd.f32 %v2110, %v1938
        %v2116 = vpack.c.bf16 %v2115, %v2115
        %s2117 = scalar_lea.vmem %s6, 64
        %v2118 = vld [vmem:[%s2117] sm:$0xff]
        %v2119 = vld [vmem:[%s2117 + $0x8] sm:$0xff]
        %v2120 = vld [vmem:[%s2117 + $0x10] sm:$0xff]
        %v2121 = vld [vmem:[%s2117 + $0x18] sm:$0xff]
        %v2122 = vld [vmem:[%s2117 + $0x20] sm:$0xff]
        %v2123 = vld [vmem:[%s2117 + $0x28] sm:$0xff]
        %v2124 = vld [vmem:[%s2117 + $0x30] sm:$0xff]
        %v2125 = vld [vmem:[%s2117 + $0x38] sm:$0xff]
        %s2126 = scalar_lea.vmem %s7, 2
        %v2127 = vld [vmem:[%s2126] sm:$0x3]
        %v2129 = vlaneseq
        %v2130 = vshrl.u32 %v2129, 7
        %v2131 = vsub.s32 0, %v2130
        %v2132 = vrot.slane %v2127, %v2131
        %v2133 = vlaneseq
        %v2134 = vshrl.u32 %v2133, 7
        %v2135 = vsub.s32 1, %v2134
        %v2136 = vrot.slane %v2127, %v2135
        %v2147 = vunpack.c.l.b16 %v2118
        %v2148 = vunpack.c.h.b16 %v2118
        %v2149 = vunpack.c.l.b16 %v2119
        %v2150 = vunpack.c.h.b16 %v2119
        %v2151 = vunpack.c.l.b16 %v2120
        %v2152 = vunpack.c.h.b16 %v2120
        %v2153 = vunpack.c.l.b16 %v2121
        %v2154 = vunpack.c.h.b16 %v2121
        %v2155 = vunpack.c.l.b16 %v2122
        %v2156 = vunpack.c.h.b16 %v2122
        %v2157 = vunpack.c.l.b16 %v2123
        %v2158 = vunpack.c.h.b16 %v2123
        %v2159 = vunpack.c.l.b16 %v2124
        %v2160 = vunpack.c.h.b16 %v2124
        %v2161 = vunpack.c.l.b16 %v2125
        %v2162 = vunpack.c.h.b16 %v2125
        %v2163 = vpack.c.b16 %v2149, %v2147
        %v2164 = vpack.c.b16 %v2150, %v2148
        %v2165 = vpack.c.b16 %v2153, %v2151
        %v2166 = vpack.c.b16 %v2154, %v2152
        %v2167 = vpack.c.b16 %v2157, %v2155
        %v2168 = vpack.c.b16 %v2158, %v2156
        %v2169 = vpack.c.b16 %v2161, %v2159
        %v2170 = vpack.c.b16 %v2162, %v2160
        %v2180 = vsel %vm990, %v2116, 0
        %2182 = vmatprep.subr.bf16.mxu0 0
        %2183 = vmatpush1.bf16.msra.mxu0 0
        %2184 = vmatprep.subr.bf16.mxu0 0
        %2185 = vmatpush1.bf16.msra.mxu0 0
        %2186 = vmatprep.subr.bf16.mxu0 0
        %2187 = vmatpush1.bf16.msra.mxu0 0
        %2188 = vmatprep.subr.bf16.mxu0 0
        %2189 = vmatpush1.bf16.msra.mxu0 0
        %2190 = vmatprep.subr.bf16.mxu0 %v2170
        %2191 = vmatpush1.bf16.msra.mxu0 %v2169
        %2192 = vmatprep.subr.bf16.mxu0 %v2168
        %2193 = vmatpush1.bf16.msra.mxu0 %v2167
        %2194 = vmatprep.subr.bf16.mxu0 %v2166
        %2195 = vmatpush1.bf16.msra.mxu0 %v2165
        %2196 = vmatprep.subr.bf16.mxu0 %v2164
        %2197 = vmatpush1.bf16.msra.mxu0 %v2163
        %2198 = vmatprep.subr.bf16.mxu0 0
        %2199 = vmatpush2.bf16.msra.mxu0 0
        %2200 = vmatprep.subr.bf16.mxu0 0
        %2201 = vmatpush2.bf16.msra.mxu0 0
        %2202 = vmatprep.subr.bf16.mxu0 0
        %2203 = vmatpush2.bf16.msra.mxu0 0
        %2204 = vmatprep.subr.bf16.mxu0 0
        %2205 = vmatpush2.bf16.msra.mxu0 0
        %2206 = vmatprep.subr.bf16.mxu0 0
        %2207 = vmatpush2.bf16.msra.mxu0 0
        %2208 = vmatprep.subr.bf16.mxu0 0
        %2209 = vmatpush2.bf16.msra.mxu0 0
        %2210 = vmatprep.subr.bf16.mxu0 0
        %2211 = vmatpush2.bf16.msra.mxu0 0
        %2212 = vmatprep.subr.bf16.mxu0 0
        %2213 = vmatpush2.bf16.msra.mxu0 0
        %2214 = vmatprep.mubr.bf16.mxu0 0
        %2215 = vmatmul.mubr.bf16.gmra.mxu0 %v2180
        %v2216 = vpop.f32.mrf.mxu0
        %v2217 = vadd.f32 %v2132, %v2216
        %v2218 = vpop.f32.mrf.mxu0
        %v2219 = vadd.f32 %v2136, %v2218
        %v2220 = vpop.f32.mrf.mxu0
        %v2221 = vpop.f32.mrf.mxu0
        %2222 = vdwg.mxu0
        %v2223 = vpack.c.bf16 %v2217, %v2217
        %v2224 = vpack.c.bf16 %v2219, %v2219
        %2226 = vrot.lane.b32.xlu0 %v2223, 64
        %v2227 = vpop.permute.xlu0 %2226
        %v2229 = vsel %vm1131, %v2223, 0
        %v2232 = vsel %vm1131, %v2227, 0
        %2234 = vmatprep.subr.bf16.mxu0 0
        %2235 = vmatpush1.bf16.xpose.msra.mxu0 0
        %2236 = vmatprep.subr.bf16.mxu0 0
        %2237 = vmatpush1.bf16.xpose.msra.mxu0 0
        %2238 = vmatprep.subr.bf16.mxu0 0
        %2239 = vmatpush1.bf16.xpose.msra.mxu0 0
        %2240 = vmatprep.subr.bf16.mxu0 0
        %2241 = vmatpush1.bf16.xpose.msra.mxu0 0
        %2242 = vmatprep.subr.bf16.mxu0 0
        %2243 = vmatpush1.bf16.xpose.msra.mxu0 0
        %2244 = vmatprep.subr.bf16.mxu0 0
        %2245 = vmatpush1.bf16.xpose.msra.mxu0 0
        %2246 = vmatprep.subr.bf16.mxu0 0
        %2247 = vmatpush1.bf16.xpose.msra.mxu0 0
        %2248 = vmatprep.subr.bf16.mxu0 0
        %2249 = vmatpush1.bf16.xpose.msra.mxu0 %v2232
        %2250 = vmatprep.subr.bf16.mxu0 0
        %2251 = vmatpush2.bf16.xpose.msra.mxu0 0
        %2252 = vmatprep.subr.bf16.mxu0 0
        %2253 = vmatpush2.bf16.xpose.msra.mxu0 0
        %2254 = vmatprep.subr.bf16.mxu0 0
        %2255 = vmatpush2.bf16.xpose.msra.mxu0 0
        %2256 = vmatprep.subr.bf16.mxu0 0
        %2257 = vmatpush2.bf16.xpose.msra.mxu0 0
        %2258 = vmatprep.subr.bf16.mxu0 0
        %2259 = vmatpush2.bf16.xpose.msra.mxu0 0
        %2260 = vmatprep.subr.bf16.mxu0 0
        %2261 = vmatpush2.bf16.xpose.msra.mxu0 0
        %2262 = vmatprep.subr.bf16.mxu0 0
        %2263 = vmatpush2.bf16.xpose.msra.mxu0 0
        %2264 = vmatprep.subr.bf16.mxu0 0
        %2265 = vmatpush2.bf16.xpose.msra.mxu0 0
        %2266 = vmatprep.mubr.bf16.mxu0 0
        %2267 = vmatmul.mubr.bf16.gmra.mxu0 %v2229
        %v2268 = vpop.f32.mrf.mxu0
        %v2269 = vadd.f32 0.0, %v2268
        %v2270 = vpop.f32.mrf.mxu0
        %v2271 = vpop.f32.mrf.mxu0
        %v2272 = vpop.f32.mrf.mxu0
        %2273 = vdwg.mxu0
        %v2274 = vsel %vm1183, -3.4028235e+38, %v2269
        %v2275 = vsel %vm1185, %v2274, -inf
        %2276 = vmax.xlane.f32.xlu0 %v2275
        %v2277 = vpop.xlane.xlu0 %2276
        %v2278 = vsub.f32 %v2274, %v2277
        %v2279 = vmul.f32 %v2278, 1.442695
        %v2280 = vpow.pop %v2279
        %v2281 = vsel %vm1185, %v2280, 0.0
        %2282 = vadd.xlane.f32.xlu0 %v2281
        %v2283 = vpop.xlane.xlu0 %2282
        %v2284 = vrcp.pop %v2283
        %v2285 = vmul.f32 %v2280, %v2284
        %v2286 = vpack.c.bf16 %v2285, %v2285
        %v2288 = vsel %vm1185, %v2286, 0
        %v2291 = vsel %vm1201, %v2224, 0
        %2293 = vmatprep.subr.bf16.mxu0 0
        %2294 = vmatpush1.bf16.msra.mxu0 0
        %2295 = vmatprep.subr.bf16.mxu0 0
        %2296 = vmatpush1.bf16.msra.mxu0 0
        %2297 = vmatprep.subr.bf16.mxu0 0
        %2298 = vmatpush1.bf16.msra.mxu0 0
        %2299 = vmatprep.subr.bf16.mxu0 0
        %2300 = vmatpush1.bf16.msra.mxu0 0
        %2301 = vmatprep.subr.bf16.mxu0 0
        %2302 = vmatpush1.bf16.msra.mxu0 0
        %2303 = vmatprep.subr.bf16.mxu0 0
        %2304 = vmatpush1.bf16.msra.mxu0 0
        %2305 = vmatprep.subr.bf16.mxu0 0
        %2306 = vmatpush1.bf16.msra.mxu0 0
        %2307 = vmatprep.subr.bf16.mxu0 0
        %2308 = vmatpush1.bf16.msra.mxu0 %v2291
        %2309 = vmatprep.subr.bf16.mxu0 0
        %2310 = vmatpush2.bf16.msra.mxu0 0
        %2311 = vmatprep.subr.bf16.mxu0 0
        %2312 = vmatpush2.bf16.msra.mxu0 0
        %2313 = vmatprep.subr.bf16.mxu0 0
        %2314 = vmatpush2.bf16.msra.mxu0 0
        %2315 = vmatprep.subr.bf16.mxu0 0
        %2316 = vmatpush2.bf16.msra.mxu0 0
        %2317 = vmatprep.subr.bf16.mxu0 0
        %2318 = vmatpush2.bf16.msra.mxu0 0
        %2319 = vmatprep.subr.bf16.mxu0 0
        %2320 = vmatpush2.bf16.msra.mxu0 0
        %2321 = vmatprep.subr.bf16.mxu0 0
        %2322 = vmatpush2.bf16.msra.mxu0 0
        %2323 = vmatprep.subr.bf16.mxu0 0
        %2324 = vmatpush2.bf16.msra.mxu0 0
        %2325 = vmatprep.mubr.bf16.mxu0 0
        %2326 = vmatmul.mubr.bf16.gmra.mxu0 %v2288
        %v2327 = vpop.f32.mrf.mxu0
        %v2328 = vadd.f32 0.0, %v2327
        %v2329 = vpop.f32.mrf.mxu0
        %v2330 = vpop.f32.mrf.mxu0
        %v2331 = vpop.f32.mrf.mxu0
        %2332 = vdwg.mxu0
        %2333 = vrot.lane.b32.xlu0 %v2223, 112
        %v2334 = vpop.permute.xlu0 %2333
        %2335 = vrot.lane.b32.xlu0 %v2223, 48
        %v2336 = vpop.permute.xlu0 %2335
        %v2338 = vsel %vm1131, %v2334, 0
        %v2341 = vsel %vm1131, %v2336, 0
        %2343 = vmatprep.subr.bf16.mxu0 0
        %2344 = vmatpush1.bf16.xpose.msra.mxu0 0
        %2345 = vmatprep.subr.bf16.mxu0 0
        %2346 = vmatpush1.bf16.xpose.msra.mxu0 0
        %2347 = vmatprep.subr.bf16.mxu0 0
        %2348 = vmatpush1.bf16.xpose.msra.mxu0 0
        %2349 = vmatprep.subr.bf16.mxu0 0
        %2350 = vmatpush1.bf16.xpose.msra.mxu0 0
        %2351 = vmatprep.subr.bf16.mxu0 0
        %2352 = vmatpush1.bf16.xpose.msra.mxu0 0
        %2353 = vmatprep.subr.bf16.mxu0 0
        %2354 = vmatpush1.bf16.xpose.msra.mxu0 0
        %2355 = vmatprep.subr.bf16.mxu0 0
        %2356 = vmatpush1.bf16.xpose.msra.mxu0 0
        %2357 = vmatprep.subr.bf16.mxu0 0
        %2358 = vmatpush1.bf16.xpose.msra.mxu0 %v2341
        %2359 = vmatprep.subr.bf16.mxu0 0
        %2360 = vmatpush2.bf16.xpose.msra.mxu0 0
        %2361 = vmatprep.subr.bf16.mxu0 0
        %2362 = vmatpush2.bf16.xpose.msra.mxu0 0
        %2363 = vmatprep.subr.bf16.mxu0 0
        %2364 = vmatpush2.bf16.xpose.msra.mxu0 0
        %2365 = vmatprep.subr.bf16.mxu0 0
        %2366 = vmatpush2.bf16.xpose.msra.mxu0 0
        %2367 = vmatprep.subr.bf16.mxu0 0
        %2368 = vmatpush2.bf16.xpose.msra.mxu0 0
        %2369 = vmatprep.subr.bf16.mxu0 0
        %2370 = vmatpush2.bf16.xpose.msra.mxu0 0
        %2371 = vmatprep.subr.bf16.mxu0 0
        %2372 = vmatpush2.bf16.xpose.msra.mxu0 0
        %2373 = vmatprep.subr.bf16.mxu0 0
        %2374 = vmatpush2.bf16.xpose.msra.mxu0 0
        %2375 = vmatprep.mubr.bf16.mxu0 0
        %2376 = vmatmul.mubr.bf16.gmra.mxu0 %v2338
        %v2377 = vpop.f32.mrf.mxu0
        %v2378 = vadd.f32 0.0, %v2377
        %v2379 = vpop.f32.mrf.mxu0
        %v2380 = vpop.f32.mrf.mxu0
        %v2381 = vpop.f32.mrf.mxu0
        %2382 = vdwg.mxu0
        %v2383 = vsel %vm1183, -3.4028235e+38, %v2378
        %v2384 = vsel %vm1185, %v2383, -inf
        %2385 = vmax.xlane.f32.xlu0 %v2384
        %v2386 = vpop.xlane.xlu0 %2385
        %v2387 = vsub.f32 %v2383, %v2386
        %v2388 = vmul.f32 %v2387, 1.442695
        %v2389 = vpow.pop %v2388
        %v2390 = vsel %vm1185, %v2389, 0.0
        %2391 = vadd.xlane.f32.xlu0 %v2390
        %v2392 = vpop.xlane.xlu0 %2391
        %v2393 = vrcp.pop %v2392
        %v2394 = vmul.f32 %v2389, %v2393
        %v2395 = vpack.c.bf16 %v2394, %v2394
        %2397 = vrot.lane.b32.xlu0 %v2224, 112
        %v2398 = vpop.permute.xlu0 %2397
        %v2400 = vsel %vm1185, %v2395, 0
        %v2403 = vsel %vm1201, %v2398, 0
        %2405 = vmatprep.subr.bf16.mxu0 0
        %2406 = vmatpush1.bf16.msra.mxu0 0
        %2407 = vmatprep.subr.bf16.mxu0 0
        %2408 = vmatpush1.bf16.msra.mxu0 0
        %2409 = vmatprep.subr.bf16.mxu0 0
        %2410 = vmatpush1.bf16.msra.mxu0 0
        %2411 = vmatprep.subr.bf16.mxu0 0
        %2412 = vmatpush1.bf16.msra.mxu0 0
        %2413 = vmatprep.subr.bf16.mxu0 0
        %2414 = vmatpush1.bf16.msra.mxu0 0
        %2415 = vmatprep.subr.bf16.mxu0 0
        %2416 = vmatpush1.bf16.msra.mxu0 0
        %2417 = vmatprep.subr.bf16.mxu0 0
        %2418 = vmatpush1.bf16.msra.mxu0 0
        %2419 = vmatprep.subr.bf16.mxu0 0
        %2420 = vmatpush1.bf16.msra.mxu0 %v2403
        %2421 = vmatprep.subr.bf16.mxu0 0
        %2422 = vmatpush2.bf16.msra.mxu0 0
        %2423 = vmatprep.subr.bf16.mxu0 0
        %2424 = vmatpush2.bf16.msra.mxu0 0
        %2425 = vmatprep.subr.bf16.mxu0 0
        %2426 = vmatpush2.bf16.msra.mxu0 0
        %2427 = vmatprep.subr.bf16.mxu0 0
        %2428 = vmatpush2.bf16.msra.mxu0 0
        %2429 = vmatprep.subr.bf16.mxu0 0
        %2430 = vmatpush2.bf16.msra.mxu0 0
        %2431 = vmatprep.subr.bf16.mxu0 0
        %2432 = vmatpush2.bf16.msra.mxu0 0
        %2433 = vmatprep.subr.bf16.mxu0 0
        %2434 = vmatpush2.bf16.msra.mxu0 0
        %2435 = vmatprep.subr.bf16.mxu0 0
        %2436 = vmatpush2.bf16.msra.mxu0 0
        %2437 = vmatprep.mubr.bf16.mxu0 0
        %2438 = vmatmul.mubr.bf16.gmra.mxu0 %v2400
        %v2439 = vpop.f32.mrf.mxu0
        %v2440 = vadd.f32 0.0, %v2439
        %v2441 = vpop.f32.mrf.mxu0
        %v2442 = vpop.f32.mrf.mxu0
        %v2443 = vpop.f32.mrf.mxu0
        %2444 = vdwg.mxu0
        %2445 = vrot.lane.b32.xlu0 %v2223, 96
        %v2446 = vpop.permute.xlu0 %2445
        %2447 = vrot.lane.b32.xlu0 %v2223, 32
        %v2448 = vpop.permute.xlu0 %2447
        %v2450 = vsel %vm1131, %v2446, 0
        %v2453 = vsel %vm1131, %v2448, 0
        %2455 = vmatprep.subr.bf16.mxu0 0
        %2456 = vmatpush1.bf16.xpose.msra.mxu0 0
        %2457 = vmatprep.subr.bf16.mxu0 0
        %2458 = vmatpush1.bf16.xpose.msra.mxu0 0
        %2459 = vmatprep.subr.bf16.mxu0 0
        %2460 = vmatpush1.bf16.xpose.msra.mxu0 0
        %2461 = vmatprep.subr.bf16.mxu0 0
        %2462 = vmatpush1.bf16.xpose.msra.mxu0 0
        %2463 = vmatprep.subr.bf16.mxu0 0
        %2464 = vmatpush1.bf16.xpose.msra.mxu0 0
        %2465 = vmatprep.subr.bf16.mxu0 0
        %2466 = vmatpush1.bf16.xpose.msra.mxu0 0
        %2467 = vmatprep.subr.bf16.mxu0 0
        %2468 = vmatpush1.bf16.xpose.msra.mxu0 0
        %2469 = vmatprep.subr.bf16.mxu0 0
        %2470 = vmatpush1.bf16.xpose.msra.mxu0 %v2453
        %2471 = vmatprep.subr.bf16.mxu0 0
        %2472 = vmatpush2.bf16.xpose.msra.mxu0 0
        %2473 = vmatprep.subr.bf16.mxu0 0
        %2474 = vmatpush2.bf16.xpose.msra.mxu0 0
        %2475 = vmatprep.subr.bf16.mxu0 0
        %2476 = vmatpush2.bf16.xpose.msra.mxu0 0
        %2477 = vmatprep.subr.bf16.mxu0 0
        %2478 = vmatpush2.bf16.xpose.msra.mxu0 0
        %2479 = vmatprep.subr.bf16.mxu0 0
        %2480 = vmatpush2.bf16.xpose.msra.mxu0 0
        %2481 = vmatprep.subr.bf16.mxu0 0
        %2482 = vmatpush2.bf16.xpose.msra.mxu0 0
        %2483 = vmatprep.subr.bf16.mxu0 0
        %2484 = vmatpush2.bf16.xpose.msra.mxu0 0
        %2485 = vmatprep.subr.bf16.mxu0 0
        %2486 = vmatpush2.bf16.xpose.msra.mxu0 0
        %2487 = vmatprep.mubr.bf16.mxu0 0
        %2488 = vmatmul.mubr.bf16.gmra.mxu0 %v2450
        %v2489 = vpop.f32.mrf.mxu0
        %v2490 = vadd.f32 0.0, %v2489
        %v2491 = vpop.f32.mrf.mxu0
        %v2492 = vpop.f32.mrf.mxu0
        %v2493 = vpop.f32.mrf.mxu0
        %2494 = vdwg.mxu0
        %v2495 = vsel %vm1183, -3.4028235e+38, %v2490
        %v2496 = vsel %vm1185, %v2495, -inf
        %2497 = vmax.xlane.f32.xlu0 %v2496
        %v2498 = vpop.xlane.xlu0 %2497
        %v2499 = vsub.f32 %v2495, %v2498
        %v2500 = vmul.f32 %v2499, 1.442695
        %v2501 = vpow.pop %v2500
        %v2502 = vsel %vm1185, %v2501, 0.0
        %2503 = vadd.xlane.f32.xlu0 %v2502
        %v2504 = vpop.xlane.xlu0 %2503
        %v2505 = vrcp.pop %v2504
        %v2506 = vmul.f32 %v2501, %v2505
        %v2507 = vpack.c.bf16 %v2506, %v2506
        %2508 = vrot.lane.b32.xlu0 %v2224, 96
        %v2509 = vpop.permute.xlu0 %2508
        %v2511 = vsel %vm1185, %v2507, 0
        %v2514 = vsel %vm1201, %v2509, 0
        %2516 = vmatprep.subr.bf16.mxu0 0
        %2517 = vmatpush1.bf16.msra.mxu0 0
        %2518 = vmatprep.subr.bf16.mxu0 0
        %2519 = vmatpush1.bf16.msra.mxu0 0
        %2520 = vmatprep.subr.bf16.mxu0 0
        %2521 = vmatpush1.bf16.msra.mxu0 0
        %2522 = vmatprep.subr.bf16.mxu0 0
        %2523 = vmatpush1.bf16.msra.mxu0 0
        %2524 = vmatprep.subr.bf16.mxu0 0
        %2525 = vmatpush1.bf16.msra.mxu0 0
        %2526 = vmatprep.subr.bf16.mxu0 0
        %2527 = vmatpush1.bf16.msra.mxu0 0
        %2528 = vmatprep.subr.bf16.mxu0 0
        %2529 = vmatpush1.bf16.msra.mxu0 0
        %2530 = vmatprep.subr.bf16.mxu0 0
        %2531 = vmatpush1.bf16.msra.mxu0 %v2514
        %2532 = vmatprep.subr.bf16.mxu0 0
        %2533 = vmatpush2.bf16.msra.mxu0 0
        %2534 = vmatprep.subr.bf16.mxu0 0
        %2535 = vmatpush2.bf16.msra.mxu0 0
        %2536 = vmatprep.subr.bf16.mxu0 0
        %2537 = vmatpush2.bf16.msra.mxu0 0
        %2538 = vmatprep.subr.bf16.mxu0 0
        %2539 = vmatpush2.bf16.msra.mxu0 0
        %2540 = vmatprep.subr.bf16.mxu0 0
        %2541 = vmatpush2.bf16.msra.mxu0 0
        %2542 = vmatprep.subr.bf16.mxu0 0
        %2543 = vmatpush2.bf16.msra.mxu0 0
        %2544 = vmatprep.subr.bf16.mxu0 0
        %2545 = vmatpush2.bf16.msra.mxu0 0
        %2546 = vmatprep.subr.bf16.mxu0 0
        %2547 = vmatpush2.bf16.msra.mxu0 0
        %2548 = vmatprep.mubr.bf16.mxu0 0
        %2549 = vmatmul.mubr.bf16.gmra.mxu0 %v2511
        %v2550 = vpop.f32.mrf.mxu0
        %v2551 = vadd.f32 0.0, %v2550
        %v2552 = vpop.f32.mrf.mxu0
        %v2553 = vpop.f32.mrf.mxu0
        %v2554 = vpop.f32.mrf.mxu0
        %2555 = vdwg.mxu0
        %2556 = vrot.lane.b32.xlu0 %v2223, 80
        %v2557 = vpop.permute.xlu0 %2556
        %2558 = vrot.lane.b32.xlu0 %v2223, 16
        %v2559 = vpop.permute.xlu0 %2558
        %v2561 = vsel %vm1131, %v2557, 0
        %v2564 = vsel %vm1131, %v2559, 0
        %2566 = vmatprep.subr.bf16.mxu0 0
        %2567 = vmatpush1.bf16.xpose.msra.mxu0 0
        %2568 = vmatprep.subr.bf16.mxu0 0
        %2569 = vmatpush1.bf16.xpose.msra.mxu0 0
        %2570 = vmatprep.subr.bf16.mxu0 0
        %2571 = vmatpush1.bf16.xpose.msra.mxu0 0
        %2572 = vmatprep.subr.bf16.mxu0 0
        %2573 = vmatpush1.bf16.xpose.msra.mxu0 0
        %2574 = vmatprep.subr.bf16.mxu0 0
        %2575 = vmatpush1.bf16.xpose.msra.mxu0 0
        %2576 = vmatprep.subr.bf16.mxu0 0
        %2577 = vmatpush1.bf16.xpose.msra.mxu0 0
        %2578 = vmatprep.subr.bf16.mxu0 0
        %2579 = vmatpush1.bf16.xpose.msra.mxu0 0
        %2580 = vmatprep.subr.bf16.mxu0 0
        %2581 = vmatpush1.bf16.xpose.msra.mxu0 %v2564
        %2582 = vmatprep.subr.bf16.mxu0 0
        %2583 = vmatpush2.bf16.xpose.msra.mxu0 0
        %2584 = vmatprep.subr.bf16.mxu0 0
        %2585 = vmatpush2.bf16.xpose.msra.mxu0 0
        %2586 = vmatprep.subr.bf16.mxu0 0
        %2587 = vmatpush2.bf16.xpose.msra.mxu0 0
        %2588 = vmatprep.subr.bf16.mxu0 0
        %2589 = vmatpush2.bf16.xpose.msra.mxu0 0
        %2590 = vmatprep.subr.bf16.mxu0 0
        %2591 = vmatpush2.bf16.xpose.msra.mxu0 0
        %2592 = vmatprep.subr.bf16.mxu0 0
        %2593 = vmatpush2.bf16.xpose.msra.mxu0 0
        %2594 = vmatprep.subr.bf16.mxu0 0
        %2595 = vmatpush2.bf16.xpose.msra.mxu0 0
        %2596 = vmatprep.subr.bf16.mxu0 0
        %2597 = vmatpush2.bf16.xpose.msra.mxu0 0
        %2598 = vmatprep.mubr.bf16.mxu0 0
        %2599 = vmatmul.mubr.bf16.gmra.mxu0 %v2561
        %v2600 = vpop.f32.mrf.mxu0
        %v2601 = vadd.f32 0.0, %v2600
        %v2602 = vpop.f32.mrf.mxu0
        %v2603 = vpop.f32.mrf.mxu0
        %v2604 = vpop.f32.mrf.mxu0
        %2605 = vdwg.mxu0
        %v2606 = vsel %vm1183, -3.4028235e+38, %v2601
        %v2607 = vsel %vm1185, %v2606, -inf
        %2608 = vmax.xlane.f32.xlu0 %v2607
        %v2609 = vpop.xlane.xlu0 %2608
        %v2610 = vsub.f32 %v2606, %v2609
        %v2611 = vmul.f32 %v2610, 1.442695
        %v2612 = vpow.pop %v2611
        %v2613 = vsel %vm1185, %v2612, 0.0
        %2614 = vadd.xlane.f32.xlu0 %v2613
        %v2615 = vpop.xlane.xlu0 %2614
        %v2616 = vrcp.pop %v2615
        %v2617 = vmul.f32 %v2612, %v2616
        %v2618 = vpack.c.bf16 %v2617, %v2617
        %2619 = vrot.lane.b32.xlu0 %v2224, 80
        %v2620 = vpop.permute.xlu0 %2619
        %v2622 = vsel %vm1185, %v2618, 0
        %v2625 = vsel %vm1201, %v2620, 0
        %2627 = vmatprep.subr.bf16.mxu0 0
        %2628 = vmatpush1.bf16.msra.mxu0 0
        %2629 = vmatprep.subr.bf16.mxu0 0
        %2630 = vmatpush1.bf16.msra.mxu0 0
        %2631 = vmatprep.subr.bf16.mxu0 0
        %2632 = vmatpush1.bf16.msra.mxu0 0
        %2633 = vmatprep.subr.bf16.mxu0 0
        %2634 = vmatpush1.bf16.msra.mxu0 0
        %2635 = vmatprep.subr.bf16.mxu0 0
        %2636 = vmatpush1.bf16.msra.mxu0 0
        %2637 = vmatprep.subr.bf16.mxu0 0
        %2638 = vmatpush1.bf16.msra.mxu0 0
        %2639 = vmatprep.subr.bf16.mxu0 0
        %2640 = vmatpush1.bf16.msra.mxu0 0
        %2641 = vmatprep.subr.bf16.mxu0 0
        %2642 = vmatpush1.bf16.msra.mxu0 %v2625
        %2643 = vmatprep.subr.bf16.mxu0 0
        %2644 = vmatpush2.bf16.msra.mxu0 0
        %2645 = vmatprep.subr.bf16.mxu0 0
        %2646 = vmatpush2.bf16.msra.mxu0 0
        %2647 = vmatprep.subr.bf16.mxu0 0
        %2648 = vmatpush2.bf16.msra.mxu0 0
        %2649 = vmatprep.subr.bf16.mxu0 0
        %2650 = vmatpush2.bf16.msra.mxu0 0
        %2651 = vmatprep.subr.bf16.mxu0 0
        %2652 = vmatpush2.bf16.msra.mxu0 0
        %2653 = vmatprep.subr.bf16.mxu0 0
        %2654 = vmatpush2.bf16.msra.mxu0 0
        %2655 = vmatprep.subr.bf16.mxu0 0
        %2656 = vmatpush2.bf16.msra.mxu0 0
        %2657 = vmatprep.subr.bf16.mxu0 0
        %2658 = vmatpush2.bf16.msra.mxu0 0
        %2659 = vmatprep.mubr.bf16.mxu0 0
        %2660 = vmatmul.mubr.bf16.gmra.mxu0 %v2622
        %v2661 = vpop.f32.mrf.mxu0
        %v2662 = vadd.f32 0.0, %v2661
        %v2663 = vpop.f32.mrf.mxu0
        %v2664 = vpop.f32.mrf.mxu0
        %v2665 = vpop.f32.mrf.mxu0
        %2666 = vdwg.mxu0
        %2668 = vrot.lane.b32.xlu0 %v2440, 16
        %v2669 = vpop.permute.xlu0 %2668
        %2672 = vrot.lane.b32.xlu0 %v2551, 32
        %v2673 = vpop.permute.xlu0 %2672
        %2676 = vrot.lane.b32.xlu0 %v2662, 48
        %v2677 = vpop.permute.xlu0 %2676
        %v2679 = vsel %vm1131, %v2328, %v2669
        %v2680 = vsel %vm1592, %v2679, %v2673
        %v2681 = vsel %vm1594, %v2680, %v2677
        %s2682 = scalar_lea.vmem %s8, 32
        %v2683 = vld [vmem:[%s2682] sm:$0xf]
        %v2684 = vld [vmem:[%s2682 + $0x4] sm:$0xf]
        %v2685 = vld [vmem:[%s2682 + $0x8] sm:$0xf]
        %v2686 = vld [vmem:[%s2682 + $0xc] sm:$0xf]
        %v2687 = vld [vmem:[%s2682 + $0x10] sm:$0xf]
        %v2688 = vld [vmem:[%s2682 + $0x14] sm:$0xf]
        %v2689 = vld [vmem:[%s2682 + $0x18] sm:$0xf]
        %v2690 = vld [vmem:[%s2682 + $0x1c] sm:$0xf]
        %s2691 = scalar_lea.vmem %s9, 1
        %v2692 = vld [vmem:[%s2691] sm:$0x1]
        %v2693 = vpack.c.bf16 %v2681, %v2681
        %v2695 = vlaneseq
        %v2696 = vshrl.u32 %v2695, 7
        %v2697 = vsub.s32 0, %v2696
        %v2698 = vrot.slane %v2692, %v2697
        %v2708 = vunpack.c.l.b16 %v2683
        %v2709 = vunpack.c.l.b16 %v2684
        %v2710 = vunpack.c.l.b16 %v2685
        %v2711 = vunpack.c.l.b16 %v2686
        %v2712 = vunpack.c.l.b16 %v2687
        %v2713 = vunpack.c.l.b16 %v2688
        %v2714 = vunpack.c.l.b16 %v2689
        %v2715 = vunpack.c.l.b16 %v2690
        %v2716 = vpack.c.b16 %v2709, %v2708
        %v2717 = vpack.c.b16 %v2711, %v2710
        %v2718 = vpack.c.b16 %v2713, %v2712
        %v2719 = vpack.c.b16 %v2715, %v2714
        %v2725 = vsel %vm990, %v2693, 0
        %2727 = vmatprep.subr.bf16.mxu0 0
        %2728 = vmatpush1.bf16.msra.mxu0 0
        %2729 = vmatprep.subr.bf16.mxu0 0
        %2730 = vmatpush1.bf16.msra.mxu0 0
        %2731 = vmatprep.subr.bf16.mxu0 0
        %2732 = vmatpush1.bf16.msra.mxu0 0
        %2733 = vmatprep.subr.bf16.mxu0 0
        %2734 = vmatpush1.bf16.msra.mxu0 0
        %2735 = vmatprep.subr.bf16.mxu0 0
        %2736 = vmatpush1.bf16.msra.mxu0 %v2719
        %2737 = vmatprep.subr.bf16.mxu0 0
        %2738 = vmatpush1.bf16.msra.mxu0 %v2718
        %2739 = vmatprep.subr.bf16.mxu0 0
        %2740 = vmatpush1.bf16.msra.mxu0 %v2717
        %2741 = vmatprep.subr.bf16.mxu0 0
        %2742 = vmatpush1.bf16.msra.mxu0 %v2716
        %2743 = vmatprep.subr.bf16.mxu0 0
        %2744 = vmatpush2.bf16.msra.mxu0 0
        %2745 = vmatprep.subr.bf16.mxu0 0
        %2746 = vmatpush2.bf16.msra.mxu0 0
        %2747 = vmatprep.subr.bf16.mxu0 0
        %2748 = vmatpush2.bf16.msra.mxu0 0
        %2749 = vmatprep.subr.bf16.mxu0 0
        %2750 = vmatpush2.bf16.msra.mxu0 0
        %2751 = vmatprep.subr.bf16.mxu0 0
        %2752 = vmatpush2.bf16.msra.mxu0 0
        %2753 = vmatprep.subr.bf16.mxu0 0
        %2754 = vmatpush2.bf16.msra.mxu0 0
        %2755 = vmatprep.subr.bf16.mxu0 0
        %2756 = vmatpush2.bf16.msra.mxu0 0
        %2757 = vmatprep.subr.bf16.mxu0 0
        %2758 = vmatpush2.bf16.msra.mxu0 0
        %2759 = vmatprep.mubr.bf16.mxu0 0
        %2760 = vmatmul.mubr.bf16.gmra.mxu0 %v2725
        %v2761 = vpop.f32.mrf.mxu0
        %v2762 = vadd.f32 %v2698, %v2761
        %v2763 = vpop.f32.mrf.mxu0
        %v2764 = vpop.f32.mrf.mxu0
        %v2765 = vpop.f32.mrf.mxu0
        %2766 = vdwg.mxu0
        %v2767 = vadd.f32 %v2762, %v2115
        %s2768 = scalar_lea.vmem %s10, 1
        %v2769 = vld [vmem:[%s2768] sm:$0x1]
        %s2770 = scalar_lea.vmem %s11, 1
        %v2771 = vld [vmem:[%s2770] sm:$0x1]
        %v2772 = vsel %vm990, %v2767, 0.0
        %2773 = vadd.xlane.f32.xlu0 %v2772
        %v2774 = vpop.xlane.xlu0 %2773
        %v2775 = vmul.f32 %v2774, %v994
        %v2776 = vsub.f32 %v2767, %v2775
        %v2777 = vmul.f32 %v2776, %v2776
        %v2778 = vsel %vm990, %v2777, 0.0
        %2779 = vadd.xlane.f32.xlu0 %v2778
        %v2780 = vpop.xlane.xlu0 %2779
        %v2781 = vmul.f32 %v2780, %v994
        %v2782 = vadd.f32 %v2781, 1e-12
        %v2783 = vrsqrt.pop %v2782
        %v2784 = vmul.f32 %v2776, %v2783
        %v2786 = vlaneseq
        %v2787 = vshrl.u32 %v2786, 7
        %v2788 = vsub.s32 0, %v2787
        %v2789 = vrot.slane %v2769, %v2788
        %v2791 = vmul.f32 %v2784, %v2789
        %v2793 = vlaneseq
        %v2794 = vshrl.u32 %v2793, 7
        %v2795 = vsub.s32 0, %v2794
        %v2796 = vrot.slane %v2771, %v2795
        %v2798 = vadd.f32 %v2791, %v2796
        %s2799 = scalar_lea.vmem [#allocation2], 32
        %v2800 = vld [vmem:[%s2799] sm:$0xf]
        %v2801 = vld [vmem:[%s2799 + $0x4] sm:$0xf]
        %v2802 = vld [vmem:[%s2799 + $0x8] sm:$0xf]
        %v2803 = vld [vmem:[%s2799 + $0xc] sm:$0xf]
        %v2804 = vld [vmem:[%s2799 + $0x10] sm:$0xf]
        %v2805 = vld [vmem:[%s2799 + $0x14] sm:$0xf]
        %v2806 = vld [vmem:[%s2799 + $0x18] sm:$0xf]
        %v2807 = vld [vmem:[%s2799 + $0x1c] sm:$0xf]
        %s2808 = scalar_lea.vmem %s13, 1
        %v2809 = vld [vmem:[%s2808] sm:$0x1]
        %v2810 = vpack.c.bf16 %v2798, %v2798
        %v2812 = vlaneseq
        %v2813 = vshrl.u32 %v2812, 7
        %v2814 = vsub.s32 0, %v2813
        %v2815 = vrot.slane %v2809, %v2814
        %v2825 = vunpack.c.l.b16 %v2800
        %v2826 = vunpack.c.l.b16 %v2801
        %v2827 = vunpack.c.l.b16 %v2802
        %v2828 = vunpack.c.l.b16 %v2803
        %v2829 = vunpack.c.l.b16 %v2804
        %v2830 = vunpack.c.l.b16 %v2805
        %v2831 = vunpack.c.l.b16 %v2806
        %v2832 = vunpack.c.l.b16 %v2807
        %v2833 = vpack.c.b16 %v2826, %v2825
        %v2834 = vpack.c.b16 %v2828, %v2827
        %v2835 = vpack.c.b16 %v2830, %v2829
        %v2836 = vpack.c.b16 %v2832, %v2831
        %v2842 = vsel %vm990, %v2810, 0
        %2844 = vmatprep.subr.bf16.mxu0 0
        %2845 = vmatpush1.bf16.msra.mxu0 0
        %2846 = vmatprep.subr.bf16.mxu0 0
        %2847 = vmatpush1.bf16.msra.mxu0 0
        %2848 = vmatprep.subr.bf16.mxu0 0
        %2849 = vmatpush1.bf16.msra.mxu0 0
        %2850 = vmatprep.subr.bf16.mxu0 0
        %2851 = vmatpush1.bf16.msra.mxu0 0
        %2852 = vmatprep.subr.bf16.mxu0 0
        %2853 = vmatpush1.bf16.msra.mxu0 %v2836
        %2854 = vmatprep.subr.bf16.mxu0 0
        %2855 = vmatpush1.bf16.msra.mxu0 %v2835
        %2856 = vmatprep.subr.bf16.mxu0 0
        %2857 = vmatpush1.bf16.msra.mxu0 %v2834
        %2858 = vmatprep.subr.bf16.mxu0 0
        %2859 = vmatpush1.bf16.msra.mxu0 %v2833
        %2860 = vmatprep.subr.bf16.mxu0 0
        %2861 = vmatpush2.bf16.msra.mxu0 0
        %2862 = vmatprep.subr.bf16.mxu0 0
        %2863 = vmatpush2.bf16.msra.mxu0 0
        %2864 = vmatprep.subr.bf16.mxu0 0
        %2865 = vmatpush2.bf16.msra.mxu0 0
        %2866 = vmatprep.subr.bf16.mxu0 0
        %2867 = vmatpush2.bf16.msra.mxu0 0
        %2868 = vmatprep.subr.bf16.mxu0 0
        %2869 = vmatpush2.bf16.msra.mxu0 0
        %2870 = vmatprep.subr.bf16.mxu0 0
        %2871 = vmatpush2.bf16.msra.mxu0 0
        %2872 = vmatprep.subr.bf16.mxu0 0
        %2873 = vmatpush2.bf16.msra.mxu0 0
        %2874 = vmatprep.subr.bf16.mxu0 0
        %2875 = vmatpush2.bf16.msra.mxu0 0
        %2876 = vmatprep.mubr.bf16.mxu0 0
        %2877 = vmatmul.mubr.bf16.gmra.mxu0 %v2842
        %v2878 = vpop.f32.mrf.mxu0
        %v2879 = vadd.f32 %v2815, %v2878
        %v2880 = vpop.f32.mrf.mxu0
        %v2881 = vpop.f32.mrf.mxu0
        %v2882 = vpop.f32.mrf.mxu0
        %2883 = vdwg.mxu0
        %v2884 = vmul.f32 %v2879, 0.5
        %v2885 = vmul.f32 %v2879, 0.70710677
        %v2886 = verf.f32.pop %v2885
        %v2887 = vadd.f32 %v2886, 1.0
        %v2888 = vmul.f32 %v2884, %v2887
        %s2889 = scalar_lea.vmem %s14, 64
        %v2890 = vld [vmem:[%s2889] sm:$0xf]
        %v2891 = vld [vmem:[%s2889 + $0x4] sm:$0xf]
        %v2892 = vld [vmem:[%s2889 + $0x8] sm:$0xf]
        %v2893 = vld [vmem:[%s2889 + $0xc] sm:$0xf]
        %v2894 = vld [vmem:[%s2889 + $0x10] sm:$0xf]
        %v2895 = vld [vmem:[%s2889 + $0x14] sm:$0xf]
        %v2896 = vld [vmem:[%s2889 + $0x18] sm:$0xf]
        %v2897 = vld [vmem:[%s2889 + $0x1c] sm:$0xf]
        %v2898 = vld [vmem:[%s2889 + $0x20] sm:$0xf]
        %v2899 = vld [vmem:[%s2889 + $0x24] sm:$0xf]
        %v2900 = vld [vmem:[%s2889 + $0x28] sm:$0xf]
        %v2901 = vld [vmem:[%s2889 + $0x2c] sm:$0xf]
        %v2902 = vld [vmem:[%s2889 + $0x30] sm:$0xf]
        %v2903 = vld [vmem:[%s2889 + $0x34] sm:$0xf]
        %v2904 = vld [vmem:[%s2889 + $0x38] sm:$0xf]
        %v2905 = vld [vmem:[%s2889 + $0x3c] sm:$0xf]
        %s2906 = scalar_lea.vmem %s15, 1
        %v2907 = vld [vmem:[%s2906] sm:$0x1]
        %v2908 = vpack.c.bf16 %v2888, %v2888
        %v2910 = vlaneseq
        %v2911 = vshrl.u32 %v2910, 7
        %v2912 = vsub.s32 0, %v2911
        %v2913 = vrot.slane %v2907, %v2912
        %v2931 = vunpack.c.l.b16 %v2890
        %v2932 = vunpack.c.l.b16 %v2891
        %v2933 = vunpack.c.l.b16 %v2892
        %v2934 = vunpack.c.l.b16 %v2893
        %v2935 = vunpack.c.l.b16 %v2894
        %v2936 = vunpack.c.l.b16 %v2895
        %v2937 = vunpack.c.l.b16 %v2896
        %v2938 = vunpack.c.l.b16 %v2897
        %v2939 = vunpack.c.l.b16 %v2898
        %v2940 = vunpack.c.l.b16 %v2899
        %v2941 = vunpack.c.l.b16 %v2900
        %v2942 = vunpack.c.l.b16 %v2901
        %v2943 = vunpack.c.l.b16 %v2902
        %v2944 = vunpack.c.l.b16 %v2903
        %v2945 = vunpack.c.l.b16 %v2904
        %v2946 = vunpack.c.l.b16 %v2905
        %v2947 = vpack.c.b16 %v2932, %v2931
        %v2948 = vpack.c.b16 %v2934, %v2933
        %v2949 = vpack.c.b16 %v2936, %v2935
        %v2950 = vpack.c.b16 %v2938, %v2937
        %v2951 = vpack.c.b16 %v2940, %v2939
        %v2952 = vpack.c.b16 %v2942, %v2941
        %v2953 = vpack.c.b16 %v2944, %v2943
        %v2954 = vpack.c.b16 %v2946, %v2945
        %2963 = vmatprep.subr.bf16.mxu0 0
        %2964 = vmatpush1.bf16.msra.mxu0 %v2954
        %2965 = vmatprep.subr.bf16.mxu0 0
        %2966 = vmatpush1.bf16.msra.mxu0 %v2953
        %2967 = vmatprep.subr.bf16.mxu0 0
        %2968 = vmatpush1.bf16.msra.mxu0 %v2952
        %2969 = vmatprep.subr.bf16.mxu0 0
        %2970 = vmatpush1.bf16.msra.mxu0 %v2951
        %2971 = vmatprep.subr.bf16.mxu0 0
        %2972 = vmatpush1.bf16.msra.mxu0 %v2950
        %2973 = vmatprep.subr.bf16.mxu0 0
        %2974 = vmatpush1.bf16.msra.mxu0 %v2949
        %2975 = vmatprep.subr.bf16.mxu0 0
        %2976 = vmatpush1.bf16.msra.mxu0 %v2948
        %2977 = vmatprep.subr.bf16.mxu0 0
        %2978 = vmatpush1.bf16.msra.mxu0 %v2947
        %2979 = vmatprep.subr.bf16.mxu0 0
        %2980 = vmatpush2.bf16.msra.mxu0 0
        %2981 = vmatprep.subr.bf16.mxu0 0
        %2982 = vmatpush2.bf16.msra.mxu0 0
        %2983 = vmatprep.subr.bf16.mxu0 0
        %2984 = vmatpush2.bf16.msra.mxu0 0
        %2985 = vmatprep.subr.bf16.mxu0 0
        %2986 = vmatpush2.bf16.msra.mxu0 0
        %2987 = vmatprep.subr.bf16.mxu0 0
        %2988 = vmatpush2.bf16.msra.mxu0 0
        %2989 = vmatprep.subr.bf16.mxu0 0
        %2990 = vmatpush2.bf16.msra.mxu0 0
        %2991 = vmatprep.subr.bf16.mxu0 0
        %2992 = vmatpush2.bf16.msra.mxu0 0
        %2993 = vmatprep.subr.bf16.mxu0 0
        %2994 = vmatpush2.bf16.msra.mxu0 0
        %2995 = vmatprep.mubr.bf16.mxu0 0
        %2996 = vmatmul.mubr.bf16.gmra.mxu0 %v2908
        %v2997 = vpop.f32.mrf.mxu0
        %v2998 = vadd.f32 %v2913, %v2997
        %v2999 = vpop.f32.mrf.mxu0
        %v3000 = vpop.f32.mrf.mxu0
        %v3001 = vpop.f32.mrf.mxu0
        %3002 = vdwg.mxu0
        %v3003 = vadd.f32 %v2998, %v2798
        %s3004 = scalar_lea.vmem %s16, 1
        %v3005 = vld [vmem:[%s3004] sm:$0x1]
        %s3006 = scalar_lea.vmem [#allocation5], 1
        %v3007 = vld [vmem:[%s3006] sm:$0x1]
        %v3008 = vsel %vm990, %v3003, 0.0
        %3009 = vadd.xlane.f32.xlu0 %v3008
        %v3010 = vpop.xlane.xlu0 %3009
        %v3011 = vmul.f32 %v3010, %v994
        %v3012 = vsub.f32 %v3003, %v3011
        %v3013 = vmul.f32 %v3012, %v3012
        %v3014 = vsel %vm990, %v3013, 0.0
        %3015 = vadd.xlane.f32.xlu0 %v3014
        %v3016 = vpop.xlane.xlu0 %3015
        %v3017 = vmul.f32 %v3016, %v994
        %v3018 = vadd.f32 %v3017, 1e-12
        %v3019 = vrsqrt.pop %v3018
        %v3020 = vmul.f32 %v3012, %v3019
        %v3022 = vlaneseq
        %v3023 = vshrl.u32 %v3022, 7
        %v3024 = vsub.s32 0, %v3023
        %v3025 = vrot.slane %v3005, %v3024
        %v3027 = vmul.f32 %v3020, %v3025
        %v3029 = vlaneseq
        %v3030 = vshrl.u32 %v3029, 7
        %v3031 = vsub.s32 0, %v3030
        %v3032 = vrot.slane %v3007, %v3031
        %v3034 = vadd.f32 %v3027, %v3032
        %s3035 = scalar_lea.vmem %s18, 1
        %v3036 = vld [vmem:[%s3035] sm:$0x1]
        %s3037 = scalar_lea.vmem [#allocation7], 1
        %v3038 = vld [vmem:[%s3037] sm:$0x1]
        %v3039 = vsel %vm990, %v3034, 0.0
        %3040 = vadd.xlane.f32.xlu0 %v3039
        %v3041 = vpop.xlane.xlu0 %3040
        %v3042 = vmul.f32 %v3041, %v994
        %v3043 = vsub.f32 %v3034, %v3042
        %v3044 = vmul.f32 %v3043, %v3043
        %v3045 = vsel %vm990, %v3044, 0.0
        %3046 = vadd.xlane.f32.xlu0 %v3045
        %v3047 = vpop.xlane.xlu0 %3046
        %v3048 = vmul.f32 %v3047, %v994
        %v3049 = vadd.f32 %v3048, 1e-05
        %v3050 = vrsqrt.pop %v3049
        %v3051 = vmul.f32 %v3043, %v3050
        %v3053 = vlaneseq
        %v3054 = vshrl.u32 %v3053, 7
        %v3055 = vsub.s32 0, %v3054
        %v3056 = vrot.slane %v3036, %v3055
        %v3058 = vmul.f32 %v3051, %v3056
        %v3060 = vlaneseq
        %v3061 = vshrl.u32 %v3060, 7
        %v3062 = vsub.s32 0, %v3061
        %v3063 = vrot.slane %v3038, %v3062
        %v3065 = vadd.f32 %v3058, %v3063
        %s3066 = scalar_lea.vmem %s20, 32
        %v3067 = vld [vmem:[%s3066] sm:$0xf]
        %v3068 = vld [vmem:[%s3066 + $0x4] sm:$0xf]
        %v3069 = vld [vmem:[%s3066 + $0x8] sm:$0xf]
        %v3070 = vld [vmem:[%s3066 + $0xc] sm:$0xf]
        %v3071 = vld [vmem:[%s3066 + $0x10] sm:$0xf]
        %v3072 = vld [vmem:[%s3066 + $0x14] sm:$0xf]
        %v3073 = vld [vmem:[%s3066 + $0x18] sm:$0xf]
        %v3074 = vld [vmem:[%s3066 + $0x1c] sm:$0xf]
        %s3075 = scalar_lea.vmem [#allocation8], 1
        %v3076 = vld [vmem:[%s3075] sm:$0x1]
        %v3077 = vpack.c.bf16 %v3065, %v3065
        %v3079 = vlaneseq
        %v3080 = vshrl.u32 %v3079, 7
        %v3081 = vsub.s32 0, %v3080
        %v3082 = vrot.slane %v3076, %v3081
        %v3092 = vunpack.c.l.b16 %v3067
        %v3093 = vunpack.c.l.b16 %v3068
        %v3094 = vunpack.c.l.b16 %v3069
        %v3095 = vunpack.c.l.b16 %v3070
        %v3096 = vunpack.c.l.b16 %v3071
        %v3097 = vunpack.c.l.b16 %v3072
        %v3098 = vunpack.c.l.b16 %v3073
        %v3099 = vunpack.c.l.b16 %v3074
        %v3100 = vpack.c.b16 %v3093, %v3092
        %v3101 = vpack.c.b16 %v3095, %v3094
        %v3102 = vpack.c.b16 %v3097, %v3096
        %v3103 = vpack.c.b16 %v3099, %v3098
        %v3109 = vsel %vm990, %v3077, 0
        %3111 = vmatprep.subr.bf16.mxu0 0
        %3112 = vmatpush1.bf16.msra.mxu0 0
        %3113 = vmatprep.subr.bf16.mxu0 0
        %3114 = vmatpush1.bf16.msra.mxu0 0
        %3115 = vmatprep.subr.bf16.mxu0 0
        %3116 = vmatpush1.bf16.msra.mxu0 0
        %3117 = vmatprep.subr.bf16.mxu0 0
        %3118 = vmatpush1.bf16.msra.mxu0 0
        %3119 = vmatprep.subr.bf16.mxu0 0
        %3120 = vmatpush1.bf16.msra.mxu0 %v3103
        %3121 = vmatprep.subr.bf16.mxu0 0
        %3122 = vmatpush1.bf16.msra.mxu0 %v3102
        %3123 = vmatprep.subr.bf16.mxu0 0
        %3124 = vmatpush1.bf16.msra.mxu0 %v3101
        %3125 = vmatprep.subr.bf16.mxu0 0
        %3126 = vmatpush1.bf16.msra.mxu0 %v3100
        %3127 = vmatprep.subr.bf16.mxu0 0
        %3128 = vmatpush2.bf16.msra.mxu0 0
        %3129 = vmatprep.subr.bf16.mxu0 0
        %3130 = vmatpush2.bf16.msra.mxu0 0
        %3131 = vmatprep.subr.bf16.mxu0 0
        %3132 = vmatpush2.bf16.msra.mxu0 0
        %3133 = vmatprep.subr.bf16.mxu0 0
        %3134 = vmatpush2.bf16.msra.mxu0 0
        %3135 = vmatprep.subr.bf16.mxu0 0
        %3136 = vmatpush2.bf16.msra.mxu0 0
        %3137 = vmatprep.subr.bf16.mxu0 0
        %3138 = vmatpush2.bf16.msra.mxu0 0
        %3139 = vmatprep.subr.bf16.mxu0 0
        %3140 = vmatpush2.bf16.msra.mxu0 0
        %3141 = vmatprep.subr.bf16.mxu0 0
        %3142 = vmatpush2.bf16.msra.mxu0 0
        %3143 = vmatprep.mubr.bf16.mxu0 0
        %3144 = vmatmul.mubr.bf16.gmra.mxu0 %v3109
        %v3145 = vpop.f32.mrf.mxu0
        %v3146 = vadd.f32 %v3082, %v3145
        %v3147 = vpop.f32.mrf.mxu0
        %v3148 = vpop.f32.mrf.mxu0
        %v3149 = vpop.f32.mrf.mxu0
        %3150 = vdwg.mxu0
        %v3151 = vmul.f32 %v3146, 0.5
        %v3152 = vmul.f32 %v3146, 0.70710677
        %v3153 = verf.f32.pop %v3152
        %v3154 = vadd.f32 %v3153, 1.0
        %v3155 = vmul.f32 %v3151, %v3154
        %s3156 = scalar_lea.vmem %s22, 8
        %v3157 = vld [vmem:[%s3156] sm:$0xf]
        %v3158 = vld [vmem:[%s3156 + $0x4] sm:$0xf]
        %s3159 = scalar_lea.vmem [#allocation10], 1
        %v3160 = vld [vmem:[%s3159] sm:$0x1]
        %v3161 = vpack.c.bf16 %v3155, %v3155
        %v3163 = vlaneseq
        %v3164 = vshrl.u32 %v3163, 7
        %v3165 = vsub.s32 0, %v3164
        %v3166 = vrot.slane %v3160, %v3165
        %v3170 = vunpack.c.l.b16 %v3157
        %v3171 = vunpack.c.l.b16 %v3158
        %v3172 = vpack.c.b16 %v3171, %v3170
        %v3175 = vsel %vm1131, %v3161, 0
        %3177 = vmatprep.subr.bf16.mxu0 0
        %3178 = vmatpush1.bf16.msra.mxu0 0
        %3179 = vmatprep.subr.bf16.mxu0 0
        %3180 = vmatpush1.bf16.msra.mxu0 0
        %3181 = vmatprep.subr.bf16.mxu0 0
        %3182 = vmatpush1.bf16.msra.mxu0 0
        %3183 = vmatprep.subr.bf16.mxu0 0
        %3184 = vmatpush1.bf16.msra.mxu0 0
        %3185 = vmatprep.subr.bf16.mxu0 0
        %3186 = vmatpush1.bf16.msra.mxu0 0
        %3187 = vmatprep.subr.bf16.mxu0 0
        %3188 = vmatpush1.bf16.msra.mxu0 0
        %3189 = vmatprep.subr.bf16.mxu0 0
        %3190 = vmatpush1.bf16.msra.mxu0 0
        %3191 = vmatprep.subr.bf16.mxu0 0
        %3192 = vmatpush1.bf16.msra.mxu0 %v3172
        %3193 = vmatprep.subr.bf16.mxu0 0
        %3194 = vmatpush2.bf16.msra.mxu0 0
        %3195 = vmatprep.subr.bf16.mxu0 0
        %3196 = vmatpush2.bf16.msra.mxu0 0
        %3197 = vmatprep.subr.bf16.mxu0 0
        %3198 = vmatpush2.bf16.msra.mxu0 0
        %3199 = vmatprep.subr.bf16.mxu0 0
        %3200 = vmatpush2.bf16.msra.mxu0 0
        %3201 = vmatprep.subr.bf16.mxu0 0
        %3202 = vmatpush2.bf16.msra.mxu0 0
        %3203 = vmatprep.subr.bf16.mxu0 0
        %3204 = vmatpush2.bf16.msra.mxu0 0
        %3205 = vmatprep.subr.bf16.mxu0 0
        %3206 = vmatpush2.bf16.msra.mxu0 0
        %3207 = vmatprep.subr.bf16.mxu0 0
        %3208 = vmatpush2.bf16.msra.mxu0 0
        %3209 = vmatprep.mubr.bf16.mxu0 0
        %3210 = vmatmul.mubr.bf16.gmra.mxu0 %v3175
        %v3211 = vpop.f32.mrf.mxu0
        %v3212 = vadd.f32 %v3166, %v3211
        %v3213 = vpop.f32.mrf.mxu0
        %v3214 = vpop.f32.mrf.mxu0
        %v3215 = vpop.f32.mrf.mxu0
        %3216 = vdwg.mxu0
        %v3217 = vadd.f32 %v3212, %v3034
        %v3218 = vpack.c.bf16 %v3217, %v3217
        %s3219 = scalar_lea.vmem %s6, 128
        %v3220 = vld [vmem:[%s3219] sm:$0xff]
        %v3221 = vld [vmem:[%s3219 + $0x8] sm:$0xff]
        %v3222 = vld [vmem:[%s3219 + $0x10] sm:$0xff]
        %v3223 = vld [vmem:[%s3219 + $0x18] sm:$0xff]
        %v3224 = vld [vmem:[%s3219 + $0x20] sm:$0xff]
        %v3225 = vld [vmem:[%s3219 + $0x28] sm:$0xff]
        %v3226 = vld [vmem:[%s3219 + $0x30] sm:$0xff]
        %v3227 = vld [vmem:[%s3219 + $0x38] sm:$0xff]
        %s3228 = scalar_lea.vmem %s7, 4
        %v3229 = vld [vmem:[%s3228] sm:$0x3]
        %v3231 = vlaneseq
        %v3232 = vshrl.u32 %v3231, 7
        %v3233 = vsub.s32 0, %v3232
        %v3234 = vrot.slane %v3229, %v3233
        %v3235 = vlaneseq
        %v3236 = vshrl.u32 %v3235, 7
        %v3237 = vsub.s32 1, %v3236
        %v3238 = vrot.slane %v3229, %v3237
        %v3249 = vunpack.c.l.b16 %v3220
        %v3250 = vunpack.c.h.b16 %v3220
        %v3251 = vunpack.c.l.b16 %v3221
        %v3252 = vunpack.c.h.b16 %v3221
        %v3253 = vunpack.c.l.b16 %v3222
        %v3254 = vunpack.c.h.b16 %v3222
        %v3255 = vunpack.c.l.b16 %v3223
        %v3256 = vunpack.c.h.b16 %v3223
        %v3257 = vunpack.c.l.b16 %v3224
        %v3258 = vunpack.c.h.b16 %v3224
        %v3259 = vunpack.c.l.b16 %v3225
        %v3260 = vunpack.c.h.b16 %v3225
        %v3261 = vunpack.c.l.b16 %v3226
        %v3262 = vunpack.c.h.b16 %v3226
        %v3263 = vunpack.c.l.b16 %v3227
        %v3264 = vunpack.c.h.b16 %v3227
        %v3265 = vpack.c.b16 %v3251, %v3249
        %v3266 = vpack.c.b16 %v3252, %v3250
        %v3267 = vpack.c.b16 %v3255, %v3253
        %v3268 = vpack.c.b16 %v3256, %v3254
        %v3269 = vpack.c.b16 %v3259, %v3257
        %v3270 = vpack.c.b16 %v3260, %v3258
        %v3271 = vpack.c.b16 %v3263, %v3261
        %v3272 = vpack.c.b16 %v3264, %v3262
        %v3282 = vsel %vm990, %v3218, 0
        %3284 = vmatprep.subr.bf16.mxu0 0
        %3285 = vmatpush1.bf16.msra.mxu0 0
        %3286 = vmatprep.subr.bf16.mxu0 0
        %3287 = vmatpush1.bf16.msra.mxu0 0
        %3288 = vmatprep.subr.bf16.mxu0 0
        %3289 = vmatpush1.bf16.msra.mxu0 0
        %3290 = vmatprep.subr.bf16.mxu0 0
        %3291 = vmatpush1.bf16.msra.mxu0 0
        %3292 = vmatprep.subr.bf16.mxu0 %v3272
        %3293 = vmatpush1.bf16.msra.mxu0 %v3271
        %3294 = vmatprep.subr.bf16.mxu0 %v3270
        %3295 = vmatpush1.bf16.msra.mxu0 %v3269
        %3296 = vmatprep.subr.bf16.mxu0 %v3268
        %3297 = vmatpush1.bf16.msra.mxu0 %v3267
        %3298 = vmatprep.subr.bf16.mxu0 %v3266
        %3299 = vmatpush1.bf16.msra.mxu0 %v3265
        %3300 = vmatprep.subr.bf16.mxu0 0
        %3301 = vmatpush2.bf16.msra.mxu0 0
        %3302 = vmatprep.subr.bf16.mxu0 0
        %3303 = vmatpush2.bf16.msra.mxu0 0
        %3304 = vmatprep.subr.bf16.mxu0 0
        %3305 = vmatpush2.bf16.msra.mxu0 0
        %3306 = vmatprep.subr.bf16.mxu0 0
        %3307 = vmatpush2.bf16.msra.mxu0 0
        %3308 = vmatprep.subr.bf16.mxu0 0
        %3309 = vmatpush2.bf16.msra.mxu0 0
        %3310 = vmatprep.subr.bf16.mxu0 0
        %3311 = vmatpush2.bf16.msra.mxu0 0
        %3312 = vmatprep.subr.bf16.mxu0 0
        %3313 = vmatpush2.bf16.msra.mxu0 0
        %3314 = vmatprep.subr.bf16.mxu0 0
        %3315 = vmatpush2.bf16.msra.mxu0 0
        %3316 = vmatprep.mubr.bf16.mxu0 0
        %3317 = vmatmul.mubr.bf16.gmra.mxu0 %v3282
        %v3318 = vpop.f32.mrf.mxu0
        %v3319 = vadd.f32 %v3234, %v3318
        %v3320 = vpop.f32.mrf.mxu0
        %v3321 = vadd.f32 %v3238, %v3320
        %v3322 = vpop.f32.mrf.mxu0
        %v3323 = vpop.f32.mrf.mxu0
        %3324 = vdwg.mxu0
        %v3325 = vpack.c.bf16 %v3319, %v3319
        %v3326 = vpack.c.bf16 %v3321, %v3321
        %3328 = vrot.lane.b32.xlu0 %v3325, 64
        %v3329 = vpop.permute.xlu0 %3328
        %v3331 = vsel %vm1131, %v3325, 0
        %v3334 = vsel %vm1131, %v3329, 0
        %3336 = vmatprep.subr.bf16.mxu0 0
        %3337 = vmatpush1.bf16.xpose.msra.mxu0 0
        %3338 = vmatprep.subr.bf16.mxu0 0
        %3339 = vmatpush1.bf16.xpose.msra.mxu0 0
        %3340 = vmatprep.subr.bf16.mxu0 0
        %3341 = vmatpush1.bf16.xpose.msra.mxu0 0
        %3342 = vmatprep.subr.bf16.mxu0 0
        %3343 = vmatpush1.bf16.xpose.msra.mxu0 0
        %3344 = vmatprep.subr.bf16.mxu0 0
        %3345 = vmatpush1.bf16.xpose.msra.mxu0 0
        %3346 = vmatprep.subr.bf16.mxu0 0
        %3347 = vmatpush1.bf16.xpose.msra.mxu0 0
        %3348 = vmatprep.subr.bf16.mxu0 0
        %3349 = vmatpush1.bf16.xpose.msra.mxu0 0
        %3350 = vmatprep.subr.bf16.mxu0 0
        %3351 = vmatpush1.bf16.xpose.msra.mxu0 %v3334
        %3352 = vmatprep.subr.bf16.mxu0 0
        %3353 = vmatpush2.bf16.xpose.msra.mxu0 0
        %3354 = vmatprep.subr.bf16.mxu0 0
        %3355 = vmatpush2.bf16.xpose.msra.mxu0 0
        %3356 = vmatprep.subr.bf16.mxu0 0
        %3357 = vmatpush2.bf16.xpose.msra.mxu0 0
        %3358 = vmatprep.subr.bf16.mxu0 0
        %3359 = vmatpush2.bf16.xpose.msra.mxu0 0
        %3360 = vmatprep.subr.bf16.mxu0 0
        %3361 = vmatpush2.bf16.xpose.msra.mxu0 0
        %3362 = vmatprep.subr.bf16.mxu0 0
        %3363 = vmatpush2.bf16.xpose.msra.mxu0 0
        %3364 = vmatprep.subr.bf16.mxu0 0
        %3365 = vmatpush2.bf16.xpose.msra.mxu0 0
        %3366 = vmatprep.subr.bf16.mxu0 0
        %3367 = vmatpush2.bf16.xpose.msra.mxu0 0
        %3368 = vmatprep.mubr.bf16.mxu0 0
        %3369 = vmatmul.mubr.bf16.gmra.mxu0 %v3331
        %v3370 = vpop.f32.mrf.mxu0
        %v3371 = vadd.f32 0.0, %v3370
        %v3372 = vpop.f32.mrf.mxu0
        %v3373 = vpop.f32.mrf.mxu0
        %v3374 = vpop.f32.mrf.mxu0
        %3375 = vdwg.mxu0
        %v3376 = vsel %vm1183, -3.4028235e+38, %v3371
        %v3377 = vsel %vm1185, %v3376, -inf
        %3378 = vmax.xlane.f32.xlu0 %v3377
        %v3379 = vpop.xlane.xlu0 %3378
        %v3380 = vsub.f32 %v3376, %v3379
        %v3381 = vmul.f32 %v3380, 1.442695
        %v3382 = vpow.pop %v3381
        %v3383 = vsel %vm1185, %v3382, 0.0
        %3384 = vadd.xlane.f32.xlu0 %v3383
        %v3385 = vpop.xlane.xlu0 %3384
        %v3386 = vrcp.pop %v3385
        %v3387 = vmul.f32 %v3382, %v3386
        %v3388 = vpack.c.bf16 %v3387, %v3387
        %v3390 = vsel %vm1185, %v3388, 0
        %v3393 = vsel %vm1201, %v3326, 0
        %3395 = vmatprep.subr.bf16.mxu0 0
        %3396 = vmatpush1.bf16.msra.mxu0 0
        %3397 = vmatprep.subr.bf16.mxu0 0
        %3398 = vmatpush1.bf16.msra.mxu0 0
        %3399 = vmatprep.subr.bf16.mxu0 0
        %3400 = vmatpush1.bf16.msra.mxu0 0
        %3401 = vmatprep.subr.bf16.mxu0 0
        %3402 = vmatpush1.bf16.msra.mxu0 0
        %3403 = vmatprep.subr.bf16.mxu0 0
        %3404 = vmatpush1.bf16.msra.mxu0 0
        %3405 = vmatprep.subr.bf16.mxu0 0
        %3406 = vmatpush1.bf16.msra.mxu0 0
        %3407 = vmatprep.subr.bf16.mxu0 0
        %3408 = vmatpush1.bf16.msra.mxu0 0
        %3409 = vmatprep.subr.bf16.mxu0 0
        %3410 = vmatpush1.bf16.msra.mxu0 %v3393
        %3411 = vmatprep.subr.bf16.mxu0 0
        %3412 = vmatpush2.bf16.msra.mxu0 0
        %3413 = vmatprep.subr.bf16.mxu0 0
        %3414 = vmatpush2.bf16.msra.mxu0 0
        %3415 = vmatprep.subr.bf16.mxu0 0
        %3416 = vmatpush2.bf16.msra.mxu0 0
        %3417 = vmatprep.subr.bf16.mxu0 0
        %3418 = vmatpush2.bf16.msra.mxu0 0
        %3419 = vmatprep.subr.bf16.mxu0 0
        %3420 = vmatpush2.bf16.msra.mxu0 0
        %3421 = vmatprep.subr.bf16.mxu0 0
        %3422 = vmatpush2.bf16.msra.mxu0 0
        %3423 = vmatprep.subr.bf16.mxu0 0
        %3424 = vmatpush2.bf16.msra.mxu0 0
        %3425 = vmatprep.subr.bf16.mxu0 0
        %3426 = vmatpush2.bf16.msra.mxu0 0
        %3427 = vmatprep.mubr.bf16.mxu0 0
        %3428 = vmatmul.mubr.bf16.gmra.mxu0 %v3390
        %v3429 = vpop.f32.mrf.mxu0
        %v3430 = vadd.f32 0.0, %v3429
        %v3431 = vpop.f32.mrf.mxu0
        %v3432 = vpop.f32.mrf.mxu0
        %v3433 = vpop.f32.mrf.mxu0
        %3434 = vdwg.mxu0
        %3435 = vrot.lane.b32.xlu0 %v3325, 112
        %v3436 = vpop.permute.xlu0 %3435
        %3437 = vrot.lane.b32.xlu0 %v3325, 48
        %v3438 = vpop.permute.xlu0 %3437
        %v3440 = vsel %vm1131, %v3436, 0
        %v3443 = vsel %vm1131, %v3438, 0
        %3445 = vmatprep.subr.bf16.mxu0 0
        %3446 = vmatpush1.bf16.xpose.msra.mxu0 0
        %3447 = vmatprep.subr.bf16.mxu0 0
        %3448 = vmatpush1.bf16.xpose.msra.mxu0 0
        %3449 = vmatprep.subr.bf16.mxu0 0
        %3450 = vmatpush1.bf16.xpose.msra.mxu0 0
        %3451 = vmatprep.subr.bf16.mxu0 0
        %3452 = vmatpush1.bf16.xpose.msra.mxu0 0
        %3453 = vmatprep.subr.bf16.mxu0 0
        %3454 = vmatpush1.bf16.xpose.msra.mxu0 0
        %3455 = vmatprep.subr.bf16.mxu0 0
        %3456 = vmatpush1.bf16.xpose.msra.mxu0 0
        %3457 = vmatprep.subr.bf16.mxu0 0
        %3458 = vmatpush1.bf16.xpose.msra.mxu0 0
        %3459 = vmatprep.subr.bf16.mxu0 0
        %3460 = vmatpush1.bf16.xpose.msra.mxu0 %v3443
        %3461 = vmatprep.subr.bf16.mxu0 0
        %3462 = vmatpush2.bf16.xpose.msra.mxu0 0
        %3463 = vmatprep.subr.bf16.mxu0 0
        %3464 = vmatpush2.bf16.xpose.msra.mxu0 0
        %3465 = vmatprep.subr.bf16.mxu0 0
        %3466 = vmatpush2.bf16.xpose.msra.mxu0 0
        %3467 = vmatprep.subr.bf16.mxu0 0
        %3468 = vmatpush2.bf16.xpose.msra.mxu0 0
        %3469 = vmatprep.subr.bf16.mxu0 0
        %3470 = vmatpush2.bf16.xpose.msra.mxu0 0
        %3471 = vmatprep.subr.bf16.mxu0 0
        %3472 = vmatpush2.bf16.xpose.msra.mxu0 0
        %3473 = vmatprep.subr.bf16.mxu0 0
        %3474 = vmatpush2.bf16.xpose.msra.mxu0 0
        %3475 = vmatprep.subr.bf16.mxu0 0
        %3476 = vmatpush2.bf16.xpose.msra.mxu0 0
        %3477 = vmatprep.mubr.bf16.mxu0 0
        %3478 = vmatmul.mubr.bf16.gmra.mxu0 %v3440
        %v3479 = vpop.f32.mrf.mxu0
        %v3480 = vadd.f32 0.0, %v3479
        %v3481 = vpop.f32.mrf.mxu0
        %v3482 = vpop.f32.mrf.mxu0
        %v3483 = vpop.f32.mrf.mxu0
        %3484 = vdwg.mxu0
        %v3485 = vsel %vm1183, -3.4028235e+38, %v3480
        %v3486 = vsel %vm1185, %v3485, -inf
        %3487 = vmax.xlane.f32.xlu0 %v3486
        %v3488 = vpop.xlane.xlu0 %3487
        %v3489 = vsub.f32 %v3485, %v3488
        %v3490 = vmul.f32 %v3489, 1.442695
        %v3491 = vpow.pop %v3490
        %v3492 = vsel %vm1185, %v3491, 0.0
        %3493 = vadd.xlane.f32.xlu0 %v3492
        %v3494 = vpop.xlane.xlu0 %3493
        %v3495 = vrcp.pop %v3494
        %v3496 = vmul.f32 %v3491, %v3495
        %v3497 = vpack.c.bf16 %v3496, %v3496
        %3499 = vrot.lane.b32.xlu0 %v3326, 112
        %v3500 = vpop.permute.xlu0 %3499
        %v3502 = vsel %vm1185, %v3497, 0
        %v3505 = vsel %vm1201, %v3500, 0
        %3507 = vmatprep.subr.bf16.mxu0 0
        %3508 = vmatpush1.bf16.msra.mxu0 0
        %3509 = vmatprep.subr.bf16.mxu0 0
        %3510 = vmatpush1.bf16.msra.mxu0 0
        %3511 = vmatprep.subr.bf16.mxu0 0
        %3512 = vmatpush1.bf16.msra.mxu0 0
        %3513 = vmatprep.subr.bf16.mxu0 0
        %3514 = vmatpush1.bf16.msra.mxu0 0
        %3515 = vmatprep.subr.bf16.mxu0 0
        %3516 = vmatpush1.bf16.msra.mxu0 0
        %3517 = vmatprep.subr.bf16.mxu0 0
        %3518 = vmatpush1.bf16.msra.mxu0 0
        %3519 = vmatprep.subr.bf16.mxu0 0
        %3520 = vmatpush1.bf16.msra.mxu0 0
        %3521 = vmatprep.subr.bf16.mxu0 0
        %3522 = vmatpush1.bf16.msra.mxu0 %v3505
        %3523 = vmatprep.subr.bf16.mxu0 0
        %3524 = vmatpush2.bf16.msra.mxu0 0
        %3525 = vmatprep.subr.bf16.mxu0 0
        %3526 = vmatpush2.bf16.msra.mxu0 0
        %3527 = vmatprep.subr.bf16.mxu0 0
        %3528 = vmatpush2.bf16.msra.mxu0 0
        %3529 = vmatprep.subr.bf16.mxu0 0
        %3530 = vmatpush2.bf16.msra.mxu0 0
        %3531 = vmatprep.subr.bf16.mxu0 0
        %3532 = vmatpush2.bf16.msra.mxu0 0
        %3533 = vmatprep.subr.bf16.mxu0 0
        %3534 = vmatpush2.bf16.msra.mxu0 0
        %3535 = vmatprep.subr.bf16.mxu0 0
        %3536 = vmatpush2.bf16.msra.mxu0 0
        %3537 = vmatprep.subr.bf16.mxu0 0
        %3538 = vmatpush2.bf16.msra.mxu0 0
        %3539 = vmatprep.mubr.bf16.mxu0 0
        %3540 = vmatmul.mubr.bf16.gmra.mxu0 %v3502
        %v3541 = vpop.f32.mrf.mxu0
        %v3542 = vadd.f32 0.0, %v3541
        %v3543 = vpop.f32.mrf.mxu0
        %v3544 = vpop.f32.mrf.mxu0
        %v3545 = vpop.f32.mrf.mxu0
        %3546 = vdwg.mxu0
        %3547 = vrot.lane.b32.xlu0 %v3325, 96
        %v3548 = vpop.permute.xlu0 %3547
        %3549 = vrot.lane.b32.xlu0 %v3325, 32
        %v3550 = vpop.permute.xlu0 %3549
        %v3552 = vsel %vm1131, %v3548, 0
        %v3555 = vsel %vm1131, %v3550, 0
        %3557 = vmatprep.subr.bf16.mxu0 0
        %3558 = vmatpush1.bf16.xpose.msra.mxu0 0
        %3559 = vmatprep.subr.bf16.mxu0 0
        %3560 = vmatpush1.bf16.xpose.msra.mxu0 0
        %3561 = vmatprep.subr.bf16.mxu0 0
        %3562 = vmatpush1.bf16.xpose.msra.mxu0 0
        %3563 = vmatprep.subr.bf16.mxu0 0
        %3564 = vmatpush1.bf16.xpose.msra.mxu0 0
        %3565 = vmatprep.subr.bf16.mxu0 0
        %3566 = vmatpush1.bf16.xpose.msra.mxu0 0
        %3567 = vmatprep.subr.bf16.mxu0 0
        %3568 = vmatpush1.bf16.xpose.msra.mxu0 0
        %3569 = vmatprep.subr.bf16.mxu0 0
        %3570 = vmatpush1.bf16.xpose.msra.mxu0 0
        %3571 = vmatprep.subr.bf16.mxu0 0
        %3572 = vmatpush1.bf16.xpose.msra.mxu0 %v3555
        %3573 = vmatprep.subr.bf16.mxu0 0
        %3574 = vmatpush2.bf16.xpose.msra.mxu0 0
        %3575 = vmatprep.subr.bf16.mxu0 0
        %3576 = vmatpush2.bf16.xpose.msra.mxu0 0
        %3577 = vmatprep.subr.bf16.mxu0 0
        %3578 = vmatpush2.bf16.xpose.msra.mxu0 0
        %3579 = vmatprep.subr.bf16.mxu0 0
        %3580 = vmatpush2.bf16.xpose.msra.mxu0 0
        %3581 = vmatprep.subr.bf16.mxu0 0
        %3582 = vmatpush2.bf16.xpose.msra.mxu0 0
        %3583 = vmatprep.subr.bf16.mxu0 0
        %3584 = vmatpush2.bf16.xpose.msra.mxu0 0
        %3585 = vmatprep.subr.bf16.mxu0 0
        %3586 = vmatpush2.bf16.xpose.msra.mxu0 0
        %3587 = vmatprep.subr.bf16.mxu0 0
        %3588 = vmatpush2.bf16.xpose.msra.mxu0 0
        %3589 = vmatprep.mubr.bf16.mxu0 0
        %3590 = vmatmul.mubr.bf16.gmra.mxu0 %v3552
        %v3591 = vpop.f32.mrf.mxu0
        %v3592 = vadd.f32 0.0, %v3591
        %v3593 = vpop.f32.mrf.mxu0
        %v3594 = vpop.f32.mrf.mxu0
        %v3595 = vpop.f32.mrf.mxu0
        %3596 = vdwg.mxu0
        %v3597 = vsel %vm1183, -3.4028235e+38, %v3592
        %v3598 = vsel %vm1185, %v3597, -inf
        %3599 = vmax.xlane.f32.xlu0 %v3598
        %v3600 = vpop.xlane.xlu0 %3599
        %v3601 = vsub.f32 %v3597, %v3600
        %v3602 = vmul.f32 %v3601, 1.442695
        %v3603 = vpow.pop %v3602
        %v3604 = vsel %vm1185, %v3603, 0.0
        %3605 = vadd.xlane.f32.xlu0 %v3604
        %v3606 = vpop.xlane.xlu0 %3605
        %v3607 = vrcp.pop %v3606
        %v3608 = vmul.f32 %v3603, %v3607
        %v3609 = vpack.c.bf16 %v3608, %v3608
        %3610 = vrot.lane.b32.xlu0 %v3326, 96
        %v3611 = vpop.permute.xlu0 %3610
        %v3613 = vsel %vm1185, %v3609, 0
        %v3616 = vsel %vm1201, %v3611, 0
        %3618 = vmatprep.subr.bf16.mxu0 0
        %3619 = vmatpush1.bf16.msra.mxu0 0
        %3620 = vmatprep.subr.bf16.mxu0 0
        %3621 = vmatpush1.bf16.msra.mxu0 0
        %3622 = vmatprep.subr.bf16.mxu0 0
        %3623 = vmatpush1.bf16.msra.mxu0 0
        %3624 = vmatprep.subr.bf16.mxu0 0
        %3625 = vmatpush1.bf16.msra.mxu0 0
        %3626 = vmatprep.subr.bf16.mxu0 0
        %3627 = vmatpush1.bf16.msra.mxu0 0
        %3628 = vmatprep.subr.bf16.mxu0 0
        %3629 = vmatpush1.bf16.msra.mxu0 0
        %3630 = vmatprep.subr.bf16.mxu0 0
        %3631 = vmatpush1.bf16.msra.mxu0 0
        %3632 = vmatprep.subr.bf16.mxu0 0
        %3633 = vmatpush1.bf16.msra.mxu0 %v3616
        %3634 = vmatprep.subr.bf16.mxu0 0
        %3635 = vmatpush2.bf16.msra.mxu0 0
        %3636 = vmatprep.subr.bf16.mxu0 0
        %3637 = vmatpush2.bf16.msra.mxu0 0
        %3638 = vmatprep.subr.bf16.mxu0 0
        %3639 = vmatpush2.bf16.msra.mxu0 0
        %3640 = vmatprep.subr.bf16.mxu0 0
        %3641 = vmatpush2.bf16.msra.mxu0 0
        %3642 = vmatprep.subr.bf16.mxu0 0
        %3643 = vmatpush2.bf16.msra.mxu0 0
        %3644 = vmatprep.subr.bf16.mxu0 0
        %3645 = vmatpush2.bf16.msra.mxu0 0
        %3646 = vmatprep.subr.bf16.mxu0 0
        %3647 = vmatpush2.bf16.msra.mxu0 0
        %3648 = vmatprep.subr.bf16.mxu0 0
        %3649 = vmatpush2.bf16.msra.mxu0 0
        %3650 = vmatprep.mubr.bf16.mxu0 0
        %3651 = vmatmul.mubr.bf16.gmra.mxu0 %v3613
        %v3652 = vpop.f32.mrf.mxu0
        %v3653 = vadd.f32 0.0, %v3652
        %v3654 = vpop.f32.mrf.mxu0
        %v3655 = vpop.f32.mrf.mxu0
        %v3656 = vpop.f32.mrf.mxu0
        %3657 = vdwg.mxu0
        %3658 = vrot.lane.b32.xlu0 %v3325, 80
        %v3659 = vpop.permute.xlu0 %3658
        %3660 = vrot.lane.b32.xlu0 %v3325, 16
        %v3661 = vpop.permute.xlu0 %3660
        %v3663 = vsel %vm1131, %v3659, 0
        %v3666 = vsel %vm1131, %v3661, 0
        %3668 = vmatprep.subr.bf16.mxu0 0
        %3669 = vmatpush1.bf16.xpose.msra.mxu0 0
        %3670 = vmatprep.subr.bf16.mxu0 0
        %3671 = vmatpush1.bf16.xpose.msra.mxu0 0
        %3672 = vmatprep.subr.bf16.mxu0 0
        %3673 = vmatpush1.bf16.xpose.msra.mxu0 0
        %3674 = vmatprep.subr.bf16.mxu0 0
        %3675 = vmatpush1.bf16.xpose.msra.mxu0 0
        %3676 = vmatprep.subr.bf16.mxu0 0
        %3677 = vmatpush1.bf16.xpose.msra.mxu0 0
        %3678 = vmatprep.subr.bf16.mxu0 0
        %3679 = vmatpush1.bf16.xpose.msra.mxu0 0
        %3680 = vmatprep.subr.bf16.mxu0 0
        %3681 = vmatpush1.bf16.xpose.msra.mxu0 0
        %3682 = vmatprep.subr.bf16.mxu0 0
        %3683 = vmatpush1.bf16.xpose.msra.mxu0 %v3666
        %3684 = vmatprep.subr.bf16.mxu0 0
        %3685 = vmatpush2.bf16.xpose.msra.mxu0 0
        %3686 = vmatprep.subr.bf16.mxu0 0
        %3687 = vmatpush2.bf16.xpose.msra.mxu0 0
        %3688 = vmatprep.subr.bf16.mxu0 0
        %3689 = vmatpush2.bf16.xpose.msra.mxu0 0
        %3690 = vmatprep.subr.bf16.mxu0 0
        %3691 = vmatpush2.bf16.xpose.msra.mxu0 0
        %3692 = vmatprep.subr.bf16.mxu0 0
        %3693 = vmatpush2.bf16.xpose.msra.mxu0 0
        %3694 = vmatprep.subr.bf16.mxu0 0
        %3695 = vmatpush2.bf16.xpose.msra.mxu0 0
        %3696 = vmatprep.subr.bf16.mxu0 0
        %3697 = vmatpush2.bf16.xpose.msra.mxu0 0
        %3698 = vmatprep.subr.bf16.mxu0 0
        %3699 = vmatpush2.bf16.xpose.msra.mxu0 0
        %3700 = vmatprep.mubr.bf16.mxu0 0
        %3701 = vmatmul.mubr.bf16.gmra.mxu0 %v3663
        %v3702 = vpop.f32.mrf.mxu0
        %v3703 = vadd.f32 0.0, %v3702
        %v3704 = vpop.f32.mrf.mxu0
        %v3705 = vpop.f32.mrf.mxu0
        %v3706 = vpop.f32.mrf.mxu0
        %3707 = vdwg.mxu0
        %v3708 = vsel %vm1183, -3.4028235e+38, %v3703
        %v3709 = vsel %vm1185, %v3708, -inf
        %3710 = vmax.xlane.f32.xlu0 %v3709
        %v3711 = vpop.xlane.xlu0 %3710
        %v3712 = vsub.f32 %v3708, %v3711
        %v3713 = vmul.f32 %v3712, 1.442695
        %v3714 = vpow.pop %v3713
        %v3715 = vsel %vm1185, %v3714, 0.0
        %3716 = vadd.xlane.f32.xlu0 %v3715
        %v3717 = vpop.xlane.xlu0 %3716
        %v3718 = vrcp.pop %v3717
        %v3719 = vmul.f32 %v3714, %v3718
        %v3720 = vpack.c.bf16 %v3719, %v3719
        %3721 = vrot.lane.b32.xlu0 %v3326, 80
        %v3722 = vpop.permute.xlu0 %3721
        %v3724 = vsel %vm1185, %v3720, 0
        %v3727 = vsel %vm1201, %v3722, 0
        %3729 = vmatprep.subr.bf16.mxu0 0
        %3730 = vmatpush1.bf16.msra.mxu0 0
        %3731 = vmatprep.subr.bf16.mxu0 0
        %3732 = vmatpush1.bf16.msra.mxu0 0
        %3733 = vmatprep.subr.bf16.mxu0 0
        %3734 = vmatpush1.bf16.msra.mxu0 0
        %3735 = vmatprep.subr.bf16.mxu0 0
        %3736 = vmatpush1.bf16.msra.mxu0 0
        %3737 = vmatprep.subr.bf16.mxu0 0
        %3738 = vmatpush1.bf16.msra.mxu0 0
        %3739 = vmatprep.subr.bf16.mxu0 0
        %3740 = vmatpush1.bf16.msra.mxu0 0
        %3741 = vmatprep.subr.bf16.mxu0 0
        %3742 = vmatpush1.bf16.msra.mxu0 0
        %3743 = vmatprep.subr.bf16.mxu0 0
        %3744 = vmatpush1.bf16.msra.mxu0 %v3727
        %3745 = vmatprep.subr.bf16.mxu0 0
        %3746 = vmatpush2.bf16.msra.mxu0 0
        %3747 = vmatprep.subr.bf16.mxu0 0
        %3748 = vmatpush2.bf16.msra.mxu0 0
        %3749 = vmatprep.subr.bf16.mxu0 0
        %3750 = vmatpush2.bf16.msra.mxu0 0
        %3751 = vmatprep.subr.bf16.mxu0 0
        %3752 = vmatpush2.bf16.msra.mxu0 0
        %3753 = vmatprep.subr.bf16.mxu0 0
        %3754 = vmatpush2.bf16.msra.mxu0 0
        %3755 = vmatprep.subr.bf16.mxu0 0
        %3756 = vmatpush2.bf16.msra.mxu0 0
        %3757 = vmatprep.subr.bf16.mxu0 0
        %3758 = vmatpush2.bf16.msra.mxu0 0
        %3759 = vmatprep.subr.bf16.mxu0 0
        %3760 = vmatpush2.bf16.msra.mxu0 0
        %3761 = vmatprep.mubr.bf16.mxu0 0
        %3762 = vmatmul.mubr.bf16.gmra.mxu0 %v3724
        %v3763 = vpop.f32.mrf.mxu0
        %v3764 = vadd.f32 0.0, %v3763
        %v3765 = vpop.f32.mrf.mxu0
        %v3766 = vpop.f32.mrf.mxu0
        %v3767 = vpop.f32.mrf.mxu0
        %3768 = vdwg.mxu0
        %3770 = vrot.lane.b32.xlu0 %v3542, 16
        %v3771 = vpop.permute.xlu0 %3770
        %3774 = vrot.lane.b32.xlu0 %v3653, 32
        %v3775 = vpop.permute.xlu0 %3774
        %3778 = vrot.lane.b32.xlu0 %v3764, 48
        %v3779 = vpop.permute.xlu0 %3778
        %v3781 = vsel %vm1131, %v3430, %v3771
        %v3782 = vsel %vm1592, %v3781, %v3775
        %v3783 = vsel %vm1594, %v3782, %v3779
        %s3784 = scalar_lea.vmem %s8, 64
        %v3785 = vld [vmem:[%s3784] sm:$0xf]
        %v3786 = vld [vmem:[%s3784 + $0x4] sm:$0xf]
        %v3787 = vld [vmem:[%s3784 + $0x8] sm:$0xf]
        %v3788 = vld [vmem:[%s3784 + $0xc] sm:$0xf]
        %v3789 = vld [vmem:[%s3784 + $0x10] sm:$0xf]
        %v3790 = vld [vmem:[%s3784 + $0x14] sm:$0xf]
        %v3791 = vld [vmem:[%s3784 + $0x18] sm:$0xf]
        %v3792 = vld [vmem:[%s3784 + $0x1c] sm:$0xf]
        %s3793 = scalar_lea.vmem %s9, 2
        %v3794 = vld [vmem:[%s3793] sm:$0x1]
        %v3795 = vpack.c.bf16 %v3783, %v3783
        %v3797 = vlaneseq
        %v3798 = vshrl.u32 %v3797, 7
        %v3799 = vsub.s32 0, %v3798
        %v3800 = vrot.slane %v3794, %v3799
        %v3810 = vunpack.c.l.b16 %v3785
        %v3811 = vunpack.c.l.b16 %v3786
        %v3812 = vunpack.c.l.b16 %v3787
        %v3813 = vunpack.c.l.b16 %v3788
        %v3814 = vunpack.c.l.b16 %v3789
        %v3815 = vunpack.c.l.b16 %v3790
        %v3816 = vunpack.c.l.b16 %v3791
        %v3817 = vunpack.c.l.b16 %v3792
        %v3818 = vpack.c.b16 %v3811, %v3810
        %v3819 = vpack.c.b16 %v3813, %v3812
        %v3820 = vpack.c.b16 %v3815, %v3814
        %v3821 = vpack.c.b16 %v3817, %v3816
        %v3827 = vsel %vm990, %v3795, 0
        %3829 = vmatprep.subr.bf16.mxu0 0
        %3830 = vmatpush1.bf16.msra.mxu0 0
        %3831 = vmatprep.subr.bf16.mxu0 0
        %3832 = vmatpush1.bf16.msra.mxu0 0
        %3833 = vmatprep.subr.bf16.mxu0 0
        %3834 = vmatpush1.bf16.msra.mxu0 0
        %3835 = vmatprep.subr.bf16.mxu0 0
        %3836 = vmatpush1.bf16.msra.mxu0 0
        %3837 = vmatprep.subr.bf16.mxu0 0
        %3838 = vmatpush1.bf16.msra.mxu0 %v3821
        %3839 = vmatprep.subr.bf16.mxu0 0
        %3840 = vmatpush1.bf16.msra.mxu0 %v3820
        %3841 = vmatprep.subr.bf16.mxu0 0
        %3842 = vmatpush1.bf16.msra.mxu0 %v3819
        %3843 = vmatprep.subr.bf16.mxu0 0
        %3844 = vmatpush1.bf16.msra.mxu0 %v3818
        %3845 = vmatprep.subr.bf16.mxu0 0
        %3846 = vmatpush2.bf16.msra.mxu0 0
        %3847 = vmatprep.subr.bf16.mxu0 0
        %3848 = vmatpush2.bf16.msra.mxu0 0
        %3849 = vmatprep.subr.bf16.mxu0 0
        %3850 = vmatpush2.bf16.msra.mxu0 0
        %3851 = vmatprep.subr.bf16.mxu0 0
        %3852 = vmatpush2.bf16.msra.mxu0 0
        %3853 = vmatprep.subr.bf16.mxu0 0
        %3854 = vmatpush2.bf16.msra.mxu0 0
        %3855 = vmatprep.subr.bf16.mxu0 0
        %3856 = vmatpush2.bf16.msra.mxu0 0
        %3857 = vmatprep.subr.bf16.mxu0 0
        %3858 = vmatpush2.bf16.msra.mxu0 0
        %3859 = vmatprep.subr.bf16.mxu0 0
        %3860 = vmatpush2.bf16.msra.mxu0 0
        %3861 = vmatprep.mubr.bf16.mxu0 0
        %3862 = vmatmul.mubr.bf16.gmra.mxu0 %v3827
        %v3863 = vpop.f32.mrf.mxu0
        %v3864 = vadd.f32 %v3800, %v3863
        %v3865 = vpop.f32.mrf.mxu0
        %v3866 = vpop.f32.mrf.mxu0
        %v3867 = vpop.f32.mrf.mxu0
        %3868 = vdwg.mxu0
        %v3869 = vadd.f32 %v3864, %v3217
        %s3870 = scalar_lea.vmem %s10, 2
        %v3871 = vld [vmem:[%s3870] sm:$0x1]
        %s3872 = scalar_lea.vmem %s11, 2
        %v3873 = vld [vmem:[%s3872] sm:$0x1]
        %v3874 = vsel %vm990, %v3869, 0.0
        %3875 = vadd.xlane.f32.xlu0 %v3874
        %v3876 = vpop.xlane.xlu0 %3875
        %v3877 = vmul.f32 %v3876, %v994
        %v3878 = vsub.f32 %v3869, %v3877
        %v3879 = vmul.f32 %v3878, %v3878
        %v3880 = vsel %vm990, %v3879, 0.0
        %3881 = vadd.xlane.f32.xlu0 %v3880
        %v3882 = vpop.xlane.xlu0 %3881
        %v3883 = vmul.f32 %v3882, %v994
        %v3884 = vadd.f32 %v3883, 1e-12
        %v3885 = vrsqrt.pop %v3884
        %v3886 = vmul.f32 %v3878, %v3885
        %v3888 = vlaneseq
        %v3889 = vshrl.u32 %v3888, 7
        %v3890 = vsub.s32 0, %v3889
        %v3891 = vrot.slane %v3871, %v3890
        %v3893 = vmul.f32 %v3886, %v3891
        %v3895 = vlaneseq
        %v3896 = vshrl.u32 %v3895, 7
        %v3897 = vsub.s32 0, %v3896
        %v3898 = vrot.slane %v3873, %v3897
        %v3900 = vadd.f32 %v3893, %v3898
        %s3901 = scalar_lea.vmem [#allocation2], 64
        %v3902 = vld [vmem:[%s3901] sm:$0xf]
        %v3903 = vld [vmem:[%s3901 + $0x4] sm:$0xf]
        %v3904 = vld [vmem:[%s3901 + $0x8] sm:$0xf]
        %v3905 = vld [vmem:[%s3901 + $0xc] sm:$0xf]
        %v3906 = vld [vmem:[%s3901 + $0x10] sm:$0xf]
        %v3907 = vld [vmem:[%s3901 + $0x14] sm:$0xf]
        %v3908 = vld [vmem:[%s3901 + $0x18] sm:$0xf]
        %v3909 = vld [vmem:[%s3901 + $0x1c] sm:$0xf]
        %s3910 = scalar_lea.vmem %s13, 2
        %v3911 = vld [vmem:[%s3910] sm:$0x1]
        %v3912 = vpack.c.bf16 %v3900, %v3900
        %v3914 = vlaneseq
        %v3915 = vshrl.u32 %v3914, 7
        %v3916 = vsub.s32 0, %v3915
        %v3917 = vrot.slane %v3911, %v3916
        %v3927 = vunpack.c.l.b16 %v3902
        %v3928 = vunpack.c.l.b16 %v3903
        %v3929 = vunpack.c.l.b16 %v3904
        %v3930 = vunpack.c.l.b16 %v3905
        %v3931 = vunpack.c.l.b16 %v3906
        %v3932 = vunpack.c.l.b16 %v3907
        %v3933 = vunpack.c.l.b16 %v3908
        %v3934 = vunpack.c.l.b16 %v3909
        %v3935 = vpack.c.b16 %v3928, %v3927
        %v3936 = vpack.c.b16 %v3930, %v3929
        %v3937 = vpack.c.b16 %v3932, %v3931
        %v3938 = vpack.c.b16 %v3934, %v3933
        %v3944 = vsel %vm990, %v3912, 0
        %3946 = vmatprep.subr.bf16.mxu0 0
        %3947 = vmatpush1.bf16.msra.mxu0 0
        %3948 = vmatprep.subr.bf16.mxu0 0
        %3949 = vmatpush1.bf16.msra.mxu0 0
        %3950 = vmatprep.subr.bf16.mxu0 0
        %3951 = vmatpush1.bf16.msra.mxu0 0
        %3952 = vmatprep.subr.bf16.mxu0 0
        %3953 = vmatpush1.bf16.msra.mxu0 0
        %3954 = vmatprep.subr.bf16.mxu0 0
        %3955 = vmatpush1.bf16.msra.mxu0 %v3938
        %3956 = vmatprep.subr.bf16.mxu0 0
        %3957 = vmatpush1.bf16.msra.mxu0 %v3937
        %3958 = vmatprep.subr.bf16.mxu0 0
        %3959 = vmatpush1.bf16.msra.mxu0 %v3936
        %3960 = vmatprep.subr.bf16.mxu0 0
        %3961 = vmatpush1.bf16.msra.mxu0 %v3935
        %3962 = vmatprep.subr.bf16.mxu0 0
        %3963 = vmatpush2.bf16.msra.mxu0 0
        %3964 = vmatprep.subr.bf16.mxu0 0
        %3965 = vmatpush2.bf16.msra.mxu0 0
        %3966 = vmatprep.subr.bf16.mxu0 0
        %3967 = vmatpush2.bf16.msra.mxu0 0
        %3968 = vmatprep.subr.bf16.mxu0 0
        %3969 = vmatpush2.bf16.msra.mxu0 0
        %3970 = vmatprep.subr.bf16.mxu0 0
        %3971 = vmatpush2.bf16.msra.mxu0 0
        %3972 = vmatprep.subr.bf16.mxu0 0
        %3973 = vmatpush2.bf16.msra.mxu0 0
        %3974 = vmatprep.subr.bf16.mxu0 0
        %3975 = vmatpush2.bf16.msra.mxu0 0
        %3976 = vmatprep.subr.bf16.mxu0 0
        %3977 = vmatpush2.bf16.msra.mxu0 0
        %3978 = vmatprep.mubr.bf16.mxu0 0
        %3979 = vmatmul.mubr.bf16.gmra.mxu0 %v3944
        %v3980 = vpop.f32.mrf.mxu0
        %v3981 = vadd.f32 %v3917, %v3980
        %v3982 = vpop.f32.mrf.mxu0
        %v3983 = vpop.f32.mrf.mxu0
        %v3984 = vpop.f32.mrf.mxu0
        %3985 = vdwg.mxu0
        %v3986 = vmul.f32 %v3981, 0.5
        %v3987 = vmul.f32 %v3981, 0.70710677
        %v3988 = verf.f32.pop %v3987
        %v3989 = vadd.f32 %v3988, 1.0
        %v3990 = vmul.f32 %v3986, %v3989
        %s3991 = scalar_lea.vmem %s14, 128
        %v3992 = vld [vmem:[%s3991] sm:$0xf]
        %v3993 = vld [vmem:[%s3991 + $0x4] sm:$0xf]
        %v3994 = vld [vmem:[%s3991 + $0x8] sm:$0xf]
        %v3995 = vld [vmem:[%s3991 + $0xc] sm:$0xf]
        %v3996 = vld [vmem:[%s3991 + $0x10] sm:$0xf]
        %v3997 = vld [vmem:[%s3991 + $0x14] sm:$0xf]
        %v3998 = vld [vmem:[%s3991 + $0x18] sm:$0xf]
        %v3999 = vld [vmem:[%s3991 + $0x1c] sm:$0xf]
        %v4000 = vld [vmem:[%s3991 + $0x20] sm:$0xf]
        %v4001 = vld [vmem:[%s3991 + $0x24] sm:$0xf]
        %v4002 = vld [vmem:[%s3991 + $0x28] sm:$0xf]
        %v4003 = vld [vmem:[%s3991 + $0x2c] sm:$0xf]
        %v4004 = vld [vmem:[%s3991 + $0x30] sm:$0xf]
        %v4005 = vld [vmem:[%s3991 + $0x34] sm:$0xf]
        %v4006 = vld [vmem:[%s3991 + $0x38] sm:$0xf]
        %v4007 = vld [vmem:[%s3991 + $0x3c] sm:$0xf]
        %s4008 = scalar_lea.vmem %s15, 2
        %v4009 = vld [vmem:[%s4008] sm:$0x1]
        %v4010 = vpack.c.bf16 %v3990, %v3990
        %v4012 = vlaneseq
        %v4013 = vshrl.u32 %v4012, 7
        %v4014 = vsub.s32 0, %v4013
        %v4015 = vrot.slane %v4009, %v4014
        %v4033 = vunpack.c.l.b16 %v3992
        %v4034 = vunpack.c.l.b16 %v3993
        %v4035 = vunpack.c.l.b16 %v3994
        %v4036 = vunpack.c.l.b16 %v3995
        %v4037 = vunpack.c.l.b16 %v3996
        %v4038 = vunpack.c.l.b16 %v3997
        %v4039 = vunpack.c.l.b16 %v3998
        %v4040 = vunpack.c.l.b16 %v3999
        %v4041 = vunpack.c.l.b16 %v4000
        %v4042 = vunpack.c.l.b16 %v4001
        %v4043 = vunpack.c.l.b16 %v4002
        %v4044 = vunpack.c.l.b16 %v4003
        %v4045 = vunpack.c.l.b16 %v4004
        %v4046 = vunpack.c.l.b16 %v4005
        %v4047 = vunpack.c.l.b16 %v4006
        %v4048 = vunpack.c.l.b16 %v4007
        %v4049 = vpack.c.b16 %v4034, %v4033
        %v4050 = vpack.c.b16 %v4036, %v4035
        %v4051 = vpack.c.b16 %v4038, %v4037
        %v4052 = vpack.c.b16 %v4040, %v4039
        %v4053 = vpack.c.b16 %v4042, %v4041
        %v4054 = vpack.c.b16 %v4044, %v4043
        %v4055 = vpack.c.b16 %v4046, %v4045
        %v4056 = vpack.c.b16 %v4048, %v4047
        %4065 = vmatprep.subr.bf16.mxu0 0
        %4066 = vmatpush1.bf16.msra.mxu0 %v4056
        %4067 = vmatprep.subr.bf16.mxu0 0
        %4068 = vmatpush1.bf16.msra.mxu0 %v4055
        %4069 = vmatprep.subr.bf16.mxu0 0
        %4070 = vmatpush1.bf16.msra.mxu0 %v4054
        %4071 = vmatprep.subr.bf16.mxu0 0
        %4072 = vmatpush1.bf16.msra.mxu0 %v4053
        %4073 = vmatprep.subr.bf16.mxu0 0
        %4074 = vmatpush1.bf16.msra.mxu0 %v4052
        %4075 = vmatprep.subr.bf16.mxu0 0
        %4076 = vmatpush1.bf16.msra.mxu0 %v4051
        %4077 = vmatprep.subr.bf16.mxu0 0
        %4078 = vmatpush1.bf16.msra.mxu0 %v4050
        %4079 = vmatprep.subr.bf16.mxu0 0
        %4080 = vmatpush1.bf16.msra.mxu0 %v4049
        %4081 = vmatprep.subr.bf16.mxu0 0
        %4082 = vmatpush2.bf16.msra.mxu0 0
        %4083 = vmatprep.subr.bf16.mxu0 0
        %4084 = vmatpush2.bf16.msra.mxu0 0
        %4085 = vmatprep.subr.bf16.mxu0 0
        %4086 = vmatpush2.bf16.msra.mxu0 0
        %4087 = vmatprep.subr.bf16.mxu0 0
        %4088 = vmatpush2.bf16.msra.mxu0 0
        %4089 = vmatprep.subr.bf16.mxu0 0
        %4090 = vmatpush2.bf16.msra.mxu0 0
        %4091 = vmatprep.subr.bf16.mxu0 0
        %4092 = vmatpush2.bf16.msra.mxu0 0
        %4093 = vmatprep.subr.bf16.mxu0 0
        %4094 = vmatpush2.bf16.msra.mxu0 0
        %4095 = vmatprep.subr.bf16.mxu0 0
        %4096 = vmatpush2.bf16.msra.mxu0 0
        %4097 = vmatprep.mubr.bf16.mxu0 0
        %4098 = vmatmul.mubr.bf16.gmra.mxu0 %v4010
        %v4099 = vpop.f32.mrf.mxu0
        %v4100 = vadd.f32 %v4015, %v4099
        %v4101 = vpop.f32.mrf.mxu0
        %v4102 = vpop.f32.mrf.mxu0
        %v4103 = vpop.f32.mrf.mxu0
        %4104 = vdwg.mxu0
        %v4105 = vadd.f32 %v4100, %v3900
        %s4106 = scalar_lea.vmem %s16, 2
        %v4107 = vld [vmem:[%s4106] sm:$0x1]
        %s4108 = scalar_lea.vmem [#allocation5], 2
        %v4109 = vld [vmem:[%s4108] sm:$0x1]
        %v4110 = vsel %vm990, %v4105, 0.0
        %4111 = vadd.xlane.f32.xlu0 %v4110
        %v4112 = vpop.xlane.xlu0 %4111
        %v4113 = vmul.f32 %v4112, %v994
        %v4114 = vsub.f32 %v4105, %v4113
        %v4115 = vmul.f32 %v4114, %v4114
        %v4116 = vsel %vm990, %v4115, 0.0
        %4117 = vadd.xlane.f32.xlu0 %v4116
        %v4118 = vpop.xlane.xlu0 %4117
        %v4119 = vmul.f32 %v4118, %v994
        %v4120 = vadd.f32 %v4119, 1e-12
        %v4121 = vrsqrt.pop %v4120
        %v4122 = vmul.f32 %v4114, %v4121
        %v4124 = vlaneseq
        %v4125 = vshrl.u32 %v4124, 7
        %v4126 = vsub.s32 0, %v4125
        %v4127 = vrot.slane %v4107, %v4126
        %v4129 = vmul.f32 %v4122, %v4127
        %v4131 = vlaneseq
        %v4132 = vshrl.u32 %v4131, 7
        %v4133 = vsub.s32 0, %v4132
        %v4134 = vrot.slane %v4109, %v4133
        %v4136 = vadd.f32 %v4129, %v4134
        %s4137 = scalar_lea.vmem %s18, 2
        %v4138 = vld [vmem:[%s4137] sm:$0x1]
        %s4139 = scalar_lea.vmem [#allocation7], 2
        %v4140 = vld [vmem:[%s4139] sm:$0x1]
        %v4141 = vsel %vm990, %v4136, 0.0
        %4142 = vadd.xlane.f32.xlu0 %v4141
        %v4143 = vpop.xlane.xlu0 %4142
        %v4144 = vmul.f32 %v4143, %v994
        %v4145 = vsub.f32 %v4136, %v4144
        %v4146 = vmul.f32 %v4145, %v4145
        %v4147 = vsel %vm990, %v4146, 0.0
        %4148 = vadd.xlane.f32.xlu0 %v4147
        %v4149 = vpop.xlane.xlu0 %4148
        %v4150 = vmul.f32 %v4149, %v994
        %v4151 = vadd.f32 %v4150, 1e-05
        %v4152 = vrsqrt.pop %v4151
        %v4153 = vmul.f32 %v4145, %v4152
        %v4155 = vlaneseq
        %v4156 = vshrl.u32 %v4155, 7
        %v4157 = vsub.s32 0, %v4156
        %v4158 = vrot.slane %v4138, %v4157
        %v4160 = vmul.f32 %v4153, %v4158
        %v4162 = vlaneseq
        %v4163 = vshrl.u32 %v4162, 7
        %v4164 = vsub.s32 0, %v4163
        %v4165 = vrot.slane %v4140, %v4164
        %v4167 = vadd.f32 %v4160, %v4165
        %s4168 = scalar_lea.vmem %s20, 64
        %v4169 = vld [vmem:[%s4168] sm:$0xf]
        %v4170 = vld [vmem:[%s4168 + $0x4] sm:$0xf]
        %v4171 = vld [vmem:[%s4168 + $0x8] sm:$0xf]
        %v4172 = vld [vmem:[%s4168 + $0xc] sm:$0xf]
        %v4173 = vld [vmem:[%s4168 + $0x10] sm:$0xf]
        %v4174 = vld [vmem:[%s4168 + $0x14] sm:$0xf]
        %v4175 = vld [vmem:[%s4168 + $0x18] sm:$0xf]
        %v4176 = vld [vmem:[%s4168 + $0x1c] sm:$0xf]
        %s4177 = scalar_lea.vmem [#allocation8], 2
        %v4178 = vld [vmem:[%s4177] sm:$0x1]
        %v4179 = vpack.c.bf16 %v4167, %v4167
        %v4181 = vlaneseq
        %v4182 = vshrl.u32 %v4181, 7
        %v4183 = vsub.s32 0, %v4182
        %v4184 = vrot.slane %v4178, %v4183
        %v4194 = vunpack.c.l.b16 %v4169
        %v4195 = vunpack.c.l.b16 %v4170
        %v4196 = vunpack.c.l.b16 %v4171
        %v4197 = vunpack.c.l.b16 %v4172
        %v4198 = vunpack.c.l.b16 %v4173
        %v4199 = vunpack.c.l.b16 %v4174
        %v4200 = vunpack.c.l.b16 %v4175
        %v4201 = vunpack.c.l.b16 %v4176
        %v4202 = vpack.c.b16 %v4195, %v4194
        %v4203 = vpack.c.b16 %v4197, %v4196
        %v4204 = vpack.c.b16 %v4199, %v4198
        %v4205 = vpack.c.b16 %v4201, %v4200
        %v4211 = vsel %vm990, %v4179, 0
        %4213 = vmatprep.subr.bf16.mxu0 0
        %4214 = vmatpush1.bf16.msra.mxu0 0
        %4215 = vmatprep.subr.bf16.mxu0 0
        %4216 = vmatpush1.bf16.msra.mxu0 0
        %4217 = vmatprep.subr.bf16.mxu0 0
        %4218 = vmatpush1.bf16.msra.mxu0 0
        %4219 = vmatprep.subr.bf16.mxu0 0
        %4220 = vmatpush1.bf16.msra.mxu0 0
        %4221 = vmatprep.subr.bf16.mxu0 0
        %4222 = vmatpush1.bf16.msra.mxu0 %v4205
        %4223 = vmatprep.subr.bf16.mxu0 0
        %4224 = vmatpush1.bf16.msra.mxu0 %v4204
        %4225 = vmatprep.subr.bf16.mxu0 0
        %4226 = vmatpush1.bf16.msra.mxu0 %v4203
        %4227 = vmatprep.subr.bf16.mxu0 0
        %4228 = vmatpush1.bf16.msra.mxu0 %v4202
        %4229 = vmatprep.subr.bf16.mxu0 0
        %4230 = vmatpush2.bf16.msra.mxu0 0
        %4231 = vmatprep.subr.bf16.mxu0 0
        %4232 = vmatpush2.bf16.msra.mxu0 0
        %4233 = vmatprep.subr.bf16.mxu0 0
        %4234 = vmatpush2.bf16.msra.mxu0 0
        %4235 = vmatprep.subr.bf16.mxu0 0
        %4236 = vmatpush2.bf16.msra.mxu0 0
        %4237 = vmatprep.subr.bf16.mxu0 0
        %4238 = vmatpush2.bf16.msra.mxu0 0
        %4239 = vmatprep.subr.bf16.mxu0 0
        %4240 = vmatpush2.bf16.msra.mxu0 0
        %4241 = vmatprep.subr.bf16.mxu0 0
        %4242 = vmatpush2.bf16.msra.mxu0 0
        %4243 = vmatprep.subr.bf16.mxu0 0
        %4244 = vmatpush2.bf16.msra.mxu0 0
        %4245 = vmatprep.mubr.bf16.mxu0 0
        %4246 = vmatmul.mubr.bf16.gmra.mxu0 %v4211
        %v4247 = vpop.f32.mrf.mxu0
        %v4248 = vadd.f32 %v4184, %v4247
        %v4249 = vpop.f32.mrf.mxu0
        %v4250 = vpop.f32.mrf.mxu0
        %v4251 = vpop.f32.mrf.mxu0
        %4252 = vdwg.mxu0
        %v4253 = vmul.f32 %v4248, 0.5
        %v4254 = vmul.f32 %v4248, 0.70710677
        %v4255 = verf.f32.pop %v4254
        %v4256 = vadd.f32 %v4255, 1.0
        %v4257 = vmul.f32 %v4253, %v4256
        %s4258 = scalar_lea.vmem %s22, 16
        %v4259 = vld [vmem:[%s4258] sm:$0xf]
        %v4260 = vld [vmem:[%s4258 + $0x4] sm:$0xf]
        %s4261 = scalar_lea.vmem [#allocation10], 2
        %v4262 = vld [vmem:[%s4261] sm:$0x1]
        %v4263 = vpack.c.bf16 %v4257, %v4257
        %v4265 = vlaneseq
        %v4266 = vshrl.u32 %v4265, 7
        %v4267 = vsub.s32 0, %v4266
        %v4268 = vrot.slane %v4262, %v4267
        %v4272 = vunpack.c.l.b16 %v4259
        %v4273 = vunpack.c.l.b16 %v4260
        %v4274 = vpack.c.b16 %v4273, %v4272
        %v4277 = vsel %vm1131, %v4263, 0
        %4279 = vmatprep.subr.bf16.mxu0 0
        %4280 = vmatpush1.bf16.msra.mxu0 0
        %4281 = vmatprep.subr.bf16.mxu0 0
        %4282 = vmatpush1.bf16.msra.mxu0 0
        %4283 = vmatprep.subr.bf16.mxu0 0
        %4284 = vmatpush1.bf16.msra.mxu0 0
        %4285 = vmatprep.subr.bf16.mxu0 0
        %4286 = vmatpush1.bf16.msra.mxu0 0
        %4287 = vmatprep.subr.bf16.mxu0 0
        %4288 = vmatpush1.bf16.msra.mxu0 0
        %4289 = vmatprep.subr.bf16.mxu0 0
        %4290 = vmatpush1.bf16.msra.mxu0 0
        %4291 = vmatprep.subr.bf16.mxu0 0
        %4292 = vmatpush1.bf16.msra.mxu0 0
        %4293 = vmatprep.subr.bf16.mxu0 0
        %4294 = vmatpush1.bf16.msra.mxu0 %v4274
        %4295 = vmatprep.subr.bf16.mxu0 0
        %4296 = vmatpush2.bf16.msra.mxu0 0
        %4297 = vmatprep.subr.bf16.mxu0 0
        %4298 = vmatpush2.bf16.msra.mxu0 0
        %4299 = vmatprep.subr.bf16.mxu0 0
        %4300 = vmatpush2.bf16.msra.mxu0 0
        %4301 = vmatprep.subr.bf16.mxu0 0
        %4302 = vmatpush2.bf16.msra.mxu0 0
        %4303 = vmatprep.subr.bf16.mxu0 0
        %4304 = vmatpush2.bf16.msra.mxu0 0
        %4305 = vmatprep.subr.bf16.mxu0 0
        %4306 = vmatpush2.bf16.msra.mxu0 0
        %4307 = vmatprep.subr.bf16.mxu0 0
        %4308 = vmatpush2.bf16.msra.mxu0 0
        %4309 = vmatprep.subr.bf16.mxu0 0
        %4310 = vmatpush2.bf16.msra.mxu0 0
        %4311 = vmatprep.mubr.bf16.mxu0 0
        %4312 = vmatmul.mubr.bf16.gmra.mxu0 %v4277
        %v4313 = vpop.f32.mrf.mxu0
        %v4314 = vadd.f32 %v4268, %v4313
        %v4315 = vpop.f32.mrf.mxu0
        %v4316 = vpop.f32.mrf.mxu0
        %v4317 = vpop.f32.mrf.mxu0
        %4318 = vdwg.mxu0
        %v4319 = vadd.f32 %v4314, %v4136
        %v4320 = vpack.c.bf16 %v4319, %v4319
        %s4321 = scalar_lea.vmem %s6, 192
        %v4322 = vld [vmem:[%s4321] sm:$0xff]
        %v4323 = vld [vmem:[%s4321 + $0x8] sm:$0xff]
        %v4324 = vld [vmem:[%s4321 + $0x10] sm:$0xff]
        %v4325 = vld [vmem:[%s4321 + $0x18] sm:$0xff]
        %v4326 = vld [vmem:[%s4321 + $0x20] sm:$0xff]
        %v4327 = vld [vmem:[%s4321 + $0x28] sm:$0xff]
        %v4328 = vld [vmem:[%s4321 + $0x30] sm:$0xff]
        %v4329 = vld [vmem:[%s4321 + $0x38] sm:$0xff]
        %s4330 = scalar_lea.vmem %s7, 6
        %v4331 = vld [vmem:[%s4330] sm:$0x3]
        %v4333 = vlaneseq
        %v4334 = vshrl.u32 %v4333, 7
        %v4335 = vsub.s32 0, %v4334
        %v4336 = vrot.slane %v4331, %v4335
        %v4337 = vlaneseq
        %v4338 = vshrl.u32 %v4337, 7
        %v4339 = vsub.s32 1, %v4338
        %v4340 = vrot.slane %v4331, %v4339
        %v4351 = vunpack.c.l.b16 %v4322
        %v4352 = vunpack.c.h.b16 %v4322
        %v4353 = vunpack.c.l.b16 %v4323
        %v4354 = vunpack.c.h.b16 %v4323
        %v4355 = vunpack.c.l.b16 %v4324
        %v4356 = vunpack.c.h.b16 %v4324
        %v4357 = vunpack.c.l.b16 %v4325
        %v4358 = vunpack.c.h.b16 %v4325
        %v4359 = vunpack.c.l.b16 %v4326
        %v4360 = vunpack.c.h.b16 %v4326
        %v4361 = vunpack.c.l.b16 %v4327
        %v4362 = vunpack.c.h.b16 %v4327
        %v4363 = vunpack.c.l.b16 %v4328
        %v4364 = vunpack.c.h.b16 %v4328
        %v4365 = vunpack.c.l.b16 %v4329
        %v4366 = vunpack.c.h.b16 %v4329
        %v4367 = vpack.c.b16 %v4353, %v4351
        %v4368 = vpack.c.b16 %v4354, %v4352
        %v4369 = vpack.c.b16 %v4357, %v4355
        %v4370 = vpack.c.b16 %v4358, %v4356
        %v4371 = vpack.c.b16 %v4361, %v4359
        %v4372 = vpack.c.b16 %v4362, %v4360
        %v4373 = vpack.c.b16 %v4365, %v4363
        %v4374 = vpack.c.b16 %v4366, %v4364
        %v4384 = vsel %vm990, %v4320, 0
        %4386 = vmatprep.subr.bf16.mxu0 0
        %4387 = vmatpush1.bf16.msra.mxu0 0
        %4388 = vmatprep.subr.bf16.mxu0 0
        %4389 = vmatpush1.bf16.msra.mxu0 0
        %4390 = vmatprep.subr.bf16.mxu0 0
        %4391 = vmatpush1.bf16.msra.mxu0 0
        %4392 = vmatprep.subr.bf16.mxu0 0
        %4393 = vmatpush1.bf16.msra.mxu0 0
        %4394 = vmatprep.subr.bf16.mxu0 %v4374
        %4395 = vmatpush1.bf16.msra.mxu0 %v4373
        %4396 = vmatprep.subr.bf16.mxu0 %v4372
        %4397 = vmatpush1.bf16.msra.mxu0 %v4371
        %4398 = vmatprep.subr.bf16.mxu0 %v4370
        %4399 = vmatpush1.bf16.msra.mxu0 %v4369
        %4400 = vmatprep.subr.bf16.mxu0 %v4368
        %4401 = vmatpush1.bf16.msra.mxu0 %v4367
        %4402 = vmatprep.subr.bf16.mxu0 0
        %4403 = vmatpush2.bf16.msra.mxu0 0
        %4404 = vmatprep.subr.bf16.mxu0 0
        %4405 = vmatpush2.bf16.msra.mxu0 0
        %4406 = vmatprep.subr.bf16.mxu0 0
        %4407 = vmatpush2.bf16.msra.mxu0 0
        %4408 = vmatprep.subr.bf16.mxu0 0
        %4409 = vmatpush2.bf16.msra.mxu0 0
        %4410 = vmatprep.subr.bf16.mxu0 0
        %4411 = vmatpush2.bf16.msra.mxu0 0
        %4412 = vmatprep.subr.bf16.mxu0 0
        %4413 = vmatpush2.bf16.msra.mxu0 0
        %4414 = vmatprep.subr.bf16.mxu0 0
        %4415 = vmatpush2.bf16.msra.mxu0 0
        %4416 = vmatprep.subr.bf16.mxu0 0
        %4417 = vmatpush2.bf16.msra.mxu0 0
        %4418 = vmatprep.mubr.bf16.mxu0 0
        %4419 = vmatmul.mubr.bf16.gmra.mxu0 %v4384
        %v4420 = vpop.f32.mrf.mxu0
        %v4421 = vadd.f32 %v4336, %v4420
        %v4422 = vpop.f32.mrf.mxu0
        %v4423 = vadd.f32 %v4340, %v4422
        %v4424 = vpop.f32.mrf.mxu0
        %v4425 = vpop.f32.mrf.mxu0
        %4426 = vdwg.mxu0
        %v4427 = vpack.c.bf16 %v4421, %v4421
        %v4428 = vpack.c.bf16 %v4423, %v4423
        %4430 = vrot.lane.b32.xlu0 %v4427, 64
        %v4431 = vpop.permute.xlu0 %4430
        %v4433 = vsel %vm1131, %v4427, 0
        %v4436 = vsel %vm1131, %v4431, 0
        %4438 = vmatprep.subr.bf16.mxu0 0
        %4439 = vmatpush1.bf16.xpose.msra.mxu0 0
        %4440 = vmatprep.subr.bf16.mxu0 0
        %4441 = vmatpush1.bf16.xpose.msra.mxu0 0
        %4442 = vmatprep.subr.bf16.mxu0 0
        %4443 = vmatpush1.bf16.xpose.msra.mxu0 0
        %4444 = vmatprep.subr.bf16.mxu0 0
        %4445 = vmatpush1.bf16.xpose.msra.mxu0 0
        %4446 = vmatprep.subr.bf16.mxu0 0
        %4447 = vmatpush1.bf16.xpose.msra.mxu0 0
        %4448 = vmatprep.subr.bf16.mxu0 0
        %4449 = vmatpush1.bf16.xpose.msra.mxu0 0
        %4450 = vmatprep.subr.bf16.mxu0 0
        %4451 = vmatpush1.bf16.xpose.msra.mxu0 0
        %4452 = vmatprep.subr.bf16.mxu0 0
        %4453 = vmatpush1.bf16.xpose.msra.mxu0 %v4436
        %4454 = vmatprep.subr.bf16.mxu0 0
        %4455 = vmatpush2.bf16.xpose.msra.mxu0 0
        %4456 = vmatprep.subr.bf16.mxu0 0
        %4457 = vmatpush2.bf16.xpose.msra.mxu0 0
        %4458 = vmatprep.subr.bf16.mxu0 0
        %4459 = vmatpush2.bf16.xpose.msra.mxu0 0
        %4460 = vmatprep.subr.bf16.mxu0 0
        %4461 = vmatpush2.bf16.xpose.msra.mxu0 0
        %4462 = vmatprep.subr.bf16.mxu0 0
        %4463 = vmatpush2.bf16.xpose.msra.mxu0 0
        %4464 = vmatprep.subr.bf16.mxu0 0
        %4465 = vmatpush2.bf16.xpose.msra.mxu0 0
        %4466 = vmatprep.subr.bf16.mxu0 0
        %4467 = vmatpush2.bf16.xpose.msra.mxu0 0
        %4468 = vmatprep.subr.bf16.mxu0 0
        %4469 = vmatpush2.bf16.xpose.msra.mxu0 0
        %4470 = vmatprep.mubr.bf16.mxu0 0
        %4471 = vmatmul.mubr.bf16.gmra.mxu0 %v4433
        %v4472 = vpop.f32.mrf.mxu0
        %v4473 = vadd.f32 0.0, %v4472
        %v4474 = vpop.f32.mrf.mxu0
        %v4475 = vpop.f32.mrf.mxu0
        %v4476 = vpop.f32.mrf.mxu0
        %4477 = vdwg.mxu0
        %v4478 = vsel %vm1183, -3.4028235e+38, %v4473
        %v4479 = vsel %vm1185, %v4478, -inf
        %4480 = vmax.xlane.f32.xlu0 %v4479
        %v4481 = vpop.xlane.xlu0 %4480
        %v4482 = vsub.f32 %v4478, %v4481
        %v4483 = vmul.f32 %v4482, 1.442695
        %v4484 = vpow.pop %v4483
        %v4485 = vsel %vm1185, %v4484, 0.0
        %4486 = vadd.xlane.f32.xlu0 %v4485
        %v4487 = vpop.xlane.xlu0 %4486
        %v4488 = vrcp.pop %v4487
        %v4489 = vmul.f32 %v4484, %v4488
        %v4490 = vpack.c.bf16 %v4489, %v4489
        %v4492 = vsel %vm1185, %v4490, 0
        %v4495 = vsel %vm1201, %v4428, 0
        %4497 = vmatprep.subr.bf16.mxu0 0
        %4498 = vmatpush1.bf16.msra.mxu0 0
        %4499 = vmatprep.subr.bf16.mxu0 0
        %4500 = vmatpush1.bf16.msra.mxu0 0
        %4501 = vmatprep.subr.bf16.mxu0 0
        %4502 = vmatpush1.bf16.msra.mxu0 0
        %4503 = vmatprep.subr.bf16.mxu0 0
        %4504 = vmatpush1.bf16.msra.mxu0 0
        %4505 = vmatprep.subr.bf16.mxu0 0
        %4506 = vmatpush1.bf16.msra.mxu0 0
        %4507 = vmatprep.subr.bf16.mxu0 0
        %4508 = vmatpush1.bf16.msra.mxu0 0
        %4509 = vmatprep.subr.bf16.mxu0 0
        %4510 = vmatpush1.bf16.msra.mxu0 0
        %4511 = vmatprep.subr.bf16.mxu0 0
        %4512 = vmatpush1.bf16.msra.mxu0 %v4495
        %4513 = vmatprep.subr.bf16.mxu0 0
        %4514 = vmatpush2.bf16.msra.mxu0 0
        %4515 = vmatprep.subr.bf16.mxu0 0
        %4516 = vmatpush2.bf16.msra.mxu0 0
        %4517 = vmatprep.subr.bf16.mxu0 0
        %4518 = vmatpush2.bf16.msra.mxu0 0
        %4519 = vmatprep.subr.bf16.mxu0 0
        %4520 = vmatpush2.bf16.msra.mxu0 0
        %4521 = vmatprep.subr.bf16.mxu0 0
        %4522 = vmatpush2.bf16.msra.mxu0 0
        %4523 = vmatprep.subr.bf16.mxu0 0
        %4524 = vmatpush2.bf16.msra.mxu0 0
        %4525 = vmatprep.subr.bf16.mxu0 0
        %4526 = vmatpush2.bf16.msra.mxu0 0
        %4527 = vmatprep.subr.bf16.mxu0 0
        %4528 = vmatpush2.bf16.msra.mxu0 0
        %4529 = vmatprep.mubr.bf16.mxu0 0
        %4530 = vmatmul.mubr.bf16.gmra.mxu0 %v4492
        %v4531 = vpop.f32.mrf.mxu0
        %v4532 = vadd.f32 0.0, %v4531
        %v4533 = vpop.f32.mrf.mxu0
        %v4534 = vpop.f32.mrf.mxu0
        %v4535 = vpop.f32.mrf.mxu0
        %4536 = vdwg.mxu0
        %4537 = vrot.lane.b32.xlu0 %v4427, 112
        %v4538 = vpop.permute.xlu0 %4537
        %4539 = vrot.lane.b32.xlu0 %v4427, 48
        %v4540 = vpop.permute.xlu0 %4539
        %v4542 = vsel %vm1131, %v4538, 0
        %v4545 = vsel %vm1131, %v4540, 0
        %4547 = vmatprep.subr.bf16.mxu0 0
        %4548 = vmatpush1.bf16.xpose.msra.mxu0 0
        %4549 = vmatprep.subr.bf16.mxu0 0
        %4550 = vmatpush1.bf16.xpose.msra.mxu0 0
        %4551 = vmatprep.subr.bf16.mxu0 0
        %4552 = vmatpush1.bf16.xpose.msra.mxu0 0
        %4553 = vmatprep.subr.bf16.mxu0 0
        %4554 = vmatpush1.bf16.xpose.msra.mxu0 0
        %4555 = vmatprep.subr.bf16.mxu0 0
        %4556 = vmatpush1.bf16.xpose.msra.mxu0 0
        %4557 = vmatprep.subr.bf16.mxu0 0
        %4558 = vmatpush1.bf16.xpose.msra.mxu0 0
        %4559 = vmatprep.subr.bf16.mxu0 0
        %4560 = vmatpush1.bf16.xpose.msra.mxu0 0
        %4561 = vmatprep.subr.bf16.mxu0 0
        %4562 = vmatpush1.bf16.xpose.msra.mxu0 %v4545
        %4563 = vmatprep.subr.bf16.mxu0 0
        %4564 = vmatpush2.bf16.xpose.msra.mxu0 0
        %4565 = vmatprep.subr.bf16.mxu0 0
        %4566 = vmatpush2.bf16.xpose.msra.mxu0 0
        %4567 = vmatprep.subr.bf16.mxu0 0
        %4568 = vmatpush2.bf16.xpose.msra.mxu0 0
        %4569 = vmatprep.subr.bf16.mxu0 0
        %4570 = vmatpush2.bf16.xpose.msra.mxu0 0
        %4571 = vmatprep.subr.bf16.mxu0 0
        %4572 = vmatpush2.bf16.xpose.msra.mxu0 0
        %4573 = vmatprep.subr.bf16.mxu0 0
        %4574 = vmatpush2.bf16.xpose.msra.mxu0 0
        %4575 = vmatprep.subr.bf16.mxu0 0
        %4576 = vmatpush2.bf16.xpose.msra.mxu0 0
        %4577 = vmatprep.subr.bf16.mxu0 0
        %4578 = vmatpush2.bf16.xpose.msra.mxu0 0
        %4579 = vmatprep.mubr.bf16.mxu0 0
        %4580 = vmatmul.mubr.bf16.gmra.mxu0 %v4542
        %v4581 = vpop.f32.mrf.mxu0
        %v4582 = vadd.f32 0.0, %v4581
        %v4583 = vpop.f32.mrf.mxu0
        %v4584 = vpop.f32.mrf.mxu0
        %v4585 = vpop.f32.mrf.mxu0
        %4586 = vdwg.mxu0
        %v4587 = vsel %vm1183, -3.4028235e+38, %v4582
        %v4588 = vsel %vm1185, %v4587, -inf
        %4589 = vmax.xlane.f32.xlu0 %v4588
        %v4590 = vpop.xlane.xlu0 %4589
        %v4591 = vsub.f32 %v4587, %v4590
        %v4592 = vmul.f32 %v4591, 1.442695
        %v4593 = vpow.pop %v4592
        %v4594 = vsel %vm1185, %v4593, 0.0
        %4595 = vadd.xlane.f32.xlu0 %v4594
        %v4596 = vpop.xlane.xlu0 %4595
        %v4597 = vrcp.pop %v4596
        %v4598 = vmul.f32 %v4593, %v4597
        %v4599 = vpack.c.bf16 %v4598, %v4598
        %4601 = vrot.lane.b32.xlu0 %v4428, 112
        %v4602 = vpop.permute.xlu0 %4601
        %v4604 = vsel %vm1185, %v4599, 0
        %v4607 = vsel %vm1201, %v4602, 0
        %4609 = vmatprep.subr.bf16.mxu0 0
        %4610 = vmatpush1.bf16.msra.mxu0 0
        %4611 = vmatprep.subr.bf16.mxu0 0
        %4612 = vmatpush1.bf16.msra.mxu0 0
        %4613 = vmatprep.subr.bf16.mxu0 0
        %4614 = vmatpush1.bf16.msra.mxu0 0
        %4615 = vmatprep.subr.bf16.mxu0 0
        %4616 = vmatpush1.bf16.msra.mxu0 0
        %4617 = vmatprep.subr.bf16.mxu0 0
        %4618 = vmatpush1.bf16.msra.mxu0 0
        %4619 = vmatprep.subr.bf16.mxu0 0
        %4620 = vmatpush1.bf16.msra.mxu0 0
        %4621 = vmatprep.subr.bf16.mxu0 0
        %4622 = vmatpush1.bf16.msra.mxu0 0
        %4623 = vmatprep.subr.bf16.mxu0 0
        %4624 = vmatpush1.bf16.msra.mxu0 %v4607
        %4625 = vmatprep.subr.bf16.mxu0 0
        %4626 = vmatpush2.bf16.msra.mxu0 0
        %4627 = vmatprep.subr.bf16.mxu0 0
        %4628 = vmatpush2.bf16.msra.mxu0 0
        %4629 = vmatprep.subr.bf16.mxu0 0
        %4630 = vmatpush2.bf16.msra.mxu0 0
        %4631 = vmatprep.subr.bf16.mxu0 0
        %4632 = vmatpush2.bf16.msra.mxu0 0
        %4633 = vmatprep.subr.bf16.mxu0 0
        %4634 = vmatpush2.bf16.msra.mxu0 0
        %4635 = vmatprep.subr.bf16.mxu0 0
        %4636 = vmatpush2.bf16.msra.mxu0 0
        %4637 = vmatprep.subr.bf16.mxu0 0
        %4638 = vmatpush2.bf16.msra.mxu0 0
        %4639 = vmatprep.subr.bf16.mxu0 0
        %4640 = vmatpush2.bf16.msra.mxu0 0
        %4641 = vmatprep.mubr.bf16.mxu0 0
        %4642 = vmatmul.mubr.bf16.gmra.mxu0 %v4604
        %v4643 = vpop.f32.mrf.mxu0
        %v4644 = vadd.f32 0.0, %v4643
        %v4645 = vpop.f32.mrf.mxu0
        %v4646 = vpop.f32.mrf.mxu0
        %v4647 = vpop.f32.mrf.mxu0
        %4648 = vdwg.mxu0
        %4649 = vrot.lane.b32.xlu0 %v4427, 96
        %v4650 = vpop.permute.xlu0 %4649
        %4651 = vrot.lane.b32.xlu0 %v4427, 32
        %v4652 = vpop.permute.xlu0 %4651
        %v4654 = vsel %vm1131, %v4650, 0
        %v4657 = vsel %vm1131, %v4652, 0
        %4659 = vmatprep.subr.bf16.mxu0 0
        %4660 = vmatpush1.bf16.xpose.msra.mxu0 0
        %4661 = vmatprep.subr.bf16.mxu0 0
        %4662 = vmatpush1.bf16.xpose.msra.mxu0 0
        %4663 = vmatprep.subr.bf16.mxu0 0
        %4664 = vmatpush1.bf16.xpose.msra.mxu0 0
        %4665 = vmatprep.subr.bf16.mxu0 0
        %4666 = vmatpush1.bf16.xpose.msra.mxu0 0
        %4667 = vmatprep.subr.bf16.mxu0 0
        %4668 = vmatpush1.bf16.xpose.msra.mxu0 0
        %4669 = vmatprep.subr.bf16.mxu0 0
        %4670 = vmatpush1.bf16.xpose.msra.mxu0 0
        %4671 = vmatprep.subr.bf16.mxu0 0
        %4672 = vmatpush1.bf16.xpose.msra.mxu0 0
        %4673 = vmatprep.subr.bf16.mxu0 0
        %4674 = vmatpush1.bf16.xpose.msra.mxu0 %v4657
        %4675 = vmatprep.subr.bf16.mxu0 0
        %4676 = vmatpush2.bf16.xpose.msra.mxu0 0
        %4677 = vmatprep.subr.bf16.mxu0 0
        %4678 = vmatpush2.bf16.xpose.msra.mxu0 0
        %4679 = vmatprep.subr.bf16.mxu0 0
        %4680 = vmatpush2.bf16.xpose.msra.mxu0 0
        %4681 = vmatprep.subr.bf16.mxu0 0
        %4682 = vmatpush2.bf16.xpose.msra.mxu0 0
        %4683 = vmatprep.subr.bf16.mxu0 0
        %4684 = vmatpush2.bf16.xpose.msra.mxu0 0
        %4685 = vmatprep.subr.bf16.mxu0 0
        %4686 = vmatpush2.bf16.xpose.msra.mxu0 0
        %4687 = vmatprep.subr.bf16.mxu0 0
        %4688 = vmatpush2.bf16.xpose.msra.mxu0 0
        %4689 = vmatprep.subr.bf16.mxu0 0
        %4690 = vmatpush2.bf16.xpose.msra.mxu0 0
        %4691 = vmatprep.mubr.bf16.mxu0 0
        %4692 = vmatmul.mubr.bf16.gmra.mxu0 %v4654
        %v4693 = vpop.f32.mrf.mxu0
        %v4694 = vadd.f32 0.0, %v4693
        %v4695 = vpop.f32.mrf.mxu0
        %v4696 = vpop.f32.mrf.mxu0
        %v4697 = vpop.f32.mrf.mxu0
        %4698 = vdwg.mxu0
        %v4699 = vsel %vm1183, -3.4028235e+38, %v4694
        %v4700 = vsel %vm1185, %v4699, -inf
        %4701 = vmax.xlane.f32.xlu0 %v4700
        %v4702 = vpop.xlane.xlu0 %4701
        %v4703 = vsub.f32 %v4699, %v4702
        %v4704 = vmul.f32 %v4703, 1.442695
        %v4705 = vpow.pop %v4704
        %v4706 = vsel %vm1185, %v4705, 0.0
        %4707 = vadd.xlane.f32.xlu0 %v4706
        %v4708 = vpop.xlane.xlu0 %4707
        %v4709 = vrcp.pop %v4708
        %v4710 = vmul.f32 %v4705, %v4709
        %v4711 = vpack.c.bf16 %v4710, %v4710
        %4712 = vrot.lane.b32.xlu0 %v4428, 96
        %v4713 = vpop.permute.xlu0 %4712
        %v4715 = vsel %vm1185, %v4711, 0
        %v4718 = vsel %vm1201, %v4713, 0
        %4720 = vmatprep.subr.bf16.mxu0 0
        %4721 = vmatpush1.bf16.msra.mxu0 0
        %4722 = vmatprep.subr.bf16.mxu0 0
        %4723 = vmatpush1.bf16.msra.mxu0 0
        %4724 = vmatprep.subr.bf16.mxu0 0
        %4725 = vmatpush1.bf16.msra.mxu0 0
        %4726 = vmatprep.subr.bf16.mxu0 0
        %4727 = vmatpush1.bf16.msra.mxu0 0
        %4728 = vmatprep.subr.bf16.mxu0 0
        %4729 = vmatpush1.bf16.msra.mxu0 0
        %4730 = vmatprep.subr.bf16.mxu0 0
        %4731 = vmatpush1.bf16.msra.mxu0 0
        %4732 = vmatprep.subr.bf16.mxu0 0
        %4733 = vmatpush1.bf16.msra.mxu0 0
        %4734 = vmatprep.subr.bf16.mxu0 0
        %4735 = vmatpush1.bf16.msra.mxu0 %v4718
        %4736 = vmatprep.subr.bf16.mxu0 0
        %4737 = vmatpush2.bf16.msra.mxu0 0
        %4738 = vmatprep.subr.bf16.mxu0 0
        %4739 = vmatpush2.bf16.msra.mxu0 0
        %4740 = vmatprep.subr.bf16.mxu0 0
        %4741 = vmatpush2.bf16.msra.mxu0 0
        %4742 = vmatprep.subr.bf16.mxu0 0
        %4743 = vmatpush2.bf16.msra.mxu0 0
        %4744 = vmatprep.subr.bf16.mxu0 0
        %4745 = vmatpush2.bf16.msra.mxu0 0
        %4746 = vmatprep.subr.bf16.mxu0 0
        %4747 = vmatpush2.bf16.msra.mxu0 0
        %4748 = vmatprep.subr.bf16.mxu0 0
        %4749 = vmatpush2.bf16.msra.mxu0 0
        %4750 = vmatprep.subr.bf16.mxu0 0
        %4751 = vmatpush2.bf16.msra.mxu0 0
        %4752 = vmatprep.mubr.bf16.mxu0 0
        %4753 = vmatmul.mubr.bf16.gmra.mxu0 %v4715
        %v4754 = vpop.f32.mrf.mxu0
        %v4755 = vadd.f32 0.0, %v4754
        %v4756 = vpop.f32.mrf.mxu0
        %v4757 = vpop.f32.mrf.mxu0
        %v4758 = vpop.f32.mrf.mxu0
        %4759 = vdwg.mxu0
        %4760 = vrot.lane.b32.xlu0 %v4427, 80
        %v4761 = vpop.permute.xlu0 %4760
        %4762 = vrot.lane.b32.xlu0 %v4427, 16
        %v4763 = vpop.permute.xlu0 %4762
        %v4765 = vsel %vm1131, %v4761, 0
        %v4768 = vsel %vm1131, %v4763, 0
        %4770 = vmatprep.subr.bf16.mxu0 0
        %4771 = vmatpush1.bf16.xpose.msra.mxu0 0
        %4772 = vmatprep.subr.bf16.mxu0 0
        %4773 = vmatpush1.bf16.xpose.msra.mxu0 0
        %4774 = vmatprep.subr.bf16.mxu0 0
        %4775 = vmatpush1.bf16.xpose.msra.mxu0 0
        %4776 = vmatprep.subr.bf16.mxu0 0
        %4777 = vmatpush1.bf16.xpose.msra.mxu0 0
        %4778 = vmatprep.subr.bf16.mxu0 0
        %4779 = vmatpush1.bf16.xpose.msra.mxu0 0
        %4780 = vmatprep.subr.bf16.mxu0 0
        %4781 = vmatpush1.bf16.xpose.msra.mxu0 0
        %4782 = vmatprep.subr.bf16.mxu0 0
        %4783 = vmatpush1.bf16.xpose.msra.mxu0 0
        %4784 = vmatprep.subr.bf16.mxu0 0
        %4785 = vmatpush1.bf16.xpose.msra.mxu0 %v4768
        %4786 = vmatprep.subr.bf16.mxu0 0
        %4787 = vmatpush2.bf16.xpose.msra.mxu0 0
        %4788 = vmatprep.subr.bf16.mxu0 0
        %4789 = vmatpush2.bf16.xpose.msra.mxu0 0
        %4790 = vmatprep.subr.bf16.mxu0 0
        %4791 = vmatpush2.bf16.xpose.msra.mxu0 0
        %4792 = vmatprep.subr.bf16.mxu0 0
        %4793 = vmatpush2.bf16.xpose.msra.mxu0 0
        %4794 = vmatprep.subr.bf16.mxu0 0
        %4795 = vmatpush2.bf16.xpose.msra.mxu0 0
        %4796 = vmatprep.subr.bf16.mxu0 0
        %4797 = vmatpush2.bf16.xpose.msra.mxu0 0
        %4798 = vmatprep.subr.bf16.mxu0 0
        %4799 = vmatpush2.bf16.xpose.msra.mxu0 0
        %4800 = vmatprep.subr.bf16.mxu0 0
        %4801 = vmatpush2.bf16.xpose.msra.mxu0 0
        %4802 = vmatprep.mubr.bf16.mxu0 0
        %4803 = vmatmul.mubr.bf16.gmra.mxu0 %v4765
        %v4804 = vpop.f32.mrf.mxu0
        %v4805 = vadd.f32 0.0, %v4804
        %v4806 = vpop.f32.mrf.mxu0
        %v4807 = vpop.f32.mrf.mxu0
        %v4808 = vpop.f32.mrf.mxu0
        %4809 = vdwg.mxu0
        %v4810 = vsel %vm1183, -3.4028235e+38, %v4805
        %v4811 = vsel %vm1185, %v4810, -inf
        %4812 = vmax.xlane.f32.xlu0 %v4811
        %v4813 = vpop.xlane.xlu0 %4812
        %v4814 = vsub.f32 %v4810, %v4813
        %v4815 = vmul.f32 %v4814, 1.442695
        %v4816 = vpow.pop %v4815
        %v4817 = vsel %vm1185, %v4816, 0.0
        %4818 = vadd.xlane.f32.xlu0 %v4817
        %v4819 = vpop.xlane.xlu0 %4818
        %v4820 = vrcp.pop %v4819
        %v4821 = vmul.f32 %v4816, %v4820
        %v4822 = vpack.c.bf16 %v4821, %v4821
        %4823 = vrot.lane.b32.xlu0 %v4428, 80
        %v4824 = vpop.permute.xlu0 %4823
        %v4826 = vsel %vm1185, %v4822, 0
        %v4829 = vsel %vm1201, %v4824, 0
        %4831 = vmatprep.subr.bf16.mxu0 0
        %4832 = vmatpush1.bf16.msra.mxu0 0
        %4833 = vmatprep.subr.bf16.mxu0 0
        %4834 = vmatpush1.bf16.msra.mxu0 0
        %4835 = vmatprep.subr.bf16.mxu0 0
        %4836 = vmatpush1.bf16.msra.mxu0 0
        %4837 = vmatprep.subr.bf16.mxu0 0
        %4838 = vmatpush1.bf16.msra.mxu0 0
        %4839 = vmatprep.subr.bf16.mxu0 0
        %4840 = vmatpush1.bf16.msra.mxu0 0
        %4841 = vmatprep.subr.bf16.mxu0 0
        %4842 = vmatpush1.bf16.msra.mxu0 0
        %4843 = vmatprep.subr.bf16.mxu0 0
        %4844 = vmatpush1.bf16.msra.mxu0 0
        %4845 = vmatprep.subr.bf16.mxu0 0
        %4846 = vmatpush1.bf16.msra.mxu0 %v4829
        %4847 = vmatprep.subr.bf16.mxu0 0
        %4848 = vmatpush2.bf16.msra.mxu0 0
        %4849 = vmatprep.subr.bf16.mxu0 0
        %4850 = vmatpush2.bf16.msra.mxu0 0
        %4851 = vmatprep.subr.bf16.mxu0 0
        %4852 = vmatpush2.bf16.msra.mxu0 0
        %4853 = vmatprep.subr.bf16.mxu0 0
        %4854 = vmatpush2.bf16.msra.mxu0 0
        %4855 = vmatprep.subr.bf16.mxu0 0
        %4856 = vmatpush2.bf16.msra.mxu0 0
        %4857 = vmatprep.subr.bf16.mxu0 0
        %4858 = vmatpush2.bf16.msra.mxu0 0
        %4859 = vmatprep.subr.bf16.mxu0 0
        %4860 = vmatpush2.bf16.msra.mxu0 0
        %4861 = vmatprep.subr.bf16.mxu0 0
        %4862 = vmatpush2.bf16.msra.mxu0 0
        %4863 = vmatprep.mubr.bf16.mxu0 0
        %4864 = vmatmul.mubr.bf16.gmra.mxu0 %v4826
        %v4865 = vpop.f32.mrf.mxu0
        %v4866 = vadd.f32 0.0, %v4865
        %v4867 = vpop.f32.mrf.mxu0
        %v4868 = vpop.f32.mrf.mxu0
        %v4869 = vpop.f32.mrf.mxu0
        %4870 = vdwg.mxu0
        %4872 = vrot.lane.b32.xlu0 %v4644, 16
        %v4873 = vpop.permute.xlu0 %4872
        %4876 = vrot.lane.b32.xlu0 %v4755, 32
        %v4877 = vpop.permute.xlu0 %4876
        %4880 = vrot.lane.b32.xlu0 %v4866, 48
        %v4881 = vpop.permute.xlu0 %4880
        %v4883 = vsel %vm1131, %v4532, %v4873
        %v4884 = vsel %vm1592, %v4883, %v4877
        %v4885 = vsel %vm1594, %v4884, %v4881
        %s4886 = scalar_lea.vmem %s8, 96
        %v4887 = vld [vmem:[%s4886] sm:$0xf]
        %v4888 = vld [vmem:[%s4886 + $0x4] sm:$0xf]
        %v4889 = vld [vmem:[%s4886 + $0x8] sm:$0xf]
        %v4890 = vld [vmem:[%s4886 + $0xc] sm:$0xf]
        %v4891 = vld [vmem:[%s4886 + $0x10] sm:$0xf]
        %v4892 = vld [vmem:[%s4886 + $0x14] sm:$0xf]
        %v4893 = vld [vmem:[%s4886 + $0x18] sm:$0xf]
        %v4894 = vld [vmem:[%s4886 + $0x1c] sm:$0xf]
        %s4895 = scalar_lea.vmem %s9, 3
        %v4896 = vld [vmem:[%s4895] sm:$0x1]
        %v4897 = vpack.c.bf16 %v4885, %v4885
        %v4899 = vlaneseq
        %v4900 = vshrl.u32 %v4899, 7
        %v4901 = vsub.s32 0, %v4900
        %v4902 = vrot.slane %v4896, %v4901
        %v4912 = vunpack.c.l.b16 %v4887
        %v4913 = vunpack.c.l.b16 %v4888
        %v4914 = vunpack.c.l.b16 %v4889
        %v4915 = vunpack.c.l.b16 %v4890
        %v4916 = vunpack.c.l.b16 %v4891
        %v4917 = vunpack.c.l.b16 %v4892
        %v4918 = vunpack.c.l.b16 %v4893
        %v4919 = vunpack.c.l.b16 %v4894
        %v4920 = vpack.c.b16 %v4913, %v4912
        %v4921 = vpack.c.b16 %v4915, %v4914
        %v4922 = vpack.c.b16 %v4917, %v4916
        %v4923 = vpack.c.b16 %v4919, %v4918
        %v4929 = vsel %vm990, %v4897, 0
        %4931 = vmatprep.subr.bf16.mxu0 0
        %4932 = vmatpush1.bf16.msra.mxu0 0
        %4933 = vmatprep.subr.bf16.mxu0 0
        %4934 = vmatpush1.bf16.msra.mxu0 0
        %4935 = vmatprep.subr.bf16.mxu0 0
        %4936 = vmatpush1.bf16.msra.mxu0 0
        %4937 = vmatprep.subr.bf16.mxu0 0
        %4938 = vmatpush1.bf16.msra.mxu0 0
        %4939 = vmatprep.subr.bf16.mxu0 0
        %4940 = vmatpush1.bf16.msra.mxu0 %v4923
        %4941 = vmatprep.subr.bf16.mxu0 0
        %4942 = vmatpush1.bf16.msra.mxu0 %v4922
        %4943 = vmatprep.subr.bf16.mxu0 0
        %4944 = vmatpush1.bf16.msra.mxu0 %v4921
        %4945 = vmatprep.subr.bf16.mxu0 0
        %4946 = vmatpush1.bf16.msra.mxu0 %v4920
        %4947 = vmatprep.subr.bf16.mxu0 0
        %4948 = vmatpush2.bf16.msra.mxu0 0
        %4949 = vmatprep.subr.bf16.mxu0 0
        %4950 = vmatpush2.bf16.msra.mxu0 0
        %4951 = vmatprep.subr.bf16.mxu0 0
        %4952 = vmatpush2.bf16.msra.mxu0 0
        %4953 = vmatprep.subr.bf16.mxu0 0
        %4954 = vmatpush2.bf16.msra.mxu0 0
        %4955 = vmatprep.subr.bf16.mxu0 0
        %4956 = vmatpush2.bf16.msra.mxu0 0
        %4957 = vmatprep.subr.bf16.mxu0 0
        %4958 = vmatpush2.bf16.msra.mxu0 0
        %4959 = vmatprep.subr.bf16.mxu0 0
        %4960 = vmatpush2.bf16.msra.mxu0 0
        %4961 = vmatprep.subr.bf16.mxu0 0
        %4962 = vmatpush2.bf16.msra.mxu0 0
        %4963 = vmatprep.mubr.bf16.mxu0 0
        %4964 = vmatmul.mubr.bf16.gmra.mxu0 %v4929
        %v4965 = vpop.f32.mrf.mxu0
        %v4966 = vadd.f32 %v4902, %v4965
        %v4967 = vpop.f32.mrf.mxu0
        %v4968 = vpop.f32.mrf.mxu0
        %v4969 = vpop.f32.mrf.mxu0
        %4970 = vdwg.mxu0
        %v4971 = vadd.f32 %v4966, %v4319
        %s4972 = scalar_lea.vmem %s10, 3
        %v4973 = vld [vmem:[%s4972] sm:$0x1]
        %s4974 = scalar_lea.vmem %s11, 3
        %v4975 = vld [vmem:[%s4974] sm:$0x1]
        %v4976 = vsel %vm990, %v4971, 0.0
        %4977 = vadd.xlane.f32.xlu0 %v4976
        %v4978 = vpop.xlane.xlu0 %4977
        %v4979 = vmul.f32 %v4978, %v994
        %v4980 = vsub.f32 %v4971, %v4979
        %v4981 = vmul.f32 %v4980, %v4980
        %v4982 = vsel %vm990, %v4981, 0.0
        %4983 = vadd.xlane.f32.xlu0 %v4982
        %v4984 = vpop.xlane.xlu0 %4983
        %v4985 = vmul.f32 %v4984, %v994
        %v4986 = vadd.f32 %v4985, 1e-12
        %v4987 = vrsqrt.pop %v4986
        %v4988 = vmul.f32 %v4980, %v4987
        %v4990 = vlaneseq
        %v4991 = vshrl.u32 %v4990, 7
        %v4992 = vsub.s32 0, %v4991
        %v4993 = vrot.slane %v4973, %v4992
        %v4995 = vmul.f32 %v4988, %v4993
        %v4997 = vlaneseq
        %v4998 = vshrl.u32 %v4997, 7
        %v4999 = vsub.s32 0, %v4998
        %v5000 = vrot.slane %v4975, %v4999
        %v5002 = vadd.f32 %v4995, %v5000
        %s5003 = scalar_lea.vmem [#allocation2], 96
        %v5004 = vld [vmem:[%s5003] sm:$0xf]
        %v5005 = vld [vmem:[%s5003 + $0x4] sm:$0xf]
        %v5006 = vld [vmem:[%s5003 + $0x8] sm:$0xf]
        %v5007 = vld [vmem:[%s5003 + $0xc] sm:$0xf]
        %v5008 = vld [vmem:[%s5003 + $0x10] sm:$0xf]
        %v5009 = vld [vmem:[%s5003 + $0x14] sm:$0xf]
        %v5010 = vld [vmem:[%s5003 + $0x18] sm:$0xf]
        %v5011 = vld [vmem:[%s5003 + $0x1c] sm:$0xf]
        %s5012 = scalar_lea.vmem %s13, 3
        %v5013 = vld [vmem:[%s5012] sm:$0x1]
        %v5014 = vpack.c.bf16 %v5002, %v5002
        %v5016 = vlaneseq
        %v5017 = vshrl.u32 %v5016, 7
        %v5018 = vsub.s32 0, %v5017
        %v5019 = vrot.slane %v5013, %v5018
        %v5029 = vunpack.c.l.b16 %v5004
        %v5030 = vunpack.c.l.b16 %v5005
        %v5031 = vunpack.c.l.b16 %v5006
        %v5032 = vunpack.c.l.b16 %v5007
        %v5033 = vunpack.c.l.b16 %v5008
        %v5034 = vunpack.c.l.b16 %v5009
        %v5035 = vunpack.c.l.b16 %v5010
        %v5036 = vunpack.c.l.b16 %v5011
        %v5037 = vpack.c.b16 %v5030, %v5029
        %v5038 = vpack.c.b16 %v5032, %v5031
        %v5039 = vpack.c.b16 %v5034, %v5033
        %v5040 = vpack.c.b16 %v5036, %v5035
        %v5046 = vsel %vm990, %v5014, 0
        %5048 = vmatprep.subr.bf16.mxu0 0
        %5049 = vmatpush1.bf16.msra.mxu0 0
        %5050 = vmatprep.subr.bf16.mxu0 0
        %5051 = vmatpush1.bf16.msra.mxu0 0
        %5052 = vmatprep.subr.bf16.mxu0 0
        %5053 = vmatpush1.bf16.msra.mxu0 0
        %5054 = vmatprep.subr.bf16.mxu0 0
        %5055 = vmatpush1.bf16.msra.mxu0 0
        %5056 = vmatprep.subr.bf16.mxu0 0
        %5057 = vmatpush1.bf16.msra.mxu0 %v5040
        %5058 = vmatprep.subr.bf16.mxu0 0
        %5059 = vmatpush1.bf16.msra.mxu0 %v5039
        %5060 = vmatprep.subr.bf16.mxu0 0
        %5061 = vmatpush1.bf16.msra.mxu0 %v5038
        %5062 = vmatprep.subr.bf16.mxu0 0
        %5063 = vmatpush1.bf16.msra.mxu0 %v5037
        %5064 = vmatprep.subr.bf16.mxu0 0
        %5065 = vmatpush2.bf16.msra.mxu0 0
        %5066 = vmatprep.subr.bf16.mxu0 0
        %5067 = vmatpush2.bf16.msra.mxu0 0
        %5068 = vmatprep.subr.bf16.mxu0 0
        %5069 = vmatpush2.bf16.msra.mxu0 0
        %5070 = vmatprep.subr.bf16.mxu0 0
        %5071 = vmatpush2.bf16.msra.mxu0 0
        %5072 = vmatprep.subr.bf16.mxu0 0
        %5073 = vmatpush2.bf16.msra.mxu0 0
        %5074 = vmatprep.subr.bf16.mxu0 0
        %5075 = vmatpush2.bf16.msra.mxu0 0
        %5076 = vmatprep.subr.bf16.mxu0 0
        %5077 = vmatpush2.bf16.msra.mxu0 0
        %5078 = vmatprep.subr.bf16.mxu0 0
        %5079 = vmatpush2.bf16.msra.mxu0 0
        %5080 = vmatprep.mubr.bf16.mxu0 0
        %5081 = vmatmul.mubr.bf16.gmra.mxu0 %v5046
        %v5082 = vpop.f32.mrf.mxu0
        %v5083 = vadd.f32 %v5019, %v5082
        %v5084 = vpop.f32.mrf.mxu0
        %v5085 = vpop.f32.mrf.mxu0
        %v5086 = vpop.f32.mrf.mxu0
        %5087 = vdwg.mxu0
        %v5088 = vmul.f32 %v5083, 0.5
        %v5089 = vmul.f32 %v5083, 0.70710677
        %v5090 = verf.f32.pop %v5089
        %v5091 = vadd.f32 %v5090, 1.0
        %v5092 = vmul.f32 %v5088, %v5091
        %s5093 = scalar_lea.vmem %s14, 192
        %v5094 = vld [vmem:[%s5093] sm:$0xf]
        %v5095 = vld [vmem:[%s5093 + $0x4] sm:$0xf]
        %v5096 = vld [vmem:[%s5093 + $0x8] sm:$0xf]
        %v5097 = vld [vmem:[%s5093 + $0xc] sm:$0xf]
        %v5098 = vld [vmem:[%s5093 + $0x10] sm:$0xf]
        %v5099 = vld [vmem:[%s5093 + $0x14] sm:$0xf]
        %v5100 = vld [vmem:[%s5093 + $0x18] sm:$0xf]
        %v5101 = vld [vmem:[%s5093 + $0x1c] sm:$0xf]
        %v5102 = vld [vmem:[%s5093 + $0x20] sm:$0xf]
        %v5103 = vld [vmem:[%s5093 + $0x24] sm:$0xf]
        %v5104 = vld [vmem:[%s5093 + $0x28] sm:$0xf]
        %v5105 = vld [vmem:[%s5093 + $0x2c] sm:$0xf]
        %v5106 = vld [vmem:[%s5093 + $0x30] sm:$0xf]
        %v5107 = vld [vmem:[%s5093 + $0x34] sm:$0xf]
        %v5108 = vld [vmem:[%s5093 + $0x38] sm:$0xf]
        %v5109 = vld [vmem:[%s5093 + $0x3c] sm:$0xf]
        %s5110 = scalar_lea.vmem %s15, 3
        %v5111 = vld [vmem:[%s5110] sm:$0x1]
        %v5112 = vpack.c.bf16 %v5092, %v5092
        %v5114 = vlaneseq
        %v5115 = vshrl.u32 %v5114, 7
        %v5116 = vsub.s32 0, %v5115
        %v5117 = vrot.slane %v5111, %v5116
        %v5135 = vunpack.c.l.b16 %v5094
        %v5136 = vunpack.c.l.b16 %v5095
        %v5137 = vunpack.c.l.b16 %v5096
        %v5138 = vunpack.c.l.b16 %v5097
        %v5139 = vunpack.c.l.b16 %v5098
        %v5140 = vunpack.c.l.b16 %v5099
        %v5141 = vunpack.c.l.b16 %v5100
        %v5142 = vunpack.c.l.b16 %v5101
        %v5143 = vunpack.c.l.b16 %v5102
        %v5144 = vunpack.c.l.b16 %v5103
        %v5145 = vunpack.c.l.b16 %v5104
        %v5146 = vunpack.c.l.b16 %v5105
        %v5147 = vunpack.c.l.b16 %v5106
        %v5148 = vunpack.c.l.b16 %v5107
        %v5149 = vunpack.c.l.b16 %v5108
        %v5150 = vunpack.c.l.b16 %v5109
        %v5151 = vpack.c.b16 %v5136, %v5135
        %v5152 = vpack.c.b16 %v5138, %v5137
        %v5153 = vpack.c.b16 %v5140, %v5139
        %v5154 = vpack.c.b16 %v5142, %v5141
        %v5155 = vpack.c.b16 %v5144, %v5143
        %v5156 = vpack.c.b16 %v5146, %v5145
        %v5157 = vpack.c.b16 %v5148, %v5147
        %v5158 = vpack.c.b16 %v5150, %v5149
        %5167 = vmatprep.subr.bf16.mxu0 0
        %5168 = vmatpush1.bf16.msra.mxu0 %v5158
        %5169 = vmatprep.subr.bf16.mxu0 0
        %5170 = vmatpush1.bf16.msra.mxu0 %v5157
        %5171 = vmatprep.subr.bf16.mxu0 0
        %5172 = vmatpush1.bf16.msra.mxu0 %v5156
        %5173 = vmatprep.subr.bf16.mxu0 0
        %5174 = vmatpush1.bf16.msra.mxu0 %v5155
        %5175 = vmatprep.subr.bf16.mxu0 0
        %5176 = vmatpush1.bf16.msra.mxu0 %v5154
        %5177 = vmatprep.subr.bf16.mxu0 0
        %5178 = vmatpush1.bf16.msra.mxu0 %v5153
        %5179 = vmatprep.subr.bf16.mxu0 0
        %5180 = vmatpush1.bf16.msra.mxu0 %v5152
        %5181 = vmatprep.subr.bf16.mxu0 0
        %5182 = vmatpush1.bf16.msra.mxu0 %v5151
        %5183 = vmatprep.subr.bf16.mxu0 0
        %5184 = vmatpush2.bf16.msra.mxu0 0
        %5185 = vmatprep.subr.bf16.mxu0 0
        %5186 = vmatpush2.bf16.msra.mxu0 0
        %5187 = vmatprep.subr.bf16.mxu0 0
        %5188 = vmatpush2.bf16.msra.mxu0 0
        %5189 = vmatprep.subr.bf16.mxu0 0
        %5190 = vmatpush2.bf16.msra.mxu0 0
        %5191 = vmatprep.subr.bf16.mxu0 0
        %5192 = vmatpush2.bf16.msra.mxu0 0
        %5193 = vmatprep.subr.bf16.mxu0 0
        %5194 = vmatpush2.bf16.msra.mxu0 0
        %5195 = vmatprep.subr.bf16.mxu0 0
        %5196 = vmatpush2.bf16.msra.mxu0 0
        %5197 = vmatprep.subr.bf16.mxu0 0
        %5198 = vmatpush2.bf16.msra.mxu0 0
        %5199 = vmatprep.mubr.bf16.mxu0 0
        %5200 = vmatmul.mubr.bf16.gmra.mxu0 %v5112
        %v5201 = vpop.f32.mrf.mxu0
        %v5202 = vadd.f32 %v5117, %v5201
        %v5203 = vpop.f32.mrf.mxu0
        %v5204 = vpop.f32.mrf.mxu0
        %v5205 = vpop.f32.mrf.mxu0
        %5206 = vdwg.mxu0
        %v5207 = vadd.f32 %v5202, %v5002
        %s5208 = scalar_lea.vmem %s16, 3
        %v5209 = vld [vmem:[%s5208] sm:$0x1]
        %s5210 = scalar_lea.vmem [#allocation5], 3
        %v5211 = vld [vmem:[%s5210] sm:$0x1]
        %v5212 = vsel %vm990, %v5207, 0.0
        %5213 = vadd.xlane.f32.xlu0 %v5212
        %v5214 = vpop.xlane.xlu0 %5213
        %v5215 = vmul.f32 %v5214, %v994
        %v5216 = vsub.f32 %v5207, %v5215
        %v5217 = vmul.f32 %v5216, %v5216
        %v5218 = vsel %vm990, %v5217, 0.0
        %5219 = vadd.xlane.f32.xlu0 %v5218
        %v5220 = vpop.xlane.xlu0 %5219
        %v5221 = vmul.f32 %v5220, %v994
        %v5222 = vadd.f32 %v5221, 1e-12
        %v5223 = vrsqrt.pop %v5222
        %v5224 = vmul.f32 %v5216, %v5223
        %v5226 = vlaneseq
        %v5227 = vshrl.u32 %v5226, 7
        %v5228 = vsub.s32 0, %v5227
        %v5229 = vrot.slane %v5209, %v5228
        %v5231 = vmul.f32 %v5224, %v5229
        %v5233 = vlaneseq
        %v5234 = vshrl.u32 %v5233, 7
        %v5235 = vsub.s32 0, %v5234
        %v5236 = vrot.slane %v5211, %v5235
        %v5238 = vadd.f32 %v5231, %v5236
        %s5239 = scalar_lea.vmem %s18, 3
        %v5240 = vld [vmem:[%s5239] sm:$0x1]
        %s5241 = scalar_lea.vmem [#allocation7], 3
        %v5242 = vld [vmem:[%s5241] sm:$0x1]
        %v5243 = vsel %vm990, %v5238, 0.0
        %5244 = vadd.xlane.f32.xlu0 %v5243
        %v5245 = vpop.xlane.xlu0 %5244
        %v5246 = vmul.f32 %v5245, %v994
        %v5247 = vsub.f32 %v5238, %v5246
        %v5248 = vmul.f32 %v5247, %v5247
        %v5249 = vsel %vm990, %v5248, 0.0
        %5250 = vadd.xlane.f32.xlu0 %v5249
        %v5251 = vpop.xlane.xlu0 %5250
        %v5252 = vmul.f32 %v5251, %v994
        %v5253 = vadd.f32 %v5252, 1e-05
        %v5254 = vrsqrt.pop %v5253
        %v5255 = vmul.f32 %v5247, %v5254
        %v5257 = vlaneseq
        %v5258 = vshrl.u32 %v5257, 7
        %v5259 = vsub.s32 0, %v5258
        %v5260 = vrot.slane %v5240, %v5259
        %v5262 = vmul.f32 %v5255, %v5260
        %v5264 = vlaneseq
        %v5265 = vshrl.u32 %v5264, 7
        %v5266 = vsub.s32 0, %v5265
        %v5267 = vrot.slane %v5242, %v5266
        %v5269 = vadd.f32 %v5262, %v5267
        %s5270 = scalar_lea.vmem %s20, 96
        %v5271 = vld [vmem:[%s5270] sm:$0xf]
        %v5272 = vld [vmem:[%s5270 + $0x4] sm:$0xf]
        %v5273 = vld [vmem:[%s5270 + $0x8] sm:$0xf]
        %v5274 = vld [vmem:[%s5270 + $0xc] sm:$0xf]
        %v5275 = vld [vmem:[%s5270 + $0x10] sm:$0xf]
        %v5276 = vld [vmem:[%s5270 + $0x14] sm:$0xf]
        %v5277 = vld [vmem:[%s5270 + $0x18] sm:$0xf]
        %v5278 = vld [vmem:[%s5270 + $0x1c] sm:$0xf]
        %s5279 = scalar_lea.vmem [#allocation8], 3
        %v5280 = vld [vmem:[%s5279] sm:$0x1]
        %v5281 = vpack.c.bf16 %v5269, %v5269
        %v5283 = vlaneseq
        %v5284 = vshrl.u32 %v5283, 7
        %v5285 = vsub.s32 0, %v5284
        %v5286 = vrot.slane %v5280, %v5285
        %v5296 = vunpack.c.l.b16 %v5271
        %v5297 = vunpack.c.l.b16 %v5272
        %v5298 = vunpack.c.l.b16 %v5273
        %v5299 = vunpack.c.l.b16 %v5274
        %v5300 = vunpack.c.l.b16 %v5275
        %v5301 = vunpack.c.l.b16 %v5276
        %v5302 = vunpack.c.l.b16 %v5277
        %v5303 = vunpack.c.l.b16 %v5278
        %v5304 = vpack.c.b16 %v5297, %v5296
        %v5305 = vpack.c.b16 %v5299, %v5298
        %v5306 = vpack.c.b16 %v5301, %v5300
        %v5307 = vpack.c.b16 %v5303, %v5302
        %v5313 = vsel %vm990, %v5281, 0
        %5315 = vmatprep.subr.bf16.mxu0 0
        %5316 = vmatpush1.bf16.msra.mxu0 0
        %5317 = vmatprep.subr.bf16.mxu0 0
        %5318 = vmatpush1.bf16.msra.mxu0 0
        %5319 = vmatprep.subr.bf16.mxu0 0
        %5320 = vmatpush1.bf16.msra.mxu0 0
        %5321 = vmatprep.subr.bf16.mxu0 0
        %5322 = vmatpush1.bf16.msra.mxu0 0
        %5323 = vmatprep.subr.bf16.mxu0 0
        %5324 = vmatpush1.bf16.msra.mxu0 %v5307
        %5325 = vmatprep.subr.bf16.mxu0 0
        %5326 = vmatpush1.bf16.msra.mxu0 %v5306
        %5327 = vmatprep.subr.bf16.mxu0 0
        %5328 = vmatpush1.bf16.msra.mxu0 %v5305
        %5329 = vmatprep.subr.bf16.mxu0 0
        %5330 = vmatpush1.bf16.msra.mxu0 %v5304
        %5331 = vmatprep.subr.bf16.mxu0 0
        %5332 = vmatpush2.bf16.msra.mxu0 0
        %5333 = vmatprep.subr.bf16.mxu0 0
        %5334 = vmatpush2.bf16.msra.mxu0 0
        %5335 = vmatprep.subr.bf16.mxu0 0
        %5336 = vmatpush2.bf16.msra.mxu0 0
        %5337 = vmatprep.subr.bf16.mxu0 0
        %5338 = vmatpush2.bf16.msra.mxu0 0
        %5339 = vmatprep.subr.bf16.mxu0 0
        %5340 = vmatpush2.bf16.msra.mxu0 0
        %5341 = vmatprep.subr.bf16.mxu0 0
        %5342 = vmatpush2.bf16.msra.mxu0 0
        %5343 = vmatprep.subr.bf16.mxu0 0
        %5344 = vmatpush2.bf16.msra.mxu0 0
        %5345 = vmatprep.subr.bf16.mxu0 0
        %5346 = vmatpush2.bf16.msra.mxu0 0
        %5347 = vmatprep.mubr.bf16.mxu0 0
        %5348 = vmatmul.mubr.bf16.gmra.mxu0 %v5313
        %v5349 = vpop.f32.mrf.mxu0
        %v5350 = vadd.f32 %v5286, %v5349
        %v5351 = vpop.f32.mrf.mxu0
        %v5352 = vpop.f32.mrf.mxu0
        %v5353 = vpop.f32.mrf.mxu0
        %5354 = vdwg.mxu0
        %v5355 = vmul.f32 %v5350, 0.5
        %v5356 = vmul.f32 %v5350, 0.70710677
        %v5357 = verf.f32.pop %v5356
        %v5358 = vadd.f32 %v5357, 1.0
        %v5359 = vmul.f32 %v5355, %v5358
        %s5360 = scalar_lea.vmem %s22, 24
        %v5361 = vld [vmem:[%s5360] sm:$0xf]
        %v5362 = vld [vmem:[%s5360 + $0x4] sm:$0xf]
        %s5363 = scalar_lea.vmem [#allocation10], 3
        %v5364 = vld [vmem:[%s5363] sm:$0x1]
        %v5365 = vpack.c.bf16 %v5359, %v5359
        %v5367 = vlaneseq
        %v5368 = vshrl.u32 %v5367, 7
        %v5369 = vsub.s32 0, %v5368
        %v5370 = vrot.slane %v5364, %v5369
        %v5374 = vunpack.c.l.b16 %v5361
        %v5375 = vunpack.c.l.b16 %v5362
        %v5376 = vpack.c.b16 %v5375, %v5374
        %v5379 = vsel %vm1131, %v5365, 0
        %5381 = vmatprep.subr.bf16.mxu0 0
        %5382 = vmatpush1.bf16.msra.mxu0 0
        %5383 = vmatprep.subr.bf16.mxu0 0
        %5384 = vmatpush1.bf16.msra.mxu0 0
        %5385 = vmatprep.subr.bf16.mxu0 0
        %5386 = vmatpush1.bf16.msra.mxu0 0
        %5387 = vmatprep.subr.bf16.mxu0 0
        %5388 = vmatpush1.bf16.msra.mxu0 0
        %5389 = vmatprep.subr.bf16.mxu0 0
        %5390 = vmatpush1.bf16.msra.mxu0 0
        %5391 = vmatprep.subr.bf16.mxu0 0
        %5392 = vmatpush1.bf16.msra.mxu0 0
        %5393 = vmatprep.subr.bf16.mxu0 0
        %5394 = vmatpush1.bf16.msra.mxu0 0
        %5395 = vmatprep.subr.bf16.mxu0 0
        %5396 = vmatpush1.bf16.msra.mxu0 %v5376
        %5397 = vmatprep.subr.bf16.mxu0 0
        %5398 = vmatpush2.bf16.msra.mxu0 0
        %5399 = vmatprep.subr.bf16.mxu0 0
        %5400 = vmatpush2.bf16.msra.mxu0 0
        %5401 = vmatprep.subr.bf16.mxu0 0
        %5402 = vmatpush2.bf16.msra.mxu0 0
        %5403 = vmatprep.subr.bf16.mxu0 0
        %5404 = vmatpush2.bf16.msra.mxu0 0
        %5405 = vmatprep.subr.bf16.mxu0 0
        %5406 = vmatpush2.bf16.msra.mxu0 0
        %5407 = vmatprep.subr.bf16.mxu0 0
        %5408 = vmatpush2.bf16.msra.mxu0 0
        %5409 = vmatprep.subr.bf16.mxu0 0
        %5410 = vmatpush2.bf16.msra.mxu0 0
        %5411 = vmatprep.subr.bf16.mxu0 0
        %5412 = vmatpush2.bf16.msra.mxu0 0
        %5413 = vmatprep.mubr.bf16.mxu0 0
        %5414 = vmatmul.mubr.bf16.gmra.mxu0 %v5379
        %v5415 = vpop.f32.mrf.mxu0
        %v5416 = vadd.f32 %v5370, %v5415
        %v5417 = vpop.f32.mrf.mxu0
        %v5418 = vpop.f32.mrf.mxu0
        %v5419 = vpop.f32.mrf.mxu0
        %5420 = vdwg.mxu0
        %v5421 = vadd.f32 %v5416, %v5238
        %v5422 = vpack.c.bf16 %v5421, %v5421
        %s5423 = scalar_lea.vmem %s6, 256
        %v5424 = vld [vmem:[%s5423] sm:$0xff]
        %v5425 = vld [vmem:[%s5423 + $0x8] sm:$0xff]
        %v5426 = vld [vmem:[%s5423 + $0x10] sm:$0xff]
        %v5427 = vld [vmem:[%s5423 + $0x18] sm:$0xff]
        %v5428 = vld [vmem:[%s5423 + $0x20] sm:$0xff]
        %v5429 = vld [vmem:[%s5423 + $0x28] sm:$0xff]
        %v5430 = vld [vmem:[%s5423 + $0x30] sm:$0xff]
        %v5431 = vld [vmem:[%s5423 + $0x38] sm:$0xff]
        %s5432 = scalar_lea.vmem %s7, 8
        %v5433 = vld [vmem:[%s5432] sm:$0x3]
        %v5435 = vlaneseq
        %v5436 = vshrl.u32 %v5435, 7
        %v5437 = vsub.s32 0, %v5436
        %v5438 = vrot.slane %v5433, %v5437
        %v5439 = vlaneseq
        %v5440 = vshrl.u32 %v5439, 7
        %v5441 = vsub.s32 1, %v5440
        %v5442 = vrot.slane %v5433, %v5441
        %v5453 = vunpack.c.l.b16 %v5424
        %v5454 = vunpack.c.h.b16 %v5424
        %v5455 = vunpack.c.l.b16 %v5425
        %v5456 = vunpack.c.h.b16 %v5425
        %v5457 = vunpack.c.l.b16 %v5426
        %v5458 = vunpack.c.h.b16 %v5426
        %v5459 = vunpack.c.l.b16 %v5427
        %v5460 = vunpack.c.h.b16 %v5427
        %v5461 = vunpack.c.l.b16 %v5428
        %v5462 = vunpack.c.h.b16 %v5428
        %v5463 = vunpack.c.l.b16 %v5429
        %v5464 = vunpack.c.h.b16 %v5429
        %v5465 = vunpack.c.l.b16 %v5430
        %v5466 = vunpack.c.h.b16 %v5430
        %v5467 = vunpack.c.l.b16 %v5431
        %v5468 = vunpack.c.h.b16 %v5431
        %v5469 = vpack.c.b16 %v5455, %v5453
        %v5470 = vpack.c.b16 %v5456, %v5454
        %v5471 = vpack.c.b16 %v5459, %v5457
        %v5472 = vpack.c.b16 %v5460, %v5458
        %v5473 = vpack.c.b16 %v5463, %v5461
        %v5474 = vpack.c.b16 %v5464, %v5462
        %v5475 = vpack.c.b16 %v5467, %v5465
        %v5476 = vpack.c.b16 %v5468, %v5466
        %v5486 = vsel %vm990, %v5422, 0
        %5488 = vmatprep.subr.bf16.mxu0 0
        %5489 = vmatpush1.bf16.msra.mxu0 0
        %5490 = vmatprep.subr.bf16.mxu0 0
        %5491 = vmatpush1.bf16.msra.mxu0 0
        %5492 = vmatprep.subr.bf16.mxu0 0
        %5493 = vmatpush1.bf16.msra.mxu0 0
        %5494 = vmatprep.subr.bf16.mxu0 0
        %5495 = vmatpush1.bf16.msra.mxu0 0
        %5496 = vmatprep.subr.bf16.mxu0 %v5476
        %5497 = vmatpush1.bf16.msra.mxu0 %v5475
        %5498 = vmatprep.subr.bf16.mxu0 %v5474
        %5499 = vmatpush1.bf16.msra.mxu0 %v5473
        %5500 = vmatprep.subr.bf16.mxu0 %v5472
        %5501 = vmatpush1.bf16.msra.mxu0 %v5471
        %5502 = vmatprep.subr.bf16.mxu0 %v5470
        %5503 = vmatpush1.bf16.msra.mxu0 %v5469
        %5504 = vmatprep.subr.bf16.mxu0 0
        %5505 = vmatpush2.bf16.msra.mxu0 0
        %5506 = vmatprep.subr.bf16.mxu0 0
        %5507 = vmatpush2.bf16.msra.mxu0 0
        %5508 = vmatprep.subr.bf16.mxu0 0
        %5509 = vmatpush2.bf16.msra.mxu0 0
        %5510 = vmatprep.subr.bf16.mxu0 0
        %5511 = vmatpush2.bf16.msra.mxu0 0
        %5512 = vmatprep.subr.bf16.mxu0 0
        %5513 = vmatpush2.bf16.msra.mxu0 0
        %5514 = vmatprep.subr.bf16.mxu0 0
        %5515 = vmatpush2.bf16.msra.mxu0 0
        %5516 = vmatprep.subr.bf16.mxu0 0
        %5517 = vmatpush2.bf16.msra.mxu0 0
        %5518 = vmatprep.subr.bf16.mxu0 0
        %5519 = vmatpush2.bf16.msra.mxu0 0
        %5520 = vmatprep.mubr.bf16.mxu0 0
        %5521 = vmatmul.mubr.bf16.gmra.mxu0 %v5486
        %v5522 = vpop.f32.mrf.mxu0
        %v5523 = vadd.f32 %v5438, %v5522
        %v5524 = vpop.f32.mrf.mxu0
        %v5525 = vadd.f32 %v5442, %v5524
        %v5526 = vpop.f32.mrf.mxu0
        %v5527 = vpop.f32.mrf.mxu0
        %5528 = vdwg.mxu0
        %v5529 = vpack.c.bf16 %v5523, %v5523
        %v5530 = vpack.c.bf16 %v5525, %v5525
        %5532 = vrot.lane.b32.xlu0 %v5529, 64
        %v5533 = vpop.permute.xlu0 %5532
        %v5535 = vsel %vm1131, %v5529, 0
        %v5538 = vsel %vm1131, %v5533, 0
        %5540 = vmatprep.subr.bf16.mxu0 0
        %5541 = vmatpush1.bf16.xpose.msra.mxu0 0
        %5542 = vmatprep.subr.bf16.mxu0 0
        %5543 = vmatpush1.bf16.xpose.msra.mxu0 0
        %5544 = vmatprep.subr.bf16.mxu0 0
        %5545 = vmatpush1.bf16.xpose.msra.mxu0 0
        %5546 = vmatprep.subr.bf16.mxu0 0
        %5547 = vmatpush1.bf16.xpose.msra.mxu0 0
        %5548 = vmatprep.subr.bf16.mxu0 0
        %5549 = vmatpush1.bf16.xpose.msra.mxu0 0
        %5550 = vmatprep.subr.bf16.mxu0 0
        %5551 = vmatpush1.bf16.xpose.msra.mxu0 0
        %5552 = vmatprep.subr.bf16.mxu0 0
        %5553 = vmatpush1.bf16.xpose.msra.mxu0 0
        %5554 = vmatprep.subr.bf16.mxu0 0
        %5555 = vmatpush1.bf16.xpose.msra.mxu0 %v5538
        %5556 = vmatprep.subr.bf16.mxu0 0
        %5557 = vmatpush2.bf16.xpose.msra.mxu0 0
        %5558 = vmatprep.subr.bf16.mxu0 0
        %5559 = vmatpush2.bf16.xpose.msra.mxu0 0
        %5560 = vmatprep.subr.bf16.mxu0 0
        %5561 = vmatpush2.bf16.xpose.msra.mxu0 0
        %5562 = vmatprep.subr.bf16.mxu0 0
        %5563 = vmatpush2.bf16.xpose.msra.mxu0 0
        %5564 = vmatprep.subr.bf16.mxu0 0
        %5565 = vmatpush2.bf16.xpose.msra.mxu0 0
        %5566 = vmatprep.subr.bf16.mxu0 0
        %5567 = vmatpush2.bf16.xpose.msra.mxu0 0
        %5568 = vmatprep.subr.bf16.mxu0 0
        %5569 = vmatpush2.bf16.xpose.msra.mxu0 0
        %5570 = vmatprep.subr.bf16.mxu0 0
        %5571 = vmatpush2.bf16.xpose.msra.mxu0 0
        %5572 = vmatprep.mubr.bf16.mxu0 0
        %5573 = vmatmul.mubr.bf16.gmra.mxu0 %v5535
        %v5574 = vpop.f32.mrf.mxu0
        %v5575 = vadd.f32 0.0, %v5574
        %v5576 = vpop.f32.mrf.mxu0
        %v5577 = vpop.f32.mrf.mxu0
        %v5578 = vpop.f32.mrf.mxu0
        %5579 = vdwg.mxu0
        %v5580 = vsel %vm1183, -3.4028235e+38, %v5575
        %v5581 = vsel %vm1185, %v5580, -inf
        %5582 = vmax.xlane.f32.xlu0 %v5581
        %v5583 = vpop.xlane.xlu0 %5582
        %v5584 = vsub.f32 %v5580, %v5583
        %v5585 = vmul.f32 %v5584, 1.442695
        %v5586 = vpow.pop %v5585
        %v5587 = vsel %vm1185, %v5586, 0.0
        %5588 = vadd.xlane.f32.xlu0 %v5587
        %v5589 = vpop.xlane.xlu0 %5588
        %v5590 = vrcp.pop %v5589
        %v5591 = vmul.f32 %v5586, %v5590
        %v5592 = vpack.c.bf16 %v5591, %v5591
        %v5594 = vsel %vm1185, %v5592, 0
        %v5597 = vsel %vm1201, %v5530, 0
        %5599 = vmatprep.subr.bf16.mxu0 0
        %5600 = vmatpush1.bf16.msra.mxu0 0
        %5601 = vmatprep.subr.bf16.mxu0 0
        %5602 = vmatpush1.bf16.msra.mxu0 0
        %5603 = vmatprep.subr.bf16.mxu0 0
        %5604 = vmatpush1.bf16.msra.mxu0 0
        %5605 = vmatprep.subr.bf16.mxu0 0
        %5606 = vmatpush1.bf16.msra.mxu0 0
        %5607 = vmatprep.subr.bf16.mxu0 0
        %5608 = vmatpush1.bf16.msra.mxu0 0
        %5609 = vmatprep.subr.bf16.mxu0 0
        %5610 = vmatpush1.bf16.msra.mxu0 0
        %5611 = vmatprep.subr.bf16.mxu0 0
        %5612 = vmatpush1.bf16.msra.mxu0 0
        %5613 = vmatprep.subr.bf16.mxu0 0
        %5614 = vmatpush1.bf16.msra.mxu0 %v5597
        %5615 = vmatprep.subr.bf16.mxu0 0
        %5616 = vmatpush2.bf16.msra.mxu0 0
        %5617 = vmatprep.subr.bf16.mxu0 0
        %5618 = vmatpush2.bf16.msra.mxu0 0
        %5619 = vmatprep.subr.bf16.mxu0 0
        %5620 = vmatpush2.bf16.msra.mxu0 0
        %5621 = vmatprep.subr.bf16.mxu0 0
        %5622 = vmatpush2.bf16.msra.mxu0 0
        %5623 = vmatprep.subr.bf16.mxu0 0
        %5624 = vmatpush2.bf16.msra.mxu0 0
        %5625 = vmatprep.subr.bf16.mxu0 0
        %5626 = vmatpush2.bf16.msra.mxu0 0
        %5627 = vmatprep.subr.bf16.mxu0 0
        %5628 = vmatpush2.bf16.msra.mxu0 0
        %5629 = vmatprep.subr.bf16.mxu0 0
        %5630 = vmatpush2.bf16.msra.mxu0 0
        %5631 = vmatprep.mubr.bf16.mxu0 0
        %5632 = vmatmul.mubr.bf16.gmra.mxu0 %v5594
        %v5633 = vpop.f32.mrf.mxu0
        %v5634 = vadd.f32 0.0, %v5633
        %v5635 = vpop.f32.mrf.mxu0
        %v5636 = vpop.f32.mrf.mxu0
        %v5637 = vpop.f32.mrf.mxu0
        %5638 = vdwg.mxu0
        %5639 = vrot.lane.b32.xlu0 %v5529, 112
        %v5640 = vpop.permute.xlu0 %5639
        %5641 = vrot.lane.b32.xlu0 %v5529, 48
        %v5642 = vpop.permute.xlu0 %5641
        %v5644 = vsel %vm1131, %v5640, 0
        %v5647 = vsel %vm1131, %v5642, 0
        %5649 = vmatprep.subr.bf16.mxu0 0
        %5650 = vmatpush1.bf16.xpose.msra.mxu0 0
        %5651 = vmatprep.subr.bf16.mxu0 0
        %5652 = vmatpush1.bf16.xpose.msra.mxu0 0
        %5653 = vmatprep.subr.bf16.mxu0 0
        %5654 = vmatpush1.bf16.xpose.msra.mxu0 0
        %5655 = vmatprep.subr.bf16.mxu0 0
        %5656 = vmatpush1.bf16.xpose.msra.mxu0 0
        %5657 = vmatprep.subr.bf16.mxu0 0
        %5658 = vmatpush1.bf16.xpose.msra.mxu0 0
        %5659 = vmatprep.subr.bf16.mxu0 0
        %5660 = vmatpush1.bf16.xpose.msra.mxu0 0
        %5661 = vmatprep.subr.bf16.mxu0 0
        %5662 = vmatpush1.bf16.xpose.msra.mxu0 0
        %5663 = vmatprep.subr.bf16.mxu0 0
        %5664 = vmatpush1.bf16.xpose.msra.mxu0 %v5647
        %5665 = vmatprep.subr.bf16.mxu0 0
        %5666 = vmatpush2.bf16.xpose.msra.mxu0 0
        %5667 = vmatprep.subr.bf16.mxu0 0
        %5668 = vmatpush2.bf16.xpose.msra.mxu0 0
        %5669 = vmatprep.subr.bf16.mxu0 0
        %5670 = vmatpush2.bf16.xpose.msra.mxu0 0
        %5671 = vmatprep.subr.bf16.mxu0 0
        %5672 = vmatpush2.bf16.xpose.msra.mxu0 0
        %5673 = vmatprep.subr.bf16.mxu0 0
        %5674 = vmatpush2.bf16.xpose.msra.mxu0 0
        %5675 = vmatprep.subr.bf16.mxu0 0
        %5676 = vmatpush2.bf16.xpose.msra.mxu0 0
        %5677 = vmatprep.subr.bf16.mxu0 0
        %5678 = vmatpush2.bf16.xpose.msra.mxu0 0
        %5679 = vmatprep.subr.bf16.mxu0 0
        %5680 = vmatpush2.bf16.xpose.msra.mxu0 0
        %5681 = vmatprep.mubr.bf16.mxu0 0
        %5682 = vmatmul.mubr.bf16.gmra.mxu0 %v5644
        %v5683 = vpop.f32.mrf.mxu0
        %v5684 = vadd.f32 0.0, %v5683
        %v5685 = vpop.f32.mrf.mxu0
        %v5686 = vpop.f32.mrf.mxu0
        %v5687 = vpop.f32.mrf.mxu0
        %5688 = vdwg.mxu0
        %v5689 = vsel %vm1183, -3.4028235e+38, %v5684
        %v5690 = vsel %vm1185, %v5689, -inf
        %5691 = vmax.xlane.f32.xlu0 %v5690
        %v5692 = vpop.xlane.xlu0 %5691
        %v5693 = vsub.f32 %v5689, %v5692
        %v5694 = vmul.f32 %v5693, 1.442695
        %v5695 = vpow.pop %v5694
        %v5696 = vsel %vm1185, %v5695, 0.0
        %5697 = vadd.xlane.f32.xlu0 %v5696
        %v5698 = vpop.xlane.xlu0 %5697
        %v5699 = vrcp.pop %v5698
        %v5700 = vmul.f32 %v5695, %v5699
        %v5701 = vpack.c.bf16 %v5700, %v5700
        %5703 = vrot.lane.b32.xlu0 %v5530, 112
        %v5704 = vpop.permute.xlu0 %5703
        %v5706 = vsel %vm1185, %v5701, 0
        %v5709 = vsel %vm1201, %v5704, 0
        %5711 = vmatprep.subr.bf16.mxu0 0
        %5712 = vmatpush1.bf16.msra.mxu0 0
        %5713 = vmatprep.subr.bf16.mxu0 0
        %5714 = vmatpush1.bf16.msra.mxu0 0
        %5715 = vmatprep.subr.bf16.mxu0 0
        %5716 = vmatpush1.bf16.msra.mxu0 0
        %5717 = vmatprep.subr.bf16.mxu0 0
        %5718 = vmatpush1.bf16.msra.mxu0 0
        %5719 = vmatprep.subr.bf16.mxu0 0
        %5720 = vmatpush1.bf16.msra.mxu0 0
        %5721 = vmatprep.subr.bf16.mxu0 0
        %5722 = vmatpush1.bf16.msra.mxu0 0
        %5723 = vmatprep.subr.bf16.mxu0 0
        %5724 = vmatpush1.bf16.msra.mxu0 0
        %5725 = vmatprep.subr.bf16.mxu0 0
        %5726 = vmatpush1.bf16.msra.mxu0 %v5709
        %5727 = vmatprep.subr.bf16.mxu0 0
        %5728 = vmatpush2.bf16.msra.mxu0 0
        %5729 = vmatprep.subr.bf16.mxu0 0
        %5730 = vmatpush2.bf16.msra.mxu0 0
        %5731 = vmatprep.subr.bf16.mxu0 0
        %5732 = vmatpush2.bf16.msra.mxu0 0
        %5733 = vmatprep.subr.bf16.mxu0 0
        %5734 = vmatpush2.bf16.msra.mxu0 0
        %5735 = vmatprep.subr.bf16.mxu0 0
        %5736 = vmatpush2.bf16.msra.mxu0 0
        %5737 = vmatprep.subr.bf16.mxu0 0
        %5738 = vmatpush2.bf16.msra.mxu0 0
        %5739 = vmatprep.subr.bf16.mxu0 0
        %5740 = vmatpush2.bf16.msra.mxu0 0
        %5741 = vmatprep.subr.bf16.mxu0 0
        %5742 = vmatpush2.bf16.msra.mxu0 0
        %5743 = vmatprep.mubr.bf16.mxu0 0
        %5744 = vmatmul.mubr.bf16.gmra.mxu0 %v5706
        %v5745 = vpop.f32.mrf.mxu0
        %v5746 = vadd.f32 0.0, %v5745
        %v5747 = vpop.f32.mrf.mxu0
        %v5748 = vpop.f32.mrf.mxu0
        %v5749 = vpop.f32.mrf.mxu0
        %5750 = vdwg.mxu0
        %5751 = vrot.lane.b32.xlu0 %v5529, 96
        %v5752 = vpop.permute.xlu0 %5751
        %5753 = vrot.lane.b32.xlu0 %v5529, 32
        %v5754 = vpop.permute.xlu0 %5753
        %v5756 = vsel %vm1131, %v5752, 0
        %v5759 = vsel %vm1131, %v5754, 0
        %5761 = vmatprep.subr.bf16.mxu0 0
        %5762 = vmatpush1.bf16.xpose.msra.mxu0 0
        %5763 = vmatprep.subr.bf16.mxu0 0
        %5764 = vmatpush1.bf16.xpose.msra.mxu0 0
        %5765 = vmatprep.subr.bf16.mxu0 0
        %5766 = vmatpush1.bf16.xpose.msra.mxu0 0
        %5767 = vmatprep.subr.bf16.mxu0 0
        %5768 = vmatpush1.bf16.xpose.msra.mxu0 0
        %5769 = vmatprep.subr.bf16.mxu0 0
        %5770 = vmatpush1.bf16.xpose.msra.mxu0 0
        %5771 = vmatprep.subr.bf16.mxu0 0
        %5772 = vmatpush1.bf16.xpose.msra.mxu0 0
        %5773 = vmatprep.subr.bf16.mxu0 0
        %5774 = vmatpush1.bf16.xpose.msra.mxu0 0
        %5775 = vmatprep.subr.bf16.mxu0 0
        %5776 = vmatpush1.bf16.xpose.msra.mxu0 %v5759
        %5777 = vmatprep.subr.bf16.mxu0 0
        %5778 = vmatpush2.bf16.xpose.msra.mxu0 0
        %5779 = vmatprep.subr.bf16.mxu0 0
        %5780 = vmatpush2.bf16.xpose.msra.mxu0 0
        %5781 = vmatprep.subr.bf16.mxu0 0
        %5782 = vmatpush2.bf16.xpose.msra.mxu0 0
        %5783 = vmatprep.subr.bf16.mxu0 0
        %5784 = vmatpush2.bf16.xpose.msra.mxu0 0
        %5785 = vmatprep.subr.bf16.mxu0 0
        %5786 = vmatpush2.bf16.xpose.msra.mxu0 0
        %5787 = vmatprep.subr.bf16.mxu0 0
        %5788 = vmatpush2.bf16.xpose.msra.mxu0 0
        %5789 = vmatprep.subr.bf16.mxu0 0
        %5790 = vmatpush2.bf16.xpose.msra.mxu0 0
        %5791 = vmatprep.subr.bf16.mxu0 0
        %5792 = vmatpush2.bf16.xpose.msra.mxu0 0
        %5793 = vmatprep.mubr.bf16.mxu0 0
        %5794 = vmatmul.mubr.bf16.gmra.mxu0 %v5756
        %v5795 = vpop.f32.mrf.mxu0
        %v5796 = vadd.f32 0.0, %v5795
        %v5797 = vpop.f32.mrf.mxu0
        %v5798 = vpop.f32.mrf.mxu0
        %v5799 = vpop.f32.mrf.mxu0
        %5800 = vdwg.mxu0
        %v5801 = vsel %vm1183, -3.4028235e+38, %v5796
        %v5802 = vsel %vm1185, %v5801, -inf
        %5803 = vmax.xlane.f32.xlu0 %v5802
        %v5804 = vpop.xlane.xlu0 %5803
        %v5805 = vsub.f32 %v5801, %v5804
        %v5806 = vmul.f32 %v5805, 1.442695
        %v5807 = vpow.pop %v5806
        %v5808 = vsel %vm1185, %v5807, 0.0
        %5809 = vadd.xlane.f32.xlu0 %v5808
        %v5810 = vpop.xlane.xlu0 %5809
        %v5811 = vrcp.pop %v5810
        %v5812 = vmul.f32 %v5807, %v5811
        %v5813 = vpack.c.bf16 %v5812, %v5812
        %5814 = vrot.lane.b32.xlu0 %v5530, 96
        %v5815 = vpop.permute.xlu0 %5814
        %v5817 = vsel %vm1185, %v5813, 0
        %v5820 = vsel %vm1201, %v5815, 0
        %5822 = vmatprep.subr.bf16.mxu0 0
        %5823 = vmatpush1.bf16.msra.mxu0 0
        %5824 = vmatprep.subr.bf16.mxu0 0
        %5825 = vmatpush1.bf16.msra.mxu0 0
        %5826 = vmatprep.subr.bf16.mxu0 0
        %5827 = vmatpush1.bf16.msra.mxu0 0
        %5828 = vmatprep.subr.bf16.mxu0 0
        %5829 = vmatpush1.bf16.msra.mxu0 0
        %5830 = vmatprep.subr.bf16.mxu0 0
        %5831 = vmatpush1.bf16.msra.mxu0 0
        %5832 = vmatprep.subr.bf16.mxu0 0
        %5833 = vmatpush1.bf16.msra.mxu0 0
        %5834 = vmatprep.subr.bf16.mxu0 0
        %5835 = vmatpush1.bf16.msra.mxu0 0
        %5836 = vmatprep.subr.bf16.mxu0 0
        %5837 = vmatpush1.bf16.msra.mxu0 %v5820
        %5838 = vmatprep.subr.bf16.mxu0 0
        %5839 = vmatpush2.bf16.msra.mxu0 0
        %5840 = vmatprep.subr.bf16.mxu0 0
        %5841 = vmatpush2.bf16.msra.mxu0 0
        %5842 = vmatprep.subr.bf16.mxu0 0
        %5843 = vmatpush2.bf16.msra.mxu0 0
        %5844 = vmatprep.subr.bf16.mxu0 0
        %5845 = vmatpush2.bf16.msra.mxu0 0
        %5846 = vmatprep.subr.bf16.mxu0 0
        %5847 = vmatpush2.bf16.msra.mxu0 0
        %5848 = vmatprep.subr.bf16.mxu0 0
        %5849 = vmatpush2.bf16.msra.mxu0 0
        %5850 = vmatprep.subr.bf16.mxu0 0
        %5851 = vmatpush2.bf16.msra.mxu0 0
        %5852 = vmatprep.subr.bf16.mxu0 0
        %5853 = vmatpush2.bf16.msra.mxu0 0
        %5854 = vmatprep.mubr.bf16.mxu0 0
        %5855 = vmatmul.mubr.bf16.gmra.mxu0 %v5817
        %v5856 = vpop.f32.mrf.mxu0
        %v5857 = vadd.f32 0.0, %v5856
        %v5858 = vpop.f32.mrf.mxu0
        %v5859 = vpop.f32.mrf.mxu0
        %v5860 = vpop.f32.mrf.mxu0
        %5861 = vdwg.mxu0
        %5862 = vrot.lane.b32.xlu0 %v5529, 80
        %v5863 = vpop.permute.xlu0 %5862
        %5864 = vrot.lane.b32.xlu0 %v5529, 16
        %v5865 = vpop.permute.xlu0 %5864
        %v5867 = vsel %vm1131, %v5863, 0
        %v5870 = vsel %vm1131, %v5865, 0
        %5872 = vmatprep.subr.bf16.mxu0 0
        %5873 = vmatpush1.bf16.xpose.msra.mxu0 0
        %5874 = vmatprep.subr.bf16.mxu0 0
        %5875 = vmatpush1.bf16.xpose.msra.mxu0 0
        %5876 = vmatprep.subr.bf16.mxu0 0
        %5877 = vmatpush1.bf16.xpose.msra.mxu0 0
        %5878 = vmatprep.subr.bf16.mxu0 0
        %5879 = vmatpush1.bf16.xpose.msra.mxu0 0
        %5880 = vmatprep.subr.bf16.mxu0 0
        %5881 = vmatpush1.bf16.xpose.msra.mxu0 0
        %5882 = vmatprep.subr.bf16.mxu0 0
        %5883 = vmatpush1.bf16.xpose.msra.mxu0 0
        %5884 = vmatprep.subr.bf16.mxu0 0
        %5885 = vmatpush1.bf16.xpose.msra.mxu0 0
        %5886 = vmatprep.subr.bf16.mxu0 0
        %5887 = vmatpush1.bf16.xpose.msra.mxu0 %v5870
        %5888 = vmatprep.subr.bf16.mxu0 0
        %5889 = vmatpush2.bf16.xpose.msra.mxu0 0
        %5890 = vmatprep.subr.bf16.mxu0 0
        %5891 = vmatpush2.bf16.xpose.msra.mxu0 0
        %5892 = vmatprep.subr.bf16.mxu0 0
        %5893 = vmatpush2.bf16.xpose.msra.mxu0 0
        %5894 = vmatprep.subr.bf16.mxu0 0
        %5895 = vmatpush2.bf16.xpose.msra.mxu0 0
        %5896 = vmatprep.subr.bf16.mxu0 0
        %5897 = vmatpush2.bf16.xpose.msra.mxu0 0
        %5898 = vmatprep.subr.bf16.mxu0 0
        %5899 = vmatpush2.bf16.xpose.msra.mxu0 0
        %5900 = vmatprep.subr.bf16.mxu0 0
        %5901 = vmatpush2.bf16.xpose.msra.mxu0 0
        %5902 = vmatprep.subr.bf16.mxu0 0
        %5903 = vmatpush2.bf16.xpose.msra.mxu0 0
        %5904 = vmatprep.mubr.bf16.mxu0 0
        %5905 = vmatmul.mubr.bf16.gmra.mxu0 %v5867
        %v5906 = vpop.f32.mrf.mxu0
        %v5907 = vadd.f32 0.0, %v5906
        %v5908 = vpop.f32.mrf.mxu0
        %v5909 = vpop.f32.mrf.mxu0
        %v5910 = vpop.f32.mrf.mxu0
        %5911 = vdwg.mxu0
        %v5912 = vsel %vm1183, -3.4028235e+38, %v5907
        %v5913 = vsel %vm1185, %v5912, -inf
        %5914 = vmax.xlane.f32.xlu0 %v5913
        %v5915 = vpop.xlane.xlu0 %5914
        %v5916 = vsub.f32 %v5912, %v5915
        %v5917 = vmul.f32 %v5916, 1.442695
        %v5918 = vpow.pop %v5917
        %v5919 = vsel %vm1185, %v5918, 0.0
        %5920 = vadd.xlane.f32.xlu0 %v5919
        %v5921 = vpop.xlane.xlu0 %5920
        %v5922 = vrcp.pop %v5921
        %v5923 = vmul.f32 %v5918, %v5922
        %v5924 = vpack.c.bf16 %v5923, %v5923
        %5925 = vrot.lane.b32.xlu0 %v5530, 80
        %v5926 = vpop.permute.xlu0 %5925
        %v5928 = vsel %vm1185, %v5924, 0
        %v5931 = vsel %vm1201, %v5926, 0
        %5933 = vmatprep.subr.bf16.mxu0 0
        %5934 = vmatpush1.bf16.msra.mxu0 0
        %5935 = vmatprep.subr.bf16.mxu0 0
        %5936 = vmatpush1.bf16.msra.mxu0 0
        %5937 = vmatprep.subr.bf16.mxu0 0
        %5938 = vmatpush1.bf16.msra.mxu0 0
        %5939 = vmatprep.subr.bf16.mxu0 0
        %5940 = vmatpush1.bf16.msra.mxu0 0
        %5941 = vmatprep.subr.bf16.mxu0 0
        %5942 = vmatpush1.bf16.msra.mxu0 0
        %5943 = vmatprep.subr.bf16.mxu0 0
        %5944 = vmatpush1.bf16.msra.mxu0 0
        %5945 = vmatprep.subr.bf16.mxu0 0
        %5946 = vmatpush1.bf16.msra.mxu0 0
        %5947 = vmatprep.subr.bf16.mxu0 0
        %5948 = vmatpush1.bf16.msra.mxu0 %v5931
        %5949 = vmatprep.subr.bf16.mxu0 0
        %5950 = vmatpush2.bf16.msra.mxu0 0
        %5951 = vmatprep.subr.bf16.mxu0 0
        %5952 = vmatpush2.bf16.msra.mxu0 0
        %5953 = vmatprep.subr.bf16.mxu0 0
        %5954 = vmatpush2.bf16.msra.mxu0 0
        %5955 = vmatprep.subr.bf16.mxu0 0
        %5956 = vmatpush2.bf16.msra.mxu0 0
        %5957 = vmatprep.subr.bf16.mxu0 0
        %5958 = vmatpush2.bf16.msra.mxu0 0
        %5959 = vmatprep.subr.bf16.mxu0 0
        %5960 = vmatpush2.bf16.msra.mxu0 0
        %5961 = vmatprep.subr.bf16.mxu0 0
        %5962 = vmatpush2.bf16.msra.mxu0 0
        %5963 = vmatprep.subr.bf16.mxu0 0
        %5964 = vmatpush2.bf16.msra.mxu0 0
        %5965 = vmatprep.mubr.bf16.mxu0 0
        %5966 = vmatmul.mubr.bf16.gmra.mxu0 %v5928
        %v5967 = vpop.f32.mrf.mxu0
        %v5968 = vadd.f32 0.0, %v5967
        %v5969 = vpop.f32.mrf.mxu0
        %v5970 = vpop.f32.mrf.mxu0
        %v5971 = vpop.f32.mrf.mxu0
        %5972 = vdwg.mxu0
        %5974 = vrot.lane.b32.xlu0 %v5746, 16
        %v5975 = vpop.permute.xlu0 %5974
        %5978 = vrot.lane.b32.xlu0 %v5857, 32
        %v5979 = vpop.permute.xlu0 %5978
        %5982 = vrot.lane.b32.xlu0 %v5968, 48
        %v5983 = vpop.permute.xlu0 %5982
        %v5985 = vsel %vm1131, %v5634, %v5975
        %v5986 = vsel %vm1592, %v5985, %v5979
        %v5987 = vsel %vm1594, %v5986, %v5983
        %s5988 = scalar_lea.vmem %s8, 128
        %v5989 = vld [vmem:[%s5988] sm:$0xf]
        %v5990 = vld [vmem:[%s5988 + $0x4] sm:$0xf]
        %v5991 = vld [vmem:[%s5988 + $0x8] sm:$0xf]
        %v5992 = vld [vmem:[%s5988 + $0xc] sm:$0xf]
        %v5993 = vld [vmem:[%s5988 + $0x10] sm:$0xf]
        %v5994 = vld [vmem:[%s5988 + $0x14] sm:$0xf]
        %v5995 = vld [vmem:[%s5988 + $0x18] sm:$0xf]
        %v5996 = vld [vmem:[%s5988 + $0x1c] sm:$0xf]
        %s5997 = scalar_lea.vmem %s9, 4
        %v5998 = vld [vmem:[%s5997] sm:$0x1]
        %v5999 = vpack.c.bf16 %v5987, %v5987
        %v6001 = vlaneseq
        %v6002 = vshrl.u32 %v6001, 7
        %v6003 = vsub.s32 0, %v6002
        %v6004 = vrot.slane %v5998, %v6003
        %v6014 = vunpack.c.l.b16 %v5989
        %v6015 = vunpack.c.l.b16 %v5990
        %v6016 = vunpack.c.l.b16 %v5991
        %v6017 = vunpack.c.l.b16 %v5992
        %v6018 = vunpack.c.l.b16 %v5993
        %v6019 = vunpack.c.l.b16 %v5994
        %v6020 = vunpack.c.l.b16 %v5995
        %v6021 = vunpack.c.l.b16 %v5996
        %v6022 = vpack.c.b16 %v6015, %v6014
        %v6023 = vpack.c.b16 %v6017, %v6016
        %v6024 = vpack.c.b16 %v6019, %v6018
        %v6025 = vpack.c.b16 %v6021, %v6020
        %v6031 = vsel %vm990, %v5999, 0
        %6033 = vmatprep.subr.bf16.mxu0 0
        %6034 = vmatpush1.bf16.msra.mxu0 0
        %6035 = vmatprep.subr.bf16.mxu0 0
        %6036 = vmatpush1.bf16.msra.mxu0 0
        %6037 = vmatprep.subr.bf16.mxu0 0
        %6038 = vmatpush1.bf16.msra.mxu0 0
        %6039 = vmatprep.subr.bf16.mxu0 0
        %6040 = vmatpush1.bf16.msra.mxu0 0
        %6041 = vmatprep.subr.bf16.mxu0 0
        %6042 = vmatpush1.bf16.msra.mxu0 %v6025
        %6043 = vmatprep.subr.bf16.mxu0 0
        %6044 = vmatpush1.bf16.msra.mxu0 %v6024
        %6045 = vmatprep.subr.bf16.mxu0 0
        %6046 = vmatpush1.bf16.msra.mxu0 %v6023
        %6047 = vmatprep.subr.bf16.mxu0 0
        %6048 = vmatpush1.bf16.msra.mxu0 %v6022
        %6049 = vmatprep.subr.bf16.mxu0 0
        %6050 = vmatpush2.bf16.msra.mxu0 0
        %6051 = vmatprep.subr.bf16.mxu0 0
        %6052 = vmatpush2.bf16.msra.mxu0 0
        %6053 = vmatprep.subr.bf16.mxu0 0
        %6054 = vmatpush2.bf16.msra.mxu0 0
        %6055 = vmatprep.subr.bf16.mxu0 0
        %6056 = vmatpush2.bf16.msra.mxu0 0
        %6057 = vmatprep.subr.bf16.mxu0 0
        %6058 = vmatpush2.bf16.msra.mxu0 0
        %6059 = vmatprep.subr.bf16.mxu0 0
        %6060 = vmatpush2.bf16.msra.mxu0 0
        %6061 = vmatprep.subr.bf16.mxu0 0
        %6062 = vmatpush2.bf16.msra.mxu0 0
        %6063 = vmatprep.subr.bf16.mxu0 0
        %6064 = vmatpush2.bf16.msra.mxu0 0
        %6065 = vmatprep.mubr.bf16.mxu0 0
        %6066 = vmatmul.mubr.bf16.gmra.mxu0 %v6031
        %v6067 = vpop.f32.mrf.mxu0
        %v6068 = vadd.f32 %v6004, %v6067
        %v6069 = vpop.f32.mrf.mxu0
        %v6070 = vpop.f32.mrf.mxu0
        %v6071 = vpop.f32.mrf.mxu0
        %6072 = vdwg.mxu0
        %v6073 = vadd.f32 %v6068, %v5421
        %s6074 = scalar_lea.vmem %s10, 4
        %v6075 = vld [vmem:[%s6074] sm:$0x1]
        %s6076 = scalar_lea.vmem %s11, 4
        %v6077 = vld [vmem:[%s6076] sm:$0x1]
        %v6078 = vsel %vm990, %v6073, 0.0
        %6079 = vadd.xlane.f32.xlu0 %v6078
        %v6080 = vpop.xlane.xlu0 %6079
        %v6081 = vmul.f32 %v6080, %v994
        %v6082 = vsub.f32 %v6073, %v6081
        %v6083 = vmul.f32 %v6082, %v6082
        %v6084 = vsel %vm990, %v6083, 0.0
        %6085 = vadd.xlane.f32.xlu0 %v6084
        %v6086 = vpop.xlane.xlu0 %6085
        %v6087 = vmul.f32 %v6086, %v994
        %v6088 = vadd.f32 %v6087, 1e-12
        %v6089 = vrsqrt.pop %v6088
        %v6090 = vmul.f32 %v6082, %v6089
        %v6092 = vlaneseq
        %v6093 = vshrl.u32 %v6092, 7
        %v6094 = vsub.s32 0, %v6093
        %v6095 = vrot.slane %v6075, %v6094
        %v6097 = vmul.f32 %v6090, %v6095
        %v6099 = vlaneseq
        %v6100 = vshrl.u32 %v6099, 7
        %v6101 = vsub.s32 0, %v6100
        %v6102 = vrot.slane %v6077, %v6101
        %v6104 = vadd.f32 %v6097, %v6102
        %s6105 = scalar_lea.vmem [#allocation2], 128
        %v6106 = vld [vmem:[%s6105] sm:$0xf]
        %v6107 = vld [vmem:[%s6105 + $0x4] sm:$0xf]
        %v6108 = vld [vmem:[%s6105 + $0x8] sm:$0xf]
        %v6109 = vld [vmem:[%s6105 + $0xc] sm:$0xf]
        %v6110 = vld [vmem:[%s6105 + $0x10] sm:$0xf]
        %v6111 = vld [vmem:[%s6105 + $0x14] sm:$0xf]
        %v6112 = vld [vmem:[%s6105 + $0x18] sm:$0xf]
        %v6113 = vld [vmem:[%s6105 + $0x1c] sm:$0xf]
        %s6114 = scalar_lea.vmem %s13, 4
        %v6115 = vld [vmem:[%s6114] sm:$0x1]
        %v6116 = vpack.c.bf16 %v6104, %v6104
        %v6118 = vlaneseq
        %v6119 = vshrl.u32 %v6118, 7
        %v6120 = vsub.s32 0, %v6119
        %v6121 = vrot.slane %v6115, %v6120
        %v6131 = vunpack.c.l.b16 %v6106
        %v6132 = vunpack.c.l.b16 %v6107
        %v6133 = vunpack.c.l.b16 %v6108
        %v6134 = vunpack.c.l.b16 %v6109
        %v6135 = vunpack.c.l.b16 %v6110
        %v6136 = vunpack.c.l.b16 %v6111
        %v6137 = vunpack.c.l.b16 %v6112
        %v6138 = vunpack.c.l.b16 %v6113
        %v6139 = vpack.c.b16 %v6132, %v6131
        %v6140 = vpack.c.b16 %v6134, %v6133
        %v6141 = vpack.c.b16 %v6136, %v6135
        %v6142 = vpack.c.b16 %v6138, %v6137
        %v6148 = vsel %vm990, %v6116, 0
        %6150 = vmatprep.subr.bf16.mxu0 0
        %6151 = vmatpush1.bf16.msra.mxu0 0
        %6152 = vmatprep.subr.bf16.mxu0 0
        %6153 = vmatpush1.bf16.msra.mxu0 0
        %6154 = vmatprep.subr.bf16.mxu0 0
        %6155 = vmatpush1.bf16.msra.mxu0 0
        %6156 = vmatprep.subr.bf16.mxu0 0
        %6157 = vmatpush1.bf16.msra.mxu0 0
        %6158 = vmatprep.subr.bf16.mxu0 0
        %6159 = vmatpush1.bf16.msra.mxu0 %v6142
        %6160 = vmatprep.subr.bf16.mxu0 0
        %6161 = vmatpush1.bf16.msra.mxu0 %v6141
        %6162 = vmatprep.subr.bf16.mxu0 0
        %6163 = vmatpush1.bf16.msra.mxu0 %v6140
        %6164 = vmatprep.subr.bf16.mxu0 0
        %6165 = vmatpush1.bf16.msra.mxu0 %v6139
        %6166 = vmatprep.subr.bf16.mxu0 0
        %6167 = vmatpush2.bf16.msra.mxu0 0
        %6168 = vmatprep.subr.bf16.mxu0 0
        %6169 = vmatpush2.bf16.msra.mxu0 0
        %6170 = vmatprep.subr.bf16.mxu0 0
        %6171 = vmatpush2.bf16.msra.mxu0 0
        %6172 = vmatprep.subr.bf16.mxu0 0
        %6173 = vmatpush2.bf16.msra.mxu0 0
        %6174 = vmatprep.subr.bf16.mxu0 0
        %6175 = vmatpush2.bf16.msra.mxu0 0
        %6176 = vmatprep.subr.bf16.mxu0 0
        %6177 = vmatpush2.bf16.msra.mxu0 0
        %6178 = vmatprep.subr.bf16.mxu0 0
        %6179 = vmatpush2.bf16.msra.mxu0 0
        %6180 = vmatprep.subr.bf16.mxu0 0
        %6181 = vmatpush2.bf16.msra.mxu0 0
        %6182 = vmatprep.mubr.bf16.mxu0 0
        %6183 = vmatmul.mubr.bf16.gmra.mxu0 %v6148
        %v6184 = vpop.f32.mrf.mxu0
        %v6185 = vadd.f32 %v6121, %v6184
        %v6186 = vpop.f32.mrf.mxu0
        %v6187 = vpop.f32.mrf.mxu0
        %v6188 = vpop.f32.mrf.mxu0
        %6189 = vdwg.mxu0
        %v6190 = vmul.f32 %v6185, 0.5
        %v6191 = vmul.f32 %v6185, 0.70710677
        %v6192 = verf.f32.pop %v6191
        %v6193 = vadd.f32 %v6192, 1.0
        %v6194 = vmul.f32 %v6190, %v6193
        %s6195 = scalar_lea.vmem %s14, 256
        %v6196 = vld [vmem:[%s6195] sm:$0xf]
        %v6197 = vld [vmem:[%s6195 + $0x4] sm:$0xf]
        %v6198 = vld [vmem:[%s6195 + $0x8] sm:$0xf]
        %v6199 = vld [vmem:[%s6195 + $0xc] sm:$0xf]
        %v6200 = vld [vmem:[%s6195 + $0x10] sm:$0xf]
        %v6201 = vld [vmem:[%s6195 + $0x14] sm:$0xf]
        %v6202 = vld [vmem:[%s6195 + $0x18] sm:$0xf]
        %v6203 = vld [vmem:[%s6195 + $0x1c] sm:$0xf]
        %v6204 = vld [vmem:[%s6195 + $0x20] sm:$0xf]
        %v6205 = vld [vmem:[%s6195 + $0x24] sm:$0xf]
        %v6206 = vld [vmem:[%s6195 + $0x28] sm:$0xf]
        %v6207 = vld [vmem:[%s6195 + $0x2c] sm:$0xf]
        %v6208 = vld [vmem:[%s6195 + $0x30] sm:$0xf]
        %v6209 = vld [vmem:[%s6195 + $0x34] sm:$0xf]
        %v6210 = vld [vmem:[%s6195 + $0x38] sm:$0xf]
        %v6211 = vld [vmem:[%s6195 + $0x3c] sm:$0xf]
        %s6212 = scalar_lea.vmem %s15, 4
        %v6213 = vld [vmem:[%s6212] sm:$0x1]
        %v6214 = vpack.c.bf16 %v6194, %v6194
        %v6216 = vlaneseq
        %v6217 = vshrl.u32 %v6216, 7
        %v6218 = vsub.s32 0, %v6217
        %v6219 = vrot.slane %v6213, %v6218
        %v6237 = vunpack.c.l.b16 %v6196
        %v6238 = vunpack.c.l.b16 %v6197
        %v6239 = vunpack.c.l.b16 %v6198
        %v6240 = vunpack.c.l.b16 %v6199
        %v6241 = vunpack.c.l.b16 %v6200
        %v6242 = vunpack.c.l.b16 %v6201
        %v6243 = vunpack.c.l.b16 %v6202
        %v6244 = vunpack.c.l.b16 %v6203
        %v6245 = vunpack.c.l.b16 %v6204
        %v6246 = vunpack.c.l.b16 %v6205
        %v6247 = vunpack.c.l.b16 %v6206
        %v6248 = vunpack.c.l.b16 %v6207
        %v6249 = vunpack.c.l.b16 %v6208
        %v6250 = vunpack.c.l.b16 %v6209
        %v6251 = vunpack.c.l.b16 %v6210
        %v6252 = vunpack.c.l.b16 %v6211
        %v6253 = vpack.c.b16 %v6238, %v6237
        %v6254 = vpack.c.b16 %v6240, %v6239
        %v6255 = vpack.c.b16 %v6242, %v6241
        %v6256 = vpack.c.b16 %v6244, %v6243
        %v6257 = vpack.c.b16 %v6246, %v6245
        %v6258 = vpack.c.b16 %v6248, %v6247
        %v6259 = vpack.c.b16 %v6250, %v6249
        %v6260 = vpack.c.b16 %v6252, %v6251
        %6269 = vmatprep.subr.bf16.mxu0 0
        %6270 = vmatpush1.bf16.msra.mxu0 %v6260
        %6271 = vmatprep.subr.bf16.mxu0 0
        %6272 = vmatpush1.bf16.msra.mxu0 %v6259
        %6273 = vmatprep.subr.bf16.mxu0 0
        %6274 = vmatpush1.bf16.msra.mxu0 %v6258
        %6275 = vmatprep.subr.bf16.mxu0 0
        %6276 = vmatpush1.bf16.msra.mxu0 %v6257
        %6277 = vmatprep.subr.bf16.mxu0 0
        %6278 = vmatpush1.bf16.msra.mxu0 %v6256
        %6279 = vmatprep.subr.bf16.mxu0 0
        %6280 = vmatpush1.bf16.msra.mxu0 %v6255
        %6281 = vmatprep.subr.bf16.mxu0 0
        %6282 = vmatpush1.bf16.msra.mxu0 %v6254
        %6283 = vmatprep.subr.bf16.mxu0 0
        %6284 = vmatpush1.bf16.msra.mxu0 %v6253
        %6285 = vmatprep.subr.bf16.mxu0 0
        %6286 = vmatpush2.bf16.msra.mxu0 0
        %6287 = vmatprep.subr.bf16.mxu0 0
        %6288 = vmatpush2.bf16.msra.mxu0 0
        %6289 = vmatprep.subr.bf16.mxu0 0
        %6290 = vmatpush2.bf16.msra.mxu0 0
        %6291 = vmatprep.subr.bf16.mxu0 0
        %6292 = vmatpush2.bf16.msra.mxu0 0
        %6293 = vmatprep.subr.bf16.mxu0 0
        %6294 = vmatpush2.bf16.msra.mxu0 0
        %6295 = vmatprep.subr.bf16.mxu0 0
        %6296 = vmatpush2.bf16.msra.mxu0 0
        %6297 = vmatprep.subr.bf16.mxu0 0
        %6298 = vmatpush2.bf16.msra.mxu0 0
        %6299 = vmatprep.subr.bf16.mxu0 0
        %6300 = vmatpush2.bf16.msra.mxu0 0
        %6301 = vmatprep.mubr.bf16.mxu0 0
        %6302 = vmatmul.mubr.bf16.gmra.mxu0 %v6214
        %v6303 = vpop.f32.mrf.mxu0
        %v6304 = vadd.f32 %v6219, %v6303
        %v6305 = vpop.f32.mrf.mxu0
        %v6306 = vpop.f32.mrf.mxu0
        %v6307 = vpop.f32.mrf.mxu0
        %6308 = vdwg.mxu0
        %v6309 = vadd.f32 %v6304, %v6104
        %s6310 = scalar_lea.vmem %s16, 4
        %v6311 = vld [vmem:[%s6310] sm:$0x1]
        %s6312 = scalar_lea.vmem [#allocation5], 4
        %v6313 = vld [vmem:[%s6312] sm:$0x1]
        %v6314 = vsel %vm990, %v6309, 0.0
        %6315 = vadd.xlane.f32.xlu0 %v6314
        %v6316 = vpop.xlane.xlu0 %6315
        %v6317 = vmul.f32 %v6316, %v994
        %v6318 = vsub.f32 %v6309, %v6317
        %v6319 = vmul.f32 %v6318, %v6318
        %v6320 = vsel %vm990, %v6319, 0.0
        %6321 = vadd.xlane.f32.xlu0 %v6320
        %v6322 = vpop.xlane.xlu0 %6321
        %v6323 = vmul.f32 %v6322, %v994
        %v6324 = vadd.f32 %v6323, 1e-12
        %v6325 = vrsqrt.pop %v6324
        %v6326 = vmul.f32 %v6318, %v6325
        %v6328 = vlaneseq
        %v6329 = vshrl.u32 %v6328, 7
        %v6330 = vsub.s32 0, %v6329
        %v6331 = vrot.slane %v6311, %v6330
        %v6333 = vmul.f32 %v6326, %v6331
        %v6335 = vlaneseq
        %v6336 = vshrl.u32 %v6335, 7
        %v6337 = vsub.s32 0, %v6336
        %v6338 = vrot.slane %v6313, %v6337
        %v6340 = vadd.f32 %v6333, %v6338
        %s6341 = scalar_lea.vmem %s18, 4
        %v6342 = vld [vmem:[%s6341] sm:$0x1]
        %s6343 = scalar_lea.vmem [#allocation7], 4
        %v6344 = vld [vmem:[%s6343] sm:$0x1]
        %v6345 = vsel %vm990, %v6340, 0.0
        %6346 = vadd.xlane.f32.xlu0 %v6345
        %v6347 = vpop.xlane.xlu0 %6346
        %v6348 = vmul.f32 %v6347, %v994
        %v6349 = vsub.f32 %v6340, %v6348
        %v6350 = vmul.f32 %v6349, %v6349
        %v6351 = vsel %vm990, %v6350, 0.0
        %6352 = vadd.xlane.f32.xlu0 %v6351
        %v6353 = vpop.xlane.xlu0 %6352
        %v6354 = vmul.f32 %v6353, %v994
        %v6355 = vadd.f32 %v6354, 1e-05
        %v6356 = vrsqrt.pop %v6355
        %v6357 = vmul.f32 %v6349, %v6356
        %v6359 = vlaneseq
        %v6360 = vshrl.u32 %v6359, 7
        %v6361 = vsub.s32 0, %v6360
        %v6362 = vrot.slane %v6342, %v6361
        %v6364 = vmul.f32 %v6357, %v6362
        %v6366 = vlaneseq
        %v6367 = vshrl.u32 %v6366, 7
        %v6368 = vsub.s32 0, %v6367
        %v6369 = vrot.slane %v6344, %v6368
        %v6371 = vadd.f32 %v6364, %v6369
        %s6372 = scalar_lea.vmem %s20, 128
        %v6373 = vld [vmem:[%s6372] sm:$0xf]
        %v6374 = vld [vmem:[%s6372 + $0x4] sm:$0xf]
        %v6375 = vld [vmem:[%s6372 + $0x8] sm:$0xf]
        %v6376 = vld [vmem:[%s6372 + $0xc] sm:$0xf]
        %v6377 = vld [vmem:[%s6372 + $0x10] sm:$0xf]
        %v6378 = vld [vmem:[%s6372 + $0x14] sm:$0xf]
        %v6379 = vld [vmem:[%s6372 + $0x18] sm:$0xf]
        %v6380 = vld [vmem:[%s6372 + $0x1c] sm:$0xf]
        %s6381 = scalar_lea.vmem [#allocation8], 4
        %v6382 = vld [vmem:[%s6381] sm:$0x1]
        %v6383 = vpack.c.bf16 %v6371, %v6371
        %v6385 = vlaneseq
        %v6386 = vshrl.u32 %v6385, 7
        %v6387 = vsub.s32 0, %v6386
        %v6388 = vrot.slane %v6382, %v6387
        %v6398 = vunpack.c.l.b16 %v6373
        %v6399 = vunpack.c.l.b16 %v6374
        %v6400 = vunpack.c.l.b16 %v6375
        %v6401 = vunpack.c.l.b16 %v6376
        %v6402 = vunpack.c.l.b16 %v6377
        %v6403 = vunpack.c.l.b16 %v6378
        %v6404 = vunpack.c.l.b16 %v6379
        %v6405 = vunpack.c.l.b16 %v6380
        %v6406 = vpack.c.b16 %v6399, %v6398
        %v6407 = vpack.c.b16 %v6401, %v6400
        %v6408 = vpack.c.b16 %v6403, %v6402
        %v6409 = vpack.c.b16 %v6405, %v6404
        %v6415 = vsel %vm990, %v6383, 0
        %6417 = vmatprep.subr.bf16.mxu0 0
        %6418 = vmatpush1.bf16.msra.mxu0 0
        %6419 = vmatprep.subr.bf16.mxu0 0
        %6420 = vmatpush1.bf16.msra.mxu0 0
        %6421 = vmatprep.subr.bf16.mxu0 0
        %6422 = vmatpush1.bf16.msra.mxu0 0
        %6423 = vmatprep.subr.bf16.mxu0 0
        %6424 = vmatpush1.bf16.msra.mxu0 0
        %6425 = vmatprep.subr.bf16.mxu0 0
        %6426 = vmatpush1.bf16.msra.mxu0 %v6409
        %6427 = vmatprep.subr.bf16.mxu0 0
        %6428 = vmatpush1.bf16.msra.mxu0 %v6408
        %6429 = vmatprep.subr.bf16.mxu0 0
        %6430 = vmatpush1.bf16.msra.mxu0 %v6407
        %6431 = vmatprep.subr.bf16.mxu0 0
        %6432 = vmatpush1.bf16.msra.mxu0 %v6406
        %6433 = vmatprep.subr.bf16.mxu0 0
        %6434 = vmatpush2.bf16.msra.mxu0 0
        %6435 = vmatprep.subr.bf16.mxu0 0
        %6436 = vmatpush2.bf16.msra.mxu0 0
        %6437 = vmatprep.subr.bf16.mxu0 0
        %6438 = vmatpush2.bf16.msra.mxu0 0
        %6439 = vmatprep.subr.bf16.mxu0 0
        %6440 = vmatpush2.bf16.msra.mxu0 0
        %6441 = vmatprep.subr.bf16.mxu0 0
        %6442 = vmatpush2.bf16.msra.mxu0 0
        %6443 = vmatprep.subr.bf16.mxu0 0
        %6444 = vmatpush2.bf16.msra.mxu0 0
        %6445 = vmatprep.subr.bf16.mxu0 0
        %6446 = vmatpush2.bf16.msra.mxu0 0
        %6447 = vmatprep.subr.bf16.mxu0 0
        %6448 = vmatpush2.bf16.msra.mxu0 0
        %6449 = vmatprep.mubr.bf16.mxu0 0
        %6450 = vmatmul.mubr.bf16.gmra.mxu0 %v6415
        %v6451 = vpop.f32.mrf.mxu0
        %v6452 = vadd.f32 %v6388, %v6451
        %v6453 = vpop.f32.mrf.mxu0
        %v6454 = vpop.f32.mrf.mxu0
        %v6455 = vpop.f32.mrf.mxu0
        %6456 = vdwg.mxu0
        %v6457 = vmul.f32 %v6452, 0.5
        %v6458 = vmul.f32 %v6452, 0.70710677
        %v6459 = verf.f32.pop %v6458
        %v6460 = vadd.f32 %v6459, 1.0
        %v6461 = vmul.f32 %v6457, %v6460
        %s6462 = scalar_lea.vmem %s22, 32
        %v6463 = vld [vmem:[%s6462] sm:$0xf]
        %v6464 = vld [vmem:[%s6462 + $0x4] sm:$0xf]
        %s6465 = scalar_lea.vmem [#allocation10], 4
        %v6466 = vld [vmem:[%s6465] sm:$0x1]
        %v6467 = vpack.c.bf16 %v6461, %v6461
        %v6469 = vlaneseq
        %v6470 = vshrl.u32 %v6469, 7
        %v6471 = vsub.s32 0, %v6470
        %v6472 = vrot.slane %v6466, %v6471
        %v6476 = vunpack.c.l.b16 %v6463
        %v6477 = vunpack.c.l.b16 %v6464
        %v6478 = vpack.c.b16 %v6477, %v6476
        %v6481 = vsel %vm1131, %v6467, 0
        %6483 = vmatprep.subr.bf16.mxu0 0
        %6484 = vmatpush1.bf16.msra.mxu0 0
        %6485 = vmatprep.subr.bf16.mxu0 0
        %6486 = vmatpush1.bf16.msra.mxu0 0
        %6487 = vmatprep.subr.bf16.mxu0 0
        %6488 = vmatpush1.bf16.msra.mxu0 0
        %6489 = vmatprep.subr.bf16.mxu0 0
        %6490 = vmatpush1.bf16.msra.mxu0 0
        %6491 = vmatprep.subr.bf16.mxu0 0
        %6492 = vmatpush1.bf16.msra.mxu0 0
        %6493 = vmatprep.subr.bf16.mxu0 0
        %6494 = vmatpush1.bf16.msra.mxu0 0
        %6495 = vmatprep.subr.bf16.mxu0 0
        %6496 = vmatpush1.bf16.msra.mxu0 0
        %6497 = vmatprep.subr.bf16.mxu0 0
        %6498 = vmatpush1.bf16.msra.mxu0 %v6478
        %6499 = vmatprep.subr.bf16.mxu0 0
        %6500 = vmatpush2.bf16.msra.mxu0 0
        %6501 = vmatprep.subr.bf16.mxu0 0
        %6502 = vmatpush2.bf16.msra.mxu0 0
        %6503 = vmatprep.subr.bf16.mxu0 0
        %6504 = vmatpush2.bf16.msra.mxu0 0
        %6505 = vmatprep.subr.bf16.mxu0 0
        %6506 = vmatpush2.bf16.msra.mxu0 0
        %6507 = vmatprep.subr.bf16.mxu0 0
        %6508 = vmatpush2.bf16.msra.mxu0 0
        %6509 = vmatprep.subr.bf16.mxu0 0
        %6510 = vmatpush2.bf16.msra.mxu0 0
        %6511 = vmatprep.subr.bf16.mxu0 0
        %6512 = vmatpush2.bf16.msra.mxu0 0
        %6513 = vmatprep.subr.bf16.mxu0 0
        %6514 = vmatpush2.bf16.msra.mxu0 0
        %6515 = vmatprep.mubr.bf16.mxu0 0
        %6516 = vmatmul.mubr.bf16.gmra.mxu0 %v6481
        %v6517 = vpop.f32.mrf.mxu0
        %v6518 = vadd.f32 %v6472, %v6517
        %v6519 = vpop.f32.mrf.mxu0
        %v6520 = vpop.f32.mrf.mxu0
        %v6521 = vpop.f32.mrf.mxu0
        %6522 = vdwg.mxu0
        %v6523 = vadd.f32 %v6518, %v6340
        %v6524 = vpack.c.bf16 %v6523, %v6523
        %s6525 = scalar_lea.vmem %s6, 320
        %v6526 = vld [vmem:[%s6525] sm:$0xff]
        %v6527 = vld [vmem:[%s6525 + $0x8] sm:$0xff]
        %v6528 = vld [vmem:[%s6525 + $0x10] sm:$0xff]
        %v6529 = vld [vmem:[%s6525 + $0x18] sm:$0xff]
        %v6530 = vld [vmem:[%s6525 + $0x20] sm:$0xff]
        %v6531 = vld [vmem:[%s6525 + $0x28] sm:$0xff]
        %v6532 = vld [vmem:[%s6525 + $0x30] sm:$0xff]
        %v6533 = vld [vmem:[%s6525 + $0x38] sm:$0xff]
        %s6534 = scalar_lea.vmem %s7, 10
        %v6535 = vld [vmem:[%s6534] sm:$0x3]
        %v6537 = vlaneseq
        %v6538 = vshrl.u32 %v6537, 7
        %v6539 = vsub.s32 0, %v6538
        %v6540 = vrot.slane %v6535, %v6539
        %v6541 = vlaneseq
        %v6542 = vshrl.u32 %v6541, 7
        %v6543 = vsub.s32 1, %v6542
        %v6544 = vrot.slane %v6535, %v6543
        %v6555 = vunpack.c.l.b16 %v6526
        %v6556 = vunpack.c.h.b16 %v6526
        %v6557 = vunpack.c.l.b16 %v6527
        %v6558 = vunpack.c.h.b16 %v6527
        %v6559 = vunpack.c.l.b16 %v6528
        %v6560 = vunpack.c.h.b16 %v6528
        %v6561 = vunpack.c.l.b16 %v6529
        %v6562 = vunpack.c.h.b16 %v6529
        %v6563 = vunpack.c.l.b16 %v6530
        %v6564 = vunpack.c.h.b16 %v6530
        %v6565 = vunpack.c.l.b16 %v6531
        %v6566 = vunpack.c.h.b16 %v6531
        %v6567 = vunpack.c.l.b16 %v6532
        %v6568 = vunpack.c.h.b16 %v6532
        %v6569 = vunpack.c.l.b16 %v6533
        %v6570 = vunpack.c.h.b16 %v6533
        %v6571 = vpack.c.b16 %v6557, %v6555
        %v6572 = vpack.c.b16 %v6558, %v6556
        %v6573 = vpack.c.b16 %v6561, %v6559
        %v6574 = vpack.c.b16 %v6562, %v6560
        %v6575 = vpack.c.b16 %v6565, %v6563
        %v6576 = vpack.c.b16 %v6566, %v6564
        %v6577 = vpack.c.b16 %v6569, %v6567
        %v6578 = vpack.c.b16 %v6570, %v6568
        %v6588 = vsel %vm990, %v6524, 0
        %6590 = vmatprep.subr.bf16.mxu0 0
        %6591 = vmatpush1.bf16.msra.mxu0 0
        %6592 = vmatprep.subr.bf16.mxu0 0
        %6593 = vmatpush1.bf16.msra.mxu0 0
        %6594 = vmatprep.subr.bf16.mxu0 0
        %6595 = vmatpush1.bf16.msra.mxu0 0
        %6596 = vmatprep.subr.bf16.mxu0 0
        %6597 = vmatpush1.bf16.msra.mxu0 0
        %6598 = vmatprep.subr.bf16.mxu0 %v6578
        %6599 = vmatpush1.bf16.msra.mxu0 %v6577
        %6600 = vmatprep.subr.bf16.mxu0 %v6576
        %6601 = vmatpush1.bf16.msra.mxu0 %v6575
        %6602 = vmatprep.subr.bf16.mxu0 %v6574
        %6603 = vmatpush1.bf16.msra.mxu0 %v6573
        %6604 = vmatprep.subr.bf16.mxu0 %v6572
        %6605 = vmatpush1.bf16.msra.mxu0 %v6571
        %6606 = vmatprep.subr.bf16.mxu0 0
        %6607 = vmatpush2.bf16.msra.mxu0 0
        %6608 = vmatprep.subr.bf16.mxu0 0
        %6609 = vmatpush2.bf16.msra.mxu0 0
        %6610 = vmatprep.subr.bf16.mxu0 0
        %6611 = vmatpush2.bf16.msra.mxu0 0
        %6612 = vmatprep.subr.bf16.mxu0 0
        %6613 = vmatpush2.bf16.msra.mxu0 0
        %6614 = vmatprep.subr.bf16.mxu0 0
        %6615 = vmatpush2.bf16.msra.mxu0 0
        %6616 = vmatprep.subr.bf16.mxu0 0
        %6617 = vmatpush2.bf16.msra.mxu0 0
        %6618 = vmatprep.subr.bf16.mxu0 0
        %6619 = vmatpush2.bf16.msra.mxu0 0
        %6620 = vmatprep.subr.bf16.mxu0 0
        %6621 = vmatpush2.bf16.msra.mxu0 0
        %6622 = vmatprep.mubr.bf16.mxu0 0
        %6623 = vmatmul.mubr.bf16.gmra.mxu0 %v6588
        %v6624 = vpop.f32.mrf.mxu0
        %v6625 = vadd.f32 %v6540, %v6624
        %v6626 = vpop.f32.mrf.mxu0
        %v6627 = vadd.f32 %v6544, %v6626
        %v6628 = vpop.f32.mrf.mxu0
        %v6629 = vpop.f32.mrf.mxu0
        %6630 = vdwg.mxu0
        %v6631 = vpack.c.bf16 %v6625, %v6625
        %v6632 = vpack.c.bf16 %v6627, %v6627
        %6634 = vrot.lane.b32.xlu0 %v6631, 64
        %v6635 = vpop.permute.xlu0 %6634
        %v6637 = vsel %vm1131, %v6631, 0
        %v6640 = vsel %vm1131, %v6635, 0
        %6642 = vmatprep.subr.bf16.mxu0 0
        %6643 = vmatpush1.bf16.xpose.msra.mxu0 0
        %6644 = vmatprep.subr.bf16.mxu0 0
        %6645 = vmatpush1.bf16.xpose.msra.mxu0 0
        %6646 = vmatprep.subr.bf16.mxu0 0
        %6647 = vmatpush1.bf16.xpose.msra.mxu0 0
        %6648 = vmatprep.subr.bf16.mxu0 0
        %6649 = vmatpush1.bf16.xpose.msra.mxu0 0
        %6650 = vmatprep.subr.bf16.mxu0 0
        %6651 = vmatpush1.bf16.xpose.msra.mxu0 0
        %6652 = vmatprep.subr.bf16.mxu0 0
        %6653 = vmatpush1.bf16.xpose.msra.mxu0 0
        %6654 = vmatprep.subr.bf16.mxu0 0
        %6655 = vmatpush1.bf16.xpose.msra.mxu0 0
        %6656 = vmatprep.subr.bf16.mxu0 0
        %6657 = vmatpush1.bf16.xpose.msra.mxu0 %v6640
        %6658 = vmatprep.subr.bf16.mxu0 0
        %6659 = vmatpush2.bf16.xpose.msra.mxu0 0
        %6660 = vmatprep.subr.bf16.mxu0 0
        %6661 = vmatpush2.bf16.xpose.msra.mxu0 0
        %6662 = vmatprep.subr.bf16.mxu0 0
        %6663 = vmatpush2.bf16.xpose.msra.mxu0 0
        %6664 = vmatprep.subr.bf16.mxu0 0
        %6665 = vmatpush2.bf16.xpose.msra.mxu0 0
        %6666 = vmatprep.subr.bf16.mxu0 0
        %6667 = vmatpush2.bf16.xpose.msra.mxu0 0
        %6668 = vmatprep.subr.bf16.mxu0 0
        %6669 = vmatpush2.bf16.xpose.msra.mxu0 0
        %6670 = vmatprep.subr.bf16.mxu0 0
        %6671 = vmatpush2.bf16.xpose.msra.mxu0 0
        %6672 = vmatprep.subr.bf16.mxu0 0
        %6673 = vmatpush2.bf16.xpose.msra.mxu0 0
        %6674 = vmatprep.mubr.bf16.mxu0 0
        %6675 = vmatmul.mubr.bf16.gmra.mxu0 %v6637
        %v6676 = vpop.f32.mrf.mxu0
        %v6677 = vadd.f32 0.0, %v6676
        %v6678 = vpop.f32.mrf.mxu0
        %v6679 = vpop.f32.mrf.mxu0
        %v6680 = vpop.f32.mrf.mxu0
        %6681 = vdwg.mxu0
        %v6682 = vsel %vm1183, -3.4028235e+38, %v6677
        %v6683 = vsel %vm1185, %v6682, -inf
        %6684 = vmax.xlane.f32.xlu0 %v6683
        %v6685 = vpop.xlane.xlu0 %6684
        %v6686 = vsub.f32 %v6682, %v6685
        %v6687 = vmul.f32 %v6686, 1.442695
        %v6688 = vpow.pop %v6687
        %v6689 = vsel %vm1185, %v6688, 0.0
        %6690 = vadd.xlane.f32.xlu0 %v6689
        %v6691 = vpop.xlane.xlu0 %6690
        %v6692 = vrcp.pop %v6691
        %v6693 = vmul.f32 %v6688, %v6692
        %v6694 = vpack.c.bf16 %v6693, %v6693
        %v6696 = vsel %vm1185, %v6694, 0
        %v6699 = vsel %vm1201, %v6632, 0
        %6701 = vmatprep.subr.bf16.mxu0 0
        %6702 = vmatpush1.bf16.msra.mxu0 0
        %6703 = vmatprep.subr.bf16.mxu0 0
        %6704 = vmatpush1.bf16.msra.mxu0 0
        %6705 = vmatprep.subr.bf16.mxu0 0
        %6706 = vmatpush1.bf16.msra.mxu0 0
        %6707 = vmatprep.subr.bf16.mxu0 0
        %6708 = vmatpush1.bf16.msra.mxu0 0
        %6709 = vmatprep.subr.bf16.mxu0 0
        %6710 = vmatpush1.bf16.msra.mxu0 0
        %6711 = vmatprep.subr.bf16.mxu0 0
        %6712 = vmatpush1.bf16.msra.mxu0 0
        %6713 = vmatprep.subr.bf16.mxu0 0
        %6714 = vmatpush1.bf16.msra.mxu0 0
        %6715 = vmatprep.subr.bf16.mxu0 0
        %6716 = vmatpush1.bf16.msra.mxu0 %v6699
        %6717 = vmatprep.subr.bf16.mxu0 0
        %6718 = vmatpush2.bf16.msra.mxu0 0
        %6719 = vmatprep.subr.bf16.mxu0 0
        %6720 = vmatpush2.bf16.msra.mxu0 0
        %6721 = vmatprep.subr.bf16.mxu0 0
        %6722 = vmatpush2.bf16.msra.mxu0 0
        %6723 = vmatprep.subr.bf16.mxu0 0
        %6724 = vmatpush2.bf16.msra.mxu0 0
        %6725 = vmatprep.subr.bf16.mxu0 0
        %6726 = vmatpush2.bf16.msra.mxu0 0
        %6727 = vmatprep.subr.bf16.mxu0 0
        %6728 = vmatpush2.bf16.msra.mxu0 0
        %6729 = vmatprep.subr.bf16.mxu0 0
        %6730 = vmatpush2.bf16.msra.mxu0 0
        %6731 = vmatprep.subr.bf16.mxu0 0
        %6732 = vmatpush2.bf16.msra.mxu0 0
        %6733 = vmatprep.mubr.bf16.mxu0 0
        %6734 = vmatmul.mubr.bf16.gmra.mxu0 %v6696
        %v6735 = vpop.f32.mrf.mxu0
        %v6736 = vadd.f32 0.0, %v6735
        %v6737 = vpop.f32.mrf.mxu0
        %v6738 = vpop.f32.mrf.mxu0
        %v6739 = vpop.f32.mrf.mxu0
        %6740 = vdwg.mxu0
        %6741 = vrot.lane.b32.xlu0 %v6631, 112
        %v6742 = vpop.permute.xlu0 %6741
        %6743 = vrot.lane.b32.xlu0 %v6631, 48
        %v6744 = vpop.permute.xlu0 %6743
        %v6746 = vsel %vm1131, %v6742, 0
        %v6749 = vsel %vm1131, %v6744, 0
        %6751 = vmatprep.subr.bf16.mxu0 0
        %6752 = vmatpush1.bf16.xpose.msra.mxu0 0
        %6753 = vmatprep.subr.bf16.mxu0 0
        %6754 = vmatpush1.bf16.xpose.msra.mxu0 0
        %6755 = vmatprep.subr.bf16.mxu0 0
        %6756 = vmatpush1.bf16.xpose.msra.mxu0 0
        %6757 = vmatprep.subr.bf16.mxu0 0
        %6758 = vmatpush1.bf16.xpose.msra.mxu0 0
        %6759 = vmatprep.subr.bf16.mxu0 0
        %6760 = vmatpush1.bf16.xpose.msra.mxu0 0
        %6761 = vmatprep.subr.bf16.mxu0 0
        %6762 = vmatpush1.bf16.xpose.msra.mxu0 0
        %6763 = vmatprep.subr.bf16.mxu0 0
        %6764 = vmatpush1.bf16.xpose.msra.mxu0 0
        %6765 = vmatprep.subr.bf16.mxu0 0
        %6766 = vmatpush1.bf16.xpose.msra.mxu0 %v6749
        %6767 = vmatprep.subr.bf16.mxu0 0
        %6768 = vmatpush2.bf16.xpose.msra.mxu0 0
        %6769 = vmatprep.subr.bf16.mxu0 0
        %6770 = vmatpush2.bf16.xpose.msra.mxu0 0
        %6771 = vmatprep.subr.bf16.mxu0 0
        %6772 = vmatpush2.bf16.xpose.msra.mxu0 0
        %6773 = vmatprep.subr.bf16.mxu0 0
        %6774 = vmatpush2.bf16.xpose.msra.mxu0 0
        %6775 = vmatprep.subr.bf16.mxu0 0
        %6776 = vmatpush2.bf16.xpose.msra.mxu0 0
        %6777 = vmatprep.subr.bf16.mxu0 0
        %6778 = vmatpush2.bf16.xpose.msra.mxu0 0
        %6779 = vmatprep.subr.bf16.mxu0 0
        %6780 = vmatpush2.bf16.xpose.msra.mxu0 0
        %6781 = vmatprep.subr.bf16.mxu0 0
        %6782 = vmatpush2.bf16.xpose.msra.mxu0 0
        %6783 = vmatprep.mubr.bf16.mxu0 0
        %6784 = vmatmul.mubr.bf16.gmra.mxu0 %v6746
        %v6785 = vpop.f32.mrf.mxu0
        %v6786 = vadd.f32 0.0, %v6785
        %v6787 = vpop.f32.mrf.mxu0
        %v6788 = vpop.f32.mrf.mxu0
        %v6789 = vpop.f32.mrf.mxu0
        %6790 = vdwg.mxu0
        %v6791 = vsel %vm1183, -3.4028235e+38, %v6786
        %v6792 = vsel %vm1185, %v6791, -inf
        %6793 = vmax.xlane.f32.xlu0 %v6792
        %v6794 = vpop.xlane.xlu0 %6793
        %v6795 = vsub.f32 %v6791, %v6794
        %v6796 = vmul.f32 %v6795, 1.442695
        %v6797 = vpow.pop %v6796
        %v6798 = vsel %vm1185, %v6797, 0.0
        %6799 = vadd.xlane.f32.xlu0 %v6798
        %v6800 = vpop.xlane.xlu0 %6799
        %v6801 = vrcp.pop %v6800
        %v6802 = vmul.f32 %v6797, %v6801
        %v6803 = vpack.c.bf16 %v6802, %v6802
        %6805 = vrot.lane.b32.xlu0 %v6632, 112
        %v6806 = vpop.permute.xlu0 %6805
        %v6808 = vsel %vm1185, %v6803, 0
        %v6811 = vsel %vm1201, %v6806, 0
        %6813 = vmatprep.subr.bf16.mxu0 0
        %6814 = vmatpush1.bf16.msra.mxu0 0
        %6815 = vmatprep.subr.bf16.mxu0 0
        %6816 = vmatpush1.bf16.msra.mxu0 0
        %6817 = vmatprep.subr.bf16.mxu0 0
        %6818 = vmatpush1.bf16.msra.mxu0 0
        %6819 = vmatprep.subr.bf16.mxu0 0
        %6820 = vmatpush1.bf16.msra.mxu0 0
        %6821 = vmatprep.subr.bf16.mxu0 0
        %6822 = vmatpush1.bf16.msra.mxu0 0
        %6823 = vmatprep.subr.bf16.mxu0 0
        %6824 = vmatpush1.bf16.msra.mxu0 0
        %6825 = vmatprep.subr.bf16.mxu0 0
        %6826 = vmatpush1.bf16.msra.mxu0 0
        %6827 = vmatprep.subr.bf16.mxu0 0
        %6828 = vmatpush1.bf16.msra.mxu0 %v6811
        %6829 = vmatprep.subr.bf16.mxu0 0
        %6830 = vmatpush2.bf16.msra.mxu0 0
        %6831 = vmatprep.subr.bf16.mxu0 0
        %6832 = vmatpush2.bf16.msra.mxu0 0
        %6833 = vmatprep.subr.bf16.mxu0 0
        %6834 = vmatpush2.bf16.msra.mxu0 0
        %6835 = vmatprep.subr.bf16.mxu0 0
        %6836 = vmatpush2.bf16.msra.mxu0 0
        %6837 = vmatprep.subr.bf16.mxu0 0
        %6838 = vmatpush2.bf16.msra.mxu0 0
        %6839 = vmatprep.subr.bf16.mxu0 0
        %6840 = vmatpush2.bf16.msra.mxu0 0
        %6841 = vmatprep.subr.bf16.mxu0 0
        %6842 = vmatpush2.bf16.msra.mxu0 0
        %6843 = vmatprep.subr.bf16.mxu0 0
        %6844 = vmatpush2.bf16.msra.mxu0 0
        %6845 = vmatprep.mubr.bf16.mxu0 0
        %6846 = vmatmul.mubr.bf16.gmra.mxu0 %v6808
        %v6847 = vpop.f32.mrf.mxu0
        %v6848 = vadd.f32 0.0, %v6847
        %v6849 = vpop.f32.mrf.mxu0
        %v6850 = vpop.f32.mrf.mxu0
        %v6851 = vpop.f32.mrf.mxu0
        %6852 = vdwg.mxu0
        %6853 = vrot.lane.b32.xlu0 %v6631, 96
        %v6854 = vpop.permute.xlu0 %6853
        %6855 = vrot.lane.b32.xlu0 %v6631, 32
        %v6856 = vpop.permute.xlu0 %6855
        %v6858 = vsel %vm1131, %v6854, 0
        %v6861 = vsel %vm1131, %v6856, 0
        %6863 = vmatprep.subr.bf16.mxu0 0
        %6864 = vmatpush1.bf16.xpose.msra.mxu0 0
        %6865 = vmatprep.subr.bf16.mxu0 0
        %6866 = vmatpush1.bf16.xpose.msra.mxu0 0
        %6867 = vmatprep.subr.bf16.mxu0 0
        %6868 = vmatpush1.bf16.xpose.msra.mxu0 0
        %6869 = vmatprep.subr.bf16.mxu0 0
        %6870 = vmatpush1.bf16.xpose.msra.mxu0 0
        %6871 = vmatprep.subr.bf16.mxu0 0
        %6872 = vmatpush1.bf16.xpose.msra.mxu0 0
        %6873 = vmatprep.subr.bf16.mxu0 0
        %6874 = vmatpush1.bf16.xpose.msra.mxu0 0
        %6875 = vmatprep.subr.bf16.mxu0 0
        %6876 = vmatpush1.bf16.xpose.msra.mxu0 0
        %6877 = vmatprep.subr.bf16.mxu0 0
        %6878 = vmatpush1.bf16.xpose.msra.mxu0 %v6861
        %6879 = vmatprep.subr.bf16.mxu0 0
        %6880 = vmatpush2.bf16.xpose.msra.mxu0 0
        %6881 = vmatprep.subr.bf16.mxu0 0
        %6882 = vmatpush2.bf16.xpose.msra.mxu0 0
        %6883 = vmatprep.subr.bf16.mxu0 0
        %6884 = vmatpush2.bf16.xpose.msra.mxu0 0
        %6885 = vmatprep.subr.bf16.mxu0 0
        %6886 = vmatpush2.bf16.xpose.msra.mxu0 0
        %6887 = vmatprep.subr.bf16.mxu0 0
        %6888 = vmatpush2.bf16.xpose.msra.mxu0 0
        %6889 = vmatprep.subr.bf16.mxu0 0
        %6890 = vmatpush2.bf16.xpose.msra.mxu0 0
        %6891 = vmatprep.subr.bf16.mxu0 0
        %6892 = vmatpush2.bf16.xpose.msra.mxu0 0
        %6893 = vmatprep.subr.bf16.mxu0 0
        %6894 = vmatpush2.bf16.xpose.msra.mxu0 0
        %6895 = vmatprep.mubr.bf16.mxu0 0
        %6896 = vmatmul.mubr.bf16.gmra.mxu0 %v6858
        %v6897 = vpop.f32.mrf.mxu0
        %v6898 = vadd.f32 0.0, %v6897
        %v6899 = vpop.f32.mrf.mxu0
        %v6900 = vpop.f32.mrf.mxu0
        %v6901 = vpop.f32.mrf.mxu0
        %6902 = vdwg.mxu0
        %v6903 = vsel %vm1183, -3.4028235e+38, %v6898
        %v6904 = vsel %vm1185, %v6903, -inf
        %6905 = vmax.xlane.f32.xlu0 %v6904
        %v6906 = vpop.xlane.xlu0 %6905
        %v6907 = vsub.f32 %v6903, %v6906
        %v6908 = vmul.f32 %v6907, 1.442695
        %v6909 = vpow.pop %v6908
        %v6910 = vsel %vm1185, %v6909, 0.0
        %6911 = vadd.xlane.f32.xlu0 %v6910
        %v6912 = vpop.xlane.xlu0 %6911
        %v6913 = vrcp.pop %v6912
        %v6914 = vmul.f32 %v6909, %v6913
        %v6915 = vpack.c.bf16 %v6914, %v6914
        %6916 = vrot.lane.b32.xlu0 %v6632, 96
        %v6917 = vpop.permute.xlu0 %6916
        %v6919 = vsel %vm1185, %v6915, 0
        %v6922 = vsel %vm1201, %v6917, 0
        %6924 = vmatprep.subr.bf16.mxu0 0
        %6925 = vmatpush1.bf16.msra.mxu0 0
        %6926 = vmatprep.subr.bf16.mxu0 0
        %6927 = vmatpush1.bf16.msra.mxu0 0
        %6928 = vmatprep.subr.bf16.mxu0 0
        %6929 = vmatpush1.bf16.msra.mxu0 0
        %6930 = vmatprep.subr.bf16.mxu0 0
        %6931 = vmatpush1.bf16.msra.mxu0 0
        %6932 = vmatprep.subr.bf16.mxu0 0
        %6933 = vmatpush1.bf16.msra.mxu0 0
        %6934 = vmatprep.subr.bf16.mxu0 0
        %6935 = vmatpush1.bf16.msra.mxu0 0
        %6936 = vmatprep.subr.bf16.mxu0 0
        %6937 = vmatpush1.bf16.msra.mxu0 0
        %6938 = vmatprep.subr.bf16.mxu0 0
        %6939 = vmatpush1.bf16.msra.mxu0 %v6922
        %6940 = vmatprep.subr.bf16.mxu0 0
        %6941 = vmatpush2.bf16.msra.mxu0 0
        %6942 = vmatprep.subr.bf16.mxu0 0
        %6943 = vmatpush2.bf16.msra.mxu0 0
        %6944 = vmatprep.subr.bf16.mxu0 0
        %6945 = vmatpush2.bf16.msra.mxu0 0
        %6946 = vmatprep.subr.bf16.mxu0 0
        %6947 = vmatpush2.bf16.msra.mxu0 0
        %6948 = vmatprep.subr.bf16.mxu0 0
        %6949 = vmatpush2.bf16.msra.mxu0 0
        %6950 = vmatprep.subr.bf16.mxu0 0
        %6951 = vmatpush2.bf16.msra.mxu0 0
        %6952 = vmatprep.subr.bf16.mxu0 0
        %6953 = vmatpush2.bf16.msra.mxu0 0
        %6954 = vmatprep.subr.bf16.mxu0 0
        %6955 = vmatpush2.bf16.msra.mxu0 0
        %6956 = vmatprep.mubr.bf16.mxu0 0
        %6957 = vmatmul.mubr.bf16.gmra.mxu0 %v6919
        %v6958 = vpop.f32.mrf.mxu0
        %v6959 = vadd.f32 0.0, %v6958
        %v6960 = vpop.f32.mrf.mxu0
        %v6961 = vpop.f32.mrf.mxu0
        %v6962 = vpop.f32.mrf.mxu0
        %6963 = vdwg.mxu0
        %6964 = vrot.lane.b32.xlu0 %v6631, 80
        %v6965 = vpop.permute.xlu0 %6964
        %6966 = vrot.lane.b32.xlu0 %v6631, 16
        %v6967 = vpop.permute.xlu0 %6966
        %v6969 = vsel %vm1131, %v6965, 0
        %v6972 = vsel %vm1131, %v6967, 0
        %6974 = vmatprep.subr.bf16.mxu0 0
        %6975 = vmatpush1.bf16.xpose.msra.mxu0 0
        %6976 = vmatprep.subr.bf16.mxu0 0
        %6977 = vmatpush1.bf16.xpose.msra.mxu0 0
        %6978 = vmatprep.subr.bf16.mxu0 0
        %6979 = vmatpush1.bf16.xpose.msra.mxu0 0
        %6980 = vmatprep.subr.bf16.mxu0 0
        %6981 = vmatpush1.bf16.xpose.msra.mxu0 0
        %6982 = vmatprep.subr.bf16.mxu0 0
        %6983 = vmatpush1.bf16.xpose.msra.mxu0 0
        %6984 = vmatprep.subr.bf16.mxu0 0
        %6985 = vmatpush1.bf16.xpose.msra.mxu0 0
        %6986 = vmatprep.subr.bf16.mxu0 0
        %6987 = vmatpush1.bf16.xpose.msra.mxu0 0
        %6988 = vmatprep.subr.bf16.mxu0 0
        %6989 = vmatpush1.bf16.xpose.msra.mxu0 %v6972
        %6990 = vmatprep.subr.bf16.mxu0 0
        %6991 = vmatpush2.bf16.xpose.msra.mxu0 0
        %6992 = vmatprep.subr.bf16.mxu0 0
        %6993 = vmatpush2.bf16.xpose.msra.mxu0 0
        %6994 = vmatprep.subr.bf16.mxu0 0
        %6995 = vmatpush2.bf16.xpose.msra.mxu0 0
        %6996 = vmatprep.subr.bf16.mxu0 0
        %6997 = vmatpush2.bf16.xpose.msra.mxu0 0
        %6998 = vmatprep.subr.bf16.mxu0 0
        %6999 = vmatpush2.bf16.xpose.msra.mxu0 0
        %7000 = vmatprep.subr.bf16.mxu0 0
        %7001 = vmatpush2.bf16.xpose.msra.mxu0 0
        %7002 = vmatprep.subr.bf16.mxu0 0
        %7003 = vmatpush2.bf16.xpose.msra.mxu0 0
        %7004 = vmatprep.subr.bf16.mxu0 0
        %7005 = vmatpush2.bf16.xpose.msra.mxu0 0
        %7006 = vmatprep.mubr.bf16.mxu0 0
        %7007 = vmatmul.mubr.bf16.gmra.mxu0 %v6969
        %v7008 = vpop.f32.mrf.mxu0
        %v7009 = vadd.f32 0.0, %v7008
        %v7010 = vpop.f32.mrf.mxu0
        %v7011 = vpop.f32.mrf.mxu0
        %v7012 = vpop.f32.mrf.mxu0
        %7013 = vdwg.mxu0
        %v7014 = vsel %vm1183, -3.4028235e+38, %v7009
        %v7015 = vsel %vm1185, %v7014, -inf
        %7016 = vmax.xlane.f32.xlu0 %v7015
        %v7017 = vpop.xlane.xlu0 %7016
        %v7018 = vsub.f32 %v7014, %v7017
        %v7019 = vmul.f32 %v7018, 1.442695
        %v7020 = vpow.pop %v7019
        %v7021 = vsel %vm1185, %v7020, 0.0
        %7022 = vadd.xlane.f32.xlu0 %v7021
        %v7023 = vpop.xlane.xlu0 %7022
        %v7024 = vrcp.pop %v7023
        %v7025 = vmul.f32 %v7020, %v7024
        %v7026 = vpack.c.bf16 %v7025, %v7025
        %7027 = vrot.lane.b32.xlu0 %v6632, 80
        %v7028 = vpop.permute.xlu0 %7027
        %v7030 = vsel %vm1185, %v7026, 0
        %v7033 = vsel %vm1201, %v7028, 0
        %7035 = vmatprep.subr.bf16.mxu0 0
        %7036 = vmatpush1.bf16.msra.mxu0 0
        %7037 = vmatprep.subr.bf16.mxu0 0
        %7038 = vmatpush1.bf16.msra.mxu0 0
        %7039 = vmatprep.subr.bf16.mxu0 0
        %7040 = vmatpush1.bf16.msra.mxu0 0
        %7041 = vmatprep.subr.bf16.mxu0 0
        %7042 = vmatpush1.bf16.msra.mxu0 0
        %7043 = vmatprep.subr.bf16.mxu0 0
        %7044 = vmatpush1.bf16.msra.mxu0 0
        %7045 = vmatprep.subr.bf16.mxu0 0
        %7046 = vmatpush1.bf16.msra.mxu0 0
        %7047 = vmatprep.subr.bf16.mxu0 0
        %7048 = vmatpush1.bf16.msra.mxu0 0
        %7049 = vmatprep.subr.bf16.mxu0 0
        %7050 = vmatpush1.bf16.msra.mxu0 %v7033
        %7051 = vmatprep.subr.bf16.mxu0 0
        %7052 = vmatpush2.bf16.msra.mxu0 0
        %7053 = vmatprep.subr.bf16.mxu0 0
        %7054 = vmatpush2.bf16.msra.mxu0 0
        %7055 = vmatprep.subr.bf16.mxu0 0
        %7056 = vmatpush2.bf16.msra.mxu0 0
        %7057 = vmatprep.subr.bf16.mxu0 0
        %7058 = vmatpush2.bf16.msra.mxu0 0
        %7059 = vmatprep.subr.bf16.mxu0 0
        %7060 = vmatpush2.bf16.msra.mxu0 0
        %7061 = vmatprep.subr.bf16.mxu0 0
        %7062 = vmatpush2.bf16.msra.mxu0 0
        %7063 = vmatprep.subr.bf16.mxu0 0
        %7064 = vmatpush2.bf16.msra.mxu0 0
        %7065 = vmatprep.subr.bf16.mxu0 0
        %7066 = vmatpush2.bf16.msra.mxu0 0
        %7067 = vmatprep.mubr.bf16.mxu0 0
        %7068 = vmatmul.mubr.bf16.gmra.mxu0 %v7030
        %v7069 = vpop.f32.mrf.mxu0
        %v7070 = vadd.f32 0.0, %v7069
        %v7071 = vpop.f32.mrf.mxu0
        %v7072 = vpop.f32.mrf.mxu0
        %v7073 = vpop.f32.mrf.mxu0
        %7074 = vdwg.mxu0
        %7076 = vrot.lane.b32.xlu0 %v6848, 16
        %v7077 = vpop.permute.xlu0 %7076
        %7080 = vrot.lane.b32.xlu0 %v6959, 32
        %v7081 = vpop.permute.xlu0 %7080
        %7084 = vrot.lane.b32.xlu0 %v7070, 48
        %v7085 = vpop.permute.xlu0 %7084
        %v7087 = vsel %vm1131, %v6736, %v7077
        %v7088 = vsel %vm1592, %v7087, %v7081
        %v7089 = vsel %vm1594, %v7088, %v7085
        %s7090 = scalar_lea.vmem %s8, 160
        %v7091 = vld [vmem:[%s7090] sm:$0xf]
        %v7092 = vld [vmem:[%s7090 + $0x4] sm:$0xf]
        %v7093 = vld [vmem:[%s7090 + $0x8] sm:$0xf]
        %v7094 = vld [vmem:[%s7090 + $0xc] sm:$0xf]
        %v7095 = vld [vmem:[%s7090 + $0x10] sm:$0xf]
        %v7096 = vld [vmem:[%s7090 + $0x14] sm:$0xf]
        %v7097 = vld [vmem:[%s7090 + $0x18] sm:$0xf]
        %v7098 = vld [vmem:[%s7090 + $0x1c] sm:$0xf]
        %s7099 = scalar_lea.vmem %s9, 5
        %v7100 = vld [vmem:[%s7099] sm:$0x1]
        %v7101 = vpack.c.bf16 %v7089, %v7089
        %v7103 = vlaneseq
        %v7104 = vshrl.u32 %v7103, 7
        %v7105 = vsub.s32 0, %v7104
        %v7106 = vrot.slane %v7100, %v7105
        %v7116 = vunpack.c.l.b16 %v7091
        %v7117 = vunpack.c.l.b16 %v7092
        %v7118 = vunpack.c.l.b16 %v7093
        %v7119 = vunpack.c.l.b16 %v7094
        %v7120 = vunpack.c.l.b16 %v7095
        %v7121 = vunpack.c.l.b16 %v7096
        %v7122 = vunpack.c.l.b16 %v7097
        %v7123 = vunpack.c.l.b16 %v7098
        %v7124 = vpack.c.b16 %v7117, %v7116
        %v7125 = vpack.c.b16 %v7119, %v7118
        %v7126 = vpack.c.b16 %v7121, %v7120
        %v7127 = vpack.c.b16 %v7123, %v7122
        %v7133 = vsel %vm990, %v7101, 0
        %7135 = vmatprep.subr.bf16.mxu0 0
        %7136 = vmatpush1.bf16.msra.mxu0 0
        %7137 = vmatprep.subr.bf16.mxu0 0
        %7138 = vmatpush1.bf16.msra.mxu0 0
        %7139 = vmatprep.subr.bf16.mxu0 0
        %7140 = vmatpush1.bf16.msra.mxu0 0
        %7141 = vmatprep.subr.bf16.mxu0 0
        %7142 = vmatpush1.bf16.msra.mxu0 0
        %7143 = vmatprep.subr.bf16.mxu0 0
        %7144 = vmatpush1.bf16.msra.mxu0 %v7127
        %7145 = vmatprep.subr.bf16.mxu0 0
        %7146 = vmatpush1.bf16.msra.mxu0 %v7126
        %7147 = vmatprep.subr.bf16.mxu0 0
        %7148 = vmatpush1.bf16.msra.mxu0 %v7125
        %7149 = vmatprep.subr.bf16.mxu0 0
        %7150 = vmatpush1.bf16.msra.mxu0 %v7124
        %7151 = vmatprep.subr.bf16.mxu0 0
        %7152 = vmatpush2.bf16.msra.mxu0 0
        %7153 = vmatprep.subr.bf16.mxu0 0
        %7154 = vmatpush2.bf16.msra.mxu0 0
        %7155 = vmatprep.subr.bf16.mxu0 0
        %7156 = vmatpush2.bf16.msra.mxu0 0
        %7157 = vmatprep.subr.bf16.mxu0 0
        %7158 = vmatpush2.bf16.msra.mxu0 0
        %7159 = vmatprep.subr.bf16.mxu0 0
        %7160 = vmatpush2.bf16.msra.mxu0 0
        %7161 = vmatprep.subr.bf16.mxu0 0
        %7162 = vmatpush2.bf16.msra.mxu0 0
        %7163 = vmatprep.subr.bf16.mxu0 0
        %7164 = vmatpush2.bf16.msra.mxu0 0
        %7165 = vmatprep.subr.bf16.mxu0 0
        %7166 = vmatpush2.bf16.msra.mxu0 0
        %7167 = vmatprep.mubr.bf16.mxu0 0
        %7168 = vmatmul.mubr.bf16.gmra.mxu0 %v7133
        %v7169 = vpop.f32.mrf.mxu0
        %v7170 = vadd.f32 %v7106, %v7169
        %v7171 = vpop.f32.mrf.mxu0
        %v7172 = vpop.f32.mrf.mxu0
        %v7173 = vpop.f32.mrf.mxu0
        %7174 = vdwg.mxu0
        %v7175 = vadd.f32 %v7170, %v6523
        %s7176 = scalar_lea.vmem %s10, 5
        %v7177 = vld [vmem:[%s7176] sm:$0x1]
        %s7178 = scalar_lea.vmem %s11, 5
        %v7179 = vld [vmem:[%s7178] sm:$0x1]
        %v7180 = vsel %vm990, %v7175, 0.0
        %7181 = vadd.xlane.f32.xlu0 %v7180
        %v7182 = vpop.xlane.xlu0 %7181
        %v7183 = vmul.f32 %v7182, %v994
        %v7184 = vsub.f32 %v7175, %v7183
        %v7185 = vmul.f32 %v7184, %v7184
        %v7186 = vsel %vm990, %v7185, 0.0
        %7187 = vadd.xlane.f32.xlu0 %v7186
        %v7188 = vpop.xlane.xlu0 %7187
        %v7189 = vmul.f32 %v7188, %v994
        %v7190 = vadd.f32 %v7189, 1e-12
        %v7191 = vrsqrt.pop %v7190
        %v7192 = vmul.f32 %v7184, %v7191
        %v7194 = vlaneseq
        %v7195 = vshrl.u32 %v7194, 7
        %v7196 = vsub.s32 0, %v7195
        %v7197 = vrot.slane %v7177, %v7196
        %v7199 = vmul.f32 %v7192, %v7197
        %v7201 = vlaneseq
        %v7202 = vshrl.u32 %v7201, 7
        %v7203 = vsub.s32 0, %v7202
        %v7204 = vrot.slane %v7179, %v7203
        %v7206 = vadd.f32 %v7199, %v7204
        %s7207 = scalar_lea.vmem [#allocation2], 160
        %v7208 = vld [vmem:[%s7207] sm:$0xf]
        %v7209 = vld [vmem:[%s7207 + $0x4] sm:$0xf]
        %v7210 = vld [vmem:[%s7207 + $0x8] sm:$0xf]
        %v7211 = vld [vmem:[%s7207 + $0xc] sm:$0xf]
        %v7212 = vld [vmem:[%s7207 + $0x10] sm:$0xf]
        %v7213 = vld [vmem:[%s7207 + $0x14] sm:$0xf]
        %v7214 = vld [vmem:[%s7207 + $0x18] sm:$0xf]
        %v7215 = vld [vmem:[%s7207 + $0x1c] sm:$0xf]
        %s7216 = scalar_lea.vmem %s13, 5
        %v7217 = vld [vmem:[%s7216] sm:$0x1]
        %v7218 = vpack.c.bf16 %v7206, %v7206
        %v7220 = vlaneseq
        %v7221 = vshrl.u32 %v7220, 7
        %v7222 = vsub.s32 0, %v7221
        %v7223 = vrot.slane %v7217, %v7222
        %v7233 = vunpack.c.l.b16 %v7208
        %v7234 = vunpack.c.l.b16 %v7209
        %v7235 = vunpack.c.l.b16 %v7210
        %v7236 = vunpack.c.l.b16 %v7211
        %v7237 = vunpack.c.l.b16 %v7212
        %v7238 = vunpack.c.l.b16 %v7213
        %v7239 = vunpack.c.l.b16 %v7214
        %v7240 = vunpack.c.l.b16 %v7215
        %v7241 = vpack.c.b16 %v7234, %v7233
        %v7242 = vpack.c.b16 %v7236, %v7235
        %v7243 = vpack.c.b16 %v7238, %v7237
        %v7244 = vpack.c.b16 %v7240, %v7239
        %v7250 = vsel %vm990, %v7218, 0
        %7252 = vmatprep.subr.bf16.mxu0 0
        %7253 = vmatpush1.bf16.msra.mxu0 0
        %7254 = vmatprep.subr.bf16.mxu0 0
        %7255 = vmatpush1.bf16.msra.mxu0 0
        %7256 = vmatprep.subr.bf16.mxu0 0
        %7257 = vmatpush1.bf16.msra.mxu0 0
        %7258 = vmatprep.subr.bf16.mxu0 0
        %7259 = vmatpush1.bf16.msra.mxu0 0
        %7260 = vmatprep.subr.bf16.mxu0 0
        %7261 = vmatpush1.bf16.msra.mxu0 %v7244
        %7262 = vmatprep.subr.bf16.mxu0 0
        %7263 = vmatpush1.bf16.msra.mxu0 %v7243
        %7264 = vmatprep.subr.bf16.mxu0 0
        %7265 = vmatpush1.bf16.msra.mxu0 %v7242
        %7266 = vmatprep.subr.bf16.mxu0 0
        %7267 = vmatpush1.bf16.msra.mxu0 %v7241
        %7268 = vmatprep.subr.bf16.mxu0 0
        %7269 = vmatpush2.bf16.msra.mxu0 0
        %7270 = vmatprep.subr.bf16.mxu0 0
        %7271 = vmatpush2.bf16.msra.mxu0 0
        %7272 = vmatprep.subr.bf16.mxu0 0
        %7273 = vmatpush2.bf16.msra.mxu0 0
        %7274 = vmatprep.subr.bf16.mxu0 0
        %7275 = vmatpush2.bf16.msra.mxu0 0
        %7276 = vmatprep.subr.bf16.mxu0 0
        %7277 = vmatpush2.bf16.msra.mxu0 0
        %7278 = vmatprep.subr.bf16.mxu0 0
        %7279 = vmatpush2.bf16.msra.mxu0 0
        %7280 = vmatprep.subr.bf16.mxu0 0
        %7281 = vmatpush2.bf16.msra.mxu0 0
        %7282 = vmatprep.subr.bf16.mxu0 0
        %7283 = vmatpush2.bf16.msra.mxu0 0
        %7284 = vmatprep.mubr.bf16.mxu0 0
        %7285 = vmatmul.mubr.bf16.gmra.mxu0 %v7250
        %v7286 = vpop.f32.mrf.mxu0
        %v7287 = vadd.f32 %v7223, %v7286
        %v7288 = vpop.f32.mrf.mxu0
        %v7289 = vpop.f32.mrf.mxu0
        %v7290 = vpop.f32.mrf.mxu0
        %7291 = vdwg.mxu0
        %v7292 = vmul.f32 %v7287, 0.5
        %v7293 = vmul.f32 %v7287, 0.70710677
        %v7294 = verf.f32.pop %v7293
        %v7295 = vadd.f32 %v7294, 1.0
        %v7296 = vmul.f32 %v7292, %v7295
        %s7297 = scalar_lea.vmem %s14, 320
        %v7298 = vld [vmem:[%s7297] sm:$0xf]
        %v7299 = vld [vmem:[%s7297 + $0x4] sm:$0xf]
        %v7300 = vld [vmem:[%s7297 + $0x8] sm:$0xf]
        %v7301 = vld [vmem:[%s7297 + $0xc] sm:$0xf]
        %v7302 = vld [vmem:[%s7297 + $0x10] sm:$0xf]
        %v7303 = vld [vmem:[%s7297 + $0x14] sm:$0xf]
        %v7304 = vld [vmem:[%s7297 + $0x18] sm:$0xf]
        %v7305 = vld [vmem:[%s7297 + $0x1c] sm:$0xf]
        %v7306 = vld [vmem:[%s7297 + $0x20] sm:$0xf]
        %v7307 = vld [vmem:[%s7297 + $0x24] sm:$0xf]
        %v7308 = vld [vmem:[%s7297 + $0x28] sm:$0xf]
        %v7309 = vld [vmem:[%s7297 + $0x2c] sm:$0xf]
        %v7310 = vld [vmem:[%s7297 + $0x30] sm:$0xf]
        %v7311 = vld [vmem:[%s7297 + $0x34] sm:$0xf]
        %v7312 = vld [vmem:[%s7297 + $0x38] sm:$0xf]
        %v7313 = vld [vmem:[%s7297 + $0x3c] sm:$0xf]
        %s7314 = scalar_lea.vmem %s15, 5
        %v7315 = vld [vmem:[%s7314] sm:$0x1]
        %v7316 = vpack.c.bf16 %v7296, %v7296
        %v7318 = vlaneseq
        %v7319 = vshrl.u32 %v7318, 7
        %v7320 = vsub.s32 0, %v7319
        %v7321 = vrot.slane %v7315, %v7320
        %v7339 = vunpack.c.l.b16 %v7298
        %v7340 = vunpack.c.l.b16 %v7299
        %v7341 = vunpack.c.l.b16 %v7300
        %v7342 = vunpack.c.l.b16 %v7301
        %v7343 = vunpack.c.l.b16 %v7302
        %v7344 = vunpack.c.l.b16 %v7303
        %v7345 = vunpack.c.l.b16 %v7304
        %v7346 = vunpack.c.l.b16 %v7305
        %v7347 = vunpack.c.l.b16 %v7306
        %v7348 = vunpack.c.l.b16 %v7307
        %v7349 = vunpack.c.l.b16 %v7308
        %v7350 = vunpack.c.l.b16 %v7309
        %v7351 = vunpack.c.l.b16 %v7310
        %v7352 = vunpack.c.l.b16 %v7311
        %v7353 = vunpack.c.l.b16 %v7312
        %v7354 = vunpack.c.l.b16 %v7313
        %v7355 = vpack.c.b16 %v7340, %v7339
        %v7356 = vpack.c.b16 %v7342, %v7341
        %v7357 = vpack.c.b16 %v7344, %v7343
        %v7358 = vpack.c.b16 %v7346, %v7345
        %v7359 = vpack.c.b16 %v7348, %v7347
        %v7360 = vpack.c.b16 %v7350, %v7349
        %v7361 = vpack.c.b16 %v7352, %v7351
        %v7362 = vpack.c.b16 %v7354, %v7353
        %7371 = vmatprep.subr.bf16.mxu0 0
        %7372 = vmatpush1.bf16.msra.mxu0 %v7362
        %7373 = vmatprep.subr.bf16.mxu0 0
        %7374 = vmatpush1.bf16.msra.mxu0 %v7361
        %7375 = vmatprep.subr.bf16.mxu0 0
        %7376 = vmatpush1.bf16.msra.mxu0 %v7360
        %7377 = vmatprep.subr.bf16.mxu0 0
        %7378 = vmatpush1.bf16.msra.mxu0 %v7359
        %7379 = vmatprep.subr.bf16.mxu0 0
        %7380 = vmatpush1.bf16.msra.mxu0 %v7358
        %7381 = vmatprep.subr.bf16.mxu0 0
        %7382 = vmatpush1.bf16.msra.mxu0 %v7357
        %7383 = vmatprep.subr.bf16.mxu0 0
        %7384 = vmatpush1.bf16.msra.mxu0 %v7356
        %7385 = vmatprep.subr.bf16.mxu0 0
        %7386 = vmatpush1.bf16.msra.mxu0 %v7355
        %7387 = vmatprep.subr.bf16.mxu0 0
        %7388 = vmatpush2.bf16.msra.mxu0 0
        %7389 = vmatprep.subr.bf16.mxu0 0
        %7390 = vmatpush2.bf16.msra.mxu0 0
        %7391 = vmatprep.subr.bf16.mxu0 0
        %7392 = vmatpush2.bf16.msra.mxu0 0
        %7393 = vmatprep.subr.bf16.mxu0 0
        %7394 = vmatpush2.bf16.msra.mxu0 0
        %7395 = vmatprep.subr.bf16.mxu0 0
        %7396 = vmatpush2.bf16.msra.mxu0 0
        %7397 = vmatprep.subr.bf16.mxu0 0
        %7398 = vmatpush2.bf16.msra.mxu0 0
        %7399 = vmatprep.subr.bf16.mxu0 0
        %7400 = vmatpush2.bf16.msra.mxu0 0
        %7401 = vmatprep.subr.bf16.mxu0 0
        %7402 = vmatpush2.bf16.msra.mxu0 0
        %7403 = vmatprep.mubr.bf16.mxu0 0
        %7404 = vmatmul.mubr.bf16.gmra.mxu0 %v7316
        %v7405 = vpop.f32.mrf.mxu0
        %v7406 = vadd.f32 %v7321, %v7405
        %v7407 = vpop.f32.mrf.mxu0
        %v7408 = vpop.f32.mrf.mxu0
        %v7409 = vpop.f32.mrf.mxu0
        %7410 = vdwg.mxu0
        %v7411 = vadd.f32 %v7406, %v7206
        %s7412 = scalar_lea.vmem %s16, 5
        %v7413 = vld [vmem:[%s7412] sm:$0x1]
        %s7414 = scalar_lea.vmem [#allocation5], 5
        %v7415 = vld [vmem:[%s7414] sm:$0x1]
        %v7416 = vsel %vm990, %v7411, 0.0
        %7417 = vadd.xlane.f32.xlu0 %v7416
        %v7418 = vpop.xlane.xlu0 %7417
        %v7419 = vmul.f32 %v7418, %v994
        %v7420 = vsub.f32 %v7411, %v7419
        %v7421 = vmul.f32 %v7420, %v7420
        %v7422 = vsel %vm990, %v7421, 0.0
        %7423 = vadd.xlane.f32.xlu0 %v7422
        %v7424 = vpop.xlane.xlu0 %7423
        %v7425 = vmul.f32 %v7424, %v994
        %v7426 = vadd.f32 %v7425, 1e-12
        %v7427 = vrsqrt.pop %v7426
        %v7428 = vmul.f32 %v7420, %v7427
        %v7430 = vlaneseq
        %v7431 = vshrl.u32 %v7430, 7
        %v7432 = vsub.s32 0, %v7431
        %v7433 = vrot.slane %v7413, %v7432
        %v7435 = vmul.f32 %v7428, %v7433
        %v7437 = vlaneseq
        %v7438 = vshrl.u32 %v7437, 7
        %v7439 = vsub.s32 0, %v7438
        %v7440 = vrot.slane %v7415, %v7439
        %v7442 = vadd.f32 %v7435, %v7440
        %s7443 = scalar_lea.vmem %s18, 5
        %v7444 = vld [vmem:[%s7443] sm:$0x1]
        %s7445 = scalar_lea.vmem [#allocation7], 5
        %v7446 = vld [vmem:[%s7445] sm:$0x1]
        %v7447 = vsel %vm990, %v7442, 0.0
        %7448 = vadd.xlane.f32.xlu0 %v7447
        %v7449 = vpop.xlane.xlu0 %7448
        %v7450 = vmul.f32 %v7449, %v994
        %v7451 = vsub.f32 %v7442, %v7450
        %v7452 = vmul.f32 %v7451, %v7451
        %v7453 = vsel %vm990, %v7452, 0.0
        %7454 = vadd.xlane.f32.xlu0 %v7453
        %v7455 = vpop.xlane.xlu0 %7454
        %v7456 = vmul.f32 %v7455, %v994
        %v7457 = vadd.f32 %v7456, 1e-05
        %v7458 = vrsqrt.pop %v7457
        %v7459 = vmul.f32 %v7451, %v7458
        %v7461 = vlaneseq
        %v7462 = vshrl.u32 %v7461, 7
        %v7463 = vsub.s32 0, %v7462
        %v7464 = vrot.slane %v7444, %v7463
        %v7466 = vmul.f32 %v7459, %v7464
        %v7468 = vlaneseq
        %v7469 = vshrl.u32 %v7468, 7
        %v7470 = vsub.s32 0, %v7469
        %v7471 = vrot.slane %v7446, %v7470
        %v7473 = vadd.f32 %v7466, %v7471
        %s7474 = scalar_lea.vmem %s20, 160
        %v7475 = vld [vmem:[%s7474] sm:$0xf]
        %v7476 = vld [vmem:[%s7474 + $0x4] sm:$0xf]
        %v7477 = vld [vmem:[%s7474 + $0x8] sm:$0xf]
        %v7478 = vld [vmem:[%s7474 + $0xc] sm:$0xf]
        %v7479 = vld [vmem:[%s7474 + $0x10] sm:$0xf]
        %v7480 = vld [vmem:[%s7474 + $0x14] sm:$0xf]
        %v7481 = vld [vmem:[%s7474 + $0x18] sm:$0xf]
        %v7482 = vld [vmem:[%s7474 + $0x1c] sm:$0xf]
        %s7483 = scalar_lea.vmem [#allocation8], 5
        %v7484 = vld [vmem:[%s7483] sm:$0x1]
        %v7485 = vpack.c.bf16 %v7473, %v7473
        %v7487 = vlaneseq
        %v7488 = vshrl.u32 %v7487, 7
        %v7489 = vsub.s32 0, %v7488
        %v7490 = vrot.slane %v7484, %v7489
        %v7500 = vunpack.c.l.b16 %v7475
        %v7501 = vunpack.c.l.b16 %v7476
        %v7502 = vunpack.c.l.b16 %v7477
        %v7503 = vunpack.c.l.b16 %v7478
        %v7504 = vunpack.c.l.b16 %v7479
        %v7505 = vunpack.c.l.b16 %v7480
        %v7506 = vunpack.c.l.b16 %v7481
        %v7507 = vunpack.c.l.b16 %v7482
        %v7508 = vpack.c.b16 %v7501, %v7500
        %v7509 = vpack.c.b16 %v7503, %v7502
        %v7510 = vpack.c.b16 %v7505, %v7504
        %v7511 = vpack.c.b16 %v7507, %v7506
        %v7517 = vsel %vm990, %v7485, 0
        %7519 = vmatprep.subr.bf16.mxu0 0
        %7520 = vmatpush1.bf16.msra.mxu0 0
        %7521 = vmatprep.subr.bf16.mxu0 0
        %7522 = vmatpush1.bf16.msra.mxu0 0
        %7523 = vmatprep.subr.bf16.mxu0 0
        %7524 = vmatpush1.bf16.msra.mxu0 0
        %7525 = vmatprep.subr.bf16.mxu0 0
        %7526 = vmatpush1.bf16.msra.mxu0 0
        %7527 = vmatprep.subr.bf16.mxu0 0
        %7528 = vmatpush1.bf16.msra.mxu0 %v7511
        %7529 = vmatprep.subr.bf16.mxu0 0
        %7530 = vmatpush1.bf16.msra.mxu0 %v7510
        %7531 = vmatprep.subr.bf16.mxu0 0
        %7532 = vmatpush1.bf16.msra.mxu0 %v7509
        %7533 = vmatprep.subr.bf16.mxu0 0
        %7534 = vmatpush1.bf16.msra.mxu0 %v7508
        %7535 = vmatprep.subr.bf16.mxu0 0
        %7536 = vmatpush2.bf16.msra.mxu0 0
        %7537 = vmatprep.subr.bf16.mxu0 0
        %7538 = vmatpush2.bf16.msra.mxu0 0
        %7539 = vmatprep.subr.bf16.mxu0 0
        %7540 = vmatpush2.bf16.msra.mxu0 0
        %7541 = vmatprep.subr.bf16.mxu0 0
        %7542 = vmatpush2.bf16.msra.mxu0 0
        %7543 = vmatprep.subr.bf16.mxu0 0
        %7544 = vmatpush2.bf16.msra.mxu0 0
        %7545 = vmatprep.subr.bf16.mxu0 0
        %7546 = vmatpush2.bf16.msra.mxu0 0
        %7547 = vmatprep.subr.bf16.mxu0 0
        %7548 = vmatpush2.bf16.msra.mxu0 0
        %7549 = vmatprep.subr.bf16.mxu0 0
        %7550 = vmatpush2.bf16.msra.mxu0 0
        %7551 = vmatprep.mubr.bf16.mxu0 0
        %7552 = vmatmul.mubr.bf16.gmra.mxu0 %v7517
        %v7553 = vpop.f32.mrf.mxu0
        %v7554 = vadd.f32 %v7490, %v7553
        %v7555 = vpop.f32.mrf.mxu0
        %v7556 = vpop.f32.mrf.mxu0
        %v7557 = vpop.f32.mrf.mxu0
        %7558 = vdwg.mxu0
        %v7559 = vmul.f32 %v7554, 0.5
        %v7560 = vmul.f32 %v7554, 0.70710677
        %v7561 = verf.f32.pop %v7560
        %v7562 = vadd.f32 %v7561, 1.0
        %v7563 = vmul.f32 %v7559, %v7562
        %s7564 = scalar_lea.vmem %s22, 40
        %v7565 = vld [vmem:[%s7564] sm:$0xf]
        %v7566 = vld [vmem:[%s7564 + $0x4] sm:$0xf]
        %s7567 = scalar_lea.vmem [#allocation10], 5
        %v7568 = vld [vmem:[%s7567] sm:$0x1]
        %v7569 = vpack.c.bf16 %v7563, %v7563
        %v7571 = vlaneseq
        %v7572 = vshrl.u32 %v7571, 7
        %v7573 = vsub.s32 0, %v7572
        %v7574 = vrot.slane %v7568, %v7573
        %v7578 = vunpack.c.l.b16 %v7565
        %v7579 = vunpack.c.l.b16 %v7566
        %v7580 = vpack.c.b16 %v7579, %v7578
        %v7583 = vsel %vm1131, %v7569, 0
        %7585 = vmatprep.subr.bf16.mxu0 0
        %7586 = vmatpush1.bf16.msra.mxu0 0
        %7587 = vmatprep.subr.bf16.mxu0 0
        %7588 = vmatpush1.bf16.msra.mxu0 0
        %7589 = vmatprep.subr.bf16.mxu0 0
        %7590 = vmatpush1.bf16.msra.mxu0 0
        %7591 = vmatprep.subr.bf16.mxu0 0
        %7592 = vmatpush1.bf16.msra.mxu0 0
        %7593 = vmatprep.subr.bf16.mxu0 0
        %7594 = vmatpush1.bf16.msra.mxu0 0
        %7595 = vmatprep.subr.bf16.mxu0 0
        %7596 = vmatpush1.bf16.msra.mxu0 0
        %7597 = vmatprep.subr.bf16.mxu0 0
        %7598 = vmatpush1.bf16.msra.mxu0 0
        %7599 = vmatprep.subr.bf16.mxu0 0
        %7600 = vmatpush1.bf16.msra.mxu0 %v7580
        %7601 = vmatprep.subr.bf16.mxu0 0
        %7602 = vmatpush2.bf16.msra.mxu0 0
        %7603 = vmatprep.subr.bf16.mxu0 0
        %7604 = vmatpush2.bf16.msra.mxu0 0
        %7605 = vmatprep.subr.bf16.mxu0 0
        %7606 = vmatpush2.bf16.msra.mxu0 0
        %7607 = vmatprep.subr.bf16.mxu0 0
        %7608 = vmatpush2.bf16.msra.mxu0 0
        %7609 = vmatprep.subr.bf16.mxu0 0
        %7610 = vmatpush2.bf16.msra.mxu0 0
        %7611 = vmatprep.subr.bf16.mxu0 0
        %7612 = vmatpush2.bf16.msra.mxu0 0
        %7613 = vmatprep.subr.bf16.mxu0 0
        %7614 = vmatpush2.bf16.msra.mxu0 0
        %7615 = vmatprep.subr.bf16.mxu0 0
        %7616 = vmatpush2.bf16.msra.mxu0 0
        %7617 = vmatprep.mubr.bf16.mxu0 0
        %7618 = vmatmul.mubr.bf16.gmra.mxu0 %v7583
        %v7619 = vpop.f32.mrf.mxu0
        %v7620 = vadd.f32 %v7574, %v7619
        %v7621 = vpop.f32.mrf.mxu0
        %v7622 = vpop.f32.mrf.mxu0
        %v7623 = vpop.f32.mrf.mxu0
        %7624 = vdwg.mxu0
        %v7625 = vadd.f32 %v7620, %v7442
        %v7626 = vld [vmem:[%s24] sm:$0xf]
        %v7627 = vld [vmem:[%s24 + $0x4] sm:$0xf]
        %v7628 = vld [vmem:[%s24 + $0x8] sm:$0xf]
        %v7629 = vld [vmem:[%s24 + $0xc] sm:$0xf]
        %v7630 = vld [vmem:[%s24 + $0x10] sm:$0xf]
        %v7631 = vld [vmem:[%s24 + $0x14] sm:$0xf]
        %v7632 = vld [vmem:[%s24 + $0x18] sm:$0xf]
        %v7633 = vld [vmem:[%s24 + $0x1c] sm:$0xf]
        %v7634 = vld [vmem:[%s25] sm:$0x1]
        %v7635 = vpack.c.bf16 %v7625, %v7625
        %v7644 = vunpack.c.l.b16 %v7626
        %v7645 = vunpack.c.l.b16 %v7627
        %v7646 = vunpack.c.l.b16 %v7628
        %v7647 = vunpack.c.l.b16 %v7629
        %v7648 = vunpack.c.l.b16 %v7630
        %v7649 = vunpack.c.l.b16 %v7631
        %v7650 = vunpack.c.l.b16 %v7632
        %v7651 = vunpack.c.l.b16 %v7633
        %v7652 = vpack.c.b16 %v7645, %v7644
        %v7653 = vpack.c.b16 %v7647, %v7646
        %v7654 = vpack.c.b16 %v7649, %v7648
        %v7655 = vpack.c.b16 %v7651, %v7650
        %v7661 = vsel %vm990, %v7635, 0
        %7663 = vmatprep.subr.bf16.mxu0 0
        %7664 = vmatpush1.bf16.msra.mxu0 0
        %7665 = vmatprep.subr.bf16.mxu0 0
        %7666 = vmatpush1.bf16.msra.mxu0 0
        %7667 = vmatprep.subr.bf16.mxu0 0
        %7668 = vmatpush1.bf16.msra.mxu0 0
        %7669 = vmatprep.subr.bf16.mxu0 0
        %7670 = vmatpush1.bf16.msra.mxu0 0
        %7671 = vmatprep.subr.bf16.mxu0 0
        %7672 = vmatpush1.bf16.msra.mxu0 %v7655
        %7673 = vmatprep.subr.bf16.mxu0 0
        %7674 = vmatpush1.bf16.msra.mxu0 %v7654
        %7675 = vmatprep.subr.bf16.mxu0 0
        %7676 = vmatpush1.bf16.msra.mxu0 %v7653
        %7677 = vmatprep.subr.bf16.mxu0 0
        %7678 = vmatpush1.bf16.msra.mxu0 %v7652
        %7679 = vmatprep.subr.bf16.mxu0 0
        %7680 = vmatpush2.bf16.msra.mxu0 0
        %7681 = vmatprep.subr.bf16.mxu0 0
        %7682 = vmatpush2.bf16.msra.mxu0 0
        %7683 = vmatprep.subr.bf16.mxu0 0
        %7684 = vmatpush2.bf16.msra.mxu0 0
        %7685 = vmatprep.subr.bf16.mxu0 0
        %7686 = vmatpush2.bf16.msra.mxu0 0
        %7687 = vmatprep.subr.bf16.mxu0 0
        %7688 = vmatpush2.bf16.msra.mxu0 0
        %7689 = vmatprep.subr.bf16.mxu0 0
        %7690 = vmatpush2.bf16.msra.mxu0 0
        %7691 = vmatprep.subr.bf16.mxu0 0
        %7692 = vmatpush2.bf16.msra.mxu0 0
        %7693 = vmatprep.subr.bf16.mxu0 0
        %7694 = vmatpush2.bf16.msra.mxu0 0
        %7695 = vmatprep.mubr.bf16.mxu0 0
        %7696 = vmatmul.mubr.bf16.gmra.mxu0 %v7661
        %v7697 = vpop.f32.mrf.mxu0
        %v7698 = vadd.f32 %v7634, %v7697
        %v7699 = vpop.f32.mrf.mxu0
        %v7700 = vpop.f32.mrf.mxu0
        %v7701 = vpop.f32.mrf.mxu0
        %7702 = vdwg.mxu0
        %7703 = vst [vmem:[%s865] sm:$0x1] %v7698
        %s7704 = sand.u32 %s607, 1
        %s7705 = scalar_lea.sflag [#allocation4], %s7704
        %s7706 = sand.u32 %s607, 1
        %s7707 = scalar_lea.vmem [#allocation11], %s7706
        // Predicated region
        $region145: #{tpu_custom_call.1} parent=123 // pred_check
          %p7708 = pneg %p617
        $region146: #{tpu_custom_call.1} parent=123 // pred_check_branch
          %7710 = sbr.rel (%p7708) target = $region148
        $region147: #{tpu_custom_call.1} parent=123 // pred_region
          %s7712 = ssub.s32 16, 16
          %7713 = vsyncadd %s7705, %s7712
          %s7714 = smul.addr %s43, 16
          %s7715 = scalar_lea.hbm %s26, %s7714
          %s7717 = sshll.u32 %s7707, 4
          %s7718 = int_to_ptr.vmem [resolvable:$true] %s7717
          %7720 = dma.vmem_to_hbm [thread:$0]  %s7718, 16, %s7715, %s7705
        $region148: #{tpu_custom_call.1} parent=123 // pred_fallthru
          _
      $region124: #{tpu_custom_call.1} parent=5 // pred_fallthru
        _
      %p7721 = scmp.le.s32.totalorder 2, %s38
      // Predicated region
      $region149: #{tpu_custom_call.1} parent=5 // pred_check
        %p7722 = pneg %p7721
      $region150: #{tpu_custom_call.1} parent=5 // pred_check_branch
        %7724 = sbr.rel (%p7722) target = $region152
      $region151: #{tpu_custom_call.1} parent=5 // pred_region
        %s7725 = ssub.s32 %s38, 2
        // Predicated region
        $region153: #{tpu_custom_call.1} parent=151 // pred_check
          %p7726 = pneg %p623
        $region154: #{tpu_custom_call.1} parent=151 // pred_check_branch
          %7728 = sbr.rel (%p7726) target = $region156
        $region155: #{tpu_custom_call.1} parent=151 // pred_region
          %s7729 = sand.u32 %s608, 1
          %s7730 = scalar_lea.sflag [#allocation4], %s7729
          %s7731 = sand.u32 %s608, 1
          %s7732 = scalar_lea.vmem [#allocation11], %s7731
          %7733 = dma.done %s7730, 16
        $region156: #{tpu_custom_call.1} parent=151 // pred_fallthru
          _
      $region152: #{tpu_custom_call.1} parent=5 // pred_fallthru
        _
    $region6: #{tpu_custom_call.1} parent=1 // loop_footer
      %s42 = sadd.s32 1, %s38
    $region7: #{tpu_custom_call.1} parent=1 // loop_footer_branch
      %37 = sbr.rel target = $region3
    $region8: #{tpu_custom_call.1} parent=1 // loop_exit
      _
    %7734 = vsyncpa [#allocation3], 1
    %s7735 = scalar_lea.sflag [#allocation3], 1
    %7736 = vsyncpa %s7735, 1
    %7737 = vsyncpa [#allocation6], 1
    %7738 = vsyncpa [#allocation9], 1
    %7739 = vsyncpa [#allocation4], 1
    %s7740 = scalar_lea.sflag [#allocation4], 1
    %7741 = vsyncpa %s7740, 1

</llo_original>
